<compile_context>
chip_gen: v6e
topology: v6e:2x2x1
jax: 0.10.0
libtpu: 0.0.40
codegen_flags: <defaults>
</compile_context>

<pallas_src>
import functools
from collections import namedtuple

import jax
import jax.numpy as jnp
from jax.experimental import pallas as pl
from jax.experimental.pallas import tpu as pltpu

HIDDEN = 512
IN_DIM = 3
OUT_DIM = 1


def _mlp_kernel(x_ref,
                w1_ref, b1_ref,
                w2_ref, b2_ref,
                w3_ref, b3_ref,
                w4_ref, b4_ref,
                w5_ref, b5_ref,
                w6_ref, b6_ref,
                o_ref,
                *, bf16_activations, fast_bf16_acc):
    act_dtype = jnp.bfloat16 if bf16_activations else jnp.float32
    mm_dtype = jnp.bfloat16 if (bf16_activations and fast_bf16_acc) else jnp.float32

    x = x_ref[...]                       # (3, tile_n)  f32, lane-dense batch
    w1 = w1_ref[...]                     # (512, 3)     f32

    # ---- Layer 1 (K=3): 3 broadcast FMAs on the VPU, f32 for accuracy ----
    h = (w1[:, 0:1] * x[0:1, :]
         + w1[:, 1:2] * x[1:2, :]
         + w1[:, 2:3] * x[2:3, :]
         + b1_ref[...])                  # (512, tile_n) f32
    h = jnp.maximum(h, 0.0).astype(act_dtype)

    # ---- Layers 2-5: bf16 MXU matmuls (f32 accumulation inside the MXU).
    # On v6e/v7x the matmul output, bias-add and ReLU stay bf16 (halves VPU
    # element ops and inter-layer VMEM traffic); on v5e they stay f32.
    for w_ref, b_ref in ((w2_ref, b2_ref), (w3_ref, b3_ref),
                         (w4_ref, b4_ref), (w5_ref, b5_ref)):
        acc = jnp.dot(w_ref[...], h.astype(jnp.bfloat16),
                      preferred_element_type=mm_dtype)          # (512, tile_n)
        h = jnp.maximum(acc.astype(act_dtype) + b_ref[...], 0.0)

    # ---- Layer 6: (1,512)@(512,tile_n) -> (1,tile_n), already lane-dense ----
    logits = jnp.dot(w6_ref[...], h.astype(jnp.bfloat16),
                     preferred_element_type=jnp.float32)        # (1, tile_n) f32
    o_ref[...] = jax.nn.sigmoid(logits + b6_ref[...]).astype(o_ref.dtype)


_HWConfig = namedtuple("_HWConfig", "bf16_act vmem_limit max_tile split_cores")


def _hw_config():
    try:
        kind = jax.devices()[0].device_kind.lower()
    except Exception:
        kind = ""
    old_gen = any(t in kind for t in ("v2", "v3", "v4", "v5"))
    is_v7 = ("v7" in kind or "7x" in kind) and not old_gen
    is_v6 = "v6" in kind and not old_gen
    if old_gen:
        # v5e and older: 128 MiB physical VMEM, no bf16 VALU -> f32 activations.
        cfg = _HWConfig(False, 64 << 20, 8192, False)
    elif is_v7:
        # v7x: 64 MiB physical VMEM per TensorCore, 2 TensorCores per chip.
        cfg = _HWConfig(True, 48 << 20, 4096, True)
    elif is_v6:
        # v6e: 128 MiB physical VMEM, bf16 VPU.
        cfg = _HWConfig(True, 64 << 20, 8192, False)
    else:
        # Unknown chip: conservative budget that is known to compile everywhere.
        cfg = _HWConfig(True, 32 << 20, 4096, False)
    try:
        phys = int(pltpu.get_tpu_info().vmem_capacity_bytes)
        cfg = cfg._replace(vmem_limit=min(cfg.vmem_limit, (phys * 3) // 4))
    except Exception:
        pass
    return cfg


def _run_pallas(xT, fm_params, *, tile_n, num_tiles, bf16_activations,
                vmem_limit, single_buffer_weights, fast_bf16_acc):
    n_pad = xT.shape[1]

    def resident_spec(arr):
        zeros = (0,) * arr.ndim
        if single_buffer_weights:
            # Constant index map: fetched once; single-buffer to halve footprint.
            return pl.BlockSpec(arr.shape, lambda i, _z=zeros: _z,
                                pipeline_mode=pl.Buffered(1))
        return pl.BlockSpec(arr.shape, lambda i, _z=zeros: _z)

    in_specs = [pl.BlockSpec((IN_DIM, tile_n), lambda i: (0, i))]
    in_specs += [resident_spec(a) for a in fm_params]
    out_spec = pl.BlockSpec((1, tile_n), lambda i: (0, i))

    kernel = functools.partial(_mlp_kernel,
                               bf16_activations=bf16_activations,
                               fast_bf16_acc=fast_bf16_acc)

    flops = 2 * n_pad * (IN_DIM * HIDDEN + 4 * HIDDEN * HIDDEN + HIDDEN * OUT_DIM)
    bytes_accessed = int(sum(int(a.size) * a.dtype.itemsize for a in fm_params)
                         + xT.size * xT.dtype.itemsize + n_pad * 4)
    cost = pl.CostEstimate(flops=flops, transcendentals=n_pad,
                           bytes_accessed=bytes_accessed)

    out = pl.pallas_call(
        kernel,
        out_shape=jax.ShapeDtypeStruct((1, n_pad), jnp.float32),
        grid_spec=pltpu.PrefetchScalarGridSpec(
            num_scalar_prefetch=0,
            grid=(num_tiles,),
            in_specs=in_specs,
            out_specs=out_spec,
        ),
        compiler_params=pltpu.CompilerParams(
            dimension_semantics=("arbitrary",) if num_tiles == 1 else ("parallel",),
            vmem_limit_bytes=vmem_limit,
        ),
        cost_estimate=cost,
    )(xT, *fm_params)
    return jax.block_until_ready(out)


def mlp_forward(x, params, *, tile_n=None, bf16_activations=None):
    """x: (N, 3) float32.  Returns sigmoid(MLP(x)) with shape (N, 1) float32."""
    N, d_in = x.shape
    assert d_in == IN_DIM
    cfg = _hw_config()
    if bf16_activations is None:
        bf16_activations = cfg.bf16_act

    if tile_n is None:
        # >=2 grid steps on v7x for mid/large batches so both TensorCores work.
        min_steps = 2 if (cfg.split_cores and N >= 1024) else 1
        if min_steps == 1 and N <= cfg.max_tile:
            tile_n = N                        # whole batch in one grid step
        else:
            n128 = pl.cdiv(N, 128) * 128
            cap = max(128, min(cfg.max_tile, n128 // min_steps))
            t = (cap // 128) * 128
            while t > 128 and n128 % t != 0:
                t -= 128
            tile_n = t
    n_pad = pl.cdiv(N, tile_n) * tile_n
    num_tiles = n_pad // tile_n
    assert tile_n == n_pad or tile_n % 128 == 0, "tile_n must be a multiple of 128"

    (w1, b1, w2, b2, w3, b3, w4, b4, w5, b5, w6, b6) = params
    act_dt = jnp.bfloat16 if bf16_activations else jnp.float32
    # Feature-major parameters: weights (out, in), biases (out, 1).  512x512
    # weights in bf16 (half HBM/VMEM traffic, bf16 MXU throughput).
    fm_params = (
        w1.T.astype(jnp.float32),  b1.T.astype(jnp.float32),   # layer 1 stays f32
        w2.T.astype(jnp.bfloat16), b2.T.astype(act_dt),
        w3.T.astype(jnp.bfloat16), b3.T.astype(act_dt),
        w4.T.astype(jnp.bfloat16), b4.T.astype(act_dt),
        w5.T.astype(jnp.bfloat16), b5.T.astype(act_dt),
        w6.T.astype(jnp.bfloat16), b6.T.astype(jnp.float32),
    )

    xT = jnp.transpose(x)                     # (3, N): lane-dense batch axis
    if n_pad != N:
        xT = jnp.pad(xT, ((0, 0), (0, n_pad - N)))

    run = functools.partial(
        _run_pallas, xT, fm_params,
        tile_n=tile_n, num_tiles=num_tiles,
        bf16_activations=bf16_activations, vmem_limit=cfg.vmem_limit)
    try:
        out = run(single_buffer_weights=True, fast_bf16_acc=True)
    except Exception:
        # Portability fallback: some jax/Mosaic versions reject pl.Buffered(1)
        # single-buffering or a bf16 matmul output dtype; rerun without them.
        out = run(single_buffer_weights=False, fast_bf16_acc=False)

    return out[0, :N].reshape(N, OUT_DIM)


def init_params(key):
    """Deterministic init matching nn.Linear shapes (uniform +-1/sqrt(fan_in)).
    Weights stored as (in, out); biases as (1, out)."""
    dims = [(IN_DIM, HIDDEN), (HIDDEN, HIDDEN), (HIDDEN, HIDDEN),
            (HIDDEN, HIDDEN), (HIDDEN, HIDDEN), (HIDDEN, OUT_DIM)]
    params = []
    for (fan_in, fan_out) in dims:
        key, kw, kb = jax.random.split(key, 3)
        bound = 1.0 / jnp.sqrt(float(fan_in))
        w = jax.random.uniform(kw, (fan_in, fan_out), jnp.float32, -bound, bound)
        b = jax.random.uniform(kb, (1, fan_out), jnp.float32, -bound, bound)
        params.extend([w, b])
    return tuple(params)


def mlp_reference(x, params):
    (w1, b1, w2, b2, w3, b3, w4, b4, w5, b5, w6, b6) = params
    h = jax.nn.relu(x @ w1 + b1)
    h = jax.nn.relu(h @ w2 + b2)
    h = jax.nn.relu(h @ w3 + b3)
    h = jax.nn.relu(h @ w4 + b4)
    h = jax.nn.relu(h @ w5 + b5)
    return jax.nn.sigmoid(h @ w6 + b6)


if __name__ == "__main__":
    key = jax.random.PRNGKey(0)
    kp, kx = jax.random.split(key)
    params = init_params(kp)

    N = 256  # batch of 3-D coordinates in [-0.5, 0.5]^3 (matches resolution=256)
    x = jax.random.uniform(kx, (N, IN_DIM), jnp.float32, -0.5, 0.5)

    out = mlp_forward(x, params)          # single grid step for N=256
    out = jax.block_until_ready(out)

    ref = mlp_reference(x, params)        # full-f32 reference
    assert out.shape == (N, OUT_DIM)
    err = float(jnp.max(jnp.abs(out - ref)))
    # bf16 weights / activations on the MXU (f32 accumulation) => relaxed tol.
    assert err < 3e-2, f"mismatch vs reference: max abs err = {err}"

    print("KERNEL_OK")
</pallas_src>

<mosaic_0001>
module attributes {stable_mosaic.version = 11 : i64} {
  func.func @_mlp_kernel(%arg0: i32, %arg1: memref<3x256xf32, #tpu.memory_space<vmem>>, %arg2: memref<512x3xf32, #tpu.memory_space<vmem>>, %arg3: memref<512x1xf32, #tpu.memory_space<vmem>>, %arg4: memref<512x512xbf16, #tpu.memory_space<vmem>>, %arg5: memref<512x1xbf16, #tpu.memory_space<vmem>>, %arg6: memref<512x512xbf16, #tpu.memory_space<vmem>>, %arg7: memref<512x1xbf16, #tpu.memory_space<vmem>>, %arg8: memref<512x512xbf16, #tpu.memory_space<vmem>>, %arg9: memref<512x1xbf16, #tpu.memory_space<vmem>>, %arg10: memref<512x512xbf16, #tpu.memory_space<vmem>>, %arg11: memref<512x1xbf16, #tpu.memory_space<vmem>>, %arg12: memref<1x512xbf16, #tpu.memory_space<vmem>>, %arg13: memref<1x1xf32, #tpu.memory_space<vmem>>, %arg14: memref<1x256xf32, #tpu.memory_space<vmem>>) attributes {dimension_semantics = [#tpu.dimension_semantics<arbitrary>], iteration_bounds = array<i64: 1>, scalar_prefetch = 0 : i64, scratch_operands = 0 : i64, tpu.core_type = #tpu.core_type<tc>, window_params = [{transform_indices = @transform_0, window_bounds = array<i64: 3, 256>}, {pipeline_mode = #tpu.pipeline_mode<synchronous>, transform_indices = @transform_1, window_bounds = array<i64: 512, 3>}, {pipeline_mode = #tpu.pipeline_mode<synchronous>, transform_indices = @transform_2, window_bounds = array<i64: 512, 1>}, {pipeline_mode = #tpu.pipeline_mode<synchronous>, transform_indices = @transform_3, window_bounds = array<i64: 512, 512>}, {pipeline_mode = #tpu.pipeline_mode<synchronous>, transform_indices = @transform_4, window_bounds = array<i64: 512, 1>}, {pipeline_mode = #tpu.pipeline_mode<synchronous>, transform_indices = @transform_5, window_bounds = array<i64: 512, 512>}, {pipeline_mode = #tpu.pipeline_mode<synchronous>, transform_indices = @transform_6, window_bounds = array<i64: 512, 1>}, {pipeline_mode = #tpu.pipeline_mode<synchronous>, transform_indices = @transform_7, window_bounds = array<i64: 512, 512>}, {pipeline_mode = #tpu.pipeline_mode<synchronous>, transform_indices = @transform_8, window_bounds = array<i64: 512, 1>}, {pipeline_mode = #tpu.pipeline_mode<synchronous>, transform_indices = @transform_9, window_bounds = array<i64: 512, 512>}, {pipeline_mode = #tpu.pipeline_mode<synchronous>, transform_indices = @transform_10, window_bounds = array<i64: 512, 1>}, {pipeline_mode = #tpu.pipeline_mode<synchronous>, transform_indices = @transform_11, window_bounds = array<i64: 1, 512>}, {pipeline_mode = #tpu.pipeline_mode<synchronous>, transform_indices = @transform_12, window_bounds = array<i64: 1, 1>}, {transform_indices = @transform_13, window_bounds = array<i64: 1, 256>}]} {
    %c0 = arith.constant 0 : index
    %c0_0 = arith.constant 0 : index
    %0 = vector.load %arg1[%c0, %c0_0] : memref<3x256xf32, #tpu.memory_space<vmem>>, vector<3x256xf32>
    %c0_1 = arith.constant 0 : index
    %c0_2 = arith.constant 0 : index
    %1 = vector.load %arg2[%c0_1, %c0_2] : memref<512x3xf32, #tpu.memory_space<vmem>>, vector<512x3xf32>
    %2 = vector.extract_strided_slice %1 {offsets = [0, 0], sizes = [512, 1], strides = [1, 1]} : vector<512x3xf32> to vector<512x1xf32>
    %3 = vector.extract_strided_slice %0 {offsets = [0, 0], sizes = [1, 256], strides = [1, 1]} : vector<3x256xf32> to vector<1x256xf32>
    %4 = vector.broadcast %2 : vector<512x1xf32> to vector<512x256xf32>
    %5 = vector.broadcast %3 : vector<1x256xf32> to vector<512x256xf32>
    %6 = arith.mulf %4, %5 : vector<512x256xf32>
    %7 = vector.extract_strided_slice %1 {offsets = [0, 1], sizes = [512, 1], strides = [1, 1]} : vector<512x3xf32> to vector<512x1xf32>
    %8 = vector.extract_strided_slice %0 {offsets = [1, 0], sizes = [1, 256], strides = [1, 1]} : vector<3x256xf32> to vector<1x256xf32>
    %9 = vector.broadcast %7 : vector<512x1xf32> to vector<512x256xf32>
    %10 = vector.broadcast %8 : vector<1x256xf32> to vector<512x256xf32>
    %11 = arith.mulf %9, %10 : vector<512x256xf32>
    %12 = arith.addf %6, %11 : vector<512x256xf32>
    %13 = vector.extract_strided_slice %1 {offsets = [0, 2], sizes = [512, 1], strides = [1, 1]} : vector<512x3xf32> to vector<512x1xf32>
    %14 = vector.extract_strided_slice %0 {offsets = [2, 0], sizes = [1, 256], strides = [1, 1]} : vector<3x256xf32> to vector<1x256xf32>
    %15 = vector.broadcast %13 : vector<512x1xf32> to vector<512x256xf32>
    %16 = vector.broadcast %14 : vector<1x256xf32> to vector<512x256xf32>
    %17 = arith.mulf %15, %16 : vector<512x256xf32>
    %18 = arith.addf %12, %17 : vector<512x256xf32>
    %c0_3 = arith.constant 0 : index
    %c0_4 = arith.constant 0 : index
    %19 = vector.load %arg3[%c0_3, %c0_4] : memref<512x1xf32, #tpu.memory_space<vmem>>, vector<512x1xf32>
    %20 = vector.broadcast %19 : vector<512x1xf32> to vector<512x256xf32>
    %21 = arith.addf %18, %20 : vector<512x256xf32>
    %cst = arith.constant 0.000000e+00 : f32
    %22 = vector.broadcast %cst : f32 to vector<512x256xf32>
    %23 = arith.maximumf %21, %22 : vector<512x256xf32>
    %24 = arith.truncf %23 : vector<512x256xf32> to vector<512x256xbf16>
    %c0_5 = arith.constant 0 : index
    %c0_6 = arith.constant 0 : index
    %25 = vector.load %arg4[%c0_5, %c0_6] : memref<512x512xbf16, #tpu.memory_space<vmem>>, vector<512x512xbf16>
    %cst_7 = arith.constant dense<0.000000e+00> : vector<512x256xf32>
    %26 = tpu.matmul %25, %24, %cst_7 {dimension_numbers = #tpu.dot_dimension_numbers<[1], [0], [0], [1], [0, 0, 1, 1], [], []>} : vector<512x512xbf16>, vector<512x256xbf16>, vector<512x256xf32> -> vector<512x256xf32>
    %27 = arith.truncf %26 : vector<512x256xf32> to vector<512x256xbf16>
    %c0_8 = arith.constant 0 : index
    %c0_9 = arith.constant 0 : index
    %28 = vector.load %arg5[%c0_8, %c0_9] : memref<512x1xbf16, #tpu.memory_space<vmem>>, vector<512x1xbf16>
    %29 = vector.broadcast %28 : vector<512x1xbf16> to vector<512x256xbf16>
    %30 = arith.addf %27, %29 : vector<512x256xbf16>
    %cst_10 = arith.constant 0.000000e+00 : bf16
    %31 = vector.broadcast %cst_10 : bf16 to vector<512x256xbf16>
    %32 = arith.maximumf %30, %31 : vector<512x256xbf16>
    %c0_11 = arith.constant 0 : index
    %c0_12 = arith.constant 0 : index
    %33 = vector.load %arg6[%c0_11, %c0_12] : memref<512x512xbf16, #tpu.memory_space<vmem>>, vector<512x512xbf16>
    %cst_13 = arith.constant dense<0.000000e+00> : vector<512x256xf32>
    %34 = tpu.matmul %33, %32, %cst_13 {dimension_numbers = #tpu.dot_dimension_numbers<[1], [0], [0], [1], [0, 0, 1, 1], [], []>} : vector<512x512xbf16>, vector<512x256xbf16>, vector<512x256xf32> -> vector<512x256xf32>
    %35 = arith.truncf %34 : vector<512x256xf32> to vector<512x256xbf16>
    %c0_14 = arith.constant 0 : index
    %c0_15 = arith.constant 0 : index
    %36 = vector.load %arg7[%c0_14, %c0_15] : memref<512x1xbf16, #tpu.memory_space<vmem>>, vector<512x1xbf16>
    %37 = vector.broadcast %36 : vector<512x1xbf16> to vector<512x256xbf16>
    %38 = arith.addf %35, %37 : vector<512x256xbf16>
    %cst_16 = arith.constant 0.000000e+00 : bf16
    %39 = vector.broadcast %cst_16 : bf16 to vector<512x256xbf16>
    %40 = arith.maximumf %38, %39 : vector<512x256xbf16>
    %c0_17 = arith.constant 0 : index
    %c0_18 = arith.constant 0 : index
    %41 = vector.load %arg8[%c0_17, %c0_18] : memref<512x512xbf16, #tpu.memory_space<vmem>>, vector<512x512xbf16>
    %cst_19 = arith.constant dense<0.000000e+00> : vector<512x256xf32>
    %42 = tpu.matmul %41, %40, %cst_19 {dimension_numbers = #tpu.dot_dimension_numbers<[1], [0], [0], [1], [0, 0, 1, 1], [], []>} : vector<512x512xbf16>, vector<512x256xbf16>, vector<512x256xf32> -> vector<512x256xf32>
    %43 = arith.truncf %42 : vector<512x256xf32> to vector<512x256xbf16>
    %c0_20 = arith.constant 0 : index
    %c0_21 = arith.constant 0 : index
    %44 = vector.load %arg9[%c0_20, %c0_21] : memref<512x1xbf16, #tpu.memory_space<vmem>>, vector<512x1xbf16>
    %45 = vector.broadcast %44 : vector<512x1xbf16> to vector<512x256xbf16>
    %46 = arith.addf %43, %45 : vector<512x256xbf16>
    %cst_22 = arith.constant 0.000000e+00 : bf16
    %47 = vector.broadcast %cst_22 : bf16 to vector<512x256xbf16>
    %48 = arith.maximumf %46, %47 : vector<512x256xbf16>
    %c0_23 = arith.constant 0 : index
    %c0_24 = arith.constant 0 : index
    %49 = vector.load %arg10[%c0_23, %c0_24] : memref<512x512xbf16, #tpu.memory_space<vmem>>, vector<512x512xbf16>
    %cst_25 = arith.constant dense<0.000000e+00> : vector<512x256xf32>
    %50 = tpu.matmul %49, %48, %cst_25 {dimension_numbers = #tpu.dot_dimension_numbers<[1], [0], [0], [1], [0, 0, 1, 1], [], []>} : vector<512x512xbf16>, vector<512x256xbf16>, vector<512x256xf32> -> vector<512x256xf32>
    %51 = arith.truncf %50 : vector<512x256xf32> to vector<512x256xbf16>
    %c0_26 = arith.constant 0 : index
    %c0_27 = arith.constant 0 : index
    %52 = vector.load %arg11[%c0_26, %c0_27] : memref<512x1xbf16, #tpu.memory_space<vmem>>, vector<512x1xbf16>
    %53 = vector.broadcast %52 : vector<512x1xbf16> to vector<512x256xbf16>
    %54 = arith.addf %51, %53 : vector<512x256xbf16>
    %cst_28 = arith.constant 0.000000e+00 : bf16
    %55 = vector.broadcast %cst_28 : bf16 to vector<512x256xbf16>
    %56 = arith.maximumf %54, %55 : vector<512x256xbf16>
    %c0_29 = arith.constant 0 : index
    %c0_30 = arith.constant 0 : index
    %57 = vector.load %arg12[%c0_29, %c0_30] : memref<1x512xbf16, #tpu.memory_space<vmem>>, vector<1x512xbf16>
    %cst_31 = arith.constant dense<0.000000e+00> : vector<1x256xf32>
    %58 = tpu.matmul %57, %56, %cst_31 {dimension_numbers = #tpu.dot_dimension_numbers<[1], [0], [0], [1], [0, 0, 1, 1], [], []>} : vector<1x512xbf16>, vector<512x256xbf16>, vector<1x256xf32> -> vector<1x256xf32>
    %c0_32 = arith.constant 0 : index
    %c0_33 = arith.constant 0 : index
    %59 = vector.load %arg13[%c0_32, %c0_33] : memref<1x1xf32, #tpu.memory_space<vmem>>, vector<1x1xf32>
    %60 = vector.broadcast %59 : vector<1x1xf32> to vector<1x256xf32>
    %61 = arith.addf %58, %60 : vector<1x256xf32>
    %62 = arith.negf %61 : vector<1x256xf32>
    %63 = math.exp %62 : vector<1x256xf32>
    %cst_34 = arith.constant 1.000000e+00 : f32
    %64 = vector.broadcast %cst_34 : f32 to vector<1x256xf32>
    %65 = arith.addf %64, %63 : vector<1x256xf32>
    %66 = arith.divf %64, %65 : vector<1x256xf32>
    %c0_35 = arith.constant 0 : index
    %c0_36 = arith.constant 0 : index
    %67 = vector.load %arg14[%c0_35, %c0_36] : memref<1x256xf32, #tpu.memory_space<vmem>>, vector<1x256xf32>
    tpu.vector_store %arg14[%c0_35, %c0_36], %66 {strides = array<i32>} : memref<1x256xf32, #tpu.memory_space<vmem>>, vector<1x256xf32>,
    return
  }
  func.func @transform_0(%arg0: i32) -> (i32, i32) {
    %c0_i32 = arith.constant 0 : i32
    %c0_i32_0 = arith.constant 0 : i32
    return %c0_i32, %arg0 : i32, i32
  }
  func.func @transform_1(%arg0: i32) -> (i32, i32) {
    %c0_i32 = arith.constant 0 : i32
    %c0_i32_0 = arith.constant 0 : i32
    %c0_i32_1 = arith.constant 0 : i32
    return %c0_i32, %c0_i32_0 : i32, i32
  }
  func.func @transform_2(%arg0: i32) -> (i32, i32) {
    %c0_i32 = arith.constant 0 : i32
    %c0_i32_0 = arith.constant 0 : i32
    %c0_i32_1 = arith.constant 0 : i32
    return %c0_i32, %c0_i32_0 : i32, i32
  }
  func.func @transform_3(%arg0: i32) -> (i32, i32) {
    %c0_i32 = arith.constant 0 : i32
    %c0_i32_0 = arith.constant 0 : i32
    %c0_i32_1 = arith.constant 0 : i32
    return %c0_i32, %c0_i32_0 : i32, i32
  }
  func.func @transform_4(%arg0: i32) -> (i32, i32) {
    %c0_i32 = arith.constant 0 : i32
    %c0_i32_0 = arith.constant 0 : i32
    %c0_i32_1 = arith.constant 0 : i32
    return %c0_i32, %c0_i32_0 : i32, i32
  }
  func.func @transform_5(%arg0: i32) -> (i32, i32) {
    %c0_i32 = arith.constant 0 : i32
    %c0_i32_0 = arith.constant 0 : i32
    %c0_i32_1 = arith.constant 0 : i32
    return %c0_i32, %c0_i32_0 : i32, i32
  }
  func.func @transform_6(%arg0: i32) -> (i32, i32) {
    %c0_i32 = arith.constant 0 : i32
    %c0_i32_0 = arith.constant 0 : i32
    %c0_i32_1 = arith.constant 0 : i32
    return %c0_i32, %c0_i32_0 : i32, i32
  }
  func.func @transform_7(%arg0: i32) -> (i32, i32) {
    %c0_i32 = arith.constant 0 : i32
    %c0_i32_0 = arith.constant 0 : i32
    %c0_i32_1 = arith.constant 0 : i32
    return %c0_i32, %c0_i32_0 : i32, i32
  }
  func.func @transform_8(%arg0: i32) -> (i32, i32) {
    %c0_i32 = arith.constant 0 : i32
    %c0_i32_0 = arith.constant 0 : i32
    %c0_i32_1 = arith.constant 0 : i32
    return %c0_i32, %c0_i32_0 : i32, i32
  }
  func.func @transform_9(%arg0: i32) -> (i32, i32) {
    %c0_i32 = arith.constant 0 : i32
    %c0_i32_0 = arith.constant 0 : i32
    %c0_i32_1 = arith.constant 0 : i32
    return %c0_i32, %c0_i32_0 : i32, i32
  }
  func.func @transform_10(%arg0: i32) -> (i32, i32) {
    %c0_i32 = arith.constant 0 : i32
    %c0_i32_0 = arith.constant 0 : i32
    %c0_i32_1 = arith.constant 0 : i32
    return %c0_i32, %c0_i32_0 : i32, i32
  }
  func.func @transform_11(%arg0: i32) -> (i32, i32) {
    %c0_i32 = arith.constant 0 : i32
    %c0_i32_0 = arith.constant 0 : i32
    %c0_i32_1 = arith.constant 0 : i32
    return %c0_i32, %c0_i32_0 : i32, i32
  }
  func.func @transform_12(%arg0: i32) -> (i32, i32) {
    %c0_i32 = arith.constant 0 : i32
    %c0_i32_0 = arith.constant 0 : i32
    %c0_i32_1 = arith.constant 0 : i32
    return %c0_i32, %c0_i32_0 : i32, i32
  }
  func.func @transform_13(%arg0: i32) -> (i32, i32) {
    %c0_i32 = arith.constant 0 : i32
    %c0_i32_0 = arith.constant 0 : i32
    return %c0_i32, %arg0 : i32, i32
  }
}

</mosaic_0001>

<llo_original>
// kernel: tpu_custom_call.1
$region0: #{tpu_custom_call.1}
  #allocation0 [shape = 'u32[]', space=smem, size = 0x4, offset = 0x4, fixed_abs, tag = 'smem constant byte address 0x4 - core index']
  #allocation1 [shape = 'u32[144,128]{1,0:T(1,128)}', space=vmem, size = 0x12000, scoped, tag = 'internal scratch']
  #allocation2 [shape = 'f32[1,1]{1,0:T(1,128)S(1)}', space=vmem, size = 0x200, scoped, tag = 'scoped memory for tpu_custom_call.1']
  %s0 = inlined_call_operand.vmem [shape: f32[3,256], index: 0, kind: input, shape index: {}]
  %s1 = inlined_call_operand.vmem [shape: f32[512,3], index: 1, kind: input, shape index: {}]
  %s2 = inlined_call_operand.vmem [shape: f32[512,1], index: 2, kind: input, shape index: {}]
  %s3 = inlined_call_operand.vmem [shape: bf16[512,512], index: 3, kind: input, shape index: {}]
  %s4 = inlined_call_operand.vmem [shape: bf16[512,1], index: 4, kind: input, shape index: {}]
  %s5 = inlined_call_operand.vmem [shape: bf16[512,512], index: 5, kind: input, shape index: {}]
  %s6 = inlined_call_operand.vmem [shape: bf16[512,1], index: 6, kind: input, shape index: {}]
  %s7 = inlined_call_operand.hbm [shape: bf16[512,512], index: 7, kind: input, shape index: {}]
  %s8 = inlined_call_operand.vmem [shape: bf16[512,1], index: 8, kind: input, shape index: {}]
  %s9 = inlined_call_operand.hbm [shape: bf16[512,512], index: 9, kind: input, shape index: {}]
  %s10 = inlined_call_operand.vmem [shape: bf16[512,1], index: 10, kind: input, shape index: {}]
  %s11 = inlined_call_operand.vmem [shape: bf16[1,512], index: 11, kind: input, shape index: {}]
  %s12 = inlined_call_operand.<no memory space> [shape: f32[1,1], index: 12, kind: input, shape index: {}]
  %s13 = inlined_call_operand.hbm [shape: f32[1,256], index: 13, kind: output, shape index: {}]
  %s14 = sld [smem:[#allocation0]]
  $region70: #{tpu_custom_call.1} parent=0
    _
  %s16 = ssub.s32 1, %s14
  %s17 = scalar_select 0, %s16, %s14
  %v18 = vstv %s12
  %19 = vst [vmem:[#allocation2] sm:$0x1] %v18
  $region1: #{tpu_custom_call.1} parent=0
    #allocation3 [shape = 'u8[524288]{0}', space=vmem, size = 0x80000, scoped, tag = 'input window, operand 7, single buffered']
    #allocation4 [shape = 's32[1]{0}', space=sflag, size = 0x4, scoped, tag = 'scoped memory for tpu_custom_call.1']
    #allocation5 [shape = 's32[1]{0}', space=sflag, size = 0x4, scoped, tag = 'scoped memory for tpu_custom_call.1']
    #allocation6 [shape = 'u8[524288]{0}', space=vmem, size = 0x80000, scoped, tag = 'input window, operand 9, single buffered']
    #allocation7 [shape = 's32[1]{0}', space=sflag, size = 0x4, scoped, tag = 'scoped memory for tpu_custom_call.1']
    #allocation8 [shape = 'u8[1024]{0}', space=vmem, size = 0x400, scoped, tag = 'output window, operand 0, single buffered']
    %20 = vsyncpa [#allocation4], 0
    %21 = vsyncpa [#allocation7], 0
    %22 = vsyncpa [#allocation5], 0
    // Predicated region
    $region2: #{tpu_custom_call.1} parent=1 // pred_check
      _
    $region3: #{tpu_custom_call.1} parent=1 // pred_check_branch
      %24 = sbr.rel (0) target = $region5
    $region4: #{tpu_custom_call.1} parent=1 // pred_region
      _
    $region5: #{tpu_custom_call.1} parent=1 // pred_fallthru
      _
    // Predicated region
    $region6: #{tpu_custom_call.1} parent=1 // pred_check
      _
    $region7: #{tpu_custom_call.1} parent=1 // pred_check_branch
      %26 = sbr.rel (0) target = $region9
    $region8: #{tpu_custom_call.1} parent=1 // pred_region
      _
    $region9: #{tpu_custom_call.1} parent=1 // pred_fallthru
      _
    // Predicated region
    $region10: #{tpu_custom_call.1} parent=1 // pred_check
      _
    $region11: #{tpu_custom_call.1} parent=1 // pred_check_branch
      %28 = sbr.rel (0) target = $region13
    $region12: #{tpu_custom_call.1} parent=1 // pred_region
      _
    $region13: #{tpu_custom_call.1} parent=1 // pred_fallthru
      _
    // Predicated region
    $region14: #{tpu_custom_call.1} parent=1 // pred_check
      _
    $region15: #{tpu_custom_call.1} parent=1 // pred_check_branch
      %30 = sbr.rel (0) target = $region17
    $region16: #{tpu_custom_call.1} parent=1 // pred_region
      _
    $region17: #{tpu_custom_call.1} parent=1 // pred_fallthru
      _
    // Predicated region
    $region18: #{tpu_custom_call.1} parent=1 // pred_check
      _
    $region19: #{tpu_custom_call.1} parent=1 // pred_check_branch
      %32 = sbr.rel (0) target = $region21
    $region20: #{tpu_custom_call.1} parent=1 // pred_region
      _
    $region21: #{tpu_custom_call.1} parent=1 // pred_fallthru
      _
    // Predicated region
    $region22: #{tpu_custom_call.1} parent=1 // pred_check
      _
    $region23: #{tpu_custom_call.1} parent=1 // pred_check_branch
      %34 = sbr.rel (0) target = $region25
    $region24: #{tpu_custom_call.1} parent=1 // pred_region
      _
    $region25: #{tpu_custom_call.1} parent=1 // pred_fallthru
      _
    // Predicated region
    $region26: #{tpu_custom_call.1} parent=1 // pred_check
      _
    $region27: #{tpu_custom_call.1} parent=1 // pred_check_branch
      %36 = sbr.rel (0) target = $region29
    $region28: #{tpu_custom_call.1} parent=1 // pred_region
      _
    $region29: #{tpu_custom_call.1} parent=1 // pred_fallthru
      _
    // Predicated region
    $region30: #{tpu_custom_call.1} parent=1 // pred_check
      _
    $region31: #{tpu_custom_call.1} parent=1 // pred_check_branch
      %38 = sbr.rel (0) target = $region33
    $region32: #{tpu_custom_call.1} parent=1 // pred_region
      %s40 = ssub.s32 16384, 16384
      %41 = vsyncadd [#allocation4], %s40
      %s42 = sshll.u32 [#allocation3], 4
      %s43 = int_to_ptr.vmem [resolvable:$true] %s42
      %48 = dma.hbm_to_vmem [thread:$0]  %s7, 16384, %s43, [#allocation4], 256, 256, 16
    $region33: #{tpu_custom_call.1} parent=1 // pred_fallthru
      _
    // Predicated region
    $region34: #{tpu_custom_call.1} parent=1 // pred_check
      _
    $region35: #{tpu_custom_call.1} parent=1 // pred_check_branch
      %50 = sbr.rel (0) target = $region37
    $region36: #{tpu_custom_call.1} parent=1 // pred_region
      _
    $region37: #{tpu_custom_call.1} parent=1 // pred_fallthru
      _
    // Predicated region
    $region38: #{tpu_custom_call.1} parent=1 // pred_check
      _
    $region39: #{tpu_custom_call.1} parent=1 // pred_check_branch
      %52 = sbr.rel (0) target = $region41
    $region40: #{tpu_custom_call.1} parent=1 // pred_region
      %s54 = ssub.s32 16384, 16384
      %55 = vsyncadd [#allocation7], %s54
      %s56 = sshll.u32 [#allocation6], 4
      %s57 = int_to_ptr.vmem [resolvable:$true] %s56
      %62 = dma.hbm_to_vmem [thread:$0]  %s9, 16384, %s57, [#allocation7], 256, 256, 16
    $region41: #{tpu_custom_call.1} parent=1 // pred_fallthru
      _
    // Predicated region
    $region42: #{tpu_custom_call.1} parent=1 // pred_check
      _
    $region43: #{tpu_custom_call.1} parent=1 // pred_check_branch
      %64 = sbr.rel (0) target = $region45
    $region44: #{tpu_custom_call.1} parent=1 // pred_region
      _
    $region45: #{tpu_custom_call.1} parent=1 // pred_fallthru
      _
    // Predicated region
    $region46: #{tpu_custom_call.1} parent=1 // pred_check
      _
    $region47: #{tpu_custom_call.1} parent=1 // pred_check_branch
      %66 = sbr.rel (0) target = $region49
    $region48: #{tpu_custom_call.1} parent=1 // pred_region
      _
    $region49: #{tpu_custom_call.1} parent=1 // pred_fallthru
      _
    // Predicated region
    $region50: #{tpu_custom_call.1} parent=1 // pred_check
      _
    $region51: #{tpu_custom_call.1} parent=1 // pred_check_branch
      %68 = sbr.rel (0) target = $region53
    $region52: #{tpu_custom_call.1} parent=1 // pred_region
      _
    $region53: #{tpu_custom_call.1} parent=1 // pred_fallthru
      _
    // Predicated region
    $region54: #{tpu_custom_call.1} parent=1 // pred_check
      _
    $region55: #{tpu_custom_call.1} parent=1 // pred_check_branch
      %70 = sbr.rel (0) target = $region57
    $region56: #{tpu_custom_call.1} parent=1 // pred_region
      %71 = dma.done [#allocation4], 16384
    $region57: #{tpu_custom_call.1} parent=1 // pred_fallthru
      _
    // Predicated region
    $region58: #{tpu_custom_call.1} parent=1 // pred_check
      _
    $region59: #{tpu_custom_call.1} parent=1 // pred_check_branch
      %73 = sbr.rel (0) target = $region61
    $region60: #{tpu_custom_call.1} parent=1 // pred_region
      %74 = dma.done [#allocation7], 16384
    $region61: #{tpu_custom_call.1} parent=1 // pred_fallthru
      _
    %v76 = vld [vmem:[%s0] sm:$0x77]
    %v77 = vld [vmem:[%s1] sm:$0xff]
    %v78 = vld [vmem:[%s1 + $0x8] sm:$0xff]
    %v79 = vld [vmem:[%s1 + $0x10] sm:$0xff]
    %v80 = vld [vmem:[%s1 + $0x18] sm:$0xff]
    %v81 = vld [vmem:[%s1 + $0x20] sm:$0xff]
    %v82 = vld [vmem:[%s1 + $0x28] sm:$0xff]
    %v83 = vld [vmem:[%s1 + $0x30] sm:$0xff]
    %v84 = vld [vmem:[%s1 + $0x38] sm:$0xff]
    %v85 = vld [vmem:[%s1 + $0x40] sm:$0xff]
    %v86 = vld [vmem:[%s1 + $0x48] sm:$0xff]
    %v87 = vld [vmem:[%s1 + $0x50] sm:$0xff]
    %v88 = vld [vmem:[%s1 + $0x58] sm:$0xff]
    %v89 = vld [vmem:[%s1 + $0x60] sm:$0xff]
    %v90 = vld [vmem:[%s1 + $0x68] sm:$0xff]
    %v91 = vld [vmem:[%s1 + $0x70] sm:$0xff]
    %v92 = vld [vmem:[%s1 + $0x78] sm:$0xff]
    %v93 = vld [vmem:[%s1 + $0x80] sm:$0xff]
    %v94 = vld [vmem:[%s1 + $0x88] sm:$0xff]
    %v95 = vld [vmem:[%s1 + $0x90] sm:$0xff]
    %v96 = vld [vmem:[%s1 + $0x98] sm:$0xff]
    %v97 = vld [vmem:[%s1 + $0xa0] sm:$0xff]
    %v98 = vld [vmem:[%s1 + $0xa8] sm:$0xff]
    %v99 = vld [vmem:[%s1 + $0xb0] sm:$0xff]
    %v100 = vld [vmem:[%s1 + $0xb8] sm:$0xff]
    %v101 = vld [vmem:[%s1 + $0xc0] sm:$0xff]
    %v102 = vld [vmem:[%s1 + $0xc8] sm:$0xff]
    %v103 = vld [vmem:[%s1 + $0xd0] sm:$0xff]
    %v104 = vld [vmem:[%s1 + $0xd8] sm:$0xff]
    %v105 = vld [vmem:[%s1 + $0xe0] sm:$0xff]
    %v106 = vld [vmem:[%s1 + $0xe8] sm:$0xff]
    %v107 = vld [vmem:[%s1 + $0xf0] sm:$0xff]
    %v108 = vld [vmem:[%s1 + $0xf8] sm:$0xff]
    %v109 = vld [vmem:[%s1 + $0x100] sm:$0xff]
    %v110 = vld [vmem:[%s1 + $0x108] sm:$0xff]
    %v111 = vld [vmem:[%s1 + $0x110] sm:$0xff]
    %v112 = vld [vmem:[%s1 + $0x118] sm:$0xff]
    %v113 = vld [vmem:[%s1 + $0x120] sm:$0xff]
    %v114 = vld [vmem:[%s1 + $0x128] sm:$0xff]
    %v115 = vld [vmem:[%s1 + $0x130] sm:$0xff]
    %v116 = vld [vmem:[%s1 + $0x138] sm:$0xff]
    %v117 = vld [vmem:[%s1 + $0x140] sm:$0xff]
    %v118 = vld [vmem:[%s1 + $0x148] sm:$0xff]
    %v119 = vld [vmem:[%s1 + $0x150] sm:$0xff]
    %v120 = vld [vmem:[%s1 + $0x158] sm:$0xff]
    %v121 = vld [vmem:[%s1 + $0x160] sm:$0xff]
    %v122 = vld [vmem:[%s1 + $0x168] sm:$0xff]
    %v123 = vld [vmem:[%s1 + $0x170] sm:$0xff]
    %v124 = vld [vmem:[%s1 + $0x178] sm:$0xff]
    %v125 = vld [vmem:[%s1 + $0x180] sm:$0xff]
    %v126 = vld [vmem:[%s1 + $0x188] sm:$0xff]
    %v127 = vld [vmem:[%s1 + $0x190] sm:$0xff]
    %v128 = vld [vmem:[%s1 + $0x198] sm:$0xff]
    %v129 = vld [vmem:[%s1 + $0x1a0] sm:$0xff]
    %v130 = vld [vmem:[%s1 + $0x1a8] sm:$0xff]
    %v131 = vld [vmem:[%s1 + $0x1b0] sm:$0xff]
    %v132 = vld [vmem:[%s1 + $0x1b8] sm:$0xff]
    %v133 = vld [vmem:[%s1 + $0x1c0] sm:$0xff]
    %v134 = vld [vmem:[%s1 + $0x1c8] sm:$0xff]
    %v135 = vld [vmem:[%s1 + $0x1d0] sm:$0xff]
    %v136 = vld [vmem:[%s1 + $0x1d8] sm:$0xff]
    %v137 = vld [vmem:[%s1 + $0x1e0] sm:$0xff]
    %v138 = vld [vmem:[%s1 + $0x1e8] sm:$0xff]
    %v139 = vld [vmem:[%s1 + $0x1f0] sm:$0xff]
    %v140 = vld [vmem:[%s1 + $0x1f8] sm:$0xff]
    %142 = vset.pattern.permute.xlu0 0
    %143 = vperm.xlu0 %142, %v77
    %v144 = vpop.permute.xlu0 %143
    %147 = vset.pattern.permute.xlu0 0
    %148 = vperm.xlu0 %147, %v78
    %v149 = vpop.permute.xlu0 %148
    %152 = vset.pattern.permute.xlu0 0
    %153 = vperm.xlu0 %152, %v79
    %v154 = vpop.permute.xlu0 %153
    %157 = vset.pattern.permute.xlu0 0
    %158 = vperm.xlu0 %157, %v80
    %v159 = vpop.permute.xlu0 %158
    %162 = vset.pattern.permute.xlu0 0
    %163 = vperm.xlu0 %162, %v81
    %v164 = vpop.permute.xlu0 %163
    %167 = vset.pattern.permute.xlu0 0
    %168 = vperm.xlu0 %167, %v82
    %v169 = vpop.permute.xlu0 %168
    %172 = vset.pattern.permute.xlu0 0
    %173 = vperm.xlu0 %172, %v83
    %v174 = vpop.permute.xlu0 %173
    %177 = vset.pattern.permute.xlu0 0
    %178 = vperm.xlu0 %177, %v84
    %v179 = vpop.permute.xlu0 %178
    %182 = vset.pattern.permute.xlu0 0
    %183 = vperm.xlu0 %182, %v85
    %v184 = vpop.permute.xlu0 %183
    %187 = vset.pattern.permute.xlu0 0
    %188 = vperm.xlu0 %187, %v86
    %v189 = vpop.permute.xlu0 %188
    %192 = vset.pattern.permute.xlu0 0
    %193 = vperm.xlu0 %192, %v87
    %v194 = vpop.permute.xlu0 %193
    %197 = vset.pattern.permute.xlu0 0
    %198 = vperm.xlu0 %197, %v88
    %v199 = vpop.permute.xlu0 %198
    %202 = vset.pattern.permute.xlu0 0
    %203 = vperm.xlu0 %202, %v89
    %v204 = vpop.permute.xlu0 %203
    %207 = vset.pattern.permute.xlu0 0
    %208 = vperm.xlu0 %207, %v90
    %v209 = vpop.permute.xlu0 %208
    %212 = vset.pattern.permute.xlu0 0
    %213 = vperm.xlu0 %212, %v91
    %v214 = vpop.permute.xlu0 %213
    %217 = vset.pattern.permute.xlu0 0
    %218 = vperm.xlu0 %217, %v92
    %v219 = vpop.permute.xlu0 %218
    %222 = vset.pattern.permute.xlu0 0
    %223 = vperm.xlu0 %222, %v93
    %v224 = vpop.permute.xlu0 %223
    %227 = vset.pattern.permute.xlu0 0
    %228 = vperm.xlu0 %227, %v94
    %v229 = vpop.permute.xlu0 %228
    %232 = vset.pattern.permute.xlu0 0
    %233 = vperm.xlu0 %232, %v95
    %v234 = vpop.permute.xlu0 %233
    %237 = vset.pattern.permute.xlu0 0
    %238 = vperm.xlu0 %237, %v96
    %v239 = vpop.permute.xlu0 %238
    %242 = vset.pattern.permute.xlu0 0
    %243 = vperm.xlu0 %242, %v97
    %v244 = vpop.permute.xlu0 %243
    %247 = vset.pattern.permute.xlu0 0
    %248 = vperm.xlu0 %247, %v98
    %v249 = vpop.permute.xlu0 %248
    %252 = vset.pattern.permute.xlu0 0
    %253 = vperm.xlu0 %252, %v99
    %v254 = vpop.permute.xlu0 %253
    %257 = vset.pattern.permute.xlu0 0
    %258 = vperm.xlu0 %257, %v100
    %v259 = vpop.permute.xlu0 %258
    %262 = vset.pattern.permute.xlu0 0
    %263 = vperm.xlu0 %262, %v101
    %v264 = vpop.permute.xlu0 %263
    %267 = vset.pattern.permute.xlu0 0
    %268 = vperm.xlu0 %267, %v102
    %v269 = vpop.permute.xlu0 %268
    %272 = vset.pattern.permute.xlu0 0
    %273 = vperm.xlu0 %272, %v103
    %v274 = vpop.permute.xlu0 %273
    %277 = vset.pattern.permute.xlu0 0
    %278 = vperm.xlu0 %277, %v104
    %v279 = vpop.permute.xlu0 %278
    %282 = vset.pattern.permute.xlu0 0
    %283 = vperm.xlu0 %282, %v105
    %v284 = vpop.permute.xlu0 %283
    %287 = vset.pattern.permute.xlu0 0
    %288 = vperm.xlu0 %287, %v106
    %v289 = vpop.permute.xlu0 %288
    %292 = vset.pattern.permute.xlu0 0
    %293 = vperm.xlu0 %292, %v107
    %v294 = vpop.permute.xlu0 %293
    %297 = vset.pattern.permute.xlu0 0
    %298 = vperm.xlu0 %297, %v108
    %v299 = vpop.permute.xlu0 %298
    %302 = vset.pattern.permute.xlu0 0
    %303 = vperm.xlu0 %302, %v109
    %v304 = vpop.permute.xlu0 %303
    %307 = vset.pattern.permute.xlu0 0
    %308 = vperm.xlu0 %307, %v110
    %v309 = vpop.permute.xlu0 %308
    %312 = vset.pattern.permute.xlu0 0
    %313 = vperm.xlu0 %312, %v111
    %v314 = vpop.permute.xlu0 %313
    %317 = vset.pattern.permute.xlu0 0
    %318 = vperm.xlu0 %317, %v112
    %v319 = vpop.permute.xlu0 %318
    %322 = vset.pattern.permute.xlu0 0
    %323 = vperm.xlu0 %322, %v113
    %v324 = vpop.permute.xlu0 %323
    %327 = vset.pattern.permute.xlu0 0
    %328 = vperm.xlu0 %327, %v114
    %v329 = vpop.permute.xlu0 %328
    %332 = vset.pattern.permute.xlu0 0
    %333 = vperm.xlu0 %332, %v115
    %v334 = vpop.permute.xlu0 %333
    %337 = vset.pattern.permute.xlu0 0
    %338 = vperm.xlu0 %337, %v116
    %v339 = vpop.permute.xlu0 %338
    %342 = vset.pattern.permute.xlu0 0
    %343 = vperm.xlu0 %342, %v117
    %v344 = vpop.permute.xlu0 %343
    %347 = vset.pattern.permute.xlu0 0
    %348 = vperm.xlu0 %347, %v118
    %v349 = vpop.permute.xlu0 %348
    %352 = vset.pattern.permute.xlu0 0
    %353 = vperm.xlu0 %352, %v119
    %v354 = vpop.permute.xlu0 %353
    %357 = vset.pattern.permute.xlu0 0
    %358 = vperm.xlu0 %357, %v120
    %v359 = vpop.permute.xlu0 %358
    %362 = vset.pattern.permute.xlu0 0
    %363 = vperm.xlu0 %362, %v121
    %v364 = vpop.permute.xlu0 %363
    %367 = vset.pattern.permute.xlu0 0
    %368 = vperm.xlu0 %367, %v122
    %v369 = vpop.permute.xlu0 %368
    %372 = vset.pattern.permute.xlu0 0
    %373 = vperm.xlu0 %372, %v123
    %v374 = vpop.permute.xlu0 %373
    %377 = vset.pattern.permute.xlu0 0
    %378 = vperm.xlu0 %377, %v124
    %v379 = vpop.permute.xlu0 %378
    %382 = vset.pattern.permute.xlu0 0
    %383 = vperm.xlu0 %382, %v125
    %v384 = vpop.permute.xlu0 %383
    %387 = vset.pattern.permute.xlu0 0
    %388 = vperm.xlu0 %387, %v126
    %v389 = vpop.permute.xlu0 %388
    %392 = vset.pattern.permute.xlu0 0
    %393 = vperm.xlu0 %392, %v127
    %v394 = vpop.permute.xlu0 %393
    %397 = vset.pattern.permute.xlu0 0
    %398 = vperm.xlu0 %397, %v128
    %v399 = vpop.permute.xlu0 %398
    %402 = vset.pattern.permute.xlu0 0
    %403 = vperm.xlu0 %402, %v129
    %v404 = vpop.permute.xlu0 %403
    %407 = vset.pattern.permute.xlu0 0
    %408 = vperm.xlu0 %407, %v130
    %v409 = vpop.permute.xlu0 %408
    %412 = vset.pattern.permute.xlu0 0
    %413 = vperm.xlu0 %412, %v131
    %v414 = vpop.permute.xlu0 %413
    %417 = vset.pattern.permute.xlu0 0
    %418 = vperm.xlu0 %417, %v132
    %v419 = vpop.permute.xlu0 %418
    %422 = vset.pattern.permute.xlu0 0
    %423 = vperm.xlu0 %422, %v133
    %v424 = vpop.permute.xlu0 %423
    %427 = vset.pattern.permute.xlu0 0
    %428 = vperm.xlu0 %427, %v134
    %v429 = vpop.permute.xlu0 %428
    %432 = vset.pattern.permute.xlu0 0
    %433 = vperm.xlu0 %432, %v135
    %v434 = vpop.permute.xlu0 %433
    %437 = vset.pattern.permute.xlu0 0
    %438 = vperm.xlu0 %437, %v136
    %v439 = vpop.permute.xlu0 %438
    %442 = vset.pattern.permute.xlu0 0
    %443 = vperm.xlu0 %442, %v137
    %v444 = vpop.permute.xlu0 %443
    %447 = vset.pattern.permute.xlu0 0
    %448 = vperm.xlu0 %447, %v138
    %v449 = vpop.permute.xlu0 %448
    %452 = vset.pattern.permute.xlu0 0
    %453 = vperm.xlu0 %452, %v139
    %v454 = vpop.permute.xlu0 %453
    %457 = vset.pattern.permute.xlu0 0
    %458 = vperm.xlu0 %457, %v140
    %v459 = vpop.permute.xlu0 %458
    %v462 = vlaneseq
    %v463 = vshrl.u32 %v462, 7
    %v464 = vsub.s32 0, %v463
    %v465 = vrot.slane %v76, %v464
    %v466 = vlaneseq
    %v467 = vshrl.u32 %v466, 7
    %v468 = vsub.s32 4, %v467
    %v469 = vrot.slane %v76, %v468
    %v472 = vlaneseq
    %v473 = vshrl.u32 %v472, 7
    %v474 = vsub.s32 0, %v473
    %v475 = vrot.slane %v465, %v474
    %v476 = vlaneseq
    %v477 = vshrl.u32 %v476, 7
    %v478 = vsub.s32 0, %v477
    %v479 = vrot.slane %v469, %v478
    %v480 = vmul.f32 %v144, %v475
    %v481 = vmul.f32 %v144, %v479
    %v482 = vmul.f32 %v149, %v475
    %v483 = vmul.f32 %v149, %v479
    %v484 = vmul.f32 %v154, %v475
    %v485 = vmul.f32 %v154, %v479
    %v486 = vmul.f32 %v159, %v475
    %v487 = vmul.f32 %v159, %v479
    %v488 = vmul.f32 %v164, %v475
    %v489 = vmul.f32 %v164, %v479
    %v490 = vmul.f32 %v169, %v475
    %v491 = vmul.f32 %v169, %v479
    %v492 = vmul.f32 %v174, %v475
    %v493 = vmul.f32 %v174, %v479
    %v494 = vmul.f32 %v179, %v475
    %v495 = vmul.f32 %v179, %v479
    %v496 = vmul.f32 %v184, %v475
    %v497 = vmul.f32 %v184, %v479
    %v498 = vmul.f32 %v189, %v475
    %v499 = vmul.f32 %v189, %v479
    %v500 = vmul.f32 %v194, %v475
    %v501 = vmul.f32 %v194, %v479
    %v502 = vmul.f32 %v199, %v475
    %v503 = vmul.f32 %v199, %v479
    %v504 = vmul.f32 %v204, %v475
    %v505 = vmul.f32 %v204, %v479
    %v506 = vmul.f32 %v209, %v475
    %v507 = vmul.f32 %v209, %v479
    %v508 = vmul.f32 %v214, %v475
    %v509 = vmul.f32 %v214, %v479
    %v510 = vmul.f32 %v219, %v475
    %v511 = vmul.f32 %v219, %v479
    %v512 = vmul.f32 %v224, %v475
    %v513 = vmul.f32 %v224, %v479
    %v514 = vmul.f32 %v229, %v475
    %v515 = vmul.f32 %v229, %v479
    %v516 = vmul.f32 %v234, %v475
    %v517 = vmul.f32 %v234, %v479
    %v518 = vmul.f32 %v239, %v475
    %v519 = vmul.f32 %v239, %v479
    %v520 = vmul.f32 %v244, %v475
    %v521 = vmul.f32 %v244, %v479
    %v522 = vmul.f32 %v249, %v475
    %v523 = vmul.f32 %v249, %v479
    %v524 = vmul.f32 %v254, %v475
    %v525 = vmul.f32 %v254, %v479
    %v526 = vmul.f32 %v259, %v475
    %v527 = vmul.f32 %v259, %v479
    %v528 = vmul.f32 %v264, %v475
    %v529 = vmul.f32 %v264, %v479
    %v530 = vmul.f32 %v269, %v475
    %v531 = vmul.f32 %v269, %v479
    %v532 = vmul.f32 %v274, %v475
    %v533 = vmul.f32 %v274, %v479
    %v534 = vmul.f32 %v279, %v475
    %v535 = vmul.f32 %v279, %v479
    %v536 = vmul.f32 %v284, %v475
    %v537 = vmul.f32 %v284, %v479
    %v538 = vmul.f32 %v289, %v475
    %v539 = vmul.f32 %v289, %v479
    %v540 = vmul.f32 %v294, %v475
    %v541 = vmul.f32 %v294, %v479
    %v542 = vmul.f32 %v299, %v475
    %v543 = vmul.f32 %v299, %v479
    %v544 = vmul.f32 %v304, %v475
    %v545 = vmul.f32 %v304, %v479
    %v546 = vmul.f32 %v309, %v475
    %v547 = vmul.f32 %v309, %v479
    %v548 = vmul.f32 %v314, %v475
    %v549 = vmul.f32 %v314, %v479
    %v550 = vmul.f32 %v319, %v475
    %v551 = vmul.f32 %v319, %v479
    %v552 = vmul.f32 %v324, %v475
    %v553 = vmul.f32 %v324, %v479
    %v554 = vmul.f32 %v329, %v475
    %v555 = vmul.f32 %v329, %v479
    %v556 = vmul.f32 %v334, %v475
    %v557 = vmul.f32 %v334, %v479
    %v558 = vmul.f32 %v339, %v475
    %v559 = vmul.f32 %v339, %v479
    %v560 = vmul.f32 %v344, %v475
    %v561 = vmul.f32 %v344, %v479
    %v562 = vmul.f32 %v349, %v475
    %v563 = vmul.f32 %v349, %v479
    %v564 = vmul.f32 %v354, %v475
    %v565 = vmul.f32 %v354, %v479
    %v566 = vmul.f32 %v359, %v475
    %v567 = vmul.f32 %v359, %v479
    %v568 = vmul.f32 %v364, %v475
    %v569 = vmul.f32 %v364, %v479
    %v570 = vmul.f32 %v369, %v475
    %v571 = vmul.f32 %v369, %v479
    %v572 = vmul.f32 %v374, %v475
    %v573 = vmul.f32 %v374, %v479
    %v574 = vmul.f32 %v379, %v475
    %v575 = vmul.f32 %v379, %v479
    %v576 = vmul.f32 %v384, %v475
    %v577 = vmul.f32 %v384, %v479
    %v578 = vmul.f32 %v389, %v475
    %v579 = vmul.f32 %v389, %v479
    %v580 = vmul.f32 %v394, %v475
    %v581 = vmul.f32 %v394, %v479
    %v582 = vmul.f32 %v399, %v475
    %v583 = vmul.f32 %v399, %v479
    %v584 = vmul.f32 %v404, %v475
    %v585 = vmul.f32 %v404, %v479
    %v586 = vmul.f32 %v409, %v475
    %v587 = vmul.f32 %v409, %v479
    %v588 = vmul.f32 %v414, %v475
    %v589 = vmul.f32 %v414, %v479
    %v590 = vmul.f32 %v419, %v475
    %v591 = vmul.f32 %v419, %v479
    %v592 = vmul.f32 %v424, %v475
    %v593 = vmul.f32 %v424, %v479
    %v594 = vmul.f32 %v429, %v475
    %v595 = vmul.f32 %v429, %v479
    %v596 = vmul.f32 %v434, %v475
    %v597 = vmul.f32 %v434, %v479
    %v598 = vmul.f32 %v439, %v475
    %v599 = vmul.f32 %v439, %v479
    %v600 = vmul.f32 %v444, %v475
    %v601 = vmul.f32 %v444, %v479
    %v602 = vmul.f32 %v449, %v475
    %v603 = vmul.f32 %v449, %v479
    %v604 = vmul.f32 %v454, %v475
    %v605 = vmul.f32 %v454, %v479
    %v606 = vmul.f32 %v459, %v475
    %v607 = vmul.f32 %v459, %v479
    %608 = vset.pattern.permute.xlu0 1
    %609 = vperm.xlu0 %608, %v77
    %v610 = vpop.permute.xlu0 %609
    %612 = vset.pattern.permute.xlu0 1
    %613 = vperm.xlu0 %612, %v78
    %v614 = vpop.permute.xlu0 %613
    %616 = vset.pattern.permute.xlu0 1
    %617 = vperm.xlu0 %616, %v79
    %v618 = vpop.permute.xlu0 %617
    %620 = vset.pattern.permute.xlu0 1
    %621 = vperm.xlu0 %620, %v80
    %v622 = vpop.permute.xlu0 %621
    %624 = vset.pattern.permute.xlu0 1
    %625 = vperm.xlu0 %624, %v81
    %v626 = vpop.permute.xlu0 %625
    %628 = vset.pattern.permute.xlu0 1
    %629 = vperm.xlu0 %628, %v82
    %v630 = vpop.permute.xlu0 %629
    %632 = vset.pattern.permute.xlu0 1
    %633 = vperm.xlu0 %632, %v83
    %v634 = vpop.permute.xlu0 %633
    %636 = vset.pattern.permute.xlu0 1
    %637 = vperm.xlu0 %636, %v84
    %v638 = vpop.permute.xlu0 %637
    %640 = vset.pattern.permute.xlu0 1
    %641 = vperm.xlu0 %640, %v85
    %v642 = vpop.permute.xlu0 %641
    %644 = vset.pattern.permute.xlu0 1
    %645 = vperm.xlu0 %644, %v86
    %v646 = vpop.permute.xlu0 %645
    %648 = vset.pattern.permute.xlu0 1
    %649 = vperm.xlu0 %648, %v87
    %v650 = vpop.permute.xlu0 %649
    %652 = vset.pattern.permute.xlu0 1
    %653 = vperm.xlu0 %652, %v88
    %v654 = vpop.permute.xlu0 %653
    %656 = vset.pattern.permute.xlu0 1
    %657 = vperm.xlu0 %656, %v89
    %v658 = vpop.permute.xlu0 %657
    %660 = vset.pattern.permute.xlu0 1
    %661 = vperm.xlu0 %660, %v90
    %v662 = vpop.permute.xlu0 %661
    %664 = vset.pattern.permute.xlu0 1
    %665 = vperm.xlu0 %664, %v91
    %v666 = vpop.permute.xlu0 %665
    %668 = vset.pattern.permute.xlu0 1
    %669 = vperm.xlu0 %668, %v92
    %v670 = vpop.permute.xlu0 %669
    %672 = vset.pattern.permute.xlu0 1
    %673 = vperm.xlu0 %672, %v93
    %v674 = vpop.permute.xlu0 %673
    %676 = vset.pattern.permute.xlu0 1
    %677 = vperm.xlu0 %676, %v94
    %v678 = vpop.permute.xlu0 %677
    %680 = vset.pattern.permute.xlu0 1
    %681 = vperm.xlu0 %680, %v95
    %v682 = vpop.permute.xlu0 %681
    %684 = vset.pattern.permute.xlu0 1
    %685 = vperm.xlu0 %684, %v96
    %v686 = vpop.permute.xlu0 %685
    %688 = vset.pattern.permute.xlu0 1
    %689 = vperm.xlu0 %688, %v97
    %v690 = vpop.permute.xlu0 %689
    %692 = vset.pattern.permute.xlu0 1
    %693 = vperm.xlu0 %692, %v98
    %v694 = vpop.permute.xlu0 %693
    %696 = vset.pattern.permute.xlu0 1
    %697 = vperm.xlu0 %696, %v99
    %v698 = vpop.permute.xlu0 %697
    %700 = vset.pattern.permute.xlu0 1
    %701 = vperm.xlu0 %700, %v100
    %v702 = vpop.permute.xlu0 %701
    %704 = vset.pattern.permute.xlu0 1
    %705 = vperm.xlu0 %704, %v101
    %v706 = vpop.permute.xlu0 %705
    %708 = vset.pattern.permute.xlu0 1
    %709 = vperm.xlu0 %708, %v102
    %v710 = vpop.permute.xlu0 %709
    %712 = vset.pattern.permute.xlu0 1
    %713 = vperm.xlu0 %712, %v103
    %v714 = vpop.permute.xlu0 %713
    %716 = vset.pattern.permute.xlu0 1
    %717 = vperm.xlu0 %716, %v104
    %v718 = vpop.permute.xlu0 %717
    %720 = vset.pattern.permute.xlu0 1
    %721 = vperm.xlu0 %720, %v105
    %v722 = vpop.permute.xlu0 %721
    %724 = vset.pattern.permute.xlu0 1
    %725 = vperm.xlu0 %724, %v106
    %v726 = vpop.permute.xlu0 %725
    %728 = vset.pattern.permute.xlu0 1
    %729 = vperm.xlu0 %728, %v107
    %v730 = vpop.permute.xlu0 %729
    %732 = vset.pattern.permute.xlu0 1
    %733 = vperm.xlu0 %732, %v108
    %v734 = vpop.permute.xlu0 %733
    %736 = vset.pattern.permute.xlu0 1
    %737 = vperm.xlu0 %736, %v109
    %v738 = vpop.permute.xlu0 %737
    %740 = vset.pattern.permute.xlu0 1
    %741 = vperm.xlu0 %740, %v110
    %v742 = vpop.permute.xlu0 %741
    %744 = vset.pattern.permute.xlu0 1
    %745 = vperm.xlu0 %744, %v111
    %v746 = vpop.permute.xlu0 %745
    %748 = vset.pattern.permute.xlu0 1
    %749 = vperm.xlu0 %748, %v112
    %v750 = vpop.permute.xlu0 %749
    %752 = vset.pattern.permute.xlu0 1
    %753 = vperm.xlu0 %752, %v113
    %v754 = vpop.permute.xlu0 %753
    %756 = vset.pattern.permute.xlu0 1
    %757 = vperm.xlu0 %756, %v114
    %v758 = vpop.permute.xlu0 %757
    %760 = vset.pattern.permute.xlu0 1
    %761 = vperm.xlu0 %760, %v115
    %v762 = vpop.permute.xlu0 %761
    %764 = vset.pattern.permute.xlu0 1
    %765 = vperm.xlu0 %764, %v116
    %v766 = vpop.permute.xlu0 %765
    %768 = vset.pattern.permute.xlu0 1
    %769 = vperm.xlu0 %768, %v117
    %v770 = vpop.permute.xlu0 %769
    %772 = vset.pattern.permute.xlu0 1
    %773 = vperm.xlu0 %772, %v118
    %v774 = vpop.permute.xlu0 %773
    %776 = vset.pattern.permute.xlu0 1
    %777 = vperm.xlu0 %776, %v119
    %v778 = vpop.permute.xlu0 %777
    %780 = vset.pattern.permute.xlu0 1
    %781 = vperm.xlu0 %780, %v120
    %v782 = vpop.permute.xlu0 %781
    %784 = vset.pattern.permute.xlu0 1
    %785 = vperm.xlu0 %784, %v121
    %v786 = vpop.permute.xlu0 %785
    %788 = vset.pattern.permute.xlu0 1
    %789 = vperm.xlu0 %788, %v122
    %v790 = vpop.permute.xlu0 %789
    %792 = vset.pattern.permute.xlu0 1
    %793 = vperm.xlu0 %792, %v123
    %v794 = vpop.permute.xlu0 %793
    %796 = vset.pattern.permute.xlu0 1
    %797 = vperm.xlu0 %796, %v124
    %v798 = vpop.permute.xlu0 %797
    %800 = vset.pattern.permute.xlu0 1
    %801 = vperm.xlu0 %800, %v125
    %v802 = vpop.permute.xlu0 %801
    %804 = vset.pattern.permute.xlu0 1
    %805 = vperm.xlu0 %804, %v126
    %v806 = vpop.permute.xlu0 %805
    %808 = vset.pattern.permute.xlu0 1
    %809 = vperm.xlu0 %808, %v127
    %v810 = vpop.permute.xlu0 %809
    %812 = vset.pattern.permute.xlu0 1
    %813 = vperm.xlu0 %812, %v128
    %v814 = vpop.permute.xlu0 %813
    %816 = vset.pattern.permute.xlu0 1
    %817 = vperm.xlu0 %816, %v129
    %v818 = vpop.permute.xlu0 %817
    %820 = vset.pattern.permute.xlu0 1
    %821 = vperm.xlu0 %820, %v130
    %v822 = vpop.permute.xlu0 %821
    %824 = vset.pattern.permute.xlu0 1
    %825 = vperm.xlu0 %824, %v131
    %v826 = vpop.permute.xlu0 %825
    %828 = vset.pattern.permute.xlu0 1
    %829 = vperm.xlu0 %828, %v132
    %v830 = vpop.permute.xlu0 %829
    %832 = vset.pattern.permute.xlu0 1
    %833 = vperm.xlu0 %832, %v133
    %v834 = vpop.permute.xlu0 %833
    %836 = vset.pattern.permute.xlu0 1
    %837 = vperm.xlu0 %836, %v134
    %v838 = vpop.permute.xlu0 %837
    %840 = vset.pattern.permute.xlu0 1
    %841 = vperm.xlu0 %840, %v135
    %v842 = vpop.permute.xlu0 %841
    %844 = vset.pattern.permute.xlu0 1
    %845 = vperm.xlu0 %844, %v136
    %v846 = vpop.permute.xlu0 %845
    %848 = vset.pattern.permute.xlu0 1
    %849 = vperm.xlu0 %848, %v137
    %v850 = vpop.permute.xlu0 %849
    %852 = vset.pattern.permute.xlu0 1
    %853 = vperm.xlu0 %852, %v138
    %v854 = vpop.permute.xlu0 %853
    %856 = vset.pattern.permute.xlu0 1
    %857 = vperm.xlu0 %856, %v139
    %v858 = vpop.permute.xlu0 %857
    %860 = vset.pattern.permute.xlu0 1
    %861 = vperm.xlu0 %860, %v140
    %v862 = vpop.permute.xlu0 %861
    %v864 = vlaneseq
    %v865 = vshrl.u32 %v864, 7
    %v866 = vsub.s32 1, %v865
    %v867 = vrot.slane %v76, %v866
    %v868 = vlaneseq
    %v869 = vshrl.u32 %v868, 7
    %v870 = vsub.s32 5, %v869
    %v871 = vrot.slane %v76, %v870
    %v874 = vlaneseq
    %v875 = vshrl.u32 %v874, 7
    %v876 = vsub.s32 1, %v875
    %v877 = vrot.slane %v867, %v876
    %v878 = vlaneseq
    %v879 = vshrl.u32 %v878, 7
    %v880 = vsub.s32 1, %v879
    %v881 = vrot.slane %v871, %v880
    %v882 = vmul.f32 %v610, %v877
    %v883 = vmul.f32 %v610, %v881
    %v884 = vmul.f32 %v614, %v877
    %v885 = vmul.f32 %v614, %v881
    %v886 = vmul.f32 %v618, %v877
    %v887 = vmul.f32 %v618, %v881
    %v888 = vmul.f32 %v622, %v877
    %v889 = vmul.f32 %v622, %v881
    %v890 = vmul.f32 %v626, %v877
    %v891 = vmul.f32 %v626, %v881
    %v892 = vmul.f32 %v630, %v877
    %v893 = vmul.f32 %v630, %v881
    %v894 = vmul.f32 %v634, %v877
    %v895 = vmul.f32 %v634, %v881
    %v896 = vmul.f32 %v638, %v877
    %v897 = vmul.f32 %v638, %v881
    %v898 = vmul.f32 %v642, %v877
    %v899 = vmul.f32 %v642, %v881
    %v900 = vmul.f32 %v646, %v877
    %v901 = vmul.f32 %v646, %v881
    %v902 = vmul.f32 %v650, %v877
    %v903 = vmul.f32 %v650, %v881
    %v904 = vmul.f32 %v654, %v877
    %v905 = vmul.f32 %v654, %v881
    %v906 = vmul.f32 %v658, %v877
    %v907 = vmul.f32 %v658, %v881
    %v908 = vmul.f32 %v662, %v877
    %v909 = vmul.f32 %v662, %v881
    %v910 = vmul.f32 %v666, %v877
    %v911 = vmul.f32 %v666, %v881
    %v912 = vmul.f32 %v670, %v877
    %v913 = vmul.f32 %v670, %v881
    %v914 = vmul.f32 %v674, %v877
    %v915 = vmul.f32 %v674, %v881
    %v916 = vmul.f32 %v678, %v877
    %v917 = vmul.f32 %v678, %v881
    %v918 = vmul.f32 %v682, %v877
    %v919 = vmul.f32 %v682, %v881
    %v920 = vmul.f32 %v686, %v877
    %v921 = vmul.f32 %v686, %v881
    %v922 = vmul.f32 %v690, %v877
    %v923 = vmul.f32 %v690, %v881
    %v924 = vmul.f32 %v694, %v877
    %v925 = vmul.f32 %v694, %v881
    %v926 = vmul.f32 %v698, %v877
    %v927 = vmul.f32 %v698, %v881
    %v928 = vmul.f32 %v702, %v877
    %v929 = vmul.f32 %v702, %v881
    %v930 = vmul.f32 %v706, %v877
    %v931 = vmul.f32 %v706, %v881
    %v932 = vmul.f32 %v710, %v877
    %v933 = vmul.f32 %v710, %v881
    %v934 = vmul.f32 %v714, %v877
    %v935 = vmul.f32 %v714, %v881
    %v936 = vmul.f32 %v718, %v877
    %v937 = vmul.f32 %v718, %v881
    %v938 = vmul.f32 %v722, %v877
    %v939 = vmul.f32 %v722, %v881
    %v940 = vmul.f32 %v726, %v877
    %v941 = vmul.f32 %v726, %v881
    %v942 = vmul.f32 %v730, %v877
    %v943 = vmul.f32 %v730, %v881
    %v944 = vmul.f32 %v734, %v877
    %v945 = vmul.f32 %v734, %v881
    %v946 = vmul.f32 %v738, %v877
    %v947 = vmul.f32 %v738, %v881
    %v948 = vmul.f32 %v742, %v877
    %v949 = vmul.f32 %v742, %v881
    %v950 = vmul.f32 %v746, %v877
    %v951 = vmul.f32 %v746, %v881
    %v952 = vmul.f32 %v750, %v877
    %v953 = vmul.f32 %v750, %v881
    %v954 = vmul.f32 %v754, %v877
    %v955 = vmul.f32 %v754, %v881
    %v956 = vmul.f32 %v758, %v877
    %v957 = vmul.f32 %v758, %v881
    %v958 = vmul.f32 %v762, %v877
    %v959 = vmul.f32 %v762, %v881
    %v960 = vmul.f32 %v766, %v877
    %v961 = vmul.f32 %v766, %v881
    %v962 = vmul.f32 %v770, %v877
    %v963 = vmul.f32 %v770, %v881
    %v964 = vmul.f32 %v774, %v877
    %v965 = vmul.f32 %v774, %v881
    %v966 = vmul.f32 %v778, %v877
    %v967 = vmul.f32 %v778, %v881
    %v968 = vmul.f32 %v782, %v877
    %v969 = vmul.f32 %v782, %v881
    %v970 = vmul.f32 %v786, %v877
    %v971 = vmul.f32 %v786, %v881
    %v972 = vmul.f32 %v790, %v877
    %v973 = vmul.f32 %v790, %v881
    %v974 = vmul.f32 %v794, %v877
    %v975 = vmul.f32 %v794, %v881
    %v976 = vmul.f32 %v798, %v877
    %v977 = vmul.f32 %v798, %v881
    %v978 = vmul.f32 %v802, %v877
    %v979 = vmul.f32 %v802, %v881
    %v980 = vmul.f32 %v806, %v877
    %v981 = vmul.f32 %v806, %v881
    %v982 = vmul.f32 %v810, %v877
    %v983 = vmul.f32 %v810, %v881
    %v984 = vmul.f32 %v814, %v877
    %v985 = vmul.f32 %v814, %v881
    %v986 = vmul.f32 %v818, %v877
    %v987 = vmul.f32 %v818, %v881
    %v988 = vmul.f32 %v822, %v877
    %v989 = vmul.f32 %v822, %v881
    %v990 = vmul.f32 %v826, %v877
    %v991 = vmul.f32 %v826, %v881
    %v992 = vmul.f32 %v830, %v877
    %v993 = vmul.f32 %v830, %v881
    %v994 = vmul.f32 %v834, %v877
    %v995 = vmul.f32 %v834, %v881
    %v996 = vmul.f32 %v838, %v877
    %v997 = vmul.f32 %v838, %v881
    %v998 = vmul.f32 %v842, %v877
    %v999 = vmul.f32 %v842, %v881
    %v1000 = vmul.f32 %v846, %v877
    %v1001 = vmul.f32 %v846, %v881
    %v1002 = vmul.f32 %v850, %v877
    %v1003 = vmul.f32 %v850, %v881
    %v1004 = vmul.f32 %v854, %v877
    %v1005 = vmul.f32 %v854, %v881
    %v1006 = vmul.f32 %v858, %v877
    %v1007 = vmul.f32 %v858, %v881
    %v1008 = vmul.f32 %v862, %v877
    %v1009 = vmul.f32 %v862, %v881
    %v1010 = vadd.f32 %v480, %v882
    %v1011 = vadd.f32 %v481, %v883
    %v1012 = vadd.f32 %v482, %v884
    %v1013 = vadd.f32 %v483, %v885
    %v1014 = vadd.f32 %v484, %v886
    %v1015 = vadd.f32 %v485, %v887
    %v1016 = vadd.f32 %v486, %v888
    %v1017 = vadd.f32 %v487, %v889
    %v1018 = vadd.f32 %v488, %v890
    %v1019 = vadd.f32 %v489, %v891
    %v1020 = vadd.f32 %v490, %v892
    %v1021 = vadd.f32 %v491, %v893
    %v1022 = vadd.f32 %v492, %v894
    %v1023 = vadd.f32 %v493, %v895
    %v1024 = vadd.f32 %v494, %v896
    %v1025 = vadd.f32 %v495, %v897
    %v1026 = vadd.f32 %v496, %v898
    %v1027 = vadd.f32 %v497, %v899
    %v1028 = vadd.f32 %v498, %v900
    %v1029 = vadd.f32 %v499, %v901
    %v1030 = vadd.f32 %v500, %v902
    %v1031 = vadd.f32 %v501, %v903
    %v1032 = vadd.f32 %v502, %v904
    %v1033 = vadd.f32 %v503, %v905
    %v1034 = vadd.f32 %v504, %v906
    %v1035 = vadd.f32 %v505, %v907
    %v1036 = vadd.f32 %v506, %v908
    %v1037 = vadd.f32 %v507, %v909
    %v1038 = vadd.f32 %v508, %v910
    %v1039 = vadd.f32 %v509, %v911
    %v1040 = vadd.f32 %v510, %v912
    %v1041 = vadd.f32 %v511, %v913
    %v1042 = vadd.f32 %v512, %v914
    %v1043 = vadd.f32 %v513, %v915
    %v1044 = vadd.f32 %v514, %v916
    %v1045 = vadd.f32 %v515, %v917
    %v1046 = vadd.f32 %v516, %v918
    %v1047 = vadd.f32 %v517, %v919
    %v1048 = vadd.f32 %v518, %v920
    %v1049 = vadd.f32 %v519, %v921
    %v1050 = vadd.f32 %v520, %v922
    %v1051 = vadd.f32 %v521, %v923
    %v1052 = vadd.f32 %v522, %v924
    %v1053 = vadd.f32 %v523, %v925
    %v1054 = vadd.f32 %v524, %v926
    %v1055 = vadd.f32 %v525, %v927
    %v1056 = vadd.f32 %v526, %v928
    %v1057 = vadd.f32 %v527, %v929
    %v1058 = vadd.f32 %v528, %v930
    %v1059 = vadd.f32 %v529, %v931
    %v1060 = vadd.f32 %v530, %v932
    %v1061 = vadd.f32 %v531, %v933
    %v1062 = vadd.f32 %v532, %v934
    %v1063 = vadd.f32 %v533, %v935
    %v1064 = vadd.f32 %v534, %v936
    %v1065 = vadd.f32 %v535, %v937
    %v1066 = vadd.f32 %v536, %v938
    %v1067 = vadd.f32 %v537, %v939
    %v1068 = vadd.f32 %v538, %v940
    %v1069 = vadd.f32 %v539, %v941
    %v1070 = vadd.f32 %v540, %v942
    %v1071 = vadd.f32 %v541, %v943
    %v1072 = vadd.f32 %v542, %v944
    %v1073 = vadd.f32 %v543, %v945
    %v1074 = vadd.f32 %v544, %v946
    %v1075 = vadd.f32 %v545, %v947
    %v1076 = vadd.f32 %v546, %v948
    %v1077 = vadd.f32 %v547, %v949
    %v1078 = vadd.f32 %v548, %v950
    %v1079 = vadd.f32 %v549, %v951
    %v1080 = vadd.f32 %v550, %v952
    %v1081 = vadd.f32 %v551, %v953
    %v1082 = vadd.f32 %v552, %v954
    %v1083 = vadd.f32 %v553, %v955
    %v1084 = vadd.f32 %v554, %v956
    %v1085 = vadd.f32 %v555, %v957
    %v1086 = vadd.f32 %v556, %v958
    %v1087 = vadd.f32 %v557, %v959
    %v1088 = vadd.f32 %v558, %v960
    %v1089 = vadd.f32 %v559, %v961
    %v1090 = vadd.f32 %v560, %v962
    %v1091 = vadd.f32 %v561, %v963
    %v1092 = vadd.f32 %v562, %v964
    %v1093 = vadd.f32 %v563, %v965
    %v1094 = vadd.f32 %v564, %v966
    %v1095 = vadd.f32 %v565, %v967
    %v1096 = vadd.f32 %v566, %v968
    %v1097 = vadd.f32 %v567, %v969
    %v1098 = vadd.f32 %v568, %v970
    %v1099 = vadd.f32 %v569, %v971
    %v1100 = vadd.f32 %v570, %v972
    %v1101 = vadd.f32 %v571, %v973
    %v1102 = vadd.f32 %v572, %v974
    %v1103 = vadd.f32 %v573, %v975
    %v1104 = vadd.f32 %v574, %v976
    %v1105 = vadd.f32 %v575, %v977
    %v1106 = vadd.f32 %v576, %v978
    %v1107 = vadd.f32 %v577, %v979
    %v1108 = vadd.f32 %v578, %v980
    %v1109 = vadd.f32 %v579, %v981
    %v1110 = vadd.f32 %v580, %v982
    %v1111 = vadd.f32 %v581, %v983
    %v1112 = vadd.f32 %v582, %v984
    %v1113 = vadd.f32 %v583, %v985
    %v1114 = vadd.f32 %v584, %v986
    %v1115 = vadd.f32 %v585, %v987
    %v1116 = vadd.f32 %v586, %v988
    %v1117 = vadd.f32 %v587, %v989
    %v1118 = vadd.f32 %v588, %v990
    %v1119 = vadd.f32 %v589, %v991
    %v1120 = vadd.f32 %v590, %v992
    %v1121 = vadd.f32 %v591, %v993
    %v1122 = vadd.f32 %v592, %v994
    %v1123 = vadd.f32 %v593, %v995
    %v1124 = vadd.f32 %v594, %v996
    %v1125 = vadd.f32 %v595, %v997
    %v1126 = vadd.f32 %v596, %v998
    %v1127 = vadd.f32 %v597, %v999
    %v1128 = vadd.f32 %v598, %v1000
    %v1129 = vadd.f32 %v599, %v1001
    %v1130 = vadd.f32 %v600, %v1002
    %v1131 = vadd.f32 %v601, %v1003
    %v1132 = vadd.f32 %v602, %v1004
    %v1133 = vadd.f32 %v603, %v1005
    %v1134 = vadd.f32 %v604, %v1006
    %v1135 = vadd.f32 %v605, %v1007
    %v1136 = vadd.f32 %v606, %v1008
    %v1137 = vadd.f32 %v607, %v1009
    %1138 = vset.pattern.permute.xlu0 2
    %1139 = vperm.xlu0 %1138, %v77
    %v1140 = vpop.permute.xlu0 %1139
    %1142 = vset.pattern.permute.xlu0 2
    %1143 = vperm.xlu0 %1142, %v78
    %v1144 = vpop.permute.xlu0 %1143
    %1146 = vset.pattern.permute.xlu0 2
    %1147 = vperm.xlu0 %1146, %v79
    %v1148 = vpop.permute.xlu0 %1147
    %1150 = vset.pattern.permute.xlu0 2
    %1151 = vperm.xlu0 %1150, %v80
    %v1152 = vpop.permute.xlu0 %1151
    %1154 = vset.pattern.permute.xlu0 2
    %1155 = vperm.xlu0 %1154, %v81
    %v1156 = vpop.permute.xlu0 %1155
    %1158 = vset.pattern.permute.xlu0 2
    %1159 = vperm.xlu0 %1158, %v82
    %v1160 = vpop.permute.xlu0 %1159
    %1162 = vset.pattern.permute.xlu0 2
    %1163 = vperm.xlu0 %1162, %v83
    %v1164 = vpop.permute.xlu0 %1163
    %1166 = vset.pattern.permute.xlu0 2
    %1167 = vperm.xlu0 %1166, %v84
    %v1168 = vpop.permute.xlu0 %1167
    %1170 = vset.pattern.permute.xlu0 2
    %1171 = vperm.xlu0 %1170, %v85
    %v1172 = vpop.permute.xlu0 %1171
    %1174 = vset.pattern.permute.xlu0 2
    %1175 = vperm.xlu0 %1174, %v86
    %v1176 = vpop.permute.xlu0 %1175
    %1178 = vset.pattern.permute.xlu0 2
    %1179 = vperm.xlu0 %1178, %v87
    %v1180 = vpop.permute.xlu0 %1179
    %1182 = vset.pattern.permute.xlu0 2
    %1183 = vperm.xlu0 %1182, %v88
    %v1184 = vpop.permute.xlu0 %1183
    %1186 = vset.pattern.permute.xlu0 2
    %1187 = vperm.xlu0 %1186, %v89
    %v1188 = vpop.permute.xlu0 %1187
    %1190 = vset.pattern.permute.xlu0 2
    %1191 = vperm.xlu0 %1190, %v90
    %v1192 = vpop.permute.xlu0 %1191
    %1194 = vset.pattern.permute.xlu0 2
    %1195 = vperm.xlu0 %1194, %v91
    %v1196 = vpop.permute.xlu0 %1195
    %1198 = vset.pattern.permute.xlu0 2
    %1199 = vperm.xlu0 %1198, %v92
    %v1200 = vpop.permute.xlu0 %1199
    %1202 = vset.pattern.permute.xlu0 2
    %1203 = vperm.xlu0 %1202, %v93
    %v1204 = vpop.permute.xlu0 %1203
    %1206 = vset.pattern.permute.xlu0 2
    %1207 = vperm.xlu0 %1206, %v94
    %v1208 = vpop.permute.xlu0 %1207
    %1210 = vset.pattern.permute.xlu0 2
    %1211 = vperm.xlu0 %1210, %v95
    %v1212 = vpop.permute.xlu0 %1211
    %1214 = vset.pattern.permute.xlu0 2
    %1215 = vperm.xlu0 %1214, %v96
    %v1216 = vpop.permute.xlu0 %1215
    %1218 = vset.pattern.permute.xlu0 2
    %1219 = vperm.xlu0 %1218, %v97
    %v1220 = vpop.permute.xlu0 %1219
    %1222 = vset.pattern.permute.xlu0 2
    %1223 = vperm.xlu0 %1222, %v98
    %v1224 = vpop.permute.xlu0 %1223
    %1226 = vset.pattern.permute.xlu0 2
    %1227 = vperm.xlu0 %1226, %v99
    %v1228 = vpop.permute.xlu0 %1227
    %1230 = vset.pattern.permute.xlu0 2
    %1231 = vperm.xlu0 %1230, %v100
    %v1232 = vpop.permute.xlu0 %1231
    %1234 = vset.pattern.permute.xlu0 2
    %1235 = vperm.xlu0 %1234, %v101
    %v1236 = vpop.permute.xlu0 %1235
    %1238 = vset.pattern.permute.xlu0 2
    %1239 = vperm.xlu0 %1238, %v102
    %v1240 = vpop.permute.xlu0 %1239
    %1242 = vset.pattern.permute.xlu0 2
    %1243 = vperm.xlu0 %1242, %v103
    %v1244 = vpop.permute.xlu0 %1243
    %1246 = vset.pattern.permute.xlu0 2
    %1247 = vperm.xlu0 %1246, %v104
    %v1248 = vpop.permute.xlu0 %1247
    %1250 = vset.pattern.permute.xlu0 2
    %1251 = vperm.xlu0 %1250, %v105
    %v1252 = vpop.permute.xlu0 %1251
    %1254 = vset.pattern.permute.xlu0 2
    %1255 = vperm.xlu0 %1254, %v106
    %v1256 = vpop.permute.xlu0 %1255
    %1258 = vset.pattern.permute.xlu0 2
    %1259 = vperm.xlu0 %1258, %v107
    %v1260 = vpop.permute.xlu0 %1259
    %1262 = vset.pattern.permute.xlu0 2
    %1263 = vperm.xlu0 %1262, %v108
    %v1264 = vpop.permute.xlu0 %1263
    %1266 = vset.pattern.permute.xlu0 2
    %1267 = vperm.xlu0 %1266, %v109
    %v1268 = vpop.permute.xlu0 %1267
    %1270 = vset.pattern.permute.xlu0 2
    %1271 = vperm.xlu0 %1270, %v110
    %v1272 = vpop.permute.xlu0 %1271
    %1274 = vset.pattern.permute.xlu0 2
    %1275 = vperm.xlu0 %1274, %v111
    %v1276 = vpop.permute.xlu0 %1275
    %1278 = vset.pattern.permute.xlu0 2
    %1279 = vperm.xlu0 %1278, %v112
    %v1280 = vpop.permute.xlu0 %1279
    %1282 = vset.pattern.permute.xlu0 2
    %1283 = vperm.xlu0 %1282, %v113
    %v1284 = vpop.permute.xlu0 %1283
    %1286 = vset.pattern.permute.xlu0 2
    %1287 = vperm.xlu0 %1286, %v114
    %v1288 = vpop.permute.xlu0 %1287
    %1290 = vset.pattern.permute.xlu0 2
    %1291 = vperm.xlu0 %1290, %v115
    %v1292 = vpop.permute.xlu0 %1291
    %1294 = vset.pattern.permute.xlu0 2
    %1295 = vperm.xlu0 %1294, %v116
    %v1296 = vpop.permute.xlu0 %1295
    %1298 = vset.pattern.permute.xlu0 2
    %1299 = vperm.xlu0 %1298, %v117
    %v1300 = vpop.permute.xlu0 %1299
    %1302 = vset.pattern.permute.xlu0 2
    %1303 = vperm.xlu0 %1302, %v118
    %v1304 = vpop.permute.xlu0 %1303
    %1306 = vset.pattern.permute.xlu0 2
    %1307 = vperm.xlu0 %1306, %v119
    %v1308 = vpop.permute.xlu0 %1307
    %1310 = vset.pattern.permute.xlu0 2
    %1311 = vperm.xlu0 %1310, %v120
    %v1312 = vpop.permute.xlu0 %1311
    %1314 = vset.pattern.permute.xlu0 2
    %1315 = vperm.xlu0 %1314, %v121
    %v1316 = vpop.permute.xlu0 %1315
    %1318 = vset.pattern.permute.xlu0 2
    %1319 = vperm.xlu0 %1318, %v122
    %v1320 = vpop.permute.xlu0 %1319
    %1322 = vset.pattern.permute.xlu0 2
    %1323 = vperm.xlu0 %1322, %v123
    %v1324 = vpop.permute.xlu0 %1323
    %1326 = vset.pattern.permute.xlu0 2
    %1327 = vperm.xlu0 %1326, %v124
    %v1328 = vpop.permute.xlu0 %1327
    %1330 = vset.pattern.permute.xlu0 2
    %1331 = vperm.xlu0 %1330, %v125
    %v1332 = vpop.permute.xlu0 %1331
    %1334 = vset.pattern.permute.xlu0 2
    %1335 = vperm.xlu0 %1334, %v126
    %v1336 = vpop.permute.xlu0 %1335
    %1338 = vset.pattern.permute.xlu0 2
    %1339 = vperm.xlu0 %1338, %v127
    %v1340 = vpop.permute.xlu0 %1339
    %1342 = vset.pattern.permute.xlu0 2
    %1343 = vperm.xlu0 %1342, %v128
    %v1344 = vpop.permute.xlu0 %1343
    %1346 = vset.pattern.permute.xlu0 2
    %1347 = vperm.xlu0 %1346, %v129
    %v1348 = vpop.permute.xlu0 %1347
    %1350 = vset.pattern.permute.xlu0 2
    %1351 = vperm.xlu0 %1350, %v130
    %v1352 = vpop.permute.xlu0 %1351
    %1354 = vset.pattern.permute.xlu0 2
    %1355 = vperm.xlu0 %1354, %v131
    %v1356 = vpop.permute.xlu0 %1355
    %1358 = vset.pattern.permute.xlu0 2
    %1359 = vperm.xlu0 %1358, %v132
    %v1360 = vpop.permute.xlu0 %1359
    %1362 = vset.pattern.permute.xlu0 2
    %1363 = vperm.xlu0 %1362, %v133
    %v1364 = vpop.permute.xlu0 %1363
    %1366 = vset.pattern.permute.xlu0 2
    %1367 = vperm.xlu0 %1366, %v134
    %v1368 = vpop.permute.xlu0 %1367
    %1370 = vset.pattern.permute.xlu0 2
    %1371 = vperm.xlu0 %1370, %v135
    %v1372 = vpop.permute.xlu0 %1371
    %1374 = vset.pattern.permute.xlu0 2
    %1375 = vperm.xlu0 %1374, %v136
    %v1376 = vpop.permute.xlu0 %1375
    %1378 = vset.pattern.permute.xlu0 2
    %1379 = vperm.xlu0 %1378, %v137
    %v1380 = vpop.permute.xlu0 %1379
    %1382 = vset.pattern.permute.xlu0 2
    %1383 = vperm.xlu0 %1382, %v138
    %v1384 = vpop.permute.xlu0 %1383
    %1386 = vset.pattern.permute.xlu0 2
    %1387 = vperm.xlu0 %1386, %v139
    %v1388 = vpop.permute.xlu0 %1387
    %1390 = vset.pattern.permute.xlu0 2
    %1391 = vperm.xlu0 %1390, %v140
    %v1392 = vpop.permute.xlu0 %1391
    %v1394 = vlaneseq
    %v1395 = vshrl.u32 %v1394, 7
    %v1396 = vsub.s32 2, %v1395
    %v1397 = vrot.slane %v76, %v1396
    %v1398 = vlaneseq
    %v1399 = vshrl.u32 %v1398, 7
    %v1400 = vsub.s32 6, %v1399
    %v1401 = vrot.slane %v76, %v1400
    %v1404 = vlaneseq
    %v1405 = vshrl.u32 %v1404, 7
    %v1406 = vsub.s32 2, %v1405
    %v1407 = vrot.slane %v1397, %v1406
    %v1408 = vlaneseq
    %v1409 = vshrl.u32 %v1408, 7
    %v1410 = vsub.s32 2, %v1409
    %v1411 = vrot.slane %v1401, %v1410
    %v1412 = vmul.f32 %v1140, %v1407
    %v1413 = vmul.f32 %v1140, %v1411
    %v1414 = vmul.f32 %v1144, %v1407
    %v1415 = vmul.f32 %v1144, %v1411
    %v1416 = vmul.f32 %v1148, %v1407
    %v1417 = vmul.f32 %v1148, %v1411
    %v1418 = vmul.f32 %v1152, %v1407
    %v1419 = vmul.f32 %v1152, %v1411
    %v1420 = vmul.f32 %v1156, %v1407
    %v1421 = vmul.f32 %v1156, %v1411
    %v1422 = vmul.f32 %v1160, %v1407
    %v1423 = vmul.f32 %v1160, %v1411
    %v1424 = vmul.f32 %v1164, %v1407
    %v1425 = vmul.f32 %v1164, %v1411
    %v1426 = vmul.f32 %v1168, %v1407
    %v1427 = vmul.f32 %v1168, %v1411
    %v1428 = vmul.f32 %v1172, %v1407
    %v1429 = vmul.f32 %v1172, %v1411
    %v1430 = vmul.f32 %v1176, %v1407
    %v1431 = vmul.f32 %v1176, %v1411
    %v1432 = vmul.f32 %v1180, %v1407
    %v1433 = vmul.f32 %v1180, %v1411
    %v1434 = vmul.f32 %v1184, %v1407
    %v1435 = vmul.f32 %v1184, %v1411
    %v1436 = vmul.f32 %v1188, %v1407
    %v1437 = vmul.f32 %v1188, %v1411
    %v1438 = vmul.f32 %v1192, %v1407
    %v1439 = vmul.f32 %v1192, %v1411
    %v1440 = vmul.f32 %v1196, %v1407
    %v1441 = vmul.f32 %v1196, %v1411
    %v1442 = vmul.f32 %v1200, %v1407
    %v1443 = vmul.f32 %v1200, %v1411
    %v1444 = vmul.f32 %v1204, %v1407
    %v1445 = vmul.f32 %v1204, %v1411
    %v1446 = vmul.f32 %v1208, %v1407
    %v1447 = vmul.f32 %v1208, %v1411
    %v1448 = vmul.f32 %v1212, %v1407
    %v1449 = vmul.f32 %v1212, %v1411
    %v1450 = vmul.f32 %v1216, %v1407
    %v1451 = vmul.f32 %v1216, %v1411
    %v1452 = vmul.f32 %v1220, %v1407
    %v1453 = vmul.f32 %v1220, %v1411
    %v1454 = vmul.f32 %v1224, %v1407
    %v1455 = vmul.f32 %v1224, %v1411
    %v1456 = vmul.f32 %v1228, %v1407
    %v1457 = vmul.f32 %v1228, %v1411
    %v1458 = vmul.f32 %v1232, %v1407
    %v1459 = vmul.f32 %v1232, %v1411
    %v1460 = vmul.f32 %v1236, %v1407
    %v1461 = vmul.f32 %v1236, %v1411
    %v1462 = vmul.f32 %v1240, %v1407
    %v1463 = vmul.f32 %v1240, %v1411
    %v1464 = vmul.f32 %v1244, %v1407
    %v1465 = vmul.f32 %v1244, %v1411
    %v1466 = vmul.f32 %v1248, %v1407
    %v1467 = vmul.f32 %v1248, %v1411
    %v1468 = vmul.f32 %v1252, %v1407
    %v1469 = vmul.f32 %v1252, %v1411
    %v1470 = vmul.f32 %v1256, %v1407
    %v1471 = vmul.f32 %v1256, %v1411
    %v1472 = vmul.f32 %v1260, %v1407
    %v1473 = vmul.f32 %v1260, %v1411
    %v1474 = vmul.f32 %v1264, %v1407
    %v1475 = vmul.f32 %v1264, %v1411
    %v1476 = vmul.f32 %v1268, %v1407
    %v1477 = vmul.f32 %v1268, %v1411
    %v1478 = vmul.f32 %v1272, %v1407
    %v1479 = vmul.f32 %v1272, %v1411
    %v1480 = vmul.f32 %v1276, %v1407
    %v1481 = vmul.f32 %v1276, %v1411
    %v1482 = vmul.f32 %v1280, %v1407
    %v1483 = vmul.f32 %v1280, %v1411
    %v1484 = vmul.f32 %v1284, %v1407
    %v1485 = vmul.f32 %v1284, %v1411
    %v1486 = vmul.f32 %v1288, %v1407
    %v1487 = vmul.f32 %v1288, %v1411
    %v1488 = vmul.f32 %v1292, %v1407
    %v1489 = vmul.f32 %v1292, %v1411
    %v1490 = vmul.f32 %v1296, %v1407
    %v1491 = vmul.f32 %v1296, %v1411
    %v1492 = vmul.f32 %v1300, %v1407
    %v1493 = vmul.f32 %v1300, %v1411
    %v1494 = vmul.f32 %v1304, %v1407
    %v1495 = vmul.f32 %v1304, %v1411
    %v1496 = vmul.f32 %v1308, %v1407
    %v1497 = vmul.f32 %v1308, %v1411
    %v1498 = vmul.f32 %v1312, %v1407
    %v1499 = vmul.f32 %v1312, %v1411
    %v1500 = vmul.f32 %v1316, %v1407
    %v1501 = vmul.f32 %v1316, %v1411
    %v1502 = vmul.f32 %v1320, %v1407
    %v1503 = vmul.f32 %v1320, %v1411
    %v1504 = vmul.f32 %v1324, %v1407
    %v1505 = vmul.f32 %v1324, %v1411
    %v1506 = vmul.f32 %v1328, %v1407
    %v1507 = vmul.f32 %v1328, %v1411
    %v1508 = vmul.f32 %v1332, %v1407
    %v1509 = vmul.f32 %v1332, %v1411
    %v1510 = vmul.f32 %v1336, %v1407
    %v1511 = vmul.f32 %v1336, %v1411
    %v1512 = vmul.f32 %v1340, %v1407
    %v1513 = vmul.f32 %v1340, %v1411
    %v1514 = vmul.f32 %v1344, %v1407
    %v1515 = vmul.f32 %v1344, %v1411
    %v1516 = vmul.f32 %v1348, %v1407
    %v1517 = vmul.f32 %v1348, %v1411
    %v1518 = vmul.f32 %v1352, %v1407
    %v1519 = vmul.f32 %v1352, %v1411
    %v1520 = vmul.f32 %v1356, %v1407
    %v1521 = vmul.f32 %v1356, %v1411
    %v1522 = vmul.f32 %v1360, %v1407
    %v1523 = vmul.f32 %v1360, %v1411
    %v1524 = vmul.f32 %v1364, %v1407
    %v1525 = vmul.f32 %v1364, %v1411
    %v1526 = vmul.f32 %v1368, %v1407
    %v1527 = vmul.f32 %v1368, %v1411
    %v1528 = vmul.f32 %v1372, %v1407
    %v1529 = vmul.f32 %v1372, %v1411
    %v1530 = vmul.f32 %v1376, %v1407
    %v1531 = vmul.f32 %v1376, %v1411
    %v1532 = vmul.f32 %v1380, %v1407
    %v1533 = vmul.f32 %v1380, %v1411
    %v1534 = vmul.f32 %v1384, %v1407
    %v1535 = vmul.f32 %v1384, %v1411
    %v1536 = vmul.f32 %v1388, %v1407
    %v1537 = vmul.f32 %v1388, %v1411
    %v1538 = vmul.f32 %v1392, %v1407
    %v1539 = vmul.f32 %v1392, %v1411
    %v1540 = vadd.f32 %v1010, %v1412
    %v1541 = vadd.f32 %v1011, %v1413
    %v1542 = vadd.f32 %v1012, %v1414
    %v1543 = vadd.f32 %v1013, %v1415
    %v1544 = vadd.f32 %v1014, %v1416
    %v1545 = vadd.f32 %v1015, %v1417
    %v1546 = vadd.f32 %v1016, %v1418
    %v1547 = vadd.f32 %v1017, %v1419
    %v1548 = vadd.f32 %v1018, %v1420
    %v1549 = vadd.f32 %v1019, %v1421
    %v1550 = vadd.f32 %v1020, %v1422
    %v1551 = vadd.f32 %v1021, %v1423
    %v1552 = vadd.f32 %v1022, %v1424
    %v1553 = vadd.f32 %v1023, %v1425
    %v1554 = vadd.f32 %v1024, %v1426
    %v1555 = vadd.f32 %v1025, %v1427
    %v1556 = vadd.f32 %v1026, %v1428
    %v1557 = vadd.f32 %v1027, %v1429
    %v1558 = vadd.f32 %v1028, %v1430
    %v1559 = vadd.f32 %v1029, %v1431
    %v1560 = vadd.f32 %v1030, %v1432
    %v1561 = vadd.f32 %v1031, %v1433
    %v1562 = vadd.f32 %v1032, %v1434
    %v1563 = vadd.f32 %v1033, %v1435
    %v1564 = vadd.f32 %v1034, %v1436
    %v1565 = vadd.f32 %v1035, %v1437
    %v1566 = vadd.f32 %v1036, %v1438
    %v1567 = vadd.f32 %v1037, %v1439
    %v1568 = vadd.f32 %v1038, %v1440
    %v1569 = vadd.f32 %v1039, %v1441
    %v1570 = vadd.f32 %v1040, %v1442
    %v1571 = vadd.f32 %v1041, %v1443
    %v1572 = vadd.f32 %v1042, %v1444
    %v1573 = vadd.f32 %v1043, %v1445
    %v1574 = vadd.f32 %v1044, %v1446
    %v1575 = vadd.f32 %v1045, %v1447
    %v1576 = vadd.f32 %v1046, %v1448
    %v1577 = vadd.f32 %v1047, %v1449
    %v1578 = vadd.f32 %v1048, %v1450
    %v1579 = vadd.f32 %v1049, %v1451
    %v1580 = vadd.f32 %v1050, %v1452
    %v1581 = vadd.f32 %v1051, %v1453
    %v1582 = vadd.f32 %v1052, %v1454
    %v1583 = vadd.f32 %v1053, %v1455
    %v1584 = vadd.f32 %v1054, %v1456
    %v1585 = vadd.f32 %v1055, %v1457
    %v1586 = vadd.f32 %v1056, %v1458
    %v1587 = vadd.f32 %v1057, %v1459
    %v1588 = vadd.f32 %v1058, %v1460
    %v1589 = vadd.f32 %v1059, %v1461
    %v1590 = vadd.f32 %v1060, %v1462
    %v1591 = vadd.f32 %v1061, %v1463
    %v1592 = vadd.f32 %v1062, %v1464
    %v1593 = vadd.f32 %v1063, %v1465
    %v1594 = vadd.f32 %v1064, %v1466
    %v1595 = vadd.f32 %v1065, %v1467
    %v1596 = vadd.f32 %v1066, %v1468
    %v1597 = vadd.f32 %v1067, %v1469
    %v1598 = vadd.f32 %v1068, %v1470
    %v1599 = vadd.f32 %v1069, %v1471
    %v1600 = vadd.f32 %v1070, %v1472
    %v1601 = vadd.f32 %v1071, %v1473
    %v1602 = vadd.f32 %v1072, %v1474
    %v1603 = vadd.f32 %v1073, %v1475
    %v1604 = vadd.f32 %v1074, %v1476
    %v1605 = vadd.f32 %v1075, %v1477
    %v1606 = vadd.f32 %v1076, %v1478
    %v1607 = vadd.f32 %v1077, %v1479
    %v1608 = vadd.f32 %v1078, %v1480
    %v1609 = vadd.f32 %v1079, %v1481
    %v1610 = vadd.f32 %v1080, %v1482
    %v1611 = vadd.f32 %v1081, %v1483
    %v1612 = vadd.f32 %v1082, %v1484
    %v1613 = vadd.f32 %v1083, %v1485
    %v1614 = vadd.f32 %v1084, %v1486
    %v1615 = vadd.f32 %v1085, %v1487
    %v1616 = vadd.f32 %v1086, %v1488
    %v1617 = vadd.f32 %v1087, %v1489
    %v1618 = vadd.f32 %v1088, %v1490
    %v1619 = vadd.f32 %v1089, %v1491
    %v1620 = vadd.f32 %v1090, %v1492
    %v1621 = vadd.f32 %v1091, %v1493
    %v1622 = vadd.f32 %v1092, %v1494
    %v1623 = vadd.f32 %v1093, %v1495
    %v1624 = vadd.f32 %v1094, %v1496
    %v1625 = vadd.f32 %v1095, %v1497
    %v1626 = vadd.f32 %v1096, %v1498
    %v1627 = vadd.f32 %v1097, %v1499
    %v1628 = vadd.f32 %v1098, %v1500
    %v1629 = vadd.f32 %v1099, %v1501
    %v1630 = vadd.f32 %v1100, %v1502
    %v1631 = vadd.f32 %v1101, %v1503
    %v1632 = vadd.f32 %v1102, %v1504
    %v1633 = vadd.f32 %v1103, %v1505
    %v1634 = vadd.f32 %v1104, %v1506
    %v1635 = vadd.f32 %v1105, %v1507
    %v1636 = vadd.f32 %v1106, %v1508
    %v1637 = vadd.f32 %v1107, %v1509
    %v1638 = vadd.f32 %v1108, %v1510
    %v1639 = vadd.f32 %v1109, %v1511
    %v1640 = vadd.f32 %v1110, %v1512
    %v1641 = vadd.f32 %v1111, %v1513
    %v1642 = vadd.f32 %v1112, %v1514
    %v1643 = vadd.f32 %v1113, %v1515
    %v1644 = vadd.f32 %v1114, %v1516
    %v1645 = vadd.f32 %v1115, %v1517
    %v1646 = vadd.f32 %v1116, %v1518
    %v1647 = vadd.f32 %v1117, %v1519
    %v1648 = vadd.f32 %v1118, %v1520
    %v1649 = vadd.f32 %v1119, %v1521
    %v1650 = vadd.f32 %v1120, %v1522
    %v1651 = vadd.f32 %v1121, %v1523
    %v1652 = vadd.f32 %v1122, %v1524
    %v1653 = vadd.f32 %v1123, %v1525
    %v1654 = vadd.f32 %v1124, %v1526
    %v1655 = vadd.f32 %v1125, %v1527
    %v1656 = vadd.f32 %v1126, %v1528
    %v1657 = vadd.f32 %v1127, %v1529
    %v1658 = vadd.f32 %v1128, %v1530
    %v1659 = vadd.f32 %v1129, %v1531
    %v1660 = vadd.f32 %v1130, %v1532
    %v1661 = vadd.f32 %v1131, %v1533
    %v1662 = vadd.f32 %v1132, %v1534
    %v1663 = vadd.f32 %v1133, %v1535
    %v1664 = vadd.f32 %v1134, %v1536
    %v1665 = vadd.f32 %v1135, %v1537
    %v1666 = vadd.f32 %v1136, %v1538
    %v1667 = vadd.f32 %v1137, %v1539
    %v1668 = vld [vmem:[%s2] sm:$0xff]
    %v1669 = vld [vmem:[%s2 + $0x8] sm:$0xff]
    %v1670 = vld [vmem:[%s2 + $0x10] sm:$0xff]
    %v1671 = vld [vmem:[%s2 + $0x18] sm:$0xff]
    %v1672 = vld [vmem:[%s2 + $0x20] sm:$0xff]
    %v1673 = vld [vmem:[%s2 + $0x28] sm:$0xff]
    %v1674 = vld [vmem:[%s2 + $0x30] sm:$0xff]
    %v1675 = vld [vmem:[%s2 + $0x38] sm:$0xff]
    %v1676 = vld [vmem:[%s2 + $0x40] sm:$0xff]
    %v1677 = vld [vmem:[%s2 + $0x48] sm:$0xff]
    %v1678 = vld [vmem:[%s2 + $0x50] sm:$0xff]
    %v1679 = vld [vmem:[%s2 + $0x58] sm:$0xff]
    %v1680 = vld [vmem:[%s2 + $0x60] sm:$0xff]
    %v1681 = vld [vmem:[%s2 + $0x68] sm:$0xff]
    %v1682 = vld [vmem:[%s2 + $0x70] sm:$0xff]
    %v1683 = vld [vmem:[%s2 + $0x78] sm:$0xff]
    %v1684 = vld [vmem:[%s2 + $0x80] sm:$0xff]
    %v1685 = vld [vmem:[%s2 + $0x88] sm:$0xff]
    %v1686 = vld [vmem:[%s2 + $0x90] sm:$0xff]
    %v1687 = vld [vmem:[%s2 + $0x98] sm:$0xff]
    %v1688 = vld [vmem:[%s2 + $0xa0] sm:$0xff]
    %v1689 = vld [vmem:[%s2 + $0xa8] sm:$0xff]
    %v1690 = vld [vmem:[%s2 + $0xb0] sm:$0xff]
    %v1691 = vld [vmem:[%s2 + $0xb8] sm:$0xff]
    %v1692 = vld [vmem:[%s2 + $0xc0] sm:$0xff]
    %v1693 = vld [vmem:[%s2 + $0xc8] sm:$0xff]
    %v1694 = vld [vmem:[%s2 + $0xd0] sm:$0xff]
    %v1695 = vld [vmem:[%s2 + $0xd8] sm:$0xff]
    %v1696 = vld [vmem:[%s2 + $0xe0] sm:$0xff]
    %v1697 = vld [vmem:[%s2 + $0xe8] sm:$0xff]
    %v1698 = vld [vmem:[%s2 + $0xf0] sm:$0xff]
    %v1699 = vld [vmem:[%s2 + $0xf8] sm:$0xff]
    %v1700 = vld [vmem:[%s2 + $0x100] sm:$0xff]
    %v1701 = vld [vmem:[%s2 + $0x108] sm:$0xff]
    %v1702 = vld [vmem:[%s2 + $0x110] sm:$0xff]
    %v1703 = vld [vmem:[%s2 + $0x118] sm:$0xff]
    %v1704 = vld [vmem:[%s2 + $0x120] sm:$0xff]
    %v1705 = vld [vmem:[%s2 + $0x128] sm:$0xff]
    %v1706 = vld [vmem:[%s2 + $0x130] sm:$0xff]
    %v1707 = vld [vmem:[%s2 + $0x138] sm:$0xff]
    %v1708 = vld [vmem:[%s2 + $0x140] sm:$0xff]
    %v1709 = vld [vmem:[%s2 + $0x148] sm:$0xff]
    %v1710 = vld [vmem:[%s2 + $0x150] sm:$0xff]
    %v1711 = vld [vmem:[%s2 + $0x158] sm:$0xff]
    %v1712 = vld [vmem:[%s2 + $0x160] sm:$0xff]
    %v1713 = vld [vmem:[%s2 + $0x168] sm:$0xff]
    %v1714 = vld [vmem:[%s2 + $0x170] sm:$0xff]
    %v1715 = vld [vmem:[%s2 + $0x178] sm:$0xff]
    %v1716 = vld [vmem:[%s2 + $0x180] sm:$0xff]
    %v1717 = vld [vmem:[%s2 + $0x188] sm:$0xff]
    %v1718 = vld [vmem:[%s2 + $0x190] sm:$0xff]
    %v1719 = vld [vmem:[%s2 + $0x198] sm:$0xff]
    %v1720 = vld [vmem:[%s2 + $0x1a0] sm:$0xff]
    %v1721 = vld [vmem:[%s2 + $0x1a8] sm:$0xff]
    %v1722 = vld [vmem:[%s2 + $0x1b0] sm:$0xff]
    %v1723 = vld [vmem:[%s2 + $0x1b8] sm:$0xff]
    %v1724 = vld [vmem:[%s2 + $0x1c0] sm:$0xff]
    %v1725 = vld [vmem:[%s2 + $0x1c8] sm:$0xff]
    %v1726 = vld [vmem:[%s2 + $0x1d0] sm:$0xff]
    %v1727 = vld [vmem:[%s2 + $0x1d8] sm:$0xff]
    %v1728 = vld [vmem:[%s2 + $0x1e0] sm:$0xff]
    %v1729 = vld [vmem:[%s2 + $0x1e8] sm:$0xff]
    %v1730 = vld [vmem:[%s2 + $0x1f0] sm:$0xff]
    %v1731 = vld [vmem:[%s2 + $0x1f8] sm:$0xff]
    %1733 = vset.pattern.permute.xlu0 0
    %1734 = vperm.xlu0 %1733, %v1668
    %v1735 = vpop.permute.xlu0 %1734
    %1738 = vset.pattern.permute.xlu0 0
    %1739 = vperm.xlu0 %1738, %v1669
    %v1740 = vpop.permute.xlu0 %1739
    %1743 = vset.pattern.permute.xlu0 0
    %1744 = vperm.xlu0 %1743, %v1670
    %v1745 = vpop.permute.xlu0 %1744
    %1748 = vset.pattern.permute.xlu0 0
    %1749 = vperm.xlu0 %1748, %v1671
    %v1750 = vpop.permute.xlu0 %1749
    %1753 = vset.pattern.permute.xlu0 0
    %1754 = vperm.xlu0 %1753, %v1672
    %v1755 = vpop.permute.xlu0 %1754
    %1758 = vset.pattern.permute.xlu0 0
    %1759 = vperm.xlu0 %1758, %v1673
    %v1760 = vpop.permute.xlu0 %1759
    %1763 = vset.pattern.permute.xlu0 0
    %1764 = vperm.xlu0 %1763, %v1674
    %v1765 = vpop.permute.xlu0 %1764
    %1768 = vset.pattern.permute.xlu0 0
    %1769 = vperm.xlu0 %1768, %v1675
    %v1770 = vpop.permute.xlu0 %1769
    %1773 = vset.pattern.permute.xlu0 0
    %1774 = vperm.xlu0 %1773, %v1676
    %v1775 = vpop.permute.xlu0 %1774
    %1778 = vset.pattern.permute.xlu0 0
    %1779 = vperm.xlu0 %1778, %v1677
    %v1780 = vpop.permute.xlu0 %1779
    %1783 = vset.pattern.permute.xlu0 0
    %1784 = vperm.xlu0 %1783, %v1678
    %v1785 = vpop.permute.xlu0 %1784
    %1788 = vset.pattern.permute.xlu0 0
    %1789 = vperm.xlu0 %1788, %v1679
    %v1790 = vpop.permute.xlu0 %1789
    %1793 = vset.pattern.permute.xlu0 0
    %1794 = vperm.xlu0 %1793, %v1680
    %v1795 = vpop.permute.xlu0 %1794
    %1798 = vset.pattern.permute.xlu0 0
    %1799 = vperm.xlu0 %1798, %v1681
    %v1800 = vpop.permute.xlu0 %1799
    %1803 = vset.pattern.permute.xlu0 0
    %1804 = vperm.xlu0 %1803, %v1682
    %v1805 = vpop.permute.xlu0 %1804
    %1808 = vset.pattern.permute.xlu0 0
    %1809 = vperm.xlu0 %1808, %v1683
    %v1810 = vpop.permute.xlu0 %1809
    %1813 = vset.pattern.permute.xlu0 0
    %1814 = vperm.xlu0 %1813, %v1684
    %v1815 = vpop.permute.xlu0 %1814
    %1818 = vset.pattern.permute.xlu0 0
    %1819 = vperm.xlu0 %1818, %v1685
    %v1820 = vpop.permute.xlu0 %1819
    %1823 = vset.pattern.permute.xlu0 0
    %1824 = vperm.xlu0 %1823, %v1686
    %v1825 = vpop.permute.xlu0 %1824
    %1828 = vset.pattern.permute.xlu0 0
    %1829 = vperm.xlu0 %1828, %v1687
    %v1830 = vpop.permute.xlu0 %1829
    %1833 = vset.pattern.permute.xlu0 0
    %1834 = vperm.xlu0 %1833, %v1688
    %v1835 = vpop.permute.xlu0 %1834
    %1838 = vset.pattern.permute.xlu0 0
    %1839 = vperm.xlu0 %1838, %v1689
    %v1840 = vpop.permute.xlu0 %1839
    %1843 = vset.pattern.permute.xlu0 0
    %1844 = vperm.xlu0 %1843, %v1690
    %v1845 = vpop.permute.xlu0 %1844
    %1848 = vset.pattern.permute.xlu0 0
    %1849 = vperm.xlu0 %1848, %v1691
    %v1850 = vpop.permute.xlu0 %1849
    %1853 = vset.pattern.permute.xlu0 0
    %1854 = vperm.xlu0 %1853, %v1692
    %v1855 = vpop.permute.xlu0 %1854
    %1858 = vset.pattern.permute.xlu0 0
    %1859 = vperm.xlu0 %1858, %v1693
    %v1860 = vpop.permute.xlu0 %1859
    %1863 = vset.pattern.permute.xlu0 0
    %1864 = vperm.xlu0 %1863, %v1694
    %v1865 = vpop.permute.xlu0 %1864
    %1868 = vset.pattern.permute.xlu0 0
    %1869 = vperm.xlu0 %1868, %v1695
    %v1870 = vpop.permute.xlu0 %1869
    %1873 = vset.pattern.permute.xlu0 0
    %1874 = vperm.xlu0 %1873, %v1696
    %v1875 = vpop.permute.xlu0 %1874
    %1878 = vset.pattern.permute.xlu0 0
    %1879 = vperm.xlu0 %1878, %v1697
    %v1880 = vpop.permute.xlu0 %1879
    %1883 = vset.pattern.permute.xlu0 0
    %1884 = vperm.xlu0 %1883, %v1698
    %v1885 = vpop.permute.xlu0 %1884
    %1888 = vset.pattern.permute.xlu0 0
    %1889 = vperm.xlu0 %1888, %v1699
    %v1890 = vpop.permute.xlu0 %1889
    %1893 = vset.pattern.permute.xlu0 0
    %1894 = vperm.xlu0 %1893, %v1700
    %v1895 = vpop.permute.xlu0 %1894
    %1898 = vset.pattern.permute.xlu0 0
    %1899 = vperm.xlu0 %1898, %v1701
    %v1900 = vpop.permute.xlu0 %1899
    %1903 = vset.pattern.permute.xlu0 0
    %1904 = vperm.xlu0 %1903, %v1702
    %v1905 = vpop.permute.xlu0 %1904
    %1908 = vset.pattern.permute.xlu0 0
    %1909 = vperm.xlu0 %1908, %v1703
    %v1910 = vpop.permute.xlu0 %1909
    %1913 = vset.pattern.permute.xlu0 0
    %1914 = vperm.xlu0 %1913, %v1704
    %v1915 = vpop.permute.xlu0 %1914
    %1918 = vset.pattern.permute.xlu0 0
    %1919 = vperm.xlu0 %1918, %v1705
    %v1920 = vpop.permute.xlu0 %1919
    %1923 = vset.pattern.permute.xlu0 0
    %1924 = vperm.xlu0 %1923, %v1706
    %v1925 = vpop.permute.xlu0 %1924
    %1928 = vset.pattern.permute.xlu0 0
    %1929 = vperm.xlu0 %1928, %v1707
    %v1930 = vpop.permute.xlu0 %1929
    %1933 = vset.pattern.permute.xlu0 0
    %1934 = vperm.xlu0 %1933, %v1708
    %v1935 = vpop.permute.xlu0 %1934
    %1938 = vset.pattern.permute.xlu0 0
    %1939 = vperm.xlu0 %1938, %v1709
    %v1940 = vpop.permute.xlu0 %1939
    %1943 = vset.pattern.permute.xlu0 0
    %1944 = vperm.xlu0 %1943, %v1710
    %v1945 = vpop.permute.xlu0 %1944
    %1948 = vset.pattern.permute.xlu0 0
    %1949 = vperm.xlu0 %1948, %v1711
    %v1950 = vpop.permute.xlu0 %1949
    %1953 = vset.pattern.permute.xlu0 0
    %1954 = vperm.xlu0 %1953, %v1712
    %v1955 = vpop.permute.xlu0 %1954
    %1958 = vset.pattern.permute.xlu0 0
    %1959 = vperm.xlu0 %1958, %v1713
    %v1960 = vpop.permute.xlu0 %1959
    %1963 = vset.pattern.permute.xlu0 0
    %1964 = vperm.xlu0 %1963, %v1714
    %v1965 = vpop.permute.xlu0 %1964
    %1968 = vset.pattern.permute.xlu0 0
    %1969 = vperm.xlu0 %1968, %v1715
    %v1970 = vpop.permute.xlu0 %1969
    %1973 = vset.pattern.permute.xlu0 0
    %1974 = vperm.xlu0 %1973, %v1716
    %v1975 = vpop.permute.xlu0 %1974
    %1978 = vset.pattern.permute.xlu0 0
    %1979 = vperm.xlu0 %1978, %v1717
    %v1980 = vpop.permute.xlu0 %1979
    %1983 = vset.pattern.permute.xlu0 0
    %1984 = vperm.xlu0 %1983, %v1718
    %v1985 = vpop.permute.xlu0 %1984
    %1988 = vset.pattern.permute.xlu0 0
    %1989 = vperm.xlu0 %1988, %v1719
    %v1990 = vpop.permute.xlu0 %1989
    %1993 = vset.pattern.permute.xlu0 0
    %1994 = vperm.xlu0 %1993, %v1720
    %v1995 = vpop.permute.xlu0 %1994
    %1998 = vset.pattern.permute.xlu0 0
    %1999 = vperm.xlu0 %1998, %v1721
    %v2000 = vpop.permute.xlu0 %1999
    %2003 = vset.pattern.permute.xlu0 0
    %2004 = vperm.xlu0 %2003, %v1722
    %v2005 = vpop.permute.xlu0 %2004
    %2008 = vset.pattern.permute.xlu0 0
    %2009 = vperm.xlu0 %2008, %v1723
    %v2010 = vpop.permute.xlu0 %2009
    %2013 = vset.pattern.permute.xlu0 0
    %2014 = vperm.xlu0 %2013, %v1724
    %v2015 = vpop.permute.xlu0 %2014
    %2018 = vset.pattern.permute.xlu0 0
    %2019 = vperm.xlu0 %2018, %v1725
    %v2020 = vpop.permute.xlu0 %2019
    %2023 = vset.pattern.permute.xlu0 0
    %2024 = vperm.xlu0 %2023, %v1726
    %v2025 = vpop.permute.xlu0 %2024
    %2028 = vset.pattern.permute.xlu0 0
    %2029 = vperm.xlu0 %2028, %v1727
    %v2030 = vpop.permute.xlu0 %2029
    %2033 = vset.pattern.permute.xlu0 0
    %2034 = vperm.xlu0 %2033, %v1728
    %v2035 = vpop.permute.xlu0 %2034
    %2038 = vset.pattern.permute.xlu0 0
    %2039 = vperm.xlu0 %2038, %v1729
    %v2040 = vpop.permute.xlu0 %2039
    %2043 = vset.pattern.permute.xlu0 0
    %2044 = vperm.xlu0 %2043, %v1730
    %v2045 = vpop.permute.xlu0 %2044
    %2048 = vset.pattern.permute.xlu0 0
    %2049 = vperm.xlu0 %2048, %v1731
    %v2050 = vpop.permute.xlu0 %2049
    %v2052 = vadd.f32 %v1540, %v1735
    %v2053 = vadd.f32 %v1541, %v1735
    %v2054 = vadd.f32 %v1542, %v1740
    %v2055 = vadd.f32 %v1543, %v1740
    %v2056 = vadd.f32 %v1544, %v1745
    %v2057 = vadd.f32 %v1545, %v1745
    %v2058 = vadd.f32 %v1546, %v1750
    %v2059 = vadd.f32 %v1547, %v1750
    %v2060 = vadd.f32 %v1548, %v1755
    %v2061 = vadd.f32 %v1549, %v1755
    %v2062 = vadd.f32 %v1550, %v1760
    %v2063 = vadd.f32 %v1551, %v1760
    %v2064 = vadd.f32 %v1552, %v1765
    %v2065 = vadd.f32 %v1553, %v1765
    %v2066 = vadd.f32 %v1554, %v1770
    %v2067 = vadd.f32 %v1555, %v1770
    %v2068 = vadd.f32 %v1556, %v1775
    %v2069 = vadd.f32 %v1557, %v1775
    %v2070 = vadd.f32 %v1558, %v1780
    %v2071 = vadd.f32 %v1559, %v1780
    %v2072 = vadd.f32 %v1560, %v1785
    %v2073 = vadd.f32 %v1561, %v1785
    %v2074 = vadd.f32 %v1562, %v1790
    %v2075 = vadd.f32 %v1563, %v1790
    %v2076 = vadd.f32 %v1564, %v1795
    %v2077 = vadd.f32 %v1565, %v1795
    %v2078 = vadd.f32 %v1566, %v1800
    %v2079 = vadd.f32 %v1567, %v1800
    %v2080 = vadd.f32 %v1568, %v1805
    %v2081 = vadd.f32 %v1569, %v1805
    %v2082 = vadd.f32 %v1570, %v1810
    %v2083 = vadd.f32 %v1571, %v1810
    %v2084 = vadd.f32 %v1572, %v1815
    %v2085 = vadd.f32 %v1573, %v1815
    %v2086 = vadd.f32 %v1574, %v1820
    %v2087 = vadd.f32 %v1575, %v1820
    %v2088 = vadd.f32 %v1576, %v1825
    %v2089 = vadd.f32 %v1577, %v1825
    %v2090 = vadd.f32 %v1578, %v1830
    %v2091 = vadd.f32 %v1579, %v1830
    %v2092 = vadd.f32 %v1580, %v1835
    %v2093 = vadd.f32 %v1581, %v1835
    %v2094 = vadd.f32 %v1582, %v1840
    %v2095 = vadd.f32 %v1583, %v1840
    %v2096 = vadd.f32 %v1584, %v1845
    %v2097 = vadd.f32 %v1585, %v1845
    %v2098 = vadd.f32 %v1586, %v1850
    %v2099 = vadd.f32 %v1587, %v1850
    %v2100 = vadd.f32 %v1588, %v1855
    %v2101 = vadd.f32 %v1589, %v1855
    %v2102 = vadd.f32 %v1590, %v1860
    %v2103 = vadd.f32 %v1591, %v1860
    %v2104 = vadd.f32 %v1592, %v1865
    %v2105 = vadd.f32 %v1593, %v1865
    %v2106 = vadd.f32 %v1594, %v1870
    %v2107 = vadd.f32 %v1595, %v1870
    %v2108 = vadd.f32 %v1596, %v1875
    %v2109 = vadd.f32 %v1597, %v1875
    %v2110 = vadd.f32 %v1598, %v1880
    %v2111 = vadd.f32 %v1599, %v1880
    %v2112 = vadd.f32 %v1600, %v1885
    %v2113 = vadd.f32 %v1601, %v1885
    %v2114 = vadd.f32 %v1602, %v1890
    %v2115 = vadd.f32 %v1603, %v1890
    %v2116 = vadd.f32 %v1604, %v1895
    %v2117 = vadd.f32 %v1605, %v1895
    %v2118 = vadd.f32 %v1606, %v1900
    %v2119 = vadd.f32 %v1607, %v1900
    %v2120 = vadd.f32 %v1608, %v1905
    %v2121 = vadd.f32 %v1609, %v1905
    %v2122 = vadd.f32 %v1610, %v1910
    %v2123 = vadd.f32 %v1611, %v1910
    %v2124 = vadd.f32 %v1612, %v1915
    %v2125 = vadd.f32 %v1613, %v1915
    %v2126 = vadd.f32 %v1614, %v1920
    %v2127 = vadd.f32 %v1615, %v1920
    %v2128 = vadd.f32 %v1616, %v1925
    %v2129 = vadd.f32 %v1617, %v1925
    %v2130 = vadd.f32 %v1618, %v1930
    %v2131 = vadd.f32 %v1619, %v1930
    %v2132 = vadd.f32 %v1620, %v1935
    %v2133 = vadd.f32 %v1621, %v1935
    %v2134 = vadd.f32 %v1622, %v1940
    %v2135 = vadd.f32 %v1623, %v1940
    %v2136 = vadd.f32 %v1624, %v1945
    %v2137 = vadd.f32 %v1625, %v1945
    %v2138 = vadd.f32 %v1626, %v1950
    %v2139 = vadd.f32 %v1627, %v1950
    %v2140 = vadd.f32 %v1628, %v1955
    %v2141 = vadd.f32 %v1629, %v1955
    %v2142 = vadd.f32 %v1630, %v1960
    %v2143 = vadd.f32 %v1631, %v1960
    %v2144 = vadd.f32 %v1632, %v1965
    %v2145 = vadd.f32 %v1633, %v1965
    %v2146 = vadd.f32 %v1634, %v1970
    %v2147 = vadd.f32 %v1635, %v1970
    %v2148 = vadd.f32 %v1636, %v1975
    %v2149 = vadd.f32 %v1637, %v1975
    %v2150 = vadd.f32 %v1638, %v1980
    %v2151 = vadd.f32 %v1639, %v1980
    %v2152 = vadd.f32 %v1640, %v1985
    %v2153 = vadd.f32 %v1641, %v1985
    %v2154 = vadd.f32 %v1642, %v1990
    %v2155 = vadd.f32 %v1643, %v1990
    %v2156 = vadd.f32 %v1644, %v1995
    %v2157 = vadd.f32 %v1645, %v1995
    %v2158 = vadd.f32 %v1646, %v2000
    %v2159 = vadd.f32 %v1647, %v2000
    %v2160 = vadd.f32 %v1648, %v2005
    %v2161 = vadd.f32 %v1649, %v2005
    %v2162 = vadd.f32 %v1650, %v2010
    %v2163 = vadd.f32 %v1651, %v2010
    %v2164 = vadd.f32 %v1652, %v2015
    %v2165 = vadd.f32 %v1653, %v2015
    %v2166 = vadd.f32 %v1654, %v2020
    %v2167 = vadd.f32 %v1655, %v2020
    %v2168 = vadd.f32 %v1656, %v2025
    %v2169 = vadd.f32 %v1657, %v2025
    %v2170 = vadd.f32 %v1658, %v2030
    %v2171 = vadd.f32 %v1659, %v2030
    %v2172 = vadd.f32 %v1660, %v2035
    %v2173 = vadd.f32 %v1661, %v2035
    %v2174 = vadd.f32 %v1662, %v2040
    %v2175 = vadd.f32 %v1663, %v2040
    %v2176 = vadd.f32 %v1664, %v2045
    %v2177 = vadd.f32 %v1665, %v2045
    %v2178 = vadd.f32 %v1666, %v2050
    %v2179 = vadd.f32 %v1667, %v2050
    %v2180 = vmax.f32 %v2052, 0.0
    %v2181 = vmax.f32 %v2053, 0.0
    %v2182 = vmax.f32 %v2054, 0.0
    %v2183 = vmax.f32 %v2055, 0.0
    %v2184 = vmax.f32 %v2056, 0.0
    %v2185 = vmax.f32 %v2057, 0.0
    %v2186 = vmax.f32 %v2058, 0.0
    %v2187 = vmax.f32 %v2059, 0.0
    %v2188 = vmax.f32 %v2060, 0.0
    %v2189 = vmax.f32 %v2061, 0.0
    %v2190 = vmax.f32 %v2062, 0.0
    %v2191 = vmax.f32 %v2063, 0.0
    %v2192 = vmax.f32 %v2064, 0.0
    %v2193 = vmax.f32 %v2065, 0.0
    %v2194 = vmax.f32 %v2066, 0.0
    %v2195 = vmax.f32 %v2067, 0.0
    %v2196 = vmax.f32 %v2068, 0.0
    %v2197 = vmax.f32 %v2069, 0.0
    %v2198 = vmax.f32 %v2070, 0.0
    %v2199 = vmax.f32 %v2071, 0.0
    %v2200 = vmax.f32 %v2072, 0.0
    %v2201 = vmax.f32 %v2073, 0.0
    %v2202 = vmax.f32 %v2074, 0.0
    %v2203 = vmax.f32 %v2075, 0.0
    %v2204 = vmax.f32 %v2076, 0.0
    %v2205 = vmax.f32 %v2077, 0.0
    %v2206 = vmax.f32 %v2078, 0.0
    %v2207 = vmax.f32 %v2079, 0.0
    %v2208 = vmax.f32 %v2080, 0.0
    %v2209 = vmax.f32 %v2081, 0.0
    %v2210 = vmax.f32 %v2082, 0.0
    %v2211 = vmax.f32 %v2083, 0.0
    %v2212 = vmax.f32 %v2084, 0.0
    %v2213 = vmax.f32 %v2085, 0.0
    %v2214 = vmax.f32 %v2086, 0.0
    %v2215 = vmax.f32 %v2087, 0.0
    %v2216 = vmax.f32 %v2088, 0.0
    %v2217 = vmax.f32 %v2089, 0.0
    %v2218 = vmax.f32 %v2090, 0.0
    %v2219 = vmax.f32 %v2091, 0.0
    %v2220 = vmax.f32 %v2092, 0.0
    %v2221 = vmax.f32 %v2093, 0.0
    %v2222 = vmax.f32 %v2094, 0.0
    %v2223 = vmax.f32 %v2095, 0.0
    %v2224 = vmax.f32 %v2096, 0.0
    %v2225 = vmax.f32 %v2097, 0.0
    %v2226 = vmax.f32 %v2098, 0.0
    %v2227 = vmax.f32 %v2099, 0.0
    %v2228 = vmax.f32 %v2100, 0.0
    %v2229 = vmax.f32 %v2101, 0.0
    %v2230 = vmax.f32 %v2102, 0.0
    %v2231 = vmax.f32 %v2103, 0.0
    %v2232 = vmax.f32 %v2104, 0.0
    %v2233 = vmax.f32 %v2105, 0.0
    %v2234 = vmax.f32 %v2106, 0.0
    %v2235 = vmax.f32 %v2107, 0.0
    %v2236 = vmax.f32 %v2108, 0.0
    %v2237 = vmax.f32 %v2109, 0.0
    %v2238 = vmax.f32 %v2110, 0.0
    %v2239 = vmax.f32 %v2111, 0.0
    %v2240 = vmax.f32 %v2112, 0.0
    %v2241 = vmax.f32 %v2113, 0.0
    %v2242 = vmax.f32 %v2114, 0.0
    %v2243 = vmax.f32 %v2115, 0.0
    %v2244 = vmax.f32 %v2116, 0.0
    %v2245 = vmax.f32 %v2117, 0.0
    %v2246 = vmax.f32 %v2118, 0.0
    %v2247 = vmax.f32 %v2119, 0.0
    %v2248 = vmax.f32 %v2120, 0.0
    %v2249 = vmax.f32 %v2121, 0.0
    %v2250 = vmax.f32 %v2122, 0.0
    %v2251 = vmax.f32 %v2123, 0.0
    %v2252 = vmax.f32 %v2124, 0.0
    %v2253 = vmax.f32 %v2125, 0.0
    %v2254 = vmax.f32 %v2126, 0.0
    %v2255 = vmax.f32 %v2127, 0.0
    %v2256 = vmax.f32 %v2128, 0.0
    %v2257 = vmax.f32 %v2129, 0.0
    %v2258 = vmax.f32 %v2130, 0.0
    %v2259 = vmax.f32 %v2131, 0.0
    %v2260 = vmax.f32 %v2132, 0.0
    %v2261 = vmax.f32 %v2133, 0.0
    %v2262 = vmax.f32 %v2134, 0.0
    %v2263 = vmax.f32 %v2135, 0.0
    %v2264 = vmax.f32 %v2136, 0.0
    %v2265 = vmax.f32 %v2137, 0.0
    %v2266 = vmax.f32 %v2138, 0.0
    %v2267 = vmax.f32 %v2139, 0.0
    %v2268 = vmax.f32 %v2140, 0.0
    %v2269 = vmax.f32 %v2141, 0.0
    %v2270 = vmax.f32 %v2142, 0.0
    %v2271 = vmax.f32 %v2143, 0.0
    %v2272 = vmax.f32 %v2144, 0.0
    %v2273 = vmax.f32 %v2145, 0.0
    %v2274 = vmax.f32 %v2146, 0.0
    %v2275 = vmax.f32 %v2147, 0.0
    %v2276 = vmax.f32 %v2148, 0.0
    %v2277 = vmax.f32 %v2149, 0.0
    %v2278 = vmax.f32 %v2150, 0.0
    %v2279 = vmax.f32 %v2151, 0.0
    %v2280 = vmax.f32 %v2152, 0.0
    %v2281 = vmax.f32 %v2153, 0.0
    %v2282 = vmax.f32 %v2154, 0.0
    %v2283 = vmax.f32 %v2155, 0.0
    %v2284 = vmax.f32 %v2156, 0.0
    %v2285 = vmax.f32 %v2157, 0.0
    %v2286 = vmax.f32 %v2158, 0.0
    %v2287 = vmax.f32 %v2159, 0.0
    %v2288 = vmax.f32 %v2160, 0.0
    %v2289 = vmax.f32 %v2161, 0.0
    %v2290 = vmax.f32 %v2162, 0.0
    %v2291 = vmax.f32 %v2163, 0.0
    %v2292 = vmax.f32 %v2164, 0.0
    %v2293 = vmax.f32 %v2165, 0.0
    %v2294 = vmax.f32 %v2166, 0.0
    %v2295 = vmax.f32 %v2167, 0.0
    %v2296 = vmax.f32 %v2168, 0.0
    %v2297 = vmax.f32 %v2169, 0.0
    %v2298 = vmax.f32 %v2170, 0.0
    %v2299 = vmax.f32 %v2171, 0.0
    %v2300 = vmax.f32 %v2172, 0.0
    %v2301 = vmax.f32 %v2173, 0.0
    %v2302 = vmax.f32 %v2174, 0.0
    %v2303 = vmax.f32 %v2175, 0.0
    %v2304 = vmax.f32 %v2176, 0.0
    %v2305 = vmax.f32 %v2177, 0.0
    %v2306 = vmax.f32 %v2178, 0.0
    %v2307 = vmax.f32 %v2179, 0.0
    %v2308 = vpack.c.bf16 %v2182, %v2180
    %v2309 = vpack.c.bf16 %v2183, %v2181
    %v2310 = vpack.c.bf16 %v2186, %v2184
    %v2311 = vpack.c.bf16 %v2187, %v2185
    %v2312 = vpack.c.bf16 %v2190, %v2188
    %v2313 = vpack.c.bf16 %v2191, %v2189
    %v2314 = vpack.c.bf16 %v2194, %v2192
    %v2315 = vpack.c.bf16 %v2195, %v2193
    %v2316 = vpack.c.bf16 %v2198, %v2196
    %v2317 = vpack.c.bf16 %v2199, %v2197
    %v2318 = vpack.c.bf16 %v2202, %v2200
    %v2319 = vpack.c.bf16 %v2203, %v2201
    %v2320 = vpack.c.bf16 %v2206, %v2204
    %v2321 = vpack.c.bf16 %v2207, %v2205
    %v2322 = vpack.c.bf16 %v2210, %v2208
    %v2323 = vpack.c.bf16 %v2211, %v2209
    %v2324 = vpack.c.bf16 %v2214, %v2212
    %v2325 = vpack.c.bf16 %v2215, %v2213
    %v2326 = vpack.c.bf16 %v2218, %v2216
    %v2327 = vpack.c.bf16 %v2219, %v2217
    %v2328 = vpack.c.bf16 %v2222, %v2220
    %v2329 = vpack.c.bf16 %v2223, %v2221
    %v2330 = vpack.c.bf16 %v2226, %v2224
    %v2331 = vpack.c.bf16 %v2227, %v2225
    %v2332 = vpack.c.bf16 %v2230, %v2228
    %v2333 = vpack.c.bf16 %v2231, %v2229
    %v2334 = vpack.c.bf16 %v2234, %v2232
    %v2335 = vpack.c.bf16 %v2235, %v2233
    %v2336 = vpack.c.bf16 %v2238, %v2236
    %v2337 = vpack.c.bf16 %v2239, %v2237
    %v2338 = vpack.c.bf16 %v2242, %v2240
    %v2339 = vpack.c.bf16 %v2243, %v2241
    %v2340 = vpack.c.bf16 %v2246, %v2244
    %v2341 = vpack.c.bf16 %v2247, %v2245
    %v2342 = vpack.c.bf16 %v2250, %v2248
    %v2343 = vpack.c.bf16 %v2251, %v2249
    %v2344 = vpack.c.bf16 %v2254, %v2252
    %v2345 = vpack.c.bf16 %v2255, %v2253
    %v2346 = vpack.c.bf16 %v2258, %v2256
    %v2347 = vpack.c.bf16 %v2259, %v2257
    %v2348 = vpack.c.bf16 %v2262, %v2260
    %v2349 = vpack.c.bf16 %v2263, %v2261
    %v2350 = vpack.c.bf16 %v2266, %v2264
    %v2351 = vpack.c.bf16 %v2267, %v2265
    %v2352 = vpack.c.bf16 %v2270, %v2268
    %v2353 = vpack.c.bf16 %v2271, %v2269
    %v2354 = vpack.c.bf16 %v2274, %v2272
    %v2355 = vpack.c.bf16 %v2275, %v2273
    %v2356 = vpack.c.bf16 %v2278, %v2276
    %v2357 = vpack.c.bf16 %v2279, %v2277
    %v2358 = vpack.c.bf16 %v2282, %v2280
    %v2359 = vpack.c.bf16 %v2283, %v2281
    %v2360 = vpack.c.bf16 %v2286, %v2284
    %v2361 = vpack.c.bf16 %v2287, %v2285
    %v2362 = vpack.c.bf16 %v2290, %v2288
    %v2363 = vpack.c.bf16 %v2291, %v2289
    %v2364 = vpack.c.bf16 %v2294, %v2292
    %v2365 = vpack.c.bf16 %v2295, %v2293
    %v2366 = vpack.c.bf16 %v2298, %v2296
    %v2367 = vpack.c.bf16 %v2299, %v2297
    %v2368 = vpack.c.bf16 %v2302, %v2300
    %v2369 = vpack.c.bf16 %v2303, %v2301
    %v2370 = vpack.c.bf16 %v2306, %v2304
    %v2371 = vpack.c.bf16 %v2307, %v2305
    %v2372 = vld [vmem:[%s3] sm:$0xff]
    %v2373 = vld [vmem:[%s3 + $0x8] sm:$0xff]
    %v2374 = vld [vmem:[%s3 + $0x10] sm:$0xff]
    %v2375 = vld [vmem:[%s3 + $0x18] sm:$0xff]
    %v2376 = vld [vmem:[%s3 + $0x20] sm:$0xff]
    %v2377 = vld [vmem:[%s3 + $0x28] sm:$0xff]
    %v2378 = vld [vmem:[%s3 + $0x30] sm:$0xff]
    %v2379 = vld [vmem:[%s3 + $0x38] sm:$0xff]
    %v2380 = vld [vmem:[%s3 + $0x40] sm:$0xff]
    %v2381 = vld [vmem:[%s3 + $0x48] sm:$0xff]
    %v2382 = vld [vmem:[%s3 + $0x50] sm:$0xff]
    %v2383 = vld [vmem:[%s3 + $0x58] sm:$0xff]
    %v2384 = vld [vmem:[%s3 + $0x60] sm:$0xff]
    %v2385 = vld [vmem:[%s3 + $0x68] sm:$0xff]
    %v2386 = vld [vmem:[%s3 + $0x70] sm:$0xff]
    %v2387 = vld [vmem:[%s3 + $0x78] sm:$0xff]
    %v2388 = vld [vmem:[%s3 + $0x80] sm:$0xff]
    %v2389 = vld [vmem:[%s3 + $0x88] sm:$0xff]
    %v2390 = vld [vmem:[%s3 + $0x90] sm:$0xff]
    %v2391 = vld [vmem:[%s3 + $0x98] sm:$0xff]
    %v2392 = vld [vmem:[%s3 + $0xa0] sm:$0xff]
    %v2393 = vld [vmem:[%s3 + $0xa8] sm:$0xff]
    %v2394 = vld [vmem:[%s3 + $0xb0] sm:$0xff]
    %v2395 = vld [vmem:[%s3 + $0xb8] sm:$0xff]
    %v2396 = vld [vmem:[%s3 + $0xc0] sm:$0xff]
    %v2397 = vld [vmem:[%s3 + $0xc8] sm:$0xff]
    %v2398 = vld [vmem:[%s3 + $0xd0] sm:$0xff]
    %v2399 = vld [vmem:[%s3 + $0xd8] sm:$0xff]
    %v2400 = vld [vmem:[%s3 + $0xe0] sm:$0xff]
    %v2401 = vld [vmem:[%s3 + $0xe8] sm:$0xff]
    %v2402 = vld [vmem:[%s3 + $0xf0] sm:$0xff]
    %v2403 = vld [vmem:[%s3 + $0xf8] sm:$0xff]
    %v2404 = vld [vmem:[%s3 + $0x100] sm:$0xff]
    %v2405 = vld [vmem:[%s3 + $0x108] sm:$0xff]
    %v2406 = vld [vmem:[%s3 + $0x110] sm:$0xff]
    %v2407 = vld [vmem:[%s3 + $0x118] sm:$0xff]
    %v2408 = vld [vmem:[%s3 + $0x120] sm:$0xff]
    %v2409 = vld [vmem:[%s3 + $0x128] sm:$0xff]
    %v2410 = vld [vmem:[%s3 + $0x130] sm:$0xff]
    %v2411 = vld [vmem:[%s3 + $0x138] sm:$0xff]
    %v2412 = vld [vmem:[%s3 + $0x140] sm:$0xff]
    %v2413 = vld [vmem:[%s3 + $0x148] sm:$0xff]
    %v2414 = vld [vmem:[%s3 + $0x150] sm:$0xff]
    %v2415 = vld [vmem:[%s3 + $0x158] sm:$0xff]
    %v2416 = vld [vmem:[%s3 + $0x160] sm:$0xff]
    %v2417 = vld [vmem:[%s3 + $0x168] sm:$0xff]
    %v2418 = vld [vmem:[%s3 + $0x170] sm:$0xff]
    %v2419 = vld [vmem:[%s3 + $0x178] sm:$0xff]
    %v2420 = vld [vmem:[%s3 + $0x180] sm:$0xff]
    %v2421 = vld [vmem:[%s3 + $0x188] sm:$0xff]
    %v2422 = vld [vmem:[%s3 + $0x190] sm:$0xff]
    %v2423 = vld [vmem:[%s3 + $0x198] sm:$0xff]
    %v2424 = vld [vmem:[%s3 + $0x1a0] sm:$0xff]
    %v2425 = vld [vmem:[%s3 + $0x1a8] sm:$0xff]
    %v2426 = vld [vmem:[%s3 + $0x1b0] sm:$0xff]
    %v2427 = vld [vmem:[%s3 + $0x1b8] sm:$0xff]
    %v2428 = vld [vmem:[%s3 + $0x1c0] sm:$0xff]
    %v2429 = vld [vmem:[%s3 + $0x1c8] sm:$0xff]
    %v2430 = vld [vmem:[%s3 + $0x1d0] sm:$0xff]
    %v2431 = vld [vmem:[%s3 + $0x1d8] sm:$0xff]
    %v2432 = vld [vmem:[%s3 + $0x1e0] sm:$0xff]
    %v2433 = vld [vmem:[%s3 + $0x1e8] sm:$0xff]
    %v2434 = vld [vmem:[%s3 + $0x1f0] sm:$0xff]
    %v2435 = vld [vmem:[%s3 + $0x1f8] sm:$0xff]
    %v2436 = vld [vmem:[%s3 + $0x200] sm:$0xff]
    %v2437 = vld [vmem:[%s3 + $0x208] sm:$0xff]
    %v2438 = vld [vmem:[%s3 + $0x210] sm:$0xff]
    %v2439 = vld [vmem:[%s3 + $0x218] sm:$0xff]
    %v2440 = vld [vmem:[%s3 + $0x220] sm:$0xff]
    %v2441 = vld [vmem:[%s3 + $0x228] sm:$0xff]
    %v2442 = vld [vmem:[%s3 + $0x230] sm:$0xff]
    %v2443 = vld [vmem:[%s3 + $0x238] sm:$0xff]
    %v2444 = vld [vmem:[%s3 + $0x240] sm:$0xff]
    %v2445 = vld [vmem:[%s3 + $0x248] sm:$0xff]
    %v2446 = vld [vmem:[%s3 + $0x250] sm:$0xff]
    %v2447 = vld [vmem:[%s3 + $0x258] sm:$0xff]
    %v2448 = vld [vmem:[%s3 + $0x260] sm:$0xff]
    %v2449 = vld [vmem:[%s3 + $0x268] sm:$0xff]
    %v2450 = vld [vmem:[%s3 + $0x270] sm:$0xff]
    %v2451 = vld [vmem:[%s3 + $0x278] sm:$0xff]
    %v2452 = vld [vmem:[%s3 + $0x280] sm:$0xff]
    %v2453 = vld [vmem:[%s3 + $0x288] sm:$0xff]
    %v2454 = vld [vmem:[%s3 + $0x290] sm:$0xff]
    %v2455 = vld [vmem:[%s3 + $0x298] sm:$0xff]
    %v2456 = vld [vmem:[%s3 + $0x2a0] sm:$0xff]
    %v2457 = vld [vmem:[%s3 + $0x2a8] sm:$0xff]
    %v2458 = vld [vmem:[%s3 + $0x2b0] sm:$0xff]
    %v2459 = vld [vmem:[%s3 + $0x2b8] sm:$0xff]
    %v2460 = vld [vmem:[%s3 + $0x2c0] sm:$0xff]
    %v2461 = vld [vmem:[%s3 + $0x2c8] sm:$0xff]
    %v2462 = vld [vmem:[%s3 + $0x2d0] sm:$0xff]
    %v2463 = vld [vmem:[%s3 + $0x2d8] sm:$0xff]
    %v2464 = vld [vmem:[%s3 + $0x2e0] sm:$0xff]
    %v2465 = vld [vmem:[%s3 + $0x2e8] sm:$0xff]
    %v2466 = vld [vmem:[%s3 + $0x2f0] sm:$0xff]
    %v2467 = vld [vmem:[%s3 + $0x2f8] sm:$0xff]
    %v2468 = vld [vmem:[%s3 + $0x300] sm:$0xff]
    %v2469 = vld [vmem:[%s3 + $0x308] sm:$0xff]
    %v2470 = vld [vmem:[%s3 + $0x310] sm:$0xff]
    %v2471 = vld [vmem:[%s3 + $0x318] sm:$0xff]
    %v2472 = vld [vmem:[%s3 + $0x320] sm:$0xff]
    %v2473 = vld [vmem:[%s3 + $0x328] sm:$0xff]
    %v2474 = vld [vmem:[%s3 + $0x330] sm:$0xff]
    %v2475 = vld [vmem:[%s3 + $0x338] sm:$0xff]
    %v2476 = vld [vmem:[%s3 + $0x340] sm:$0xff]
    %v2477 = vld [vmem:[%s3 + $0x348] sm:$0xff]
    %v2478 = vld [vmem:[%s3 + $0x350] sm:$0xff]
    %v2479 = vld [vmem:[%s3 + $0x358] sm:$0xff]
    %v2480 = vld [vmem:[%s3 + $0x360] sm:$0xff]
    %v2481 = vld [vmem:[%s3 + $0x368] sm:$0xff]
    %v2482 = vld [vmem:[%s3 + $0x370] sm:$0xff]
    %v2483 = vld [vmem:[%s3 + $0x378] sm:$0xff]
    %v2484 = vld [vmem:[%s3 + $0x380] sm:$0xff]
    %v2485 = vld [vmem:[%s3 + $0x388] sm:$0xff]
    %v2486 = vld [vmem:[%s3 + $0x390] sm:$0xff]
    %v2487 = vld [vmem:[%s3 + $0x398] sm:$0xff]
    %v2488 = vld [vmem:[%s3 + $0x3a0] sm:$0xff]
    %v2489 = vld [vmem:[%s3 + $0x3a8] sm:$0xff]
    %v2490 = vld [vmem:[%s3 + $0x3b0] sm:$0xff]
    %v2491 = vld [vmem:[%s3 + $0x3b8] sm:$0xff]
    %v2492 = vld [vmem:[%s3 + $0x3c0] sm:$0xff]
    %v2493 = vld [vmem:[%s3 + $0x3c8] sm:$0xff]
    %v2494 = vld [vmem:[%s3 + $0x3d0] sm:$0xff]
    %v2495 = vld [vmem:[%s3 + $0x3d8] sm:$0xff]
    %v2496 = vld [vmem:[%s3 + $0x3e0] sm:$0xff]
    %v2497 = vld [vmem:[%s3 + $0x3e8] sm:$0xff]
    %v2498 = vld [vmem:[%s3 + $0x3f0] sm:$0xff]
    %v2499 = vld [vmem:[%s3 + $0x3f8] sm:$0xff]
    %v2628 = vunpack.c.l.b16 %v2372
    %v2629 = vunpack.c.h.b16 %v2372
    %v2630 = vunpack.c.l.b16 %v2373
    %v2631 = vunpack.c.h.b16 %v2373
    %v2632 = vunpack.c.l.b16 %v2374
    %v2633 = vunpack.c.h.b16 %v2374
    %v2634 = vunpack.c.l.b16 %v2375
    %v2635 = vunpack.c.h.b16 %v2375
    %v2636 = vunpack.c.l.b16 %v2376
    %v2637 = vunpack.c.h.b16 %v2376
    %v2638 = vunpack.c.l.b16 %v2377
    %v2639 = vunpack.c.h.b16 %v2377
    %v2640 = vunpack.c.l.b16 %v2378
    %v2641 = vunpack.c.h.b16 %v2378
    %v2642 = vunpack.c.l.b16 %v2379
    %v2643 = vunpack.c.h.b16 %v2379
    %v2644 = vunpack.c.l.b16 %v2380
    %v2645 = vunpack.c.h.b16 %v2380
    %v2646 = vunpack.c.l.b16 %v2381
    %v2647 = vunpack.c.h.b16 %v2381
    %v2648 = vunpack.c.l.b16 %v2382
    %v2649 = vunpack.c.h.b16 %v2382
    %v2650 = vunpack.c.l.b16 %v2383
    %v2651 = vunpack.c.h.b16 %v2383
    %v2652 = vunpack.c.l.b16 %v2384
    %v2653 = vunpack.c.h.b16 %v2384
    %v2654 = vunpack.c.l.b16 %v2385
    %v2655 = vunpack.c.h.b16 %v2385
    %v2656 = vunpack.c.l.b16 %v2386
    %v2657 = vunpack.c.h.b16 %v2386
    %v2658 = vunpack.c.l.b16 %v2387
    %v2659 = vunpack.c.h.b16 %v2387
    %v2660 = vunpack.c.l.b16 %v2388
    %v2661 = vunpack.c.h.b16 %v2388
    %v2662 = vunpack.c.l.b16 %v2389
    %v2663 = vunpack.c.h.b16 %v2389
    %v2664 = vunpack.c.l.b16 %v2390
    %v2665 = vunpack.c.h.b16 %v2390
    %v2666 = vunpack.c.l.b16 %v2391
    %v2667 = vunpack.c.h.b16 %v2391
    %v2668 = vunpack.c.l.b16 %v2392
    %v2669 = vunpack.c.h.b16 %v2392
    %v2670 = vunpack.c.l.b16 %v2393
    %v2671 = vunpack.c.h.b16 %v2393
    %v2672 = vunpack.c.l.b16 %v2394
    %v2673 = vunpack.c.h.b16 %v2394
    %v2674 = vunpack.c.l.b16 %v2395
    %v2675 = vunpack.c.h.b16 %v2395
    %v2676 = vunpack.c.l.b16 %v2396
    %v2677 = vunpack.c.h.b16 %v2396
    %v2678 = vunpack.c.l.b16 %v2397
    %v2679 = vunpack.c.h.b16 %v2397
    %v2680 = vunpack.c.l.b16 %v2398
    %v2681 = vunpack.c.h.b16 %v2398
    %v2682 = vunpack.c.l.b16 %v2399
    %v2683 = vunpack.c.h.b16 %v2399
    %v2684 = vunpack.c.l.b16 %v2400
    %v2685 = vunpack.c.h.b16 %v2400
    %v2686 = vunpack.c.l.b16 %v2401
    %v2687 = vunpack.c.h.b16 %v2401
    %v2688 = vunpack.c.l.b16 %v2402
    %v2689 = vunpack.c.h.b16 %v2402
    %v2690 = vunpack.c.l.b16 %v2403
    %v2691 = vunpack.c.h.b16 %v2403
    %v2692 = vunpack.c.l.b16 %v2404
    %v2693 = vunpack.c.h.b16 %v2404
    %v2694 = vunpack.c.l.b16 %v2405
    %v2695 = vunpack.c.h.b16 %v2405
    %v2696 = vunpack.c.l.b16 %v2406
    %v2697 = vunpack.c.h.b16 %v2406
    %v2698 = vunpack.c.l.b16 %v2407
    %v2699 = vunpack.c.h.b16 %v2407
    %v2700 = vunpack.c.l.b16 %v2408
    %v2701 = vunpack.c.h.b16 %v2408
    %v2702 = vunpack.c.l.b16 %v2409
    %v2703 = vunpack.c.h.b16 %v2409
    %v2704 = vunpack.c.l.b16 %v2410
    %v2705 = vunpack.c.h.b16 %v2410
    %v2706 = vunpack.c.l.b16 %v2411
    %v2707 = vunpack.c.h.b16 %v2411
    %v2708 = vunpack.c.l.b16 %v2412
    %v2709 = vunpack.c.h.b16 %v2412
    %v2710 = vunpack.c.l.b16 %v2413
    %v2711 = vunpack.c.h.b16 %v2413
    %v2712 = vunpack.c.l.b16 %v2414
    %v2713 = vunpack.c.h.b16 %v2414
    %v2714 = vunpack.c.l.b16 %v2415
    %v2715 = vunpack.c.h.b16 %v2415
    %v2716 = vunpack.c.l.b16 %v2416
    %v2717 = vunpack.c.h.b16 %v2416
    %v2718 = vunpack.c.l.b16 %v2417
    %v2719 = vunpack.c.h.b16 %v2417
    %v2720 = vunpack.c.l.b16 %v2418
    %v2721 = vunpack.c.h.b16 %v2418
    %v2722 = vunpack.c.l.b16 %v2419
    %v2723 = vunpack.c.h.b16 %v2419
    %v2724 = vunpack.c.l.b16 %v2420
    %v2725 = vunpack.c.h.b16 %v2420
    %v2726 = vunpack.c.l.b16 %v2421
    %v2727 = vunpack.c.h.b16 %v2421
    %v2728 = vunpack.c.l.b16 %v2422
    %v2729 = vunpack.c.h.b16 %v2422
    %v2730 = vunpack.c.l.b16 %v2423
    %v2731 = vunpack.c.h.b16 %v2423
    %v2732 = vunpack.c.l.b16 %v2424
    %v2733 = vunpack.c.h.b16 %v2424
    %v2734 = vunpack.c.l.b16 %v2425
    %v2735 = vunpack.c.h.b16 %v2425
    %v2736 = vunpack.c.l.b16 %v2426
    %v2737 = vunpack.c.h.b16 %v2426
    %v2738 = vunpack.c.l.b16 %v2427
    %v2739 = vunpack.c.h.b16 %v2427
    %v2740 = vunpack.c.l.b16 %v2428
    %v2741 = vunpack.c.h.b16 %v2428
    %v2742 = vunpack.c.l.b16 %v2429
    %v2743 = vunpack.c.h.b16 %v2429
    %v2744 = vunpack.c.l.b16 %v2430
    %v2745 = vunpack.c.h.b16 %v2430
    %v2746 = vunpack.c.l.b16 %v2431
    %v2747 = vunpack.c.h.b16 %v2431
    %v2748 = vunpack.c.l.b16 %v2432
    %v2749 = vunpack.c.h.b16 %v2432
    %v2750 = vunpack.c.l.b16 %v2433
    %v2751 = vunpack.c.h.b16 %v2433
    %v2752 = vunpack.c.l.b16 %v2434
    %v2753 = vunpack.c.h.b16 %v2434
    %v2754 = vunpack.c.l.b16 %v2435
    %v2755 = vunpack.c.h.b16 %v2435
    %v2756 = vunpack.c.l.b16 %v2436
    %v2757 = vunpack.c.h.b16 %v2436
    %v2758 = vunpack.c.l.b16 %v2437
    %v2759 = vunpack.c.h.b16 %v2437
    %v2760 = vunpack.c.l.b16 %v2438
    %v2761 = vunpack.c.h.b16 %v2438
    %v2762 = vunpack.c.l.b16 %v2439
    %v2763 = vunpack.c.h.b16 %v2439
    %v2764 = vunpack.c.l.b16 %v2440
    %v2765 = vunpack.c.h.b16 %v2440
    %v2766 = vunpack.c.l.b16 %v2441
    %v2767 = vunpack.c.h.b16 %v2441
    %v2768 = vunpack.c.l.b16 %v2442
    %v2769 = vunpack.c.h.b16 %v2442
    %v2770 = vunpack.c.l.b16 %v2443
    %v2771 = vunpack.c.h.b16 %v2443
    %v2772 = vunpack.c.l.b16 %v2444
    %v2773 = vunpack.c.h.b16 %v2444
    %v2774 = vunpack.c.l.b16 %v2445
    %v2775 = vunpack.c.h.b16 %v2445
    %v2776 = vunpack.c.l.b16 %v2446
    %v2777 = vunpack.c.h.b16 %v2446
    %v2778 = vunpack.c.l.b16 %v2447
    %v2779 = vunpack.c.h.b16 %v2447
    %v2780 = vunpack.c.l.b16 %v2448
    %v2781 = vunpack.c.h.b16 %v2448
    %v2782 = vunpack.c.l.b16 %v2449
    %v2783 = vunpack.c.h.b16 %v2449
    %v2784 = vunpack.c.l.b16 %v2450
    %v2785 = vunpack.c.h.b16 %v2450
    %v2786 = vunpack.c.l.b16 %v2451
    %v2787 = vunpack.c.h.b16 %v2451
    %v2788 = vunpack.c.l.b16 %v2452
    %v2789 = vunpack.c.h.b16 %v2452
    %v2790 = vunpack.c.l.b16 %v2453
    %v2791 = vunpack.c.h.b16 %v2453
    %v2792 = vunpack.c.l.b16 %v2454
    %v2793 = vunpack.c.h.b16 %v2454
    %v2794 = vunpack.c.l.b16 %v2455
    %v2795 = vunpack.c.h.b16 %v2455
    %v2796 = vunpack.c.l.b16 %v2456
    %v2797 = vunpack.c.h.b16 %v2456
    %v2798 = vunpack.c.l.b16 %v2457
    %v2799 = vunpack.c.h.b16 %v2457
    %v2800 = vunpack.c.l.b16 %v2458
    %v2801 = vunpack.c.h.b16 %v2458
    %v2802 = vunpack.c.l.b16 %v2459
    %v2803 = vunpack.c.h.b16 %v2459
    %v2804 = vunpack.c.l.b16 %v2460
    %v2805 = vunpack.c.h.b16 %v2460
    %v2806 = vunpack.c.l.b16 %v2461
    %v2807 = vunpack.c.h.b16 %v2461
    %v2808 = vunpack.c.l.b16 %v2462
    %v2809 = vunpack.c.h.b16 %v2462
    %v2810 = vunpack.c.l.b16 %v2463
    %v2811 = vunpack.c.h.b16 %v2463
    %v2812 = vunpack.c.l.b16 %v2464
    %v2813 = vunpack.c.h.b16 %v2464
    %v2814 = vunpack.c.l.b16 %v2465
    %v2815 = vunpack.c.h.b16 %v2465
    %v2816 = vunpack.c.l.b16 %v2466
    %v2817 = vunpack.c.h.b16 %v2466
    %v2818 = vunpack.c.l.b16 %v2467
    %v2819 = vunpack.c.h.b16 %v2467
    %v2820 = vunpack.c.l.b16 %v2468
    %v2821 = vunpack.c.h.b16 %v2468
    %v2822 = vunpack.c.l.b16 %v2469
    %v2823 = vunpack.c.h.b16 %v2469
    %v2824 = vunpack.c.l.b16 %v2470
    %v2825 = vunpack.c.h.b16 %v2470
    %v2826 = vunpack.c.l.b16 %v2471
    %v2827 = vunpack.c.h.b16 %v2471
    %v2828 = vunpack.c.l.b16 %v2472
    %v2829 = vunpack.c.h.b16 %v2472
    %v2830 = vunpack.c.l.b16 %v2473
    %v2831 = vunpack.c.h.b16 %v2473
    %v2832 = vunpack.c.l.b16 %v2474
    %v2833 = vunpack.c.h.b16 %v2474
    %v2834 = vunpack.c.l.b16 %v2475
    %v2835 = vunpack.c.h.b16 %v2475
    %v2836 = vunpack.c.l.b16 %v2476
    %v2837 = vunpack.c.h.b16 %v2476
    %v2838 = vunpack.c.l.b16 %v2477
    %v2839 = vunpack.c.h.b16 %v2477
    %v2840 = vunpack.c.l.b16 %v2478
    %v2841 = vunpack.c.h.b16 %v2478
    %v2842 = vunpack.c.l.b16 %v2479
    %v2843 = vunpack.c.h.b16 %v2479
    %v2844 = vunpack.c.l.b16 %v2480
    %v2845 = vunpack.c.h.b16 %v2480
    %v2846 = vunpack.c.l.b16 %v2481
    %v2847 = vunpack.c.h.b16 %v2481
    %v2848 = vunpack.c.l.b16 %v2482
    %v2849 = vunpack.c.h.b16 %v2482
    %v2850 = vunpack.c.l.b16 %v2483
    %v2851 = vunpack.c.h.b16 %v2483
    %v2852 = vunpack.c.l.b16 %v2484
    %v2853 = vunpack.c.h.b16 %v2484
    %v2854 = vunpack.c.l.b16 %v2485
    %v2855 = vunpack.c.h.b16 %v2485
    %v2856 = vunpack.c.l.b16 %v2486
    %v2857 = vunpack.c.h.b16 %v2486
    %v2858 = vunpack.c.l.b16 %v2487
    %v2859 = vunpack.c.h.b16 %v2487
    %v2860 = vunpack.c.l.b16 %v2488
    %v2861 = vunpack.c.h.b16 %v2488
    %v2862 = vunpack.c.l.b16 %v2489
    %v2863 = vunpack.c.h.b16 %v2489
    %v2864 = vunpack.c.l.b16 %v2490
    %v2865 = vunpack.c.h.b16 %v2490
    %v2866 = vunpack.c.l.b16 %v2491
    %v2867 = vunpack.c.h.b16 %v2491
    %v2868 = vunpack.c.l.b16 %v2492
    %v2869 = vunpack.c.h.b16 %v2492
    %v2870 = vunpack.c.l.b16 %v2493
    %v2871 = vunpack.c.h.b16 %v2493
    %v2872 = vunpack.c.l.b16 %v2494
    %v2873 = vunpack.c.h.b16 %v2494
    %v2874 = vunpack.c.l.b16 %v2495
    %v2875 = vunpack.c.h.b16 %v2495
    %v2876 = vunpack.c.l.b16 %v2496
    %v2877 = vunpack.c.h.b16 %v2496
    %v2878 = vunpack.c.l.b16 %v2497
    %v2879 = vunpack.c.h.b16 %v2497
    %v2880 = vunpack.c.l.b16 %v2498
    %v2881 = vunpack.c.h.b16 %v2498
    %v2882 = vunpack.c.l.b16 %v2499
    %v2883 = vunpack.c.h.b16 %v2499
    %v2884 = vpack.c.b16 %v2632, %v2628
    %v2885 = vpack.c.b16 %v2633, %v2629
    %v2886 = vpack.c.b16 %v2634, %v2630
    %v2887 = vpack.c.b16 %v2635, %v2631
    %v2888 = vpack.c.b16 %v2640, %v2636
    %v2889 = vpack.c.b16 %v2641, %v2637
    %v2890 = vpack.c.b16 %v2642, %v2638
    %v2891 = vpack.c.b16 %v2643, %v2639
    %v2892 = vpack.c.b16 %v2648, %v2644
    %v2893 = vpack.c.b16 %v2649, %v2645
    %v2894 = vpack.c.b16 %v2650, %v2646
    %v2895 = vpack.c.b16 %v2651, %v2647
    %v2896 = vpack.c.b16 %v2656, %v2652
    %v2897 = vpack.c.b16 %v2657, %v2653
    %v2898 = vpack.c.b16 %v2658, %v2654
    %v2899 = vpack.c.b16 %v2659, %v2655
    %v2900 = vpack.c.b16 %v2664, %v2660
    %v2901 = vpack.c.b16 %v2665, %v2661
    %v2902 = vpack.c.b16 %v2666, %v2662
    %v2903 = vpack.c.b16 %v2667, %v2663
    %v2904 = vpack.c.b16 %v2672, %v2668
    %v2905 = vpack.c.b16 %v2673, %v2669
    %v2906 = vpack.c.b16 %v2674, %v2670
    %v2907 = vpack.c.b16 %v2675, %v2671
    %v2908 = vpack.c.b16 %v2680, %v2676
    %v2909 = vpack.c.b16 %v2681, %v2677
    %v2910 = vpack.c.b16 %v2682, %v2678
    %v2911 = vpack.c.b16 %v2683, %v2679
    %v2912 = vpack.c.b16 %v2688, %v2684
    %v2913 = vpack.c.b16 %v2689, %v2685
    %v2914 = vpack.c.b16 %v2690, %v2686
    %v2915 = vpack.c.b16 %v2691, %v2687
    %v2916 = vpack.c.b16 %v2696, %v2692
    %v2917 = vpack.c.b16 %v2697, %v2693
    %v2918 = vpack.c.b16 %v2698, %v2694
    %v2919 = vpack.c.b16 %v2699, %v2695
    %v2920 = vpack.c.b16 %v2704, %v2700
    %v2921 = vpack.c.b16 %v2705, %v2701
    %v2922 = vpack.c.b16 %v2706, %v2702
    %v2923 = vpack.c.b16 %v2707, %v2703
    %v2924 = vpack.c.b16 %v2712, %v2708
    %v2925 = vpack.c.b16 %v2713, %v2709
    %v2926 = vpack.c.b16 %v2714, %v2710
    %v2927 = vpack.c.b16 %v2715, %v2711
    %v2928 = vpack.c.b16 %v2720, %v2716
    %v2929 = vpack.c.b16 %v2721, %v2717
    %v2930 = vpack.c.b16 %v2722, %v2718
    %v2931 = vpack.c.b16 %v2723, %v2719
    %v2932 = vpack.c.b16 %v2728, %v2724
    %v2933 = vpack.c.b16 %v2729, %v2725
    %v2934 = vpack.c.b16 %v2730, %v2726
    %v2935 = vpack.c.b16 %v2731, %v2727
    %v2936 = vpack.c.b16 %v2736, %v2732
    %v2937 = vpack.c.b16 %v2737, %v2733
    %v2938 = vpack.c.b16 %v2738, %v2734
    %v2939 = vpack.c.b16 %v2739, %v2735
    %v2940 = vpack.c.b16 %v2744, %v2740
    %v2941 = vpack.c.b16 %v2745, %v2741
    %v2942 = vpack.c.b16 %v2746, %v2742
    %v2943 = vpack.c.b16 %v2747, %v2743
    %v2944 = vpack.c.b16 %v2752, %v2748
    %v2945 = vpack.c.b16 %v2753, %v2749
    %v2946 = vpack.c.b16 %v2754, %v2750
    %v2947 = vpack.c.b16 %v2755, %v2751
    %v2948 = vpack.c.b16 %v2760, %v2756
    %v2949 = vpack.c.b16 %v2761, %v2757
    %v2950 = vpack.c.b16 %v2762, %v2758
    %v2951 = vpack.c.b16 %v2763, %v2759
    %v2952 = vpack.c.b16 %v2768, %v2764
    %v2953 = vpack.c.b16 %v2769, %v2765
    %v2954 = vpack.c.b16 %v2770, %v2766
    %v2955 = vpack.c.b16 %v2771, %v2767
    %v2956 = vpack.c.b16 %v2776, %v2772
    %v2957 = vpack.c.b16 %v2777, %v2773
    %v2958 = vpack.c.b16 %v2778, %v2774
    %v2959 = vpack.c.b16 %v2779, %v2775
    %v2960 = vpack.c.b16 %v2784, %v2780
    %v2961 = vpack.c.b16 %v2785, %v2781
    %v2962 = vpack.c.b16 %v2786, %v2782
    %v2963 = vpack.c.b16 %v2787, %v2783
    %v2964 = vpack.c.b16 %v2792, %v2788
    %v2965 = vpack.c.b16 %v2793, %v2789
    %v2966 = vpack.c.b16 %v2794, %v2790
    %v2967 = vpack.c.b16 %v2795, %v2791
    %v2968 = vpack.c.b16 %v2800, %v2796
    %v2969 = vpack.c.b16 %v2801, %v2797
    %v2970 = vpack.c.b16 %v2802, %v2798
    %v2971 = vpack.c.b16 %v2803, %v2799
    %v2972 = vpack.c.b16 %v2808, %v2804
    %v2973 = vpack.c.b16 %v2809, %v2805
    %v2974 = vpack.c.b16 %v2810, %v2806
    %v2975 = vpack.c.b16 %v2811, %v2807
    %v2976 = vpack.c.b16 %v2816, %v2812
    %v2977 = vpack.c.b16 %v2817, %v2813
    %v2978 = vpack.c.b16 %v2818, %v2814
    %v2979 = vpack.c.b16 %v2819, %v2815
    %v2980 = vpack.c.b16 %v2824, %v2820
    %v2981 = vpack.c.b16 %v2825, %v2821
    %v2982 = vpack.c.b16 %v2826, %v2822
    %v2983 = vpack.c.b16 %v2827, %v2823
    %v2984 = vpack.c.b16 %v2832, %v2828
    %v2985 = vpack.c.b16 %v2833, %v2829
    %v2986 = vpack.c.b16 %v2834, %v2830
    %v2987 = vpack.c.b16 %v2835, %v2831
    %v2988 = vpack.c.b16 %v2840, %v2836
    %v2989 = vpack.c.b16 %v2841, %v2837
    %v2990 = vpack.c.b16 %v2842, %v2838
    %v2991 = vpack.c.b16 %v2843, %v2839
    %v2992 = vpack.c.b16 %v2848, %v2844
    %v2993 = vpack.c.b16 %v2849, %v2845
    %v2994 = vpack.c.b16 %v2850, %v2846
    %v2995 = vpack.c.b16 %v2851, %v2847
    %v2996 = vpack.c.b16 %v2856, %v2852
    %v2997 = vpack.c.b16 %v2857, %v2853
    %v2998 = vpack.c.b16 %v2858, %v2854
    %v2999 = vpack.c.b16 %v2859, %v2855
    %v3000 = vpack.c.b16 %v2864, %v2860
    %v3001 = vpack.c.b16 %v2865, %v2861
    %v3002 = vpack.c.b16 %v2866, %v2862
    %v3003 = vpack.c.b16 %v2867, %v2863
    %v3004 = vpack.c.b16 %v2872, %v2868
    %v3005 = vpack.c.b16 %v2873, %v2869
    %v3006 = vpack.c.b16 %v2874, %v2870
    %v3007 = vpack.c.b16 %v2875, %v2871
    %v3008 = vpack.c.b16 %v2880, %v2876
    %v3009 = vpack.c.b16 %v2881, %v2877
    %v3010 = vpack.c.b16 %v2882, %v2878
    %v3011 = vpack.c.b16 %v2883, %v2879
    %3140 = vmatprep.subr.bf16.mxu0 %v2323
    %3141 = vmatpush1.bf16.msra.mxu0 %v2322
    %3142 = vmatprep.subr.bf16.mxu0 %v2321
    %3143 = vmatpush1.bf16.msra.mxu0 %v2320
    %3144 = vmatprep.subr.bf16.mxu0 %v2319
    %3145 = vmatpush1.bf16.msra.mxu0 %v2318
    %3146 = vmatprep.subr.bf16.mxu0 %v2317
    %3147 = vmatpush1.bf16.msra.mxu0 %v2316
    %3148 = vmatprep.subr.bf16.mxu0 %v2315
    %3149 = vmatpush1.bf16.msra.mxu0 %v2314
    %3150 = vmatprep.subr.bf16.mxu0 %v2313
    %3151 = vmatpush1.bf16.msra.mxu0 %v2312
    %3152 = vmatprep.subr.bf16.mxu0 %v2311
    %3153 = vmatpush1.bf16.msra.mxu0 %v2310
    %3154 = vmatprep.subr.bf16.mxu0 %v2309
    %3155 = vmatpush1.bf16.msra.mxu0 %v2308
    %3156 = vmatprep.subr.bf16.mxu0 %v2339
    %3157 = vmatpush2.bf16.msra.mxu0 %v2338
    %3158 = vmatprep.subr.bf16.mxu0 %v2337
    %3159 = vmatpush2.bf16.msra.mxu0 %v2336
    %3160 = vmatprep.subr.bf16.mxu0 %v2335
    %3161 = vmatpush2.bf16.msra.mxu0 %v2334
    %3162 = vmatprep.subr.bf16.mxu0 %v2333
    %3163 = vmatpush2.bf16.msra.mxu0 %v2332
    %3164 = vmatprep.subr.bf16.mxu0 %v2331
    %3165 = vmatpush2.bf16.msra.mxu0 %v2330
    %3166 = vmatprep.subr.bf16.mxu0 %v2329
    %3167 = vmatpush2.bf16.msra.mxu0 %v2328
    %3168 = vmatprep.subr.bf16.mxu0 %v2327
    %3169 = vmatpush2.bf16.msra.mxu0 %v2326
    %3170 = vmatprep.subr.bf16.mxu0 %v2325
    %3171 = vmatpush2.bf16.msra.mxu0 %v2324
    %3172 = vmatprep.mubr.bf16.mxu0 %v2885
    %3173 = vmatmul.mubr.bf16.gmra.mxu0 %v2884
    %v3174 = vpop.f32.mrf.mxu0
    %v3175 = vadd.f32 0.0, %v3174
    %v3176 = vpop.f32.mrf.mxu0
    %v3177 = vadd.f32 0.0, %v3176
    %v3178 = vpop.f32.mrf.mxu0
    %v3179 = vadd.f32 0.0, %v3178
    %v3180 = vpop.f32.mrf.mxu0
    %v3181 = vadd.f32 0.0, %v3180
    %3182 = vmatprep.mubr.bf16.mxu0 %v2889
    %3183 = vmatmul.mubr.bf16.gmra.mxu0 %v2888
    %v3184 = vpop.f32.mrf.mxu0
    %v3185 = vadd.f32 0.0, %v3184
    %v3186 = vpop.f32.mrf.mxu0
    %v3187 = vadd.f32 0.0, %v3186
    %v3188 = vpop.f32.mrf.mxu0
    %v3189 = vadd.f32 0.0, %v3188
    %v3190 = vpop.f32.mrf.mxu0
    %v3191 = vadd.f32 0.0, %v3190
    %3192 = vmatprep.mubr.bf16.mxu0 %v2893
    %3193 = vmatmul.mubr.bf16.gmra.mxu0 %v2892
    %v3194 = vpop.f32.mrf.mxu0
    %v3195 = vadd.f32 0.0, %v3194
    %v3196 = vpop.f32.mrf.mxu0
    %v3197 = vadd.f32 0.0, %v3196
    %v3198 = vpop.f32.mrf.mxu0
    %v3199 = vadd.f32 0.0, %v3198
    %v3200 = vpop.f32.mrf.mxu0
    %v3201 = vadd.f32 0.0, %v3200
    %3202 = vmatprep.mubr.bf16.mxu0 %v2897
    %3203 = vmatmul.mubr.bf16.gmra.mxu0 %v2896
    %v3204 = vpop.f32.mrf.mxu0
    %v3205 = vadd.f32 0.0, %v3204
    %v3206 = vpop.f32.mrf.mxu0
    %v3207 = vadd.f32 0.0, %v3206
    %v3208 = vpop.f32.mrf.mxu0
    %v3209 = vadd.f32 0.0, %v3208
    %v3210 = vpop.f32.mrf.mxu0
    %v3211 = vadd.f32 0.0, %v3210
    %3212 = vmatprep.mubr.bf16.mxu0 %v2901
    %3213 = vmatmul.mubr.bf16.gmra.mxu0 %v2900
    %v3214 = vpop.f32.mrf.mxu0
    %v3215 = vadd.f32 0.0, %v3214
    %v3216 = vpop.f32.mrf.mxu0
    %v3217 = vadd.f32 0.0, %v3216
    %v3218 = vpop.f32.mrf.mxu0
    %v3219 = vadd.f32 0.0, %v3218
    %v3220 = vpop.f32.mrf.mxu0
    %v3221 = vadd.f32 0.0, %v3220
    %3222 = vmatprep.mubr.bf16.mxu0 %v2905
    %3223 = vmatmul.mubr.bf16.gmra.mxu0 %v2904
    %v3224 = vpop.f32.mrf.mxu0
    %v3225 = vadd.f32 0.0, %v3224
    %v3226 = vpop.f32.mrf.mxu0
    %v3227 = vadd.f32 0.0, %v3226
    %v3228 = vpop.f32.mrf.mxu0
    %v3229 = vadd.f32 0.0, %v3228
    %v3230 = vpop.f32.mrf.mxu0
    %v3231 = vadd.f32 0.0, %v3230
    %3232 = vmatprep.mubr.bf16.mxu0 %v2909
    %3233 = vmatmul.mubr.bf16.gmra.mxu0 %v2908
    %v3234 = vpop.f32.mrf.mxu0
    %v3235 = vadd.f32 0.0, %v3234
    %v3236 = vpop.f32.mrf.mxu0
    %v3237 = vadd.f32 0.0, %v3236
    %v3238 = vpop.f32.mrf.mxu0
    %v3239 = vadd.f32 0.0, %v3238
    %v3240 = vpop.f32.mrf.mxu0
    %v3241 = vadd.f32 0.0, %v3240
    %3242 = vmatprep.mubr.bf16.mxu0 %v2913
    %3243 = vmatmul.mubr.bf16.gmra.mxu0 %v2912
    %v3244 = vpop.f32.mrf.mxu0
    %v3245 = vadd.f32 0.0, %v3244
    %v3246 = vpop.f32.mrf.mxu0
    %v3247 = vadd.f32 0.0, %v3246
    %v3248 = vpop.f32.mrf.mxu0
    %v3249 = vadd.f32 0.0, %v3248
    %v3250 = vpop.f32.mrf.mxu0
    %v3251 = vadd.f32 0.0, %v3250
    %3252 = vmatprep.mubr.bf16.mxu0 %v2917
    %3253 = vmatmul.mubr.bf16.gmra.mxu0 %v2916
    %v3254 = vpop.f32.mrf.mxu0
    %v3255 = vadd.f32 0.0, %v3254
    %v3256 = vpop.f32.mrf.mxu0
    %v3257 = vadd.f32 0.0, %v3256
    %v3258 = vpop.f32.mrf.mxu0
    %v3259 = vadd.f32 0.0, %v3258
    %v3260 = vpop.f32.mrf.mxu0
    %v3261 = vadd.f32 0.0, %v3260
    %3262 = vmatprep.mubr.bf16.mxu0 %v2921
    %3263 = vmatmul.mubr.bf16.gmra.mxu0 %v2920
    %v3264 = vpop.f32.mrf.mxu0
    %v3265 = vadd.f32 0.0, %v3264
    %v3266 = vpop.f32.mrf.mxu0
    %v3267 = vadd.f32 0.0, %v3266
    %v3268 = vpop.f32.mrf.mxu0
    %v3269 = vadd.f32 0.0, %v3268
    %v3270 = vpop.f32.mrf.mxu0
    %v3271 = vadd.f32 0.0, %v3270
    %3272 = vmatprep.mubr.bf16.mxu0 %v2925
    %3273 = vmatmul.mubr.bf16.gmra.mxu0 %v2924
    %v3274 = vpop.f32.mrf.mxu0
    %v3275 = vadd.f32 0.0, %v3274
    %v3276 = vpop.f32.mrf.mxu0
    %v3277 = vadd.f32 0.0, %v3276
    %v3278 = vpop.f32.mrf.mxu0
    %v3279 = vadd.f32 0.0, %v3278
    %v3280 = vpop.f32.mrf.mxu0
    %v3281 = vadd.f32 0.0, %v3280
    %3282 = vmatprep.mubr.bf16.mxu0 %v2929
    %3283 = vmatmul.mubr.bf16.gmra.mxu0 %v2928
    %v3284 = vpop.f32.mrf.mxu0
    %v3285 = vadd.f32 0.0, %v3284
    %v3286 = vpop.f32.mrf.mxu0
    %v3287 = vadd.f32 0.0, %v3286
    %v3288 = vpop.f32.mrf.mxu0
    %v3289 = vadd.f32 0.0, %v3288
    %v3290 = vpop.f32.mrf.mxu0
    %v3291 = vadd.f32 0.0, %v3290
    %3292 = vmatprep.mubr.bf16.mxu0 %v2933
    %3293 = vmatmul.mubr.bf16.gmra.mxu0 %v2932
    %v3294 = vpop.f32.mrf.mxu0
    %v3295 = vadd.f32 0.0, %v3294
    %v3296 = vpop.f32.mrf.mxu0
    %v3297 = vadd.f32 0.0, %v3296
    %v3298 = vpop.f32.mrf.mxu0
    %v3299 = vadd.f32 0.0, %v3298
    %v3300 = vpop.f32.mrf.mxu0
    %v3301 = vadd.f32 0.0, %v3300
    %3302 = vmatprep.mubr.bf16.mxu0 %v2937
    %3303 = vmatmul.mubr.bf16.gmra.mxu0 %v2936
    %v3304 = vpop.f32.mrf.mxu0
    %v3305 = vadd.f32 0.0, %v3304
    %v3306 = vpop.f32.mrf.mxu0
    %v3307 = vadd.f32 0.0, %v3306
    %v3308 = vpop.f32.mrf.mxu0
    %v3309 = vadd.f32 0.0, %v3308
    %v3310 = vpop.f32.mrf.mxu0
    %v3311 = vadd.f32 0.0, %v3310
    %3312 = vmatprep.mubr.bf16.mxu0 %v2941
    %3313 = vmatmul.mubr.bf16.gmra.mxu0 %v2940
    %v3314 = vpop.f32.mrf.mxu0
    %v3315 = vadd.f32 0.0, %v3314
    %v3316 = vpop.f32.mrf.mxu0
    %v3317 = vadd.f32 0.0, %v3316
    %v3318 = vpop.f32.mrf.mxu0
    %v3319 = vadd.f32 0.0, %v3318
    %v3320 = vpop.f32.mrf.mxu0
    %v3321 = vadd.f32 0.0, %v3320
    %3322 = vmatprep.mubr.bf16.mxu0 %v2945
    %3323 = vmatmul.mubr.bf16.gmra.mxu0 %v2944
    %v3324 = vpop.f32.mrf.mxu0
    %v3325 = vadd.f32 0.0, %v3324
    %v3326 = vpop.f32.mrf.mxu0
    %v3327 = vadd.f32 0.0, %v3326
    %v3328 = vpop.f32.mrf.mxu0
    %v3329 = vadd.f32 0.0, %v3328
    %v3330 = vpop.f32.mrf.mxu0
    %v3331 = vadd.f32 0.0, %v3330
    %3332 = vmatprep.mubr.bf16.mxu0 %v2949
    %3333 = vmatmul.mubr.bf16.gmra.mxu0 %v2948
    %v3334 = vpop.f32.mrf.mxu0
    %v3335 = vadd.f32 0.0, %v3334
    %v3336 = vpop.f32.mrf.mxu0
    %v3337 = vadd.f32 0.0, %v3336
    %v3338 = vpop.f32.mrf.mxu0
    %v3339 = vadd.f32 0.0, %v3338
    %v3340 = vpop.f32.mrf.mxu0
    %v3341 = vadd.f32 0.0, %v3340
    %3342 = vmatprep.mubr.bf16.mxu0 %v2953
    %3343 = vmatmul.mubr.bf16.gmra.mxu0 %v2952
    %v3344 = vpop.f32.mrf.mxu0
    %v3345 = vadd.f32 0.0, %v3344
    %v3346 = vpop.f32.mrf.mxu0
    %v3347 = vadd.f32 0.0, %v3346
    %v3348 = vpop.f32.mrf.mxu0
    %v3349 = vadd.f32 0.0, %v3348
    %v3350 = vpop.f32.mrf.mxu0
    %v3351 = vadd.f32 0.0, %v3350
    %3352 = vmatprep.mubr.bf16.mxu0 %v2957
    %3353 = vmatmul.mubr.bf16.gmra.mxu0 %v2956
    %v3354 = vpop.f32.mrf.mxu0
    %v3355 = vadd.f32 0.0, %v3354
    %v3356 = vpop.f32.mrf.mxu0
    %v3357 = vadd.f32 0.0, %v3356
    %v3358 = vpop.f32.mrf.mxu0
    %v3359 = vadd.f32 0.0, %v3358
    %v3360 = vpop.f32.mrf.mxu0
    %v3361 = vadd.f32 0.0, %v3360
    %3362 = vmatprep.mubr.bf16.mxu0 %v2961
    %3363 = vmatmul.mubr.bf16.gmra.mxu0 %v2960
    %v3364 = vpop.f32.mrf.mxu0
    %v3365 = vadd.f32 0.0, %v3364
    %v3366 = vpop.f32.mrf.mxu0
    %v3367 = vadd.f32 0.0, %v3366
    %v3368 = vpop.f32.mrf.mxu0
    %v3369 = vadd.f32 0.0, %v3368
    %v3370 = vpop.f32.mrf.mxu0
    %v3371 = vadd.f32 0.0, %v3370
    %3372 = vmatprep.mubr.bf16.mxu0 %v2965
    %3373 = vmatmul.mubr.bf16.gmra.mxu0 %v2964
    %v3374 = vpop.f32.mrf.mxu0
    %v3375 = vadd.f32 0.0, %v3374
    %v3376 = vpop.f32.mrf.mxu0
    %v3377 = vadd.f32 0.0, %v3376
    %v3378 = vpop.f32.mrf.mxu0
    %v3379 = vadd.f32 0.0, %v3378
    %v3380 = vpop.f32.mrf.mxu0
    %v3381 = vadd.f32 0.0, %v3380
    %3382 = vmatprep.mubr.bf16.mxu0 %v2969
    %3383 = vmatmul.mubr.bf16.gmra.mxu0 %v2968
    %v3384 = vpop.f32.mrf.mxu0
    %v3385 = vadd.f32 0.0, %v3384
    %v3386 = vpop.f32.mrf.mxu0
    %v3387 = vadd.f32 0.0, %v3386
    %v3388 = vpop.f32.mrf.mxu0
    %v3389 = vadd.f32 0.0, %v3388
    %v3390 = vpop.f32.mrf.mxu0
    %v3391 = vadd.f32 0.0, %v3390
    %3392 = vmatprep.mubr.bf16.mxu0 %v2973
    %3393 = vmatmul.mubr.bf16.gmra.mxu0 %v2972
    %v3394 = vpop.f32.mrf.mxu0
    %v3395 = vadd.f32 0.0, %v3394
    %v3396 = vpop.f32.mrf.mxu0
    %v3397 = vadd.f32 0.0, %v3396
    %v3398 = vpop.f32.mrf.mxu0
    %v3399 = vadd.f32 0.0, %v3398
    %v3400 = vpop.f32.mrf.mxu0
    %v3401 = vadd.f32 0.0, %v3400
    %3402 = vmatprep.mubr.bf16.mxu0 %v2977
    %3403 = vmatmul.mubr.bf16.gmra.mxu0 %v2976
    %v3404 = vpop.f32.mrf.mxu0
    %v3405 = vadd.f32 0.0, %v3404
    %v3406 = vpop.f32.mrf.mxu0
    %v3407 = vadd.f32 0.0, %v3406
    %v3408 = vpop.f32.mrf.mxu0
    %v3409 = vadd.f32 0.0, %v3408
    %v3410 = vpop.f32.mrf.mxu0
    %v3411 = vadd.f32 0.0, %v3410
    %3412 = vmatprep.mubr.bf16.mxu0 %v2981
    %3413 = vmatmul.mubr.bf16.gmra.mxu0 %v2980
    %v3414 = vpop.f32.mrf.mxu0
    %v3415 = vadd.f32 0.0, %v3414
    %v3416 = vpop.f32.mrf.mxu0
    %v3417 = vadd.f32 0.0, %v3416
    %v3418 = vpop.f32.mrf.mxu0
    %v3419 = vadd.f32 0.0, %v3418
    %v3420 = vpop.f32.mrf.mxu0
    %v3421 = vadd.f32 0.0, %v3420
    %3422 = vmatprep.mubr.bf16.mxu0 %v2985
    %3423 = vmatmul.mubr.bf16.gmra.mxu0 %v2984
    %v3424 = vpop.f32.mrf.mxu0
    %v3425 = vadd.f32 0.0, %v3424
    %v3426 = vpop.f32.mrf.mxu0
    %v3427 = vadd.f32 0.0, %v3426
    %v3428 = vpop.f32.mrf.mxu0
    %v3429 = vadd.f32 0.0, %v3428
    %v3430 = vpop.f32.mrf.mxu0
    %v3431 = vadd.f32 0.0, %v3430
    %3432 = vmatprep.mubr.bf16.mxu0 %v2989
    %3433 = vmatmul.mubr.bf16.gmra.mxu0 %v2988
    %v3434 = vpop.f32.mrf.mxu0
    %v3435 = vadd.f32 0.0, %v3434
    %v3436 = vpop.f32.mrf.mxu0
    %v3437 = vadd.f32 0.0, %v3436
    %v3438 = vpop.f32.mrf.mxu0
    %v3439 = vadd.f32 0.0, %v3438
    %v3440 = vpop.f32.mrf.mxu0
    %v3441 = vadd.f32 0.0, %v3440
    %3442 = vmatprep.mubr.bf16.mxu0 %v2993
    %3443 = vmatmul.mubr.bf16.gmra.mxu0 %v2992
    %v3444 = vpop.f32.mrf.mxu0
    %v3445 = vadd.f32 0.0, %v3444
    %v3446 = vpop.f32.mrf.mxu0
    %v3447 = vadd.f32 0.0, %v3446
    %v3448 = vpop.f32.mrf.mxu0
    %v3449 = vadd.f32 0.0, %v3448
    %v3450 = vpop.f32.mrf.mxu0
    %v3451 = vadd.f32 0.0, %v3450
    %3452 = vmatprep.mubr.bf16.mxu0 %v2997
    %3453 = vmatmul.mubr.bf16.gmra.mxu0 %v2996
    %v3454 = vpop.f32.mrf.mxu0
    %v3455 = vadd.f32 0.0, %v3454
    %v3456 = vpop.f32.mrf.mxu0
    %v3457 = vadd.f32 0.0, %v3456
    %v3458 = vpop.f32.mrf.mxu0
    %v3459 = vadd.f32 0.0, %v3458
    %v3460 = vpop.f32.mrf.mxu0
    %v3461 = vadd.f32 0.0, %v3460
    %3462 = vmatprep.mubr.bf16.mxu0 %v3001
    %3463 = vmatmul.mubr.bf16.gmra.mxu0 %v3000
    %v3464 = vpop.f32.mrf.mxu0
    %v3465 = vadd.f32 0.0, %v3464
    %v3466 = vpop.f32.mrf.mxu0
    %v3467 = vadd.f32 0.0, %v3466
    %v3468 = vpop.f32.mrf.mxu0
    %v3469 = vadd.f32 0.0, %v3468
    %v3470 = vpop.f32.mrf.mxu0
    %v3471 = vadd.f32 0.0, %v3470
    %3472 = vmatprep.mubr.bf16.mxu0 %v3005
    %3473 = vmatmul.mubr.bf16.gmra.mxu0 %v3004
    %v3474 = vpop.f32.mrf.mxu0
    %v3475 = vadd.f32 0.0, %v3474
    %v3476 = vpop.f32.mrf.mxu0
    %v3477 = vadd.f32 0.0, %v3476
    %v3478 = vpop.f32.mrf.mxu0
    %v3479 = vadd.f32 0.0, %v3478
    %v3480 = vpop.f32.mrf.mxu0
    %v3481 = vadd.f32 0.0, %v3480
    %3482 = vmatprep.mubr.bf16.mxu0 %v3009
    %3483 = vmatmul.mubr.bf16.gmra.mxu0 %v3008
    %v3484 = vpop.f32.mrf.mxu0
    %v3485 = vadd.f32 0.0, %v3484
    %v3486 = vpop.f32.mrf.mxu0
    %v3487 = vadd.f32 0.0, %v3486
    %v3488 = vpop.f32.mrf.mxu0
    %v3489 = vadd.f32 0.0, %v3488
    %v3490 = vpop.f32.mrf.mxu0
    %v3491 = vadd.f32 0.0, %v3490
    %3492 = vdwg.mxu0
    %3493 = vmatprep.subr.bf16.mxu0 %v2355
    %3494 = vmatpush1.bf16.msra.mxu0 %v2354
    %3495 = vmatprep.subr.bf16.mxu0 %v2353
    %3496 = vmatpush1.bf16.msra.mxu0 %v2352
    %3497 = vmatprep.subr.bf16.mxu0 %v2351
    %3498 = vmatpush1.bf16.msra.mxu0 %v2350
    %3499 = vmatprep.subr.bf16.mxu0 %v2349
    %3500 = vmatpush1.bf16.msra.mxu0 %v2348
    %3501 = vmatprep.subr.bf16.mxu0 %v2347
    %3502 = vmatpush1.bf16.msra.mxu0 %v2346
    %3503 = vmatprep.subr.bf16.mxu0 %v2345
    %3504 = vmatpush1.bf16.msra.mxu0 %v2344
    %3505 = vmatprep.subr.bf16.mxu0 %v2343
    %3506 = vmatpush1.bf16.msra.mxu0 %v2342
    %3507 = vmatprep.subr.bf16.mxu0 %v2341
    %3508 = vmatpush1.bf16.msra.mxu0 %v2340
    %3509 = vmatprep.subr.bf16.mxu0 %v2371
    %3510 = vmatpush2.bf16.msra.mxu0 %v2370
    %3511 = vmatprep.subr.bf16.mxu0 %v2369
    %3512 = vmatpush2.bf16.msra.mxu0 %v2368
    %3513 = vmatprep.subr.bf16.mxu0 %v2367
    %3514 = vmatpush2.bf16.msra.mxu0 %v2366
    %3515 = vmatprep.subr.bf16.mxu0 %v2365
    %3516 = vmatpush2.bf16.msra.mxu0 %v2364
    %3517 = vmatprep.subr.bf16.mxu0 %v2363
    %3518 = vmatpush2.bf16.msra.mxu0 %v2362
    %3519 = vmatprep.subr.bf16.mxu0 %v2361
    %3520 = vmatpush2.bf16.msra.mxu0 %v2360
    %3521 = vmatprep.subr.bf16.mxu0 %v2359
    %3522 = vmatpush2.bf16.msra.mxu0 %v2358
    %3523 = vmatprep.subr.bf16.mxu0 %v2357
    %3524 = vmatpush2.bf16.msra.mxu0 %v2356
    %3525 = vmatprep.mubr.bf16.mxu0 %v2887
    %3526 = vmatmul.mubr.bf16.gmra.mxu0 %v2886
    %v3527 = vpop.f32.mrf.mxu0
    %v3528 = vadd.f32 %v3175, %v3527
    %v3529 = vpop.f32.mrf.mxu0
    %v3530 = vadd.f32 %v3177, %v3529
    %v3531 = vpop.f32.mrf.mxu0
    %v3532 = vadd.f32 %v3179, %v3531
    %v3533 = vpop.f32.mrf.mxu0
    %v3534 = vadd.f32 %v3181, %v3533
    %3535 = vmatprep.mubr.bf16.mxu0 %v2891
    %3536 = vmatmul.mubr.bf16.gmra.mxu0 %v2890
    %v3537 = vpop.f32.mrf.mxu0
    %v3538 = vadd.f32 %v3185, %v3537
    %v3539 = vpop.f32.mrf.mxu0
    %v3540 = vadd.f32 %v3187, %v3539
    %v3541 = vpop.f32.mrf.mxu0
    %v3542 = vadd.f32 %v3189, %v3541
    %v3543 = vpop.f32.mrf.mxu0
    %v3544 = vadd.f32 %v3191, %v3543
    %3545 = vmatprep.mubr.bf16.mxu0 %v2895
    %3546 = vmatmul.mubr.bf16.gmra.mxu0 %v2894
    %v3547 = vpop.f32.mrf.mxu0
    %v3548 = vadd.f32 %v3195, %v3547
    %v3549 = vpop.f32.mrf.mxu0
    %v3550 = vadd.f32 %v3197, %v3549
    %v3551 = vpop.f32.mrf.mxu0
    %v3552 = vadd.f32 %v3199, %v3551
    %v3553 = vpop.f32.mrf.mxu0
    %v3554 = vadd.f32 %v3201, %v3553
    %3555 = vmatprep.mubr.bf16.mxu0 %v2899
    %3556 = vmatmul.mubr.bf16.gmra.mxu0 %v2898
    %v3557 = vpop.f32.mrf.mxu0
    %v3558 = vadd.f32 %v3205, %v3557
    %v3559 = vpop.f32.mrf.mxu0
    %v3560 = vadd.f32 %v3207, %v3559
    %v3561 = vpop.f32.mrf.mxu0
    %v3562 = vadd.f32 %v3209, %v3561
    %v3563 = vpop.f32.mrf.mxu0
    %v3564 = vadd.f32 %v3211, %v3563
    %3565 = vmatprep.mubr.bf16.mxu0 %v2903
    %3566 = vmatmul.mubr.bf16.gmra.mxu0 %v2902
    %v3567 = vpop.f32.mrf.mxu0
    %v3568 = vadd.f32 %v3215, %v3567
    %v3569 = vpop.f32.mrf.mxu0
    %v3570 = vadd.f32 %v3217, %v3569
    %v3571 = vpop.f32.mrf.mxu0
    %v3572 = vadd.f32 %v3219, %v3571
    %v3573 = vpop.f32.mrf.mxu0
    %v3574 = vadd.f32 %v3221, %v3573
    %3575 = vmatprep.mubr.bf16.mxu0 %v2907
    %3576 = vmatmul.mubr.bf16.gmra.mxu0 %v2906
    %v3577 = vpop.f32.mrf.mxu0
    %v3578 = vadd.f32 %v3225, %v3577
    %v3579 = vpop.f32.mrf.mxu0
    %v3580 = vadd.f32 %v3227, %v3579
    %v3581 = vpop.f32.mrf.mxu0
    %v3582 = vadd.f32 %v3229, %v3581
    %v3583 = vpop.f32.mrf.mxu0
    %v3584 = vadd.f32 %v3231, %v3583
    %3585 = vmatprep.mubr.bf16.mxu0 %v2911
    %3586 = vmatmul.mubr.bf16.gmra.mxu0 %v2910
    %v3587 = vpop.f32.mrf.mxu0
    %v3588 = vadd.f32 %v3235, %v3587
    %v3589 = vpop.f32.mrf.mxu0
    %v3590 = vadd.f32 %v3237, %v3589
    %v3591 = vpop.f32.mrf.mxu0
    %v3592 = vadd.f32 %v3239, %v3591
    %v3593 = vpop.f32.mrf.mxu0
    %v3594 = vadd.f32 %v3241, %v3593
    %3595 = vmatprep.mubr.bf16.mxu0 %v2915
    %3596 = vmatmul.mubr.bf16.gmra.mxu0 %v2914
    %v3597 = vpop.f32.mrf.mxu0
    %v3598 = vadd.f32 %v3245, %v3597
    %v3599 = vpop.f32.mrf.mxu0
    %v3600 = vadd.f32 %v3247, %v3599
    %v3601 = vpop.f32.mrf.mxu0
    %v3602 = vadd.f32 %v3249, %v3601
    %v3603 = vpop.f32.mrf.mxu0
    %v3604 = vadd.f32 %v3251, %v3603
    %3605 = vmatprep.mubr.bf16.mxu0 %v2919
    %3606 = vmatmul.mubr.bf16.gmra.mxu0 %v2918
    %v3607 = vpop.f32.mrf.mxu0
    %v3608 = vadd.f32 %v3255, %v3607
    %v3609 = vpop.f32.mrf.mxu0
    %v3610 = vadd.f32 %v3257, %v3609
    %v3611 = vpop.f32.mrf.mxu0
    %v3612 = vadd.f32 %v3259, %v3611
    %v3613 = vpop.f32.mrf.mxu0
    %v3614 = vadd.f32 %v3261, %v3613
    %3615 = vmatprep.mubr.bf16.mxu0 %v2923
    %3616 = vmatmul.mubr.bf16.gmra.mxu0 %v2922
    %v3617 = vpop.f32.mrf.mxu0
    %v3618 = vadd.f32 %v3265, %v3617
    %v3619 = vpop.f32.mrf.mxu0
    %v3620 = vadd.f32 %v3267, %v3619
    %v3621 = vpop.f32.mrf.mxu0
    %v3622 = vadd.f32 %v3269, %v3621
    %v3623 = vpop.f32.mrf.mxu0
    %v3624 = vadd.f32 %v3271, %v3623
    %3625 = vmatprep.mubr.bf16.mxu0 %v2927
    %3626 = vmatmul.mubr.bf16.gmra.mxu0 %v2926
    %v3627 = vpop.f32.mrf.mxu0
    %v3628 = vadd.f32 %v3275, %v3627
    %v3629 = vpop.f32.mrf.mxu0
    %v3630 = vadd.f32 %v3277, %v3629
    %v3631 = vpop.f32.mrf.mxu0
    %v3632 = vadd.f32 %v3279, %v3631
    %v3633 = vpop.f32.mrf.mxu0
    %v3634 = vadd.f32 %v3281, %v3633
    %3635 = vmatprep.mubr.bf16.mxu0 %v2931
    %3636 = vmatmul.mubr.bf16.gmra.mxu0 %v2930
    %v3637 = vpop.f32.mrf.mxu0
    %v3638 = vadd.f32 %v3285, %v3637
    %v3639 = vpop.f32.mrf.mxu0
    %v3640 = vadd.f32 %v3287, %v3639
    %v3641 = vpop.f32.mrf.mxu0
    %v3642 = vadd.f32 %v3289, %v3641
    %v3643 = vpop.f32.mrf.mxu0
    %v3644 = vadd.f32 %v3291, %v3643
    %3645 = vmatprep.mubr.bf16.mxu0 %v2935
    %3646 = vmatmul.mubr.bf16.gmra.mxu0 %v2934
    %v3647 = vpop.f32.mrf.mxu0
    %v3648 = vadd.f32 %v3295, %v3647
    %v3649 = vpop.f32.mrf.mxu0
    %v3650 = vadd.f32 %v3297, %v3649
    %v3651 = vpop.f32.mrf.mxu0
    %v3652 = vadd.f32 %v3299, %v3651
    %v3653 = vpop.f32.mrf.mxu0
    %v3654 = vadd.f32 %v3301, %v3653
    %3655 = vmatprep.mubr.bf16.mxu0 %v2939
    %3656 = vmatmul.mubr.bf16.gmra.mxu0 %v2938
    %v3657 = vpop.f32.mrf.mxu0
    %v3658 = vadd.f32 %v3305, %v3657
    %v3659 = vpop.f32.mrf.mxu0
    %v3660 = vadd.f32 %v3307, %v3659
    %v3661 = vpop.f32.mrf.mxu0
    %v3662 = vadd.f32 %v3309, %v3661
    %v3663 = vpop.f32.mrf.mxu0
    %v3664 = vadd.f32 %v3311, %v3663
    %3665 = vmatprep.mubr.bf16.mxu0 %v2943
    %3666 = vmatmul.mubr.bf16.gmra.mxu0 %v2942
    %v3667 = vpop.f32.mrf.mxu0
    %v3668 = vadd.f32 %v3315, %v3667
    %v3669 = vpop.f32.mrf.mxu0
    %v3670 = vadd.f32 %v3317, %v3669
    %v3671 = vpop.f32.mrf.mxu0
    %v3672 = vadd.f32 %v3319, %v3671
    %v3673 = vpop.f32.mrf.mxu0
    %v3674 = vadd.f32 %v3321, %v3673
    %3675 = vmatprep.mubr.bf16.mxu0 %v2947
    %3676 = vmatmul.mubr.bf16.gmra.mxu0 %v2946
    %v3677 = vpop.f32.mrf.mxu0
    %v3678 = vadd.f32 %v3325, %v3677
    %v3679 = vpop.f32.mrf.mxu0
    %v3680 = vadd.f32 %v3327, %v3679
    %v3681 = vpop.f32.mrf.mxu0
    %v3682 = vadd.f32 %v3329, %v3681
    %v3683 = vpop.f32.mrf.mxu0
    %v3684 = vadd.f32 %v3331, %v3683
    %3685 = vmatprep.mubr.bf16.mxu0 %v2951
    %3686 = vmatmul.mubr.bf16.gmra.mxu0 %v2950
    %v3687 = vpop.f32.mrf.mxu0
    %v3688 = vadd.f32 %v3335, %v3687
    %v3689 = vpop.f32.mrf.mxu0
    %v3690 = vadd.f32 %v3337, %v3689
    %v3691 = vpop.f32.mrf.mxu0
    %v3692 = vadd.f32 %v3339, %v3691
    %v3693 = vpop.f32.mrf.mxu0
    %v3694 = vadd.f32 %v3341, %v3693
    %3695 = vmatprep.mubr.bf16.mxu0 %v2955
    %3696 = vmatmul.mubr.bf16.gmra.mxu0 %v2954
    %v3697 = vpop.f32.mrf.mxu0
    %v3698 = vadd.f32 %v3345, %v3697
    %v3699 = vpop.f32.mrf.mxu0
    %v3700 = vadd.f32 %v3347, %v3699
    %v3701 = vpop.f32.mrf.mxu0
    %v3702 = vadd.f32 %v3349, %v3701
    %v3703 = vpop.f32.mrf.mxu0
    %v3704 = vadd.f32 %v3351, %v3703
    %3705 = vmatprep.mubr.bf16.mxu0 %v2959
    %3706 = vmatmul.mubr.bf16.gmra.mxu0 %v2958
    %v3707 = vpop.f32.mrf.mxu0
    %v3708 = vadd.f32 %v3355, %v3707
    %v3709 = vpop.f32.mrf.mxu0
    %v3710 = vadd.f32 %v3357, %v3709
    %v3711 = vpop.f32.mrf.mxu0
    %v3712 = vadd.f32 %v3359, %v3711
    %v3713 = vpop.f32.mrf.mxu0
    %v3714 = vadd.f32 %v3361, %v3713
    %3715 = vmatprep.mubr.bf16.mxu0 %v2963
    %3716 = vmatmul.mubr.bf16.gmra.mxu0 %v2962
    %v3717 = vpop.f32.mrf.mxu0
    %v3718 = vadd.f32 %v3365, %v3717
    %v3719 = vpop.f32.mrf.mxu0
    %v3720 = vadd.f32 %v3367, %v3719
    %v3721 = vpop.f32.mrf.mxu0
    %v3722 = vadd.f32 %v3369, %v3721
    %v3723 = vpop.f32.mrf.mxu0
    %v3724 = vadd.f32 %v3371, %v3723
    %3725 = vmatprep.mubr.bf16.mxu0 %v2967
    %3726 = vmatmul.mubr.bf16.gmra.mxu0 %v2966
    %v3727 = vpop.f32.mrf.mxu0
    %v3728 = vadd.f32 %v3375, %v3727
    %v3729 = vpop.f32.mrf.mxu0
    %v3730 = vadd.f32 %v3377, %v3729
    %v3731 = vpop.f32.mrf.mxu0
    %v3732 = vadd.f32 %v3379, %v3731
    %v3733 = vpop.f32.mrf.mxu0
    %v3734 = vadd.f32 %v3381, %v3733
    %3735 = vmatprep.mubr.bf16.mxu0 %v2971
    %3736 = vmatmul.mubr.bf16.gmra.mxu0 %v2970
    %v3737 = vpop.f32.mrf.mxu0
    %v3738 = vadd.f32 %v3385, %v3737
    %v3739 = vpop.f32.mrf.mxu0
    %v3740 = vadd.f32 %v3387, %v3739
    %v3741 = vpop.f32.mrf.mxu0
    %v3742 = vadd.f32 %v3389, %v3741
    %v3743 = vpop.f32.mrf.mxu0
    %v3744 = vadd.f32 %v3391, %v3743
    %3745 = vmatprep.mubr.bf16.mxu0 %v2975
    %3746 = vmatmul.mubr.bf16.gmra.mxu0 %v2974
    %v3747 = vpop.f32.mrf.mxu0
    %v3748 = vadd.f32 %v3395, %v3747
    %v3749 = vpop.f32.mrf.mxu0
    %v3750 = vadd.f32 %v3397, %v3749
    %v3751 = vpop.f32.mrf.mxu0
    %v3752 = vadd.f32 %v3399, %v3751
    %v3753 = vpop.f32.mrf.mxu0
    %v3754 = vadd.f32 %v3401, %v3753
    %3755 = vmatprep.mubr.bf16.mxu0 %v2979
    %3756 = vmatmul.mubr.bf16.gmra.mxu0 %v2978
    %v3757 = vpop.f32.mrf.mxu0
    %v3758 = vadd.f32 %v3405, %v3757
    %v3759 = vpop.f32.mrf.mxu0
    %v3760 = vadd.f32 %v3407, %v3759
    %v3761 = vpop.f32.mrf.mxu0
    %v3762 = vadd.f32 %v3409, %v3761
    %v3763 = vpop.f32.mrf.mxu0
    %v3764 = vadd.f32 %v3411, %v3763
    %3765 = vmatprep.mubr.bf16.mxu0 %v2983
    %3766 = vmatmul.mubr.bf16.gmra.mxu0 %v2982
    %v3767 = vpop.f32.mrf.mxu0
    %v3768 = vadd.f32 %v3415, %v3767
    %v3769 = vpop.f32.mrf.mxu0
    %v3770 = vadd.f32 %v3417, %v3769
    %v3771 = vpop.f32.mrf.mxu0
    %v3772 = vadd.f32 %v3419, %v3771
    %v3773 = vpop.f32.mrf.mxu0
    %v3774 = vadd.f32 %v3421, %v3773
    %3775 = vmatprep.mubr.bf16.mxu0 %v2987
    %3776 = vmatmul.mubr.bf16.gmra.mxu0 %v2986
    %v3777 = vpop.f32.mrf.mxu0
    %v3778 = vadd.f32 %v3425, %v3777
    %v3779 = vpop.f32.mrf.mxu0
    %v3780 = vadd.f32 %v3427, %v3779
    %v3781 = vpop.f32.mrf.mxu0
    %v3782 = vadd.f32 %v3429, %v3781
    %v3783 = vpop.f32.mrf.mxu0
    %v3784 = vadd.f32 %v3431, %v3783
    %3785 = vmatprep.mubr.bf16.mxu0 %v2991
    %3786 = vmatmul.mubr.bf16.gmra.mxu0 %v2990
    %v3787 = vpop.f32.mrf.mxu0
    %v3788 = vadd.f32 %v3435, %v3787
    %v3789 = vpop.f32.mrf.mxu0
    %v3790 = vadd.f32 %v3437, %v3789
    %v3791 = vpop.f32.mrf.mxu0
    %v3792 = vadd.f32 %v3439, %v3791
    %v3793 = vpop.f32.mrf.mxu0
    %v3794 = vadd.f32 %v3441, %v3793
    %3795 = vmatprep.mubr.bf16.mxu0 %v2995
    %3796 = vmatmul.mubr.bf16.gmra.mxu0 %v2994
    %v3797 = vpop.f32.mrf.mxu0
    %v3798 = vadd.f32 %v3445, %v3797
    %v3799 = vpop.f32.mrf.mxu0
    %v3800 = vadd.f32 %v3447, %v3799
    %v3801 = vpop.f32.mrf.mxu0
    %v3802 = vadd.f32 %v3449, %v3801
    %v3803 = vpop.f32.mrf.mxu0
    %v3804 = vadd.f32 %v3451, %v3803
    %3805 = vmatprep.mubr.bf16.mxu0 %v2999
    %3806 = vmatmul.mubr.bf16.gmra.mxu0 %v2998
    %v3807 = vpop.f32.mrf.mxu0
    %v3808 = vadd.f32 %v3455, %v3807
    %v3809 = vpop.f32.mrf.mxu0
    %v3810 = vadd.f32 %v3457, %v3809
    %v3811 = vpop.f32.mrf.mxu0
    %v3812 = vadd.f32 %v3459, %v3811
    %v3813 = vpop.f32.mrf.mxu0
    %v3814 = vadd.f32 %v3461, %v3813
    %3815 = vmatprep.mubr.bf16.mxu0 %v3003
    %3816 = vmatmul.mubr.bf16.gmra.mxu0 %v3002
    %v3817 = vpop.f32.mrf.mxu0
    %v3818 = vadd.f32 %v3465, %v3817
    %v3819 = vpop.f32.mrf.mxu0
    %v3820 = vadd.f32 %v3467, %v3819
    %v3821 = vpop.f32.mrf.mxu0
    %v3822 = vadd.f32 %v3469, %v3821
    %v3823 = vpop.f32.mrf.mxu0
    %v3824 = vadd.f32 %v3471, %v3823
    %3825 = vmatprep.mubr.bf16.mxu0 %v3007
    %3826 = vmatmul.mubr.bf16.gmra.mxu0 %v3006
    %v3827 = vpop.f32.mrf.mxu0
    %v3828 = vadd.f32 %v3475, %v3827
    %v3829 = vpop.f32.mrf.mxu0
    %v3830 = vadd.f32 %v3477, %v3829
    %v3831 = vpop.f32.mrf.mxu0
    %v3832 = vadd.f32 %v3479, %v3831
    %v3833 = vpop.f32.mrf.mxu0
    %v3834 = vadd.f32 %v3481, %v3833
    %3835 = vmatprep.mubr.bf16.mxu0 %v3011
    %3836 = vmatmul.mubr.bf16.gmra.mxu0 %v3010
    %v3837 = vpop.f32.mrf.mxu0
    %v3838 = vadd.f32 %v3485, %v3837
    %v3839 = vpop.f32.mrf.mxu0
    %v3840 = vadd.f32 %v3487, %v3839
    %v3841 = vpop.f32.mrf.mxu0
    %v3842 = vadd.f32 %v3489, %v3841
    %v3843 = vpop.f32.mrf.mxu0
    %v3844 = vadd.f32 %v3491, %v3843
    %3845 = vdwg.mxu0
    %v3846 = vpack.c.bf16 %v3532, %v3528
    %v3847 = vpack.c.bf16 %v3534, %v3530
    %v3848 = vpack.c.bf16 %v3542, %v3538
    %v3849 = vpack.c.bf16 %v3544, %v3540
    %v3850 = vpack.c.bf16 %v3552, %v3548
    %v3851 = vpack.c.bf16 %v3554, %v3550
    %v3852 = vpack.c.bf16 %v3562, %v3558
    %v3853 = vpack.c.bf16 %v3564, %v3560
    %v3854 = vpack.c.bf16 %v3572, %v3568
    %v3855 = vpack.c.bf16 %v3574, %v3570
    %v3856 = vpack.c.bf16 %v3582, %v3578
    %v3857 = vpack.c.bf16 %v3584, %v3580
    %v3858 = vpack.c.bf16 %v3592, %v3588
    %v3859 = vpack.c.bf16 %v3594, %v3590
    %v3860 = vpack.c.bf16 %v3602, %v3598
    %v3861 = vpack.c.bf16 %v3604, %v3600
    %v3862 = vpack.c.bf16 %v3612, %v3608
    %v3863 = vpack.c.bf16 %v3614, %v3610
    %v3864 = vpack.c.bf16 %v3622, %v3618
    %v3865 = vpack.c.bf16 %v3624, %v3620
    %v3866 = vpack.c.bf16 %v3632, %v3628
    %v3867 = vpack.c.bf16 %v3634, %v3630
    %v3868 = vpack.c.bf16 %v3642, %v3638
    %v3869 = vpack.c.bf16 %v3644, %v3640
    %v3870 = vpack.c.bf16 %v3652, %v3648
    %v3871 = vpack.c.bf16 %v3654, %v3650
    %v3872 = vpack.c.bf16 %v3662, %v3658
    %v3873 = vpack.c.bf16 %v3664, %v3660
    %v3874 = vpack.c.bf16 %v3672, %v3668
    %v3875 = vpack.c.bf16 %v3674, %v3670
    %v3876 = vpack.c.bf16 %v3682, %v3678
    %v3877 = vpack.c.bf16 %v3684, %v3680
    %v3878 = vpack.c.bf16 %v3692, %v3688
    %v3879 = vpack.c.bf16 %v3694, %v3690
    %v3880 = vpack.c.bf16 %v3702, %v3698
    %v3881 = vpack.c.bf16 %v3704, %v3700
    %v3882 = vpack.c.bf16 %v3712, %v3708
    %v3883 = vpack.c.bf16 %v3714, %v3710
    %v3884 = vpack.c.bf16 %v3722, %v3718
    %v3885 = vpack.c.bf16 %v3724, %v3720
    %v3886 = vpack.c.bf16 %v3732, %v3728
    %v3887 = vpack.c.bf16 %v3734, %v3730
    %v3888 = vpack.c.bf16 %v3742, %v3738
    %v3889 = vpack.c.bf16 %v3744, %v3740
    %v3890 = vpack.c.bf16 %v3752, %v3748
    %v3891 = vpack.c.bf16 %v3754, %v3750
    %v3892 = vpack.c.bf16 %v3762, %v3758
    %v3893 = vpack.c.bf16 %v3764, %v3760
    %v3894 = vpack.c.bf16 %v3772, %v3768
    %v3895 = vpack.c.bf16 %v3774, %v3770
    %v3896 = vpack.c.bf16 %v3782, %v3778
    %v3897 = vpack.c.bf16 %v3784, %v3780
    %v3898 = vpack.c.bf16 %v3792, %v3788
    %v3899 = vpack.c.bf16 %v3794, %v3790
    %v3900 = vpack.c.bf16 %v3802, %v3798
    %v3901 = vpack.c.bf16 %v3804, %v3800
    %v3902 = vpack.c.bf16 %v3812, %v3808
    %v3903 = vpack.c.bf16 %v3814, %v3810
    %v3904 = vpack.c.bf16 %v3822, %v3818
    %v3905 = vpack.c.bf16 %v3824, %v3820
    %v3906 = vpack.c.bf16 %v3832, %v3828
    %v3907 = vpack.c.bf16 %v3834, %v3830
    %v3908 = vpack.c.bf16 %v3842, %v3838
    %v3909 = vpack.c.bf16 %v3844, %v3840
    %v3910 = vld [vmem:[%s4] sm:$0xf]
    %v3911 = vld [vmem:[%s4 + $0x4] sm:$0xf]
    %v3912 = vld [vmem:[%s4 + $0x8] sm:$0xf]
    %v3913 = vld [vmem:[%s4 + $0xc] sm:$0xf]
    %v3914 = vld [vmem:[%s4 + $0x10] sm:$0xf]
    %v3915 = vld [vmem:[%s4 + $0x14] sm:$0xf]
    %v3916 = vld [vmem:[%s4 + $0x18] sm:$0xf]
    %v3917 = vld [vmem:[%s4 + $0x1c] sm:$0xf]
    %v3918 = vld [vmem:[%s4 + $0x20] sm:$0xf]
    %v3919 = vld [vmem:[%s4 + $0x24] sm:$0xf]
    %v3920 = vld [vmem:[%s4 + $0x28] sm:$0xf]
    %v3921 = vld [vmem:[%s4 + $0x2c] sm:$0xf]
    %v3922 = vld [vmem:[%s4 + $0x30] sm:$0xf]
    %v3923 = vld [vmem:[%s4 + $0x34] sm:$0xf]
    %v3924 = vld [vmem:[%s4 + $0x38] sm:$0xf]
    %v3925 = vld [vmem:[%s4 + $0x3c] sm:$0xf]
    %v3926 = vld [vmem:[%s4 + $0x40] sm:$0xf]
    %v3927 = vld [vmem:[%s4 + $0x44] sm:$0xf]
    %v3928 = vld [vmem:[%s4 + $0x48] sm:$0xf]
    %v3929 = vld [vmem:[%s4 + $0x4c] sm:$0xf]
    %v3930 = vld [vmem:[%s4 + $0x50] sm:$0xf]
    %v3931 = vld [vmem:[%s4 + $0x54] sm:$0xf]
    %v3932 = vld [vmem:[%s4 + $0x58] sm:$0xf]
    %v3933 = vld [vmem:[%s4 + $0x5c] sm:$0xf]
    %v3934 = vld [vmem:[%s4 + $0x60] sm:$0xf]
    %v3935 = vld [vmem:[%s4 + $0x64] sm:$0xf]
    %v3936 = vld [vmem:[%s4 + $0x68] sm:$0xf]
    %v3937 = vld [vmem:[%s4 + $0x6c] sm:$0xf]
    %v3938 = vld [vmem:[%s4 + $0x70] sm:$0xf]
    %v3939 = vld [vmem:[%s4 + $0x74] sm:$0xf]
    %v3940 = vld [vmem:[%s4 + $0x78] sm:$0xf]
    %v3941 = vld [vmem:[%s4 + $0x7c] sm:$0xf]
    %v3942 = vld [vmem:[%s4 + $0x80] sm:$0xf]
    %v3943 = vld [vmem:[%s4 + $0x84] sm:$0xf]
    %v3944 = vld [vmem:[%s4 + $0x88] sm:$0xf]
    %v3945 = vld [vmem:[%s4 + $0x8c] sm:$0xf]
    %v3946 = vld [vmem:[%s4 + $0x90] sm:$0xf]
    %v3947 = vld [vmem:[%s4 + $0x94] sm:$0xf]
    %v3948 = vld [vmem:[%s4 + $0x98] sm:$0xf]
    %v3949 = vld [vmem:[%s4 + $0x9c] sm:$0xf]
    %v3950 = vld [vmem:[%s4 + $0xa0] sm:$0xf]
    %v3951 = vld [vmem:[%s4 + $0xa4] sm:$0xf]
    %v3952 = vld [vmem:[%s4 + $0xa8] sm:$0xf]
    %v3953 = vld [vmem:[%s4 + $0xac] sm:$0xf]
    %v3954 = vld [vmem:[%s4 + $0xb0] sm:$0xf]
    %v3955 = vld [vmem:[%s4 + $0xb4] sm:$0xf]
    %v3956 = vld [vmem:[%s4 + $0xb8] sm:$0xf]
    %v3957 = vld [vmem:[%s4 + $0xbc] sm:$0xf]
    %v3958 = vld [vmem:[%s4 + $0xc0] sm:$0xf]
    %v3959 = vld [vmem:[%s4 + $0xc4] sm:$0xf]
    %v3960 = vld [vmem:[%s4 + $0xc8] sm:$0xf]
    %v3961 = vld [vmem:[%s4 + $0xcc] sm:$0xf]
    %v3962 = vld [vmem:[%s4 + $0xd0] sm:$0xf]
    %v3963 = vld [vmem:[%s4 + $0xd4] sm:$0xf]
    %v3964 = vld [vmem:[%s4 + $0xd8] sm:$0xf]
    %v3965 = vld [vmem:[%s4 + $0xdc] sm:$0xf]
    %v3966 = vld [vmem:[%s4 + $0xe0] sm:$0xf]
    %v3967 = vld [vmem:[%s4 + $0xe4] sm:$0xf]
    %v3968 = vld [vmem:[%s4 + $0xe8] sm:$0xf]
    %v3969 = vld [vmem:[%s4 + $0xec] sm:$0xf]
    %v3970 = vld [vmem:[%s4 + $0xf0] sm:$0xf]
    %v3971 = vld [vmem:[%s4 + $0xf4] sm:$0xf]
    %v3972 = vld [vmem:[%s4 + $0xf8] sm:$0xf]
    %v3973 = vld [vmem:[%s4 + $0xfc] sm:$0xf]
    %3975 = vset.pattern.permute.xlu0 0
    %3976 = vperm.xlu0 %3975, %v3910
    %v3977 = vpop.permute.xlu0 %3976
    %v3980 = vunpack.c.l.s4 839922192
    %v3981 = vunpack.c.0.s8 %v3980
    %v3982 = vlaneseq
    %v3983 = vshrl.u32 %v3982, 7
    %v3984 = vsub.s32 %v3981, %v3983
    %v3985 = vrot.slane %v3977, %v3984
    %3987 = vset.pattern.permute.xlu0 0
    %3988 = vperm.xlu0 %3987, %v3911
    %v3989 = vpop.permute.xlu0 %3988
    %v3992 = vunpack.c.l.s4 839922192
    %v3993 = vunpack.c.0.s8 %v3992
    %v3994 = vlaneseq
    %v3995 = vshrl.u32 %v3994, 7
    %v3996 = vsub.s32 %v3993, %v3995
    %v3997 = vrot.slane %v3989, %v3996
    %3999 = vset.pattern.permute.xlu0 0
    %4000 = vperm.xlu0 %3999, %v3912
    %v4001 = vpop.permute.xlu0 %4000
    %v4004 = vunpack.c.l.s4 839922192
    %v4005 = vunpack.c.0.s8 %v4004
    %v4006 = vlaneseq
    %v4007 = vshrl.u32 %v4006, 7
    %v4008 = vsub.s32 %v4005, %v4007
    %v4009 = vrot.slane %v4001, %v4008
    %4011 = vset.pattern.permute.xlu0 0
    %4012 = vperm.xlu0 %4011, %v3913
    %v4013 = vpop.permute.xlu0 %4012
    %v4016 = vunpack.c.l.s4 839922192
    %v4017 = vunpack.c.0.s8 %v4016
    %v4018 = vlaneseq
    %v4019 = vshrl.u32 %v4018, 7
    %v4020 = vsub.s32 %v4017, %v4019
    %v4021 = vrot.slane %v4013, %v4020
    %4023 = vset.pattern.permute.xlu0 0
    %4024 = vperm.xlu0 %4023, %v3914
    %v4025 = vpop.permute.xlu0 %4024
    %v4028 = vunpack.c.l.s4 839922192
    %v4029 = vunpack.c.0.s8 %v4028
    %v4030 = vlaneseq
    %v4031 = vshrl.u32 %v4030, 7
    %v4032 = vsub.s32 %v4029, %v4031
    %v4033 = vrot.slane %v4025, %v4032
    %4035 = vset.pattern.permute.xlu0 0
    %4036 = vperm.xlu0 %4035, %v3915
    %v4037 = vpop.permute.xlu0 %4036
    %v4040 = vunpack.c.l.s4 839922192
    %v4041 = vunpack.c.0.s8 %v4040
    %v4042 = vlaneseq
    %v4043 = vshrl.u32 %v4042, 7
    %v4044 = vsub.s32 %v4041, %v4043
    %v4045 = vrot.slane %v4037, %v4044
    %4047 = vset.pattern.permute.xlu0 0
    %4048 = vperm.xlu0 %4047, %v3916
    %v4049 = vpop.permute.xlu0 %4048
    %v4052 = vunpack.c.l.s4 839922192
    %v4053 = vunpack.c.0.s8 %v4052
    %v4054 = vlaneseq
    %v4055 = vshrl.u32 %v4054, 7
    %v4056 = vsub.s32 %v4053, %v4055
    %v4057 = vrot.slane %v4049, %v4056
    %4059 = vset.pattern.permute.xlu0 0
    %4060 = vperm.xlu0 %4059, %v3917
    %v4061 = vpop.permute.xlu0 %4060
    %v4064 = vunpack.c.l.s4 839922192
    %v4065 = vunpack.c.0.s8 %v4064
    %v4066 = vlaneseq
    %v4067 = vshrl.u32 %v4066, 7
    %v4068 = vsub.s32 %v4065, %v4067
    %v4069 = vrot.slane %v4061, %v4068
    %4071 = vset.pattern.permute.xlu0 0
    %4072 = vperm.xlu0 %4071, %v3918
    %v4073 = vpop.permute.xlu0 %4072
    %v4076 = vunpack.c.l.s4 839922192
    %v4077 = vunpack.c.0.s8 %v4076
    %v4078 = vlaneseq
    %v4079 = vshrl.u32 %v4078, 7
    %v4080 = vsub.s32 %v4077, %v4079
    %v4081 = vrot.slane %v4073, %v4080
    %4083 = vset.pattern.permute.xlu0 0
    %4084 = vperm.xlu0 %4083, %v3919
    %v4085 = vpop.permute.xlu0 %4084
    %v4088 = vunpack.c.l.s4 839922192
    %v4089 = vunpack.c.0.s8 %v4088
    %v4090 = vlaneseq
    %v4091 = vshrl.u32 %v4090, 7
    %v4092 = vsub.s32 %v4089, %v4091
    %v4093 = vrot.slane %v4085, %v4092
    %4095 = vset.pattern.permute.xlu0 0
    %4096 = vperm.xlu0 %4095, %v3920
    %v4097 = vpop.permute.xlu0 %4096
    %v4100 = vunpack.c.l.s4 839922192
    %v4101 = vunpack.c.0.s8 %v4100
    %v4102 = vlaneseq
    %v4103 = vshrl.u32 %v4102, 7
    %v4104 = vsub.s32 %v4101, %v4103
    %v4105 = vrot.slane %v4097, %v4104
    %4107 = vset.pattern.permute.xlu0 0
    %4108 = vperm.xlu0 %4107, %v3921
    %v4109 = vpop.permute.xlu0 %4108
    %v4112 = vunpack.c.l.s4 839922192
    %v4113 = vunpack.c.0.s8 %v4112
    %v4114 = vlaneseq
    %v4115 = vshrl.u32 %v4114, 7
    %v4116 = vsub.s32 %v4113, %v4115
    %v4117 = vrot.slane %v4109, %v4116
    %4119 = vset.pattern.permute.xlu0 0
    %4120 = vperm.xlu0 %4119, %v3922
    %v4121 = vpop.permute.xlu0 %4120
    %v4124 = vunpack.c.l.s4 839922192
    %v4125 = vunpack.c.0.s8 %v4124
    %v4126 = vlaneseq
    %v4127 = vshrl.u32 %v4126, 7
    %v4128 = vsub.s32 %v4125, %v4127
    %v4129 = vrot.slane %v4121, %v4128
    %4131 = vset.pattern.permute.xlu0 0
    %4132 = vperm.xlu0 %4131, %v3923
    %v4133 = vpop.permute.xlu0 %4132
    %v4136 = vunpack.c.l.s4 839922192
    %v4137 = vunpack.c.0.s8 %v4136
    %v4138 = vlaneseq
    %v4139 = vshrl.u32 %v4138, 7
    %v4140 = vsub.s32 %v4137, %v4139
    %v4141 = vrot.slane %v4133, %v4140
    %4143 = vset.pattern.permute.xlu0 0
    %4144 = vperm.xlu0 %4143, %v3924
    %v4145 = vpop.permute.xlu0 %4144
    %v4148 = vunpack.c.l.s4 839922192
    %v4149 = vunpack.c.0.s8 %v4148
    %v4150 = vlaneseq
    %v4151 = vshrl.u32 %v4150, 7
    %v4152 = vsub.s32 %v4149, %v4151
    %v4153 = vrot.slane %v4145, %v4152
    %4155 = vset.pattern.permute.xlu0 0
    %4156 = vperm.xlu0 %4155, %v3925
    %v4157 = vpop.permute.xlu0 %4156
    %v4160 = vunpack.c.l.s4 839922192
    %v4161 = vunpack.c.0.s8 %v4160
    %v4162 = vlaneseq
    %v4163 = vshrl.u32 %v4162, 7
    %v4164 = vsub.s32 %v4161, %v4163
    %v4165 = vrot.slane %v4157, %v4164
    %4167 = vset.pattern.permute.xlu0 0
    %4168 = vperm.xlu0 %4167, %v3926
    %v4169 = vpop.permute.xlu0 %4168
    %v4172 = vunpack.c.l.s4 839922192
    %v4173 = vunpack.c.0.s8 %v4172
    %v4174 = vlaneseq
    %v4175 = vshrl.u32 %v4174, 7
    %v4176 = vsub.s32 %v4173, %v4175
    %v4177 = vrot.slane %v4169, %v4176
    %4179 = vset.pattern.permute.xlu0 0
    %4180 = vperm.xlu0 %4179, %v3927
    %v4181 = vpop.permute.xlu0 %4180
    %v4184 = vunpack.c.l.s4 839922192
    %v4185 = vunpack.c.0.s8 %v4184
    %v4186 = vlaneseq
    %v4187 = vshrl.u32 %v4186, 7
    %v4188 = vsub.s32 %v4185, %v4187
    %v4189 = vrot.slane %v4181, %v4188
    %4191 = vset.pattern.permute.xlu0 0
    %4192 = vperm.xlu0 %4191, %v3928
    %v4193 = vpop.permute.xlu0 %4192
    %v4196 = vunpack.c.l.s4 839922192
    %v4197 = vunpack.c.0.s8 %v4196
    %v4198 = vlaneseq
    %v4199 = vshrl.u32 %v4198, 7
    %v4200 = vsub.s32 %v4197, %v4199
    %v4201 = vrot.slane %v4193, %v4200
    %4203 = vset.pattern.permute.xlu0 0
    %4204 = vperm.xlu0 %4203, %v3929
    %v4205 = vpop.permute.xlu0 %4204
    %v4208 = vunpack.c.l.s4 839922192
    %v4209 = vunpack.c.0.s8 %v4208
    %v4210 = vlaneseq
    %v4211 = vshrl.u32 %v4210, 7
    %v4212 = vsub.s32 %v4209, %v4211
    %v4213 = vrot.slane %v4205, %v4212
    %4215 = vset.pattern.permute.xlu0 0
    %4216 = vperm.xlu0 %4215, %v3930
    %v4217 = vpop.permute.xlu0 %4216
    %v4220 = vunpack.c.l.s4 839922192
    %v4221 = vunpack.c.0.s8 %v4220
    %v4222 = vlaneseq
    %v4223 = vshrl.u32 %v4222, 7
    %v4224 = vsub.s32 %v4221, %v4223
    %v4225 = vrot.slane %v4217, %v4224
    %4227 = vset.pattern.permute.xlu0 0
    %4228 = vperm.xlu0 %4227, %v3931
    %v4229 = vpop.permute.xlu0 %4228
    %v4232 = vunpack.c.l.s4 839922192
    %v4233 = vunpack.c.0.s8 %v4232
    %v4234 = vlaneseq
    %v4235 = vshrl.u32 %v4234, 7
    %v4236 = vsub.s32 %v4233, %v4235
    %v4237 = vrot.slane %v4229, %v4236
    %4239 = vset.pattern.permute.xlu0 0
    %4240 = vperm.xlu0 %4239, %v3932
    %v4241 = vpop.permute.xlu0 %4240
    %v4244 = vunpack.c.l.s4 839922192
    %v4245 = vunpack.c.0.s8 %v4244
    %v4246 = vlaneseq
    %v4247 = vshrl.u32 %v4246, 7
    %v4248 = vsub.s32 %v4245, %v4247
    %v4249 = vrot.slane %v4241, %v4248
    %4251 = vset.pattern.permute.xlu0 0
    %4252 = vperm.xlu0 %4251, %v3933
    %v4253 = vpop.permute.xlu0 %4252
    %v4256 = vunpack.c.l.s4 839922192
    %v4257 = vunpack.c.0.s8 %v4256
    %v4258 = vlaneseq
    %v4259 = vshrl.u32 %v4258, 7
    %v4260 = vsub.s32 %v4257, %v4259
    %v4261 = vrot.slane %v4253, %v4260
    %4263 = vset.pattern.permute.xlu0 0
    %4264 = vperm.xlu0 %4263, %v3934
    %v4265 = vpop.permute.xlu0 %4264
    %v4268 = vunpack.c.l.s4 839922192
    %v4269 = vunpack.c.0.s8 %v4268
    %v4270 = vlaneseq
    %v4271 = vshrl.u32 %v4270, 7
    %v4272 = vsub.s32 %v4269, %v4271
    %v4273 = vrot.slane %v4265, %v4272
    %4275 = vset.pattern.permute.xlu0 0
    %4276 = vperm.xlu0 %4275, %v3935
    %v4277 = vpop.permute.xlu0 %4276
    %v4280 = vunpack.c.l.s4 839922192
    %v4281 = vunpack.c.0.s8 %v4280
    %v4282 = vlaneseq
    %v4283 = vshrl.u32 %v4282, 7
    %v4284 = vsub.s32 %v4281, %v4283
    %v4285 = vrot.slane %v4277, %v4284
    %4287 = vset.pattern.permute.xlu0 0
    %4288 = vperm.xlu0 %4287, %v3936
    %v4289 = vpop.permute.xlu0 %4288
    %v4292 = vunpack.c.l.s4 839922192
    %v4293 = vunpack.c.0.s8 %v4292
    %v4294 = vlaneseq
    %v4295 = vshrl.u32 %v4294, 7
    %v4296 = vsub.s32 %v4293, %v4295
    %v4297 = vrot.slane %v4289, %v4296
    %4299 = vset.pattern.permute.xlu0 0
    %4300 = vperm.xlu0 %4299, %v3937
    %v4301 = vpop.permute.xlu0 %4300
    %v4304 = vunpack.c.l.s4 839922192
    %v4305 = vunpack.c.0.s8 %v4304
    %v4306 = vlaneseq
    %v4307 = vshrl.u32 %v4306, 7
    %v4308 = vsub.s32 %v4305, %v4307
    %v4309 = vrot.slane %v4301, %v4308
    %4311 = vset.pattern.permute.xlu0 0
    %4312 = vperm.xlu0 %4311, %v3938
    %v4313 = vpop.permute.xlu0 %4312
    %v4316 = vunpack.c.l.s4 839922192
    %v4317 = vunpack.c.0.s8 %v4316
    %v4318 = vlaneseq
    %v4319 = vshrl.u32 %v4318, 7
    %v4320 = vsub.s32 %v4317, %v4319
    %v4321 = vrot.slane %v4313, %v4320
    %4323 = vset.pattern.permute.xlu0 0
    %4324 = vperm.xlu0 %4323, %v3939
    %v4325 = vpop.permute.xlu0 %4324
    %v4328 = vunpack.c.l.s4 839922192
    %v4329 = vunpack.c.0.s8 %v4328
    %v4330 = vlaneseq
    %v4331 = vshrl.u32 %v4330, 7
    %v4332 = vsub.s32 %v4329, %v4331
    %v4333 = vrot.slane %v4325, %v4332
    %4335 = vset.pattern.permute.xlu0 0
    %4336 = vperm.xlu0 %4335, %v3940
    %v4337 = vpop.permute.xlu0 %4336
    %v4340 = vunpack.c.l.s4 839922192
    %v4341 = vunpack.c.0.s8 %v4340
    %v4342 = vlaneseq
    %v4343 = vshrl.u32 %v4342, 7
    %v4344 = vsub.s32 %v4341, %v4343
    %v4345 = vrot.slane %v4337, %v4344
    %4347 = vset.pattern.permute.xlu0 0
    %4348 = vperm.xlu0 %4347, %v3941
    %v4349 = vpop.permute.xlu0 %4348
    %v4352 = vunpack.c.l.s4 839922192
    %v4353 = vunpack.c.0.s8 %v4352
    %v4354 = vlaneseq
    %v4355 = vshrl.u32 %v4354, 7
    %v4356 = vsub.s32 %v4353, %v4355
    %v4357 = vrot.slane %v4349, %v4356
    %4359 = vset.pattern.permute.xlu0 0
    %4360 = vperm.xlu0 %4359, %v3942
    %v4361 = vpop.permute.xlu0 %4360
    %v4364 = vunpack.c.l.s4 839922192
    %v4365 = vunpack.c.0.s8 %v4364
    %v4366 = vlaneseq
    %v4367 = vshrl.u32 %v4366, 7
    %v4368 = vsub.s32 %v4365, %v4367
    %v4369 = vrot.slane %v4361, %v4368
    %4371 = vset.pattern.permute.xlu0 0
    %4372 = vperm.xlu0 %4371, %v3943
    %v4373 = vpop.permute.xlu0 %4372
    %v4376 = vunpack.c.l.s4 839922192
    %v4377 = vunpack.c.0.s8 %v4376
    %v4378 = vlaneseq
    %v4379 = vshrl.u32 %v4378, 7
    %v4380 = vsub.s32 %v4377, %v4379
    %v4381 = vrot.slane %v4373, %v4380
    %4383 = vset.pattern.permute.xlu0 0
    %4384 = vperm.xlu0 %4383, %v3944
    %v4385 = vpop.permute.xlu0 %4384
    %v4388 = vunpack.c.l.s4 839922192
    %v4389 = vunpack.c.0.s8 %v4388
    %v4390 = vlaneseq
    %v4391 = vshrl.u32 %v4390, 7
    %v4392 = vsub.s32 %v4389, %v4391
    %v4393 = vrot.slane %v4385, %v4392
    %4395 = vset.pattern.permute.xlu0 0
    %4396 = vperm.xlu0 %4395, %v3945
    %v4397 = vpop.permute.xlu0 %4396
    %v4400 = vunpack.c.l.s4 839922192
    %v4401 = vunpack.c.0.s8 %v4400
    %v4402 = vlaneseq
    %v4403 = vshrl.u32 %v4402, 7
    %v4404 = vsub.s32 %v4401, %v4403
    %v4405 = vrot.slane %v4397, %v4404
    %4407 = vset.pattern.permute.xlu0 0
    %4408 = vperm.xlu0 %4407, %v3946
    %v4409 = vpop.permute.xlu0 %4408
    %v4412 = vunpack.c.l.s4 839922192
    %v4413 = vunpack.c.0.s8 %v4412
    %v4414 = vlaneseq
    %v4415 = vshrl.u32 %v4414, 7
    %v4416 = vsub.s32 %v4413, %v4415
    %v4417 = vrot.slane %v4409, %v4416
    %4419 = vset.pattern.permute.xlu0 0
    %4420 = vperm.xlu0 %4419, %v3947
    %v4421 = vpop.permute.xlu0 %4420
    %v4424 = vunpack.c.l.s4 839922192
    %v4425 = vunpack.c.0.s8 %v4424
    %v4426 = vlaneseq
    %v4427 = vshrl.u32 %v4426, 7
    %v4428 = vsub.s32 %v4425, %v4427
    %v4429 = vrot.slane %v4421, %v4428
    %4431 = vset.pattern.permute.xlu0 0
    %4432 = vperm.xlu0 %4431, %v3948
    %v4433 = vpop.permute.xlu0 %4432
    %v4436 = vunpack.c.l.s4 839922192
    %v4437 = vunpack.c.0.s8 %v4436
    %v4438 = vlaneseq
    %v4439 = vshrl.u32 %v4438, 7
    %v4440 = vsub.s32 %v4437, %v4439
    %v4441 = vrot.slane %v4433, %v4440
    %4443 = vset.pattern.permute.xlu0 0
    %4444 = vperm.xlu0 %4443, %v3949
    %v4445 = vpop.permute.xlu0 %4444
    %v4448 = vunpack.c.l.s4 839922192
    %v4449 = vunpack.c.0.s8 %v4448
    %v4450 = vlaneseq
    %v4451 = vshrl.u32 %v4450, 7
    %v4452 = vsub.s32 %v4449, %v4451
    %v4453 = vrot.slane %v4445, %v4452
    %4455 = vset.pattern.permute.xlu0 0
    %4456 = vperm.xlu0 %4455, %v3950
    %v4457 = vpop.permute.xlu0 %4456
    %v4460 = vunpack.c.l.s4 839922192
    %v4461 = vunpack.c.0.s8 %v4460
    %v4462 = vlaneseq
    %v4463 = vshrl.u32 %v4462, 7
    %v4464 = vsub.s32 %v4461, %v4463
    %v4465 = vrot.slane %v4457, %v4464
    %4467 = vset.pattern.permute.xlu0 0
    %4468 = vperm.xlu0 %4467, %v3951
    %v4469 = vpop.permute.xlu0 %4468
    %v4472 = vunpack.c.l.s4 839922192
    %v4473 = vunpack.c.0.s8 %v4472
    %v4474 = vlaneseq
    %v4475 = vshrl.u32 %v4474, 7
    %v4476 = vsub.s32 %v4473, %v4475
    %v4477 = vrot.slane %v4469, %v4476
    %4479 = vset.pattern.permute.xlu0 0
    %4480 = vperm.xlu0 %4479, %v3952
    %v4481 = vpop.permute.xlu0 %4480
    %v4484 = vunpack.c.l.s4 839922192
    %v4485 = vunpack.c.0.s8 %v4484
    %v4486 = vlaneseq
    %v4487 = vshrl.u32 %v4486, 7
    %v4488 = vsub.s32 %v4485, %v4487
    %v4489 = vrot.slane %v4481, %v4488
    %4491 = vset.pattern.permute.xlu0 0
    %4492 = vperm.xlu0 %4491, %v3953
    %v4493 = vpop.permute.xlu0 %4492
    %v4496 = vunpack.c.l.s4 839922192
    %v4497 = vunpack.c.0.s8 %v4496
    %v4498 = vlaneseq
    %v4499 = vshrl.u32 %v4498, 7
    %v4500 = vsub.s32 %v4497, %v4499
    %v4501 = vrot.slane %v4493, %v4500
    %4503 = vset.pattern.permute.xlu0 0
    %4504 = vperm.xlu0 %4503, %v3954
    %v4505 = vpop.permute.xlu0 %4504
    %v4508 = vunpack.c.l.s4 839922192
    %v4509 = vunpack.c.0.s8 %v4508
    %v4510 = vlaneseq
    %v4511 = vshrl.u32 %v4510, 7
    %v4512 = vsub.s32 %v4509, %v4511
    %v4513 = vrot.slane %v4505, %v4512
    %4515 = vset.pattern.permute.xlu0 0
    %4516 = vperm.xlu0 %4515, %v3955
    %v4517 = vpop.permute.xlu0 %4516
    %v4520 = vunpack.c.l.s4 839922192
    %v4521 = vunpack.c.0.s8 %v4520
    %v4522 = vlaneseq
    %v4523 = vshrl.u32 %v4522, 7
    %v4524 = vsub.s32 %v4521, %v4523
    %v4525 = vrot.slane %v4517, %v4524
    %4527 = vset.pattern.permute.xlu0 0
    %4528 = vperm.xlu0 %4527, %v3956
    %v4529 = vpop.permute.xlu0 %4528
    %v4532 = vunpack.c.l.s4 839922192
    %v4533 = vunpack.c.0.s8 %v4532
    %v4534 = vlaneseq
    %v4535 = vshrl.u32 %v4534, 7
    %v4536 = vsub.s32 %v4533, %v4535
    %v4537 = vrot.slane %v4529, %v4536
    %4539 = vset.pattern.permute.xlu0 0
    %4540 = vperm.xlu0 %4539, %v3957
    %v4541 = vpop.permute.xlu0 %4540
    %v4544 = vunpack.c.l.s4 839922192
    %v4545 = vunpack.c.0.s8 %v4544
    %v4546 = vlaneseq
    %v4547 = vshrl.u32 %v4546, 7
    %v4548 = vsub.s32 %v4545, %v4547
    %v4549 = vrot.slane %v4541, %v4548
    %4551 = vset.pattern.permute.xlu0 0
    %4552 = vperm.xlu0 %4551, %v3958
    %v4553 = vpop.permute.xlu0 %4552
    %v4556 = vunpack.c.l.s4 839922192
    %v4557 = vunpack.c.0.s8 %v4556
    %v4558 = vlaneseq
    %v4559 = vshrl.u32 %v4558, 7
    %v4560 = vsub.s32 %v4557, %v4559
    %v4561 = vrot.slane %v4553, %v4560
    %4563 = vset.pattern.permute.xlu0 0
    %4564 = vperm.xlu0 %4563, %v3959
    %v4565 = vpop.permute.xlu0 %4564
    %v4568 = vunpack.c.l.s4 839922192
    %v4569 = vunpack.c.0.s8 %v4568
    %v4570 = vlaneseq
    %v4571 = vshrl.u32 %v4570, 7
    %v4572 = vsub.s32 %v4569, %v4571
    %v4573 = vrot.slane %v4565, %v4572
    %4575 = vset.pattern.permute.xlu0 0
    %4576 = vperm.xlu0 %4575, %v3960
    %v4577 = vpop.permute.xlu0 %4576
    %v4580 = vunpack.c.l.s4 839922192
    %v4581 = vunpack.c.0.s8 %v4580
    %v4582 = vlaneseq
    %v4583 = vshrl.u32 %v4582, 7
    %v4584 = vsub.s32 %v4581, %v4583
    %v4585 = vrot.slane %v4577, %v4584
    %4587 = vset.pattern.permute.xlu0 0
    %4588 = vperm.xlu0 %4587, %v3961
    %v4589 = vpop.permute.xlu0 %4588
    %v4592 = vunpack.c.l.s4 839922192
    %v4593 = vunpack.c.0.s8 %v4592
    %v4594 = vlaneseq
    %v4595 = vshrl.u32 %v4594, 7
    %v4596 = vsub.s32 %v4593, %v4595
    %v4597 = vrot.slane %v4589, %v4596
    %4599 = vset.pattern.permute.xlu0 0
    %4600 = vperm.xlu0 %4599, %v3962
    %v4601 = vpop.permute.xlu0 %4600
    %v4604 = vunpack.c.l.s4 839922192
    %v4605 = vunpack.c.0.s8 %v4604
    %v4606 = vlaneseq
    %v4607 = vshrl.u32 %v4606, 7
    %v4608 = vsub.s32 %v4605, %v4607
    %v4609 = vrot.slane %v4601, %v4608
    %4611 = vset.pattern.permute.xlu0 0
    %4612 = vperm.xlu0 %4611, %v3963
    %v4613 = vpop.permute.xlu0 %4612
    %v4616 = vunpack.c.l.s4 839922192
    %v4617 = vunpack.c.0.s8 %v4616
    %v4618 = vlaneseq
    %v4619 = vshrl.u32 %v4618, 7
    %v4620 = vsub.s32 %v4617, %v4619
    %v4621 = vrot.slane %v4613, %v4620
    %4623 = vset.pattern.permute.xlu0 0
    %4624 = vperm.xlu0 %4623, %v3964
    %v4625 = vpop.permute.xlu0 %4624
    %v4628 = vunpack.c.l.s4 839922192
    %v4629 = vunpack.c.0.s8 %v4628
    %v4630 = vlaneseq
    %v4631 = vshrl.u32 %v4630, 7
    %v4632 = vsub.s32 %v4629, %v4631
    %v4633 = vrot.slane %v4625, %v4632
    %4635 = vset.pattern.permute.xlu0 0
    %4636 = vperm.xlu0 %4635, %v3965
    %v4637 = vpop.permute.xlu0 %4636
    %v4640 = vunpack.c.l.s4 839922192
    %v4641 = vunpack.c.0.s8 %v4640
    %v4642 = vlaneseq
    %v4643 = vshrl.u32 %v4642, 7
    %v4644 = vsub.s32 %v4641, %v4643
    %v4645 = vrot.slane %v4637, %v4644
    %4647 = vset.pattern.permute.xlu0 0
    %4648 = vperm.xlu0 %4647, %v3966
    %v4649 = vpop.permute.xlu0 %4648
    %v4652 = vunpack.c.l.s4 839922192
    %v4653 = vunpack.c.0.s8 %v4652
    %v4654 = vlaneseq
    %v4655 = vshrl.u32 %v4654, 7
    %v4656 = vsub.s32 %v4653, %v4655
    %v4657 = vrot.slane %v4649, %v4656
    %4659 = vset.pattern.permute.xlu0 0
    %4660 = vperm.xlu0 %4659, %v3967
    %v4661 = vpop.permute.xlu0 %4660
    %v4664 = vunpack.c.l.s4 839922192
    %v4665 = vunpack.c.0.s8 %v4664
    %v4666 = vlaneseq
    %v4667 = vshrl.u32 %v4666, 7
    %v4668 = vsub.s32 %v4665, %v4667
    %v4669 = vrot.slane %v4661, %v4668
    %4671 = vset.pattern.permute.xlu0 0
    %4672 = vperm.xlu0 %4671, %v3968
    %v4673 = vpop.permute.xlu0 %4672
    %v4676 = vunpack.c.l.s4 839922192
    %v4677 = vunpack.c.0.s8 %v4676
    %v4678 = vlaneseq
    %v4679 = vshrl.u32 %v4678, 7
    %v4680 = vsub.s32 %v4677, %v4679
    %v4681 = vrot.slane %v4673, %v4680
    %4683 = vset.pattern.permute.xlu0 0
    %4684 = vperm.xlu0 %4683, %v3969
    %v4685 = vpop.permute.xlu0 %4684
    %v4688 = vunpack.c.l.s4 839922192
    %v4689 = vunpack.c.0.s8 %v4688
    %v4690 = vlaneseq
    %v4691 = vshrl.u32 %v4690, 7
    %v4692 = vsub.s32 %v4689, %v4691
    %v4693 = vrot.slane %v4685, %v4692
    %4695 = vset.pattern.permute.xlu0 0
    %4696 = vperm.xlu0 %4695, %v3970
    %v4697 = vpop.permute.xlu0 %4696
    %v4700 = vunpack.c.l.s4 839922192
    %v4701 = vunpack.c.0.s8 %v4700
    %v4702 = vlaneseq
    %v4703 = vshrl.u32 %v4702, 7
    %v4704 = vsub.s32 %v4701, %v4703
    %v4705 = vrot.slane %v4697, %v4704
    %4707 = vset.pattern.permute.xlu0 0
    %4708 = vperm.xlu0 %4707, %v3971
    %v4709 = vpop.permute.xlu0 %4708
    %v4712 = vunpack.c.l.s4 839922192
    %v4713 = vunpack.c.0.s8 %v4712
    %v4714 = vlaneseq
    %v4715 = vshrl.u32 %v4714, 7
    %v4716 = vsub.s32 %v4713, %v4715
    %v4717 = vrot.slane %v4709, %v4716
    %4719 = vset.pattern.permute.xlu0 0
    %4720 = vperm.xlu0 %4719, %v3972
    %v4721 = vpop.permute.xlu0 %4720
    %v4724 = vunpack.c.l.s4 839922192
    %v4725 = vunpack.c.0.s8 %v4724
    %v4726 = vlaneseq
    %v4727 = vshrl.u32 %v4726, 7
    %v4728 = vsub.s32 %v4725, %v4727
    %v4729 = vrot.slane %v4721, %v4728
    %4731 = vset.pattern.permute.xlu0 0
    %4732 = vperm.xlu0 %4731, %v3973
    %v4733 = vpop.permute.xlu0 %4732
    %v4736 = vunpack.c.l.s4 839922192
    %v4737 = vunpack.c.0.s8 %v4736
    %v4738 = vlaneseq
    %v4739 = vshrl.u32 %v4738, 7
    %v4740 = vsub.s32 %v4737, %v4739
    %v4741 = vrot.slane %v4733, %v4740
    %v4806 = vunpack.c.l.b16 %v3985
    %v4807 = vunpack.c.l.b16 %v3997
    %v4808 = vunpack.c.l.b16 %v4009
    %v4809 = vunpack.c.l.b16 %v4021
    %v4810 = vunpack.c.l.b16 %v4033
    %v4811 = vunpack.c.l.b16 %v4045
    %v4812 = vunpack.c.l.b16 %v4057
    %v4813 = vunpack.c.l.b16 %v4069
    %v4814 = vunpack.c.l.b16 %v4081
    %v4815 = vunpack.c.l.b16 %v4093
    %v4816 = vunpack.c.l.b16 %v4105
    %v4817 = vunpack.c.l.b16 %v4117
    %v4818 = vunpack.c.l.b16 %v4129
    %v4819 = vunpack.c.l.b16 %v4141
    %v4820 = vunpack.c.l.b16 %v4153
    %v4821 = vunpack.c.l.b16 %v4165
    %v4822 = vunpack.c.l.b16 %v4177
    %v4823 = vunpack.c.l.b16 %v4189
    %v4824 = vunpack.c.l.b16 %v4201
    %v4825 = vunpack.c.l.b16 %v4213
    %v4826 = vunpack.c.l.b16 %v4225
    %v4827 = vunpack.c.l.b16 %v4237
    %v4828 = vunpack.c.l.b16 %v4249
    %v4829 = vunpack.c.l.b16 %v4261
    %v4830 = vunpack.c.l.b16 %v4273
    %v4831 = vunpack.c.l.b16 %v4285
    %v4832 = vunpack.c.l.b16 %v4297
    %v4833 = vunpack.c.l.b16 %v4309
    %v4834 = vunpack.c.l.b16 %v4321
    %v4835 = vunpack.c.l.b16 %v4333
    %v4836 = vunpack.c.l.b16 %v4345
    %v4837 = vunpack.c.l.b16 %v4357
    %v4838 = vunpack.c.l.b16 %v4369
    %v4839 = vunpack.c.l.b16 %v4381
    %v4840 = vunpack.c.l.b16 %v4393
    %v4841 = vunpack.c.l.b16 %v4405
    %v4842 = vunpack.c.l.b16 %v4417
    %v4843 = vunpack.c.l.b16 %v4429
    %v4844 = vunpack.c.l.b16 %v4441
    %v4845 = vunpack.c.l.b16 %v4453
    %v4846 = vunpack.c.l.b16 %v4465
    %v4847 = vunpack.c.l.b16 %v4477
    %v4848 = vunpack.c.l.b16 %v4489
    %v4849 = vunpack.c.l.b16 %v4501
    %v4850 = vunpack.c.l.b16 %v4513
    %v4851 = vunpack.c.l.b16 %v4525
    %v4852 = vunpack.c.l.b16 %v4537
    %v4853 = vunpack.c.l.b16 %v4549
    %v4854 = vunpack.c.l.b16 %v4561
    %v4855 = vunpack.c.l.b16 %v4573
    %v4856 = vunpack.c.l.b16 %v4585
    %v4857 = vunpack.c.l.b16 %v4597
    %v4858 = vunpack.c.l.b16 %v4609
    %v4859 = vunpack.c.l.b16 %v4621
    %v4860 = vunpack.c.l.b16 %v4633
    %v4861 = vunpack.c.l.b16 %v4645
    %v4862 = vunpack.c.l.b16 %v4657
    %v4863 = vunpack.c.l.b16 %v4669
    %v4864 = vunpack.c.l.b16 %v4681
    %v4865 = vunpack.c.l.b16 %v4693
    %v4866 = vunpack.c.l.b16 %v4705
    %v4867 = vunpack.c.l.b16 %v4717
    %v4868 = vunpack.c.l.b16 %v4729
    %v4869 = vunpack.c.l.b16 %v4741
    %v4870 = vpack.c.b16 %v4807, %v4806
    %v4871 = vpack.c.b16 %v4809, %v4808
    %v4872 = vpack.c.b16 %v4811, %v4810
    %v4873 = vpack.c.b16 %v4813, %v4812
    %v4874 = vpack.c.b16 %v4815, %v4814
    %v4875 = vpack.c.b16 %v4817, %v4816
    %v4876 = vpack.c.b16 %v4819, %v4818
    %v4877 = vpack.c.b16 %v4821, %v4820
    %v4878 = vpack.c.b16 %v4823, %v4822
    %v4879 = vpack.c.b16 %v4825, %v4824
    %v4880 = vpack.c.b16 %v4827, %v4826
    %v4881 = vpack.c.b16 %v4829, %v4828
    %v4882 = vpack.c.b16 %v4831, %v4830
    %v4883 = vpack.c.b16 %v4833, %v4832
    %v4884 = vpack.c.b16 %v4835, %v4834
    %v4885 = vpack.c.b16 %v4837, %v4836
    %v4886 = vpack.c.b16 %v4839, %v4838
    %v4887 = vpack.c.b16 %v4841, %v4840
    %v4888 = vpack.c.b16 %v4843, %v4842
    %v4889 = vpack.c.b16 %v4845, %v4844
    %v4890 = vpack.c.b16 %v4847, %v4846
    %v4891 = vpack.c.b16 %v4849, %v4848
    %v4892 = vpack.c.b16 %v4851, %v4850
    %v4893 = vpack.c.b16 %v4853, %v4852
    %v4894 = vpack.c.b16 %v4855, %v4854
    %v4895 = vpack.c.b16 %v4857, %v4856
    %v4896 = vpack.c.b16 %v4859, %v4858
    %v4897 = vpack.c.b16 %v4861, %v4860
    %v4898 = vpack.c.b16 %v4863, %v4862
    %v4899 = vpack.c.b16 %v4865, %v4864
    %v4900 = vpack.c.b16 %v4867, %v4866
    %v4901 = vpack.c.b16 %v4869, %v4868
    %v4934 = vadd.bf16 %v3846, %v4870
    %v4935 = vadd.bf16 %v3847, %v4870
    %v4936 = vadd.bf16 %v3848, %v4871
    %v4937 = vadd.bf16 %v3849, %v4871
    %v4938 = vadd.bf16 %v3850, %v4872
    %v4939 = vadd.bf16 %v3851, %v4872
    %v4940 = vadd.bf16 %v3852, %v4873
    %v4941 = vadd.bf16 %v3853, %v4873
    %v4942 = vadd.bf16 %v3854, %v4874
    %v4943 = vadd.bf16 %v3855, %v4874
    %v4944 = vadd.bf16 %v3856, %v4875
    %v4945 = vadd.bf16 %v3857, %v4875
    %v4946 = vadd.bf16 %v3858, %v4876
    %v4947 = vadd.bf16 %v3859, %v4876
    %v4948 = vadd.bf16 %v3860, %v4877
    %v4949 = vadd.bf16 %v3861, %v4877
    %v4950 = vadd.bf16 %v3862, %v4878
    %v4951 = vadd.bf16 %v3863, %v4878
    %v4952 = vadd.bf16 %v3864, %v4879
    %v4953 = vadd.bf16 %v3865, %v4879
    %v4954 = vadd.bf16 %v3866, %v4880
    %v4955 = vadd.bf16 %v3867, %v4880
    %v4956 = vadd.bf16 %v3868, %v4881
    %v4957 = vadd.bf16 %v3869, %v4881
    %v4958 = vadd.bf16 %v3870, %v4882
    %v4959 = vadd.bf16 %v3871, %v4882
    %v4960 = vadd.bf16 %v3872, %v4883
    %v4961 = vadd.bf16 %v3873, %v4883
    %v4962 = vadd.bf16 %v3874, %v4884
    %v4963 = vadd.bf16 %v3875, %v4884
    %v4964 = vadd.bf16 %v3876, %v4885
    %v4965 = vadd.bf16 %v3877, %v4885
    %v4966 = vadd.bf16 %v3878, %v4886
    %v4967 = vadd.bf16 %v3879, %v4886
    %v4968 = vadd.bf16 %v3880, %v4887
    %v4969 = vadd.bf16 %v3881, %v4887
    %v4970 = vadd.bf16 %v3882, %v4888
    %v4971 = vadd.bf16 %v3883, %v4888
    %v4972 = vadd.bf16 %v3884, %v4889
    %v4973 = vadd.bf16 %v3885, %v4889
    %v4974 = vadd.bf16 %v3886, %v4890
    %v4975 = vadd.bf16 %v3887, %v4890
    %v4976 = vadd.bf16 %v3888, %v4891
    %v4977 = vadd.bf16 %v3889, %v4891
    %v4978 = vadd.bf16 %v3890, %v4892
    %v4979 = vadd.bf16 %v3891, %v4892
    %v4980 = vadd.bf16 %v3892, %v4893
    %v4981 = vadd.bf16 %v3893, %v4893
    %v4982 = vadd.bf16 %v3894, %v4894
    %v4983 = vadd.bf16 %v3895, %v4894
    %v4984 = vadd.bf16 %v3896, %v4895
    %v4985 = vadd.bf16 %v3897, %v4895
    %v4986 = vadd.bf16 %v3898, %v4896
    %v4987 = vadd.bf16 %v3899, %v4896
    %v4988 = vadd.bf16 %v3900, %v4897
    %v4989 = vadd.bf16 %v3901, %v4897
    %v4990 = vadd.bf16 %v3902, %v4898
    %v4991 = vadd.bf16 %v3903, %v4898
    %v4992 = vadd.bf16 %v3904, %v4899
    %v4993 = vadd.bf16 %v3905, %v4899
    %v4994 = vadd.bf16 %v3906, %v4900
    %v4995 = vadd.bf16 %v3907, %v4900
    %v4996 = vadd.bf16 %v3908, %v4901
    %v4997 = vadd.bf16 %v3909, %v4901
    %v4998 = vmax.bf16 %v4934, 0
    %v4999 = vmax.bf16 %v4935, 0
    %v5000 = vmax.bf16 %v4936, 0
    %v5001 = vmax.bf16 %v4937, 0
    %v5002 = vmax.bf16 %v4938, 0
    %v5003 = vmax.bf16 %v4939, 0
    %v5004 = vmax.bf16 %v4940, 0
    %v5005 = vmax.bf16 %v4941, 0
    %v5006 = vmax.bf16 %v4942, 0
    %v5007 = vmax.bf16 %v4943, 0
    %v5008 = vmax.bf16 %v4944, 0
    %v5009 = vmax.bf16 %v4945, 0
    %v5010 = vmax.bf16 %v4946, 0
    %v5011 = vmax.bf16 %v4947, 0
    %v5012 = vmax.bf16 %v4948, 0
    %v5013 = vmax.bf16 %v4949, 0
    %v5014 = vmax.bf16 %v4950, 0
    %v5015 = vmax.bf16 %v4951, 0
    %v5016 = vmax.bf16 %v4952, 0
    %v5017 = vmax.bf16 %v4953, 0
    %v5018 = vmax.bf16 %v4954, 0
    %v5019 = vmax.bf16 %v4955, 0
    %v5020 = vmax.bf16 %v4956, 0
    %v5021 = vmax.bf16 %v4957, 0
    %v5022 = vmax.bf16 %v4958, 0
    %v5023 = vmax.bf16 %v4959, 0
    %v5024 = vmax.bf16 %v4960, 0
    %v5025 = vmax.bf16 %v4961, 0
    %v5026 = vmax.bf16 %v4962, 0
    %v5027 = vmax.bf16 %v4963, 0
    %v5028 = vmax.bf16 %v4964, 0
    %v5029 = vmax.bf16 %v4965, 0
    %v5030 = vmax.bf16 %v4966, 0
    %v5031 = vmax.bf16 %v4967, 0
    %v5032 = vmax.bf16 %v4968, 0
    %v5033 = vmax.bf16 %v4969, 0
    %v5034 = vmax.bf16 %v4970, 0
    %v5035 = vmax.bf16 %v4971, 0
    %v5036 = vmax.bf16 %v4972, 0
    %v5037 = vmax.bf16 %v4973, 0
    %v5038 = vmax.bf16 %v4974, 0
    %v5039 = vmax.bf16 %v4975, 0
    %v5040 = vmax.bf16 %v4976, 0
    %v5041 = vmax.bf16 %v4977, 0
    %v5042 = vmax.bf16 %v4978, 0
    %v5043 = vmax.bf16 %v4979, 0
    %v5044 = vmax.bf16 %v4980, 0
    %v5045 = vmax.bf16 %v4981, 0
    %v5046 = vmax.bf16 %v4982, 0
    %v5047 = vmax.bf16 %v4983, 0
    %v5048 = vmax.bf16 %v4984, 0
    %v5049 = vmax.bf16 %v4985, 0
    %v5050 = vmax.bf16 %v4986, 0
    %v5051 = vmax.bf16 %v4987, 0
    %v5052 = vmax.bf16 %v4988, 0
    %v5053 = vmax.bf16 %v4989, 0
    %v5054 = vmax.bf16 %v4990, 0
    %v5055 = vmax.bf16 %v4991, 0
    %v5056 = vmax.bf16 %v4992, 0
    %v5057 = vmax.bf16 %v4993, 0
    %v5058 = vmax.bf16 %v4994, 0
    %v5059 = vmax.bf16 %v4995, 0
    %v5060 = vmax.bf16 %v4996, 0
    %v5061 = vmax.bf16 %v4997, 0
    %v5062 = vld [vmem:[%s5] sm:$0xff]
    %v5063 = vld [vmem:[%s5 + $0x8] sm:$0xff]
    %v5064 = vld [vmem:[%s5 + $0x10] sm:$0xff]
    %v5065 = vld [vmem:[%s5 + $0x18] sm:$0xff]
    %v5066 = vld [vmem:[%s5 + $0x20] sm:$0xff]
    %v5067 = vld [vmem:[%s5 + $0x28] sm:$0xff]
    %v5068 = vld [vmem:[%s5 + $0x30] sm:$0xff]
    %v5069 = vld [vmem:[%s5 + $0x38] sm:$0xff]
    %v5070 = vld [vmem:[%s5 + $0x40] sm:$0xff]
    %v5071 = vld [vmem:[%s5 + $0x48] sm:$0xff]
    %v5072 = vld [vmem:[%s5 + $0x50] sm:$0xff]
    %v5073 = vld [vmem:[%s5 + $0x58] sm:$0xff]
    %v5074 = vld [vmem:[%s5 + $0x60] sm:$0xff]
    %v5075 = vld [vmem:[%s5 + $0x68] sm:$0xff]
    %v5076 = vld [vmem:[%s5 + $0x70] sm:$0xff]
    %v5077 = vld [vmem:[%s5 + $0x78] sm:$0xff]
    %v5078 = vld [vmem:[%s5 + $0x80] sm:$0xff]
    %v5079 = vld [vmem:[%s5 + $0x88] sm:$0xff]
    %v5080 = vld [vmem:[%s5 + $0x90] sm:$0xff]
    %v5081 = vld [vmem:[%s5 + $0x98] sm:$0xff]
    %v5082 = vld [vmem:[%s5 + $0xa0] sm:$0xff]
    %v5083 = vld [vmem:[%s5 + $0xa8] sm:$0xff]
    %v5084 = vld [vmem:[%s5 + $0xb0] sm:$0xff]
    %v5085 = vld [vmem:[%s5 + $0xb8] sm:$0xff]
    %v5086 = vld [vmem:[%s5 + $0xc0] sm:$0xff]
    %v5087 = vld [vmem:[%s5 + $0xc8] sm:$0xff]
    %v5088 = vld [vmem:[%s5 + $0xd0] sm:$0xff]
    %v5089 = vld [vmem:[%s5 + $0xd8] sm:$0xff]
    %v5090 = vld [vmem:[%s5 + $0xe0] sm:$0xff]
    %v5091 = vld [vmem:[%s5 + $0xe8] sm:$0xff]
    %v5092 = vld [vmem:[%s5 + $0xf0] sm:$0xff]
    %v5093 = vld [vmem:[%s5 + $0xf8] sm:$0xff]
    %v5094 = vld [vmem:[%s5 + $0x100] sm:$0xff]
    %v5095 = vld [vmem:[%s5 + $0x108] sm:$0xff]
    %v5096 = vld [vmem:[%s5 + $0x110] sm:$0xff]
    %v5097 = vld [vmem:[%s5 + $0x118] sm:$0xff]
    %v5098 = vld [vmem:[%s5 + $0x120] sm:$0xff]
    %v5099 = vld [vmem:[%s5 + $0x128] sm:$0xff]
    %v5100 = vld [vmem:[%s5 + $0x130] sm:$0xff]
    %v5101 = vld [vmem:[%s5 + $0x138] sm:$0xff]
    %v5102 = vld [vmem:[%s5 + $0x140] sm:$0xff]
    %v5103 = vld [vmem:[%s5 + $0x148] sm:$0xff]
    %v5104 = vld [vmem:[%s5 + $0x150] sm:$0xff]
    %v5105 = vld [vmem:[%s5 + $0x158] sm:$0xff]
    %v5106 = vld [vmem:[%s5 + $0x160] sm:$0xff]
    %v5107 = vld [vmem:[%s5 + $0x168] sm:$0xff]
    %v5108 = vld [vmem:[%s5 + $0x170] sm:$0xff]
    %v5109 = vld [vmem:[%s5 + $0x178] sm:$0xff]
    %v5110 = vld [vmem:[%s5 + $0x180] sm:$0xff]
    %v5111 = vld [vmem:[%s5 + $0x188] sm:$0xff]
    %v5112 = vld [vmem:[%s5 + $0x190] sm:$0xff]
    %v5113 = vld [vmem:[%s5 + $0x198] sm:$0xff]
    %v5114 = vld [vmem:[%s5 + $0x1a0] sm:$0xff]
    %v5115 = vld [vmem:[%s5 + $0x1a8] sm:$0xff]
    %v5116 = vld [vmem:[%s5 + $0x1b0] sm:$0xff]
    %v5117 = vld [vmem:[%s5 + $0x1b8] sm:$0xff]
    %v5118 = vld [vmem:[%s5 + $0x1c0] sm:$0xff]
    %v5119 = vld [vmem:[%s5 + $0x1c8] sm:$0xff]
    %v5120 = vld [vmem:[%s5 + $0x1d0] sm:$0xff]
    %v5121 = vld [vmem:[%s5 + $0x1d8] sm:$0xff]
    %v5122 = vld [vmem:[%s5 + $0x1e0] sm:$0xff]
    %v5123 = vld [vmem:[%s5 + $0x1e8] sm:$0xff]
    %v5124 = vld [vmem:[%s5 + $0x1f0] sm:$0xff]
    %v5125 = vld [vmem:[%s5 + $0x1f8] sm:$0xff]
    %v5126 = vld [vmem:[%s5 + $0x200] sm:$0xff]
    %v5127 = vld [vmem:[%s5 + $0x208] sm:$0xff]
    %v5128 = vld [vmem:[%s5 + $0x210] sm:$0xff]
    %v5129 = vld [vmem:[%s5 + $0x218] sm:$0xff]
    %v5130 = vld [vmem:[%s5 + $0x220] sm:$0xff]
    %v5131 = vld [vmem:[%s5 + $0x228] sm:$0xff]
    %v5132 = vld [vmem:[%s5 + $0x230] sm:$0xff]
    %v5133 = vld [vmem:[%s5 + $0x238] sm:$0xff]
    %v5134 = vld [vmem:[%s5 + $0x240] sm:$0xff]
    %v5135 = vld [vmem:[%s5 + $0x248] sm:$0xff]
    %v5136 = vld [vmem:[%s5 + $0x250] sm:$0xff]
    %v5137 = vld [vmem:[%s5 + $0x258] sm:$0xff]
    %v5138 = vld [vmem:[%s5 + $0x260] sm:$0xff]
    %v5139 = vld [vmem:[%s5 + $0x268] sm:$0xff]
    %v5140 = vld [vmem:[%s5 + $0x270] sm:$0xff]
    %v5141 = vld [vmem:[%s5 + $0x278] sm:$0xff]
    %v5142 = vld [vmem:[%s5 + $0x280] sm:$0xff]
    %v5143 = vld [vmem:[%s5 + $0x288] sm:$0xff]
    %v5144 = vld [vmem:[%s5 + $0x290] sm:$0xff]
    %v5145 = vld [vmem:[%s5 + $0x298] sm:$0xff]
    %v5146 = vld [vmem:[%s5 + $0x2a0] sm:$0xff]
    %v5147 = vld [vmem:[%s5 + $0x2a8] sm:$0xff]
    %v5148 = vld [vmem:[%s5 + $0x2b0] sm:$0xff]
    %v5149 = vld [vmem:[%s5 + $0x2b8] sm:$0xff]
    %v5150 = vld [vmem:[%s5 + $0x2c0] sm:$0xff]
    %v5151 = vld [vmem:[%s5 + $0x2c8] sm:$0xff]
    %v5152 = vld [vmem:[%s5 + $0x2d0] sm:$0xff]
    %v5153 = vld [vmem:[%s5 + $0x2d8] sm:$0xff]
    %v5154 = vld [vmem:[%s5 + $0x2e0] sm:$0xff]
    %v5155 = vld [vmem:[%s5 + $0x2e8] sm:$0xff]
    %v5156 = vld [vmem:[%s5 + $0x2f0] sm:$0xff]
    %v5157 = vld [vmem:[%s5 + $0x2f8] sm:$0xff]
    %v5158 = vld [vmem:[%s5 + $0x300] sm:$0xff]
    %v5159 = vld [vmem:[%s5 + $0x308] sm:$0xff]
    %v5160 = vld [vmem:[%s5 + $0x310] sm:$0xff]
    %v5161 = vld [vmem:[%s5 + $0x318] sm:$0xff]
    %v5162 = vld [vmem:[%s5 + $0x320] sm:$0xff]
    %v5163 = vld [vmem:[%s5 + $0x328] sm:$0xff]
    %v5164 = vld [vmem:[%s5 + $0x330] sm:$0xff]
    %v5165 = vld [vmem:[%s5 + $0x338] sm:$0xff]
    %v5166 = vld [vmem:[%s5 + $0x340] sm:$0xff]
    %v5167 = vld [vmem:[%s5 + $0x348] sm:$0xff]
    %v5168 = vld [vmem:[%s5 + $0x350] sm:$0xff]
    %v5169 = vld [vmem:[%s5 + $0x358] sm:$0xff]
    %v5170 = vld [vmem:[%s5 + $0x360] sm:$0xff]
    %v5171 = vld [vmem:[%s5 + $0x368] sm:$0xff]
    %v5172 = vld [vmem:[%s5 + $0x370] sm:$0xff]
    %v5173 = vld [vmem:[%s5 + $0x378] sm:$0xff]
    %v5174 = vld [vmem:[%s5 + $0x380] sm:$0xff]
    %v5175 = vld [vmem:[%s5 + $0x388] sm:$0xff]
    %v5176 = vld [vmem:[%s5 + $0x390] sm:$0xff]
    %v5177 = vld [vmem:[%s5 + $0x398] sm:$0xff]
    %v5178 = vld [vmem:[%s5 + $0x3a0] sm:$0xff]
    %v5179 = vld [vmem:[%s5 + $0x3a8] sm:$0xff]
    %v5180 = vld [vmem:[%s5 + $0x3b0] sm:$0xff]
    %v5181 = vld [vmem:[%s5 + $0x3b8] sm:$0xff]
    %v5182 = vld [vmem:[%s5 + $0x3c0] sm:$0xff]
    %v5183 = vld [vmem:[%s5 + $0x3c8] sm:$0xff]
    %v5184 = vld [vmem:[%s5 + $0x3d0] sm:$0xff]
    %v5185 = vld [vmem:[%s5 + $0x3d8] sm:$0xff]
    %v5186 = vld [vmem:[%s5 + $0x3e0] sm:$0xff]
    %v5187 = vld [vmem:[%s5 + $0x3e8] sm:$0xff]
    %v5188 = vld [vmem:[%s5 + $0x3f0] sm:$0xff]
    %v5189 = vld [vmem:[%s5 + $0x3f8] sm:$0xff]
    %v5318 = vunpack.c.l.b16 %v5062
    %v5319 = vunpack.c.h.b16 %v5062
    %v5320 = vunpack.c.l.b16 %v5063
    %v5321 = vunpack.c.h.b16 %v5063
    %v5322 = vunpack.c.l.b16 %v5064
    %v5323 = vunpack.c.h.b16 %v5064
    %v5324 = vunpack.c.l.b16 %v5065
    %v5325 = vunpack.c.h.b16 %v5065
    %v5326 = vunpack.c.l.b16 %v5066
    %v5327 = vunpack.c.h.b16 %v5066
    %v5328 = vunpack.c.l.b16 %v5067
    %v5329 = vunpack.c.h.b16 %v5067
    %v5330 = vunpack.c.l.b16 %v5068
    %v5331 = vunpack.c.h.b16 %v5068
    %v5332 = vunpack.c.l.b16 %v5069
    %v5333 = vunpack.c.h.b16 %v5069
    %v5334 = vunpack.c.l.b16 %v5070
    %v5335 = vunpack.c.h.b16 %v5070
    %v5336 = vunpack.c.l.b16 %v5071
    %v5337 = vunpack.c.h.b16 %v5071
    %v5338 = vunpack.c.l.b16 %v5072
    %v5339 = vunpack.c.h.b16 %v5072
    %v5340 = vunpack.c.l.b16 %v5073
    %v5341 = vunpack.c.h.b16 %v5073
    %v5342 = vunpack.c.l.b16 %v5074
    %v5343 = vunpack.c.h.b16 %v5074
    %v5344 = vunpack.c.l.b16 %v5075
    %v5345 = vunpack.c.h.b16 %v5075
    %v5346 = vunpack.c.l.b16 %v5076
    %v5347 = vunpack.c.h.b16 %v5076
    %v5348 = vunpack.c.l.b16 %v5077
    %v5349 = vunpack.c.h.b16 %v5077
    %v5350 = vunpack.c.l.b16 %v5078
    %v5351 = vunpack.c.h.b16 %v5078
    %v5352 = vunpack.c.l.b16 %v5079
    %v5353 = vunpack.c.h.b16 %v5079
    %v5354 = vunpack.c.l.b16 %v5080
    %v5355 = vunpack.c.h.b16 %v5080
    %v5356 = vunpack.c.l.b16 %v5081
    %v5357 = vunpack.c.h.b16 %v5081
    %v5358 = vunpack.c.l.b16 %v5082
    %v5359 = vunpack.c.h.b16 %v5082
    %v5360 = vunpack.c.l.b16 %v5083
    %v5361 = vunpack.c.h.b16 %v5083
    %v5362 = vunpack.c.l.b16 %v5084
    %v5363 = vunpack.c.h.b16 %v5084
    %v5364 = vunpack.c.l.b16 %v5085
    %v5365 = vunpack.c.h.b16 %v5085
    %v5366 = vunpack.c.l.b16 %v5086
    %v5367 = vunpack.c.h.b16 %v5086
    %v5368 = vunpack.c.l.b16 %v5087
    %v5369 = vunpack.c.h.b16 %v5087
    %v5370 = vunpack.c.l.b16 %v5088
    %v5371 = vunpack.c.h.b16 %v5088
    %v5372 = vunpack.c.l.b16 %v5089
    %v5373 = vunpack.c.h.b16 %v5089
    %v5374 = vunpack.c.l.b16 %v5090
    %v5375 = vunpack.c.h.b16 %v5090
    %v5376 = vunpack.c.l.b16 %v5091
    %v5377 = vunpack.c.h.b16 %v5091
    %v5378 = vunpack.c.l.b16 %v5092
    %v5379 = vunpack.c.h.b16 %v5092
    %v5380 = vunpack.c.l.b16 %v5093
    %v5381 = vunpack.c.h.b16 %v5093
    %v5382 = vunpack.c.l.b16 %v5094
    %v5383 = vunpack.c.h.b16 %v5094
    %v5384 = vunpack.c.l.b16 %v5095
    %v5385 = vunpack.c.h.b16 %v5095
    %v5386 = vunpack.c.l.b16 %v5096
    %v5387 = vunpack.c.h.b16 %v5096
    %v5388 = vunpack.c.l.b16 %v5097
    %v5389 = vunpack.c.h.b16 %v5097
    %v5390 = vunpack.c.l.b16 %v5098
    %v5391 = vunpack.c.h.b16 %v5098
    %v5392 = vunpack.c.l.b16 %v5099
    %v5393 = vunpack.c.h.b16 %v5099
    %v5394 = vunpack.c.l.b16 %v5100
    %v5395 = vunpack.c.h.b16 %v5100
    %v5396 = vunpack.c.l.b16 %v5101
    %v5397 = vunpack.c.h.b16 %v5101
    %v5398 = vunpack.c.l.b16 %v5102
    %v5399 = vunpack.c.h.b16 %v5102
    %v5400 = vunpack.c.l.b16 %v5103
    %v5401 = vunpack.c.h.b16 %v5103
    %v5402 = vunpack.c.l.b16 %v5104
    %v5403 = vunpack.c.h.b16 %v5104
    %v5404 = vunpack.c.l.b16 %v5105
    %v5405 = vunpack.c.h.b16 %v5105
    %v5406 = vunpack.c.l.b16 %v5106
    %v5407 = vunpack.c.h.b16 %v5106
    %v5408 = vunpack.c.l.b16 %v5107
    %v5409 = vunpack.c.h.b16 %v5107
    %v5410 = vunpack.c.l.b16 %v5108
    %v5411 = vunpack.c.h.b16 %v5108
    %v5412 = vunpack.c.l.b16 %v5109
    %v5413 = vunpack.c.h.b16 %v5109
    %v5414 = vunpack.c.l.b16 %v5110
    %v5415 = vunpack.c.h.b16 %v5110
    %v5416 = vunpack.c.l.b16 %v5111
    %v5417 = vunpack.c.h.b16 %v5111
    %v5418 = vunpack.c.l.b16 %v5112
    %v5419 = vunpack.c.h.b16 %v5112
    %v5420 = vunpack.c.l.b16 %v5113
    %v5421 = vunpack.c.h.b16 %v5113
    %v5422 = vunpack.c.l.b16 %v5114
    %v5423 = vunpack.c.h.b16 %v5114
    %v5424 = vunpack.c.l.b16 %v5115
    %v5425 = vunpack.c.h.b16 %v5115
    %v5426 = vunpack.c.l.b16 %v5116
    %v5427 = vunpack.c.h.b16 %v5116
    %v5428 = vunpack.c.l.b16 %v5117
    %v5429 = vunpack.c.h.b16 %v5117
    %v5430 = vunpack.c.l.b16 %v5118
    %v5431 = vunpack.c.h.b16 %v5118
    %v5432 = vunpack.c.l.b16 %v5119
    %v5433 = vunpack.c.h.b16 %v5119
    %v5434 = vunpack.c.l.b16 %v5120
    %v5435 = vunpack.c.h.b16 %v5120
    %v5436 = vunpack.c.l.b16 %v5121
    %v5437 = vunpack.c.h.b16 %v5121
    %v5438 = vunpack.c.l.b16 %v5122
    %v5439 = vunpack.c.h.b16 %v5122
    %v5440 = vunpack.c.l.b16 %v5123
    %v5441 = vunpack.c.h.b16 %v5123
    %v5442 = vunpack.c.l.b16 %v5124
    %v5443 = vunpack.c.h.b16 %v5124
    %v5444 = vunpack.c.l.b16 %v5125
    %v5445 = vunpack.c.h.b16 %v5125
    %v5446 = vunpack.c.l.b16 %v5126
    %v5447 = vunpack.c.h.b16 %v5126
    %v5448 = vunpack.c.l.b16 %v5127
    %v5449 = vunpack.c.h.b16 %v5127
    %v5450 = vunpack.c.l.b16 %v5128
    %v5451 = vunpack.c.h.b16 %v5128
    %v5452 = vunpack.c.l.b16 %v5129
    %v5453 = vunpack.c.h.b16 %v5129
    %v5454 = vunpack.c.l.b16 %v5130
    %v5455 = vunpack.c.h.b16 %v5130
    %v5456 = vunpack.c.l.b16 %v5131
    %v5457 = vunpack.c.h.b16 %v5131
    %v5458 = vunpack.c.l.b16 %v5132
    %v5459 = vunpack.c.h.b16 %v5132
    %v5460 = vunpack.c.l.b16 %v5133
    %v5461 = vunpack.c.h.b16 %v5133
    %v5462 = vunpack.c.l.b16 %v5134
    %v5463 = vunpack.c.h.b16 %v5134
    %v5464 = vunpack.c.l.b16 %v5135
    %v5465 = vunpack.c.h.b16 %v5135
    %v5466 = vunpack.c.l.b16 %v5136
    %v5467 = vunpack.c.h.b16 %v5136
    %v5468 = vunpack.c.l.b16 %v5137
    %v5469 = vunpack.c.h.b16 %v5137
    %v5470 = vunpack.c.l.b16 %v5138
    %v5471 = vunpack.c.h.b16 %v5138
    %v5472 = vunpack.c.l.b16 %v5139
    %v5473 = vunpack.c.h.b16 %v5139
    %v5474 = vunpack.c.l.b16 %v5140
    %v5475 = vunpack.c.h.b16 %v5140
    %v5476 = vunpack.c.l.b16 %v5141
    %v5477 = vunpack.c.h.b16 %v5141
    %v5478 = vunpack.c.l.b16 %v5142
    %v5479 = vunpack.c.h.b16 %v5142
    %v5480 = vunpack.c.l.b16 %v5143
    %v5481 = vunpack.c.h.b16 %v5143
    %v5482 = vunpack.c.l.b16 %v5144
    %v5483 = vunpack.c.h.b16 %v5144
    %v5484 = vunpack.c.l.b16 %v5145
    %v5485 = vunpack.c.h.b16 %v5145
    %v5486 = vunpack.c.l.b16 %v5146
    %v5487 = vunpack.c.h.b16 %v5146
    %v5488 = vunpack.c.l.b16 %v5147
    %v5489 = vunpack.c.h.b16 %v5147
    %v5490 = vunpack.c.l.b16 %v5148
    %v5491 = vunpack.c.h.b16 %v5148
    %v5492 = vunpack.c.l.b16 %v5149
    %v5493 = vunpack.c.h.b16 %v5149
    %v5494 = vunpack.c.l.b16 %v5150
    %v5495 = vunpack.c.h.b16 %v5150
    %v5496 = vunpack.c.l.b16 %v5151
    %v5497 = vunpack.c.h.b16 %v5151
    %v5498 = vunpack.c.l.b16 %v5152
    %v5499 = vunpack.c.h.b16 %v5152
    %v5500 = vunpack.c.l.b16 %v5153
    %v5501 = vunpack.c.h.b16 %v5153
    %v5502 = vunpack.c.l.b16 %v5154
    %v5503 = vunpack.c.h.b16 %v5154
    %v5504 = vunpack.c.l.b16 %v5155
    %v5505 = vunpack.c.h.b16 %v5155
    %v5506 = vunpack.c.l.b16 %v5156
    %v5507 = vunpack.c.h.b16 %v5156
    %v5508 = vunpack.c.l.b16 %v5157
    %v5509 = vunpack.c.h.b16 %v5157
    %v5510 = vunpack.c.l.b16 %v5158
    %v5511 = vunpack.c.h.b16 %v5158
    %v5512 = vunpack.c.l.b16 %v5159
    %v5513 = vunpack.c.h.b16 %v5159
    %v5514 = vunpack.c.l.b16 %v5160
    %v5515 = vunpack.c.h.b16 %v5160
    %v5516 = vunpack.c.l.b16 %v5161
    %v5517 = vunpack.c.h.b16 %v5161
    %v5518 = vunpack.c.l.b16 %v5162
    %v5519 = vunpack.c.h.b16 %v5162
    %v5520 = vunpack.c.l.b16 %v5163
    %v5521 = vunpack.c.h.b16 %v5163
    %v5522 = vunpack.c.l.b16 %v5164
    %v5523 = vunpack.c.h.b16 %v5164
    %v5524 = vunpack.c.l.b16 %v5165
    %v5525 = vunpack.c.h.b16 %v5165
    %v5526 = vunpack.c.l.b16 %v5166
    %v5527 = vunpack.c.h.b16 %v5166
    %v5528 = vunpack.c.l.b16 %v5167
    %v5529 = vunpack.c.h.b16 %v5167
    %v5530 = vunpack.c.l.b16 %v5168
    %v5531 = vunpack.c.h.b16 %v5168
    %v5532 = vunpack.c.l.b16 %v5169
    %v5533 = vunpack.c.h.b16 %v5169
    %v5534 = vunpack.c.l.b16 %v5170
    %v5535 = vunpack.c.h.b16 %v5170
    %v5536 = vunpack.c.l.b16 %v5171
    %v5537 = vunpack.c.h.b16 %v5171
    %v5538 = vunpack.c.l.b16 %v5172
    %v5539 = vunpack.c.h.b16 %v5172
    %v5540 = vunpack.c.l.b16 %v5173
    %v5541 = vunpack.c.h.b16 %v5173
    %v5542 = vunpack.c.l.b16 %v5174
    %v5543 = vunpack.c.h.b16 %v5174
    %v5544 = vunpack.c.l.b16 %v5175
    %v5545 = vunpack.c.h.b16 %v5175
    %v5546 = vunpack.c.l.b16 %v5176
    %v5547 = vunpack.c.h.b16 %v5176
    %v5548 = vunpack.c.l.b16 %v5177
    %v5549 = vunpack.c.h.b16 %v5177
    %v5550 = vunpack.c.l.b16 %v5178
    %v5551 = vunpack.c.h.b16 %v5178
    %v5552 = vunpack.c.l.b16 %v5179
    %v5553 = vunpack.c.h.b16 %v5179
    %v5554 = vunpack.c.l.b16 %v5180
    %v5555 = vunpack.c.h.b16 %v5180
    %v5556 = vunpack.c.l.b16 %v5181
    %v5557 = vunpack.c.h.b16 %v5181
    %v5558 = vunpack.c.l.b16 %v5182
    %v5559 = vunpack.c.h.b16 %v5182
    %v5560 = vunpack.c.l.b16 %v5183
    %v5561 = vunpack.c.h.b16 %v5183
    %v5562 = vunpack.c.l.b16 %v5184
    %v5563 = vunpack.c.h.b16 %v5184
    %v5564 = vunpack.c.l.b16 %v5185
    %v5565 = vunpack.c.h.b16 %v5185
    %v5566 = vunpack.c.l.b16 %v5186
    %v5567 = vunpack.c.h.b16 %v5186
    %v5568 = vunpack.c.l.b16 %v5187
    %v5569 = vunpack.c.h.b16 %v5187
    %v5570 = vunpack.c.l.b16 %v5188
    %v5571 = vunpack.c.h.b16 %v5188
    %v5572 = vunpack.c.l.b16 %v5189
    %v5573 = vunpack.c.h.b16 %v5189
    %v5574 = vpack.c.b16 %v5322, %v5318
    %v5575 = vpack.c.b16 %v5323, %v5319
    %v5576 = vpack.c.b16 %v5324, %v5320
    %v5577 = vpack.c.b16 %v5325, %v5321
    %v5578 = vpack.c.b16 %v5330, %v5326
    %v5579 = vpack.c.b16 %v5331, %v5327
    %v5580 = vpack.c.b16 %v5332, %v5328
    %v5581 = vpack.c.b16 %v5333, %v5329
    %v5582 = vpack.c.b16 %v5338, %v5334
    %v5583 = vpack.c.b16 %v5339, %v5335
    %v5584 = vpack.c.b16 %v5340, %v5336
    %v5585 = vpack.c.b16 %v5341, %v5337
    %v5586 = vpack.c.b16 %v5346, %v5342
    %v5587 = vpack.c.b16 %v5347, %v5343
    %v5588 = vpack.c.b16 %v5348, %v5344
    %v5589 = vpack.c.b16 %v5349, %v5345
    %v5590 = vpack.c.b16 %v5354, %v5350
    %v5591 = vpack.c.b16 %v5355, %v5351
    %v5592 = vpack.c.b16 %v5356, %v5352
    %v5593 = vpack.c.b16 %v5357, %v5353
    %v5594 = vpack.c.b16 %v5362, %v5358
    %v5595 = vpack.c.b16 %v5363, %v5359
    %v5596 = vpack.c.b16 %v5364, %v5360
    %v5597 = vpack.c.b16 %v5365, %v5361
    %v5598 = vpack.c.b16 %v5370, %v5366
    %v5599 = vpack.c.b16 %v5371, %v5367
    %v5600 = vpack.c.b16 %v5372, %v5368
    %v5601 = vpack.c.b16 %v5373, %v5369
    %v5602 = vpack.c.b16 %v5378, %v5374
    %v5603 = vpack.c.b16 %v5379, %v5375
    %v5604 = vpack.c.b16 %v5380, %v5376
    %v5605 = vpack.c.b16 %v5381, %v5377
    %v5606 = vpack.c.b16 %v5386, %v5382
    %v5607 = vpack.c.b16 %v5387, %v5383
    %v5608 = vpack.c.b16 %v5388, %v5384
    %v5609 = vpack.c.b16 %v5389, %v5385
    %v5610 = vpack.c.b16 %v5394, %v5390
    %v5611 = vpack.c.b16 %v5395, %v5391
    %v5612 = vpack.c.b16 %v5396, %v5392
    %v5613 = vpack.c.b16 %v5397, %v5393
    %v5614 = vpack.c.b16 %v5402, %v5398
    %v5615 = vpack.c.b16 %v5403, %v5399
    %v5616 = vpack.c.b16 %v5404, %v5400
    %v5617 = vpack.c.b16 %v5405, %v5401
    %v5618 = vpack.c.b16 %v5410, %v5406
    %v5619 = vpack.c.b16 %v5411, %v5407
    %v5620 = vpack.c.b16 %v5412, %v5408
    %v5621 = vpack.c.b16 %v5413, %v5409
    %v5622 = vpack.c.b16 %v5418, %v5414
    %v5623 = vpack.c.b16 %v5419, %v5415
    %v5624 = vpack.c.b16 %v5420, %v5416
    %v5625 = vpack.c.b16 %v5421, %v5417
    %v5626 = vpack.c.b16 %v5426, %v5422
    %v5627 = vpack.c.b16 %v5427, %v5423
    %v5628 = vpack.c.b16 %v5428, %v5424
    %v5629 = vpack.c.b16 %v5429, %v5425
    %v5630 = vpack.c.b16 %v5434, %v5430
    %v5631 = vpack.c.b16 %v5435, %v5431
    %v5632 = vpack.c.b16 %v5436, %v5432
    %v5633 = vpack.c.b16 %v5437, %v5433
    %v5634 = vpack.c.b16 %v5442, %v5438
    %v5635 = vpack.c.b16 %v5443, %v5439
    %v5636 = vpack.c.b16 %v5444, %v5440
    %v5637 = vpack.c.b16 %v5445, %v5441
    %v5638 = vpack.c.b16 %v5450, %v5446
    %v5639 = vpack.c.b16 %v5451, %v5447
    %v5640 = vpack.c.b16 %v5452, %v5448
    %v5641 = vpack.c.b16 %v5453, %v5449
    %v5642 = vpack.c.b16 %v5458, %v5454
    %v5643 = vpack.c.b16 %v5459, %v5455
    %v5644 = vpack.c.b16 %v5460, %v5456
    %v5645 = vpack.c.b16 %v5461, %v5457
    %v5646 = vpack.c.b16 %v5466, %v5462
    %v5647 = vpack.c.b16 %v5467, %v5463
    %v5648 = vpack.c.b16 %v5468, %v5464
    %v5649 = vpack.c.b16 %v5469, %v5465
    %v5650 = vpack.c.b16 %v5474, %v5470
    %v5651 = vpack.c.b16 %v5475, %v5471
    %v5652 = vpack.c.b16 %v5476, %v5472
    %v5653 = vpack.c.b16 %v5477, %v5473
    %v5654 = vpack.c.b16 %v5482, %v5478
    %v5655 = vpack.c.b16 %v5483, %v5479
    %v5656 = vpack.c.b16 %v5484, %v5480
    %v5657 = vpack.c.b16 %v5485, %v5481
    %v5658 = vpack.c.b16 %v5490, %v5486
    %v5659 = vpack.c.b16 %v5491, %v5487
    %v5660 = vpack.c.b16 %v5492, %v5488
    %v5661 = vpack.c.b16 %v5493, %v5489
    %v5662 = vpack.c.b16 %v5498, %v5494
    %v5663 = vpack.c.b16 %v5499, %v5495
    %v5664 = vpack.c.b16 %v5500, %v5496
    %v5665 = vpack.c.b16 %v5501, %v5497
    %v5666 = vpack.c.b16 %v5506, %v5502
    %v5667 = vpack.c.b16 %v5507, %v5503
    %v5668 = vpack.c.b16 %v5508, %v5504
    %v5669 = vpack.c.b16 %v5509, %v5505
    %v5670 = vpack.c.b16 %v5514, %v5510
    %v5671 = vpack.c.b16 %v5515, %v5511
    %v5672 = vpack.c.b16 %v5516, %v5512
    %v5673 = vpack.c.b16 %v5517, %v5513
    %v5674 = vpack.c.b16 %v5522, %v5518
    %v5675 = vpack.c.b16 %v5523, %v5519
    %v5676 = vpack.c.b16 %v5524, %v5520
    %v5677 = vpack.c.b16 %v5525, %v5521
    %v5678 = vpack.c.b16 %v5530, %v5526
    %v5679 = vpack.c.b16 %v5531, %v5527
    %v5680 = vpack.c.b16 %v5532, %v5528
    %v5681 = vpack.c.b16 %v5533, %v5529
    %v5682 = vpack.c.b16 %v5538, %v5534
    %v5683 = vpack.c.b16 %v5539, %v5535
    %v5684 = vpack.c.b16 %v5540, %v5536
    %v5685 = vpack.c.b16 %v5541, %v5537
    %v5686 = vpack.c.b16 %v5546, %v5542
    %v5687 = vpack.c.b16 %v5547, %v5543
    %v5688 = vpack.c.b16 %v5548, %v5544
    %v5689 = vpack.c.b16 %v5549, %v5545
    %v5690 = vpack.c.b16 %v5554, %v5550
    %v5691 = vpack.c.b16 %v5555, %v5551
    %v5692 = vpack.c.b16 %v5556, %v5552
    %v5693 = vpack.c.b16 %v5557, %v5553
    %v5694 = vpack.c.b16 %v5562, %v5558
    %v5695 = vpack.c.b16 %v5563, %v5559
    %v5696 = vpack.c.b16 %v5564, %v5560
    %v5697 = vpack.c.b16 %v5565, %v5561
    %v5698 = vpack.c.b16 %v5570, %v5566
    %v5699 = vpack.c.b16 %v5571, %v5567
    %v5700 = vpack.c.b16 %v5572, %v5568
    %v5701 = vpack.c.b16 %v5573, %v5569
    %5830 = vmatprep.subr.bf16.mxu0 %v5013
    %5831 = vmatpush1.bf16.msra.mxu0 %v5012
    %5832 = vmatprep.subr.bf16.mxu0 %v5011
    %5833 = vmatpush1.bf16.msra.mxu0 %v5010
    %5834 = vmatprep.subr.bf16.mxu0 %v5009
    %5835 = vmatpush1.bf16.msra.mxu0 %v5008
    %5836 = vmatprep.subr.bf16.mxu0 %v5007
    %5837 = vmatpush1.bf16.msra.mxu0 %v5006
    %5838 = vmatprep.subr.bf16.mxu0 %v5005
    %5839 = vmatpush1.bf16.msra.mxu0 %v5004
    %5840 = vmatprep.subr.bf16.mxu0 %v5003
    %5841 = vmatpush1.bf16.msra.mxu0 %v5002
    %5842 = vmatprep.subr.bf16.mxu0 %v5001
    %5843 = vmatpush1.bf16.msra.mxu0 %v5000
    %5844 = vmatprep.subr.bf16.mxu0 %v4999
    %5845 = vmatpush1.bf16.msra.mxu0 %v4998
    %5846 = vmatprep.subr.bf16.mxu0 %v5029
    %5847 = vmatpush2.bf16.msra.mxu0 %v5028
    %5848 = vmatprep.subr.bf16.mxu0 %v5027
    %5849 = vmatpush2.bf16.msra.mxu0 %v5026
    %5850 = vmatprep.subr.bf16.mxu0 %v5025
    %5851 = vmatpush2.bf16.msra.mxu0 %v5024
    %5852 = vmatprep.subr.bf16.mxu0 %v5023
    %5853 = vmatpush2.bf16.msra.mxu0 %v5022
    %5854 = vmatprep.subr.bf16.mxu0 %v5021
    %5855 = vmatpush2.bf16.msra.mxu0 %v5020
    %5856 = vmatprep.subr.bf16.mxu0 %v5019
    %5857 = vmatpush2.bf16.msra.mxu0 %v5018
    %5858 = vmatprep.subr.bf16.mxu0 %v5017
    %5859 = vmatpush2.bf16.msra.mxu0 %v5016
    %5860 = vmatprep.subr.bf16.mxu0 %v5015
    %5861 = vmatpush2.bf16.msra.mxu0 %v5014
    %5862 = vmatprep.mubr.bf16.mxu0 %v5575
    %5863 = vmatmul.mubr.bf16.gmra.mxu0 %v5574
    %v5864 = vpop.f32.mrf.mxu0
    %v5865 = vadd.f32 0.0, %v5864
    %v5866 = vpop.f32.mrf.mxu0
    %v5867 = vadd.f32 0.0, %v5866
    %v5868 = vpop.f32.mrf.mxu0
    %v5869 = vadd.f32 0.0, %v5868
    %v5870 = vpop.f32.mrf.mxu0
    %v5871 = vadd.f32 0.0, %v5870
    %5872 = vmatprep.mubr.bf16.mxu0 %v5579
    %5873 = vmatmul.mubr.bf16.gmra.mxu0 %v5578
    %v5874 = vpop.f32.mrf.mxu0
    %v5875 = vadd.f32 0.0, %v5874
    %v5876 = vpop.f32.mrf.mxu0
    %v5877 = vadd.f32 0.0, %v5876
    %v5878 = vpop.f32.mrf.mxu0
    %v5879 = vadd.f32 0.0, %v5878
    %v5880 = vpop.f32.mrf.mxu0
    %v5881 = vadd.f32 0.0, %v5880
    %5882 = vmatprep.mubr.bf16.mxu0 %v5583
    %5883 = vmatmul.mubr.bf16.gmra.mxu0 %v5582
    %v5884 = vpop.f32.mrf.mxu0
    %v5885 = vadd.f32 0.0, %v5884
    %v5886 = vpop.f32.mrf.mxu0
    %v5887 = vadd.f32 0.0, %v5886
    %v5888 = vpop.f32.mrf.mxu0
    %v5889 = vadd.f32 0.0, %v5888
    %v5890 = vpop.f32.mrf.mxu0
    %v5891 = vadd.f32 0.0, %v5890
    %5892 = vmatprep.mubr.bf16.mxu0 %v5587
    %5893 = vmatmul.mubr.bf16.gmra.mxu0 %v5586
    %v5894 = vpop.f32.mrf.mxu0
    %v5895 = vadd.f32 0.0, %v5894
    %v5896 = vpop.f32.mrf.mxu0
    %v5897 = vadd.f32 0.0, %v5896
    %v5898 = vpop.f32.mrf.mxu0
    %v5899 = vadd.f32 0.0, %v5898
    %v5900 = vpop.f32.mrf.mxu0
    %v5901 = vadd.f32 0.0, %v5900
    %5902 = vmatprep.mubr.bf16.mxu0 %v5591
    %5903 = vmatmul.mubr.bf16.gmra.mxu0 %v5590
    %v5904 = vpop.f32.mrf.mxu0
    %v5905 = vadd.f32 0.0, %v5904
    %v5906 = vpop.f32.mrf.mxu0
    %v5907 = vadd.f32 0.0, %v5906
    %v5908 = vpop.f32.mrf.mxu0
    %v5909 = vadd.f32 0.0, %v5908
    %v5910 = vpop.f32.mrf.mxu0
    %v5911 = vadd.f32 0.0, %v5910
    %5912 = vmatprep.mubr.bf16.mxu0 %v5595
    %5913 = vmatmul.mubr.bf16.gmra.mxu0 %v5594
    %v5914 = vpop.f32.mrf.mxu0
    %v5915 = vadd.f32 0.0, %v5914
    %v5916 = vpop.f32.mrf.mxu0
    %v5917 = vadd.f32 0.0, %v5916
    %v5918 = vpop.f32.mrf.mxu0
    %v5919 = vadd.f32 0.0, %v5918
    %v5920 = vpop.f32.mrf.mxu0
    %v5921 = vadd.f32 0.0, %v5920
    %5922 = vmatprep.mubr.bf16.mxu0 %v5599
    %5923 = vmatmul.mubr.bf16.gmra.mxu0 %v5598
    %v5924 = vpop.f32.mrf.mxu0
    %v5925 = vadd.f32 0.0, %v5924
    %v5926 = vpop.f32.mrf.mxu0
    %v5927 = vadd.f32 0.0, %v5926
    %v5928 = vpop.f32.mrf.mxu0
    %v5929 = vadd.f32 0.0, %v5928
    %v5930 = vpop.f32.mrf.mxu0
    %v5931 = vadd.f32 0.0, %v5930
    %5932 = vmatprep.mubr.bf16.mxu0 %v5603
    %5933 = vmatmul.mubr.bf16.gmra.mxu0 %v5602
    %v5934 = vpop.f32.mrf.mxu0
    %v5935 = vadd.f32 0.0, %v5934
    %v5936 = vpop.f32.mrf.mxu0
    %v5937 = vadd.f32 0.0, %v5936
    %v5938 = vpop.f32.mrf.mxu0
    %v5939 = vadd.f32 0.0, %v5938
    %v5940 = vpop.f32.mrf.mxu0
    %v5941 = vadd.f32 0.0, %v5940
    %5942 = vmatprep.mubr.bf16.mxu0 %v5607
    %5943 = vmatmul.mubr.bf16.gmra.mxu0 %v5606
    %v5944 = vpop.f32.mrf.mxu0
    %v5945 = vadd.f32 0.0, %v5944
    %v5946 = vpop.f32.mrf.mxu0
    %v5947 = vadd.f32 0.0, %v5946
    %v5948 = vpop.f32.mrf.mxu0
    %v5949 = vadd.f32 0.0, %v5948
    %v5950 = vpop.f32.mrf.mxu0
    %v5951 = vadd.f32 0.0, %v5950
    %5952 = vmatprep.mubr.bf16.mxu0 %v5611
    %5953 = vmatmul.mubr.bf16.gmra.mxu0 %v5610
    %v5954 = vpop.f32.mrf.mxu0
    %v5955 = vadd.f32 0.0, %v5954
    %v5956 = vpop.f32.mrf.mxu0
    %v5957 = vadd.f32 0.0, %v5956
    %v5958 = vpop.f32.mrf.mxu0
    %v5959 = vadd.f32 0.0, %v5958
    %v5960 = vpop.f32.mrf.mxu0
    %v5961 = vadd.f32 0.0, %v5960
    %5962 = vmatprep.mubr.bf16.mxu0 %v5615
    %5963 = vmatmul.mubr.bf16.gmra.mxu0 %v5614
    %v5964 = vpop.f32.mrf.mxu0
    %v5965 = vadd.f32 0.0, %v5964
    %v5966 = vpop.f32.mrf.mxu0
    %v5967 = vadd.f32 0.0, %v5966
    %v5968 = vpop.f32.mrf.mxu0
    %v5969 = vadd.f32 0.0, %v5968
    %v5970 = vpop.f32.mrf.mxu0
    %v5971 = vadd.f32 0.0, %v5970
    %5972 = vmatprep.mubr.bf16.mxu0 %v5619
    %5973 = vmatmul.mubr.bf16.gmra.mxu0 %v5618
    %v5974 = vpop.f32.mrf.mxu0
    %v5975 = vadd.f32 0.0, %v5974
    %v5976 = vpop.f32.mrf.mxu0
    %v5977 = vadd.f32 0.0, %v5976
    %v5978 = vpop.f32.mrf.mxu0
    %v5979 = vadd.f32 0.0, %v5978
    %v5980 = vpop.f32.mrf.mxu0
    %v5981 = vadd.f32 0.0, %v5980
    %5982 = vmatprep.mubr.bf16.mxu0 %v5623
    %5983 = vmatmul.mubr.bf16.gmra.mxu0 %v5622
    %v5984 = vpop.f32.mrf.mxu0
    %v5985 = vadd.f32 0.0, %v5984
    %v5986 = vpop.f32.mrf.mxu0
    %v5987 = vadd.f32 0.0, %v5986
    %v5988 = vpop.f32.mrf.mxu0
    %v5989 = vadd.f32 0.0, %v5988
    %v5990 = vpop.f32.mrf.mxu0
    %v5991 = vadd.f32 0.0, %v5990
    %5992 = vmatprep.mubr.bf16.mxu0 %v5627
    %5993 = vmatmul.mubr.bf16.gmra.mxu0 %v5626
    %v5994 = vpop.f32.mrf.mxu0
    %v5995 = vadd.f32 0.0, %v5994
    %v5996 = vpop.f32.mrf.mxu0
    %v5997 = vadd.f32 0.0, %v5996
    %v5998 = vpop.f32.mrf.mxu0
    %v5999 = vadd.f32 0.0, %v5998
    %v6000 = vpop.f32.mrf.mxu0
    %v6001 = vadd.f32 0.0, %v6000
    %6002 = vmatprep.mubr.bf16.mxu0 %v5631
    %6003 = vmatmul.mubr.bf16.gmra.mxu0 %v5630
    %v6004 = vpop.f32.mrf.mxu0
    %v6005 = vadd.f32 0.0, %v6004
    %v6006 = vpop.f32.mrf.mxu0
    %v6007 = vadd.f32 0.0, %v6006
    %v6008 = vpop.f32.mrf.mxu0
    %v6009 = vadd.f32 0.0, %v6008
    %v6010 = vpop.f32.mrf.mxu0
    %v6011 = vadd.f32 0.0, %v6010
    %6012 = vmatprep.mubr.bf16.mxu0 %v5635
    %6013 = vmatmul.mubr.bf16.gmra.mxu0 %v5634
    %v6014 = vpop.f32.mrf.mxu0
    %v6015 = vadd.f32 0.0, %v6014
    %v6016 = vpop.f32.mrf.mxu0
    %v6017 = vadd.f32 0.0, %v6016
    %v6018 = vpop.f32.mrf.mxu0
    %v6019 = vadd.f32 0.0, %v6018
    %v6020 = vpop.f32.mrf.mxu0
    %v6021 = vadd.f32 0.0, %v6020
    %6022 = vmatprep.mubr.bf16.mxu0 %v5639
    %6023 = vmatmul.mubr.bf16.gmra.mxu0 %v5638
    %v6024 = vpop.f32.mrf.mxu0
    %v6025 = vadd.f32 0.0, %v6024
    %v6026 = vpop.f32.mrf.mxu0
    %v6027 = vadd.f32 0.0, %v6026
    %v6028 = vpop.f32.mrf.mxu0
    %v6029 = vadd.f32 0.0, %v6028
    %v6030 = vpop.f32.mrf.mxu0
    %v6031 = vadd.f32 0.0, %v6030
    %6032 = vmatprep.mubr.bf16.mxu0 %v5643
    %6033 = vmatmul.mubr.bf16.gmra.mxu0 %v5642
    %v6034 = vpop.f32.mrf.mxu0
    %v6035 = vadd.f32 0.0, %v6034
    %v6036 = vpop.f32.mrf.mxu0
    %v6037 = vadd.f32 0.0, %v6036
    %v6038 = vpop.f32.mrf.mxu0
    %v6039 = vadd.f32 0.0, %v6038
    %v6040 = vpop.f32.mrf.mxu0
    %v6041 = vadd.f32 0.0, %v6040
    %6042 = vmatprep.mubr.bf16.mxu0 %v5647
    %6043 = vmatmul.mubr.bf16.gmra.mxu0 %v5646
    %v6044 = vpop.f32.mrf.mxu0
    %v6045 = vadd.f32 0.0, %v6044
    %v6046 = vpop.f32.mrf.mxu0
    %v6047 = vadd.f32 0.0, %v6046
    %v6048 = vpop.f32.mrf.mxu0
    %v6049 = vadd.f32 0.0, %v6048
    %v6050 = vpop.f32.mrf.mxu0
    %v6051 = vadd.f32 0.0, %v6050
    %6052 = vmatprep.mubr.bf16.mxu0 %v5651
    %6053 = vmatmul.mubr.bf16.gmra.mxu0 %v5650
    %v6054 = vpop.f32.mrf.mxu0
    %v6055 = vadd.f32 0.0, %v6054
    %v6056 = vpop.f32.mrf.mxu0
    %v6057 = vadd.f32 0.0, %v6056
    %v6058 = vpop.f32.mrf.mxu0
    %v6059 = vadd.f32 0.0, %v6058
    %v6060 = vpop.f32.mrf.mxu0
    %v6061 = vadd.f32 0.0, %v6060
    %6062 = vmatprep.mubr.bf16.mxu0 %v5655
    %6063 = vmatmul.mubr.bf16.gmra.mxu0 %v5654
    %v6064 = vpop.f32.mrf.mxu0
    %v6065 = vadd.f32 0.0, %v6064
    %v6066 = vpop.f32.mrf.mxu0
    %v6067 = vadd.f32 0.0, %v6066
    %v6068 = vpop.f32.mrf.mxu0
    %v6069 = vadd.f32 0.0, %v6068
    %v6070 = vpop.f32.mrf.mxu0
    %v6071 = vadd.f32 0.0, %v6070
    %6072 = vmatprep.mubr.bf16.mxu0 %v5659
    %6073 = vmatmul.mubr.bf16.gmra.mxu0 %v5658
    %v6074 = vpop.f32.mrf.mxu0
    %v6075 = vadd.f32 0.0, %v6074
    %v6076 = vpop.f32.mrf.mxu0
    %v6077 = vadd.f32 0.0, %v6076
    %v6078 = vpop.f32.mrf.mxu0
    %v6079 = vadd.f32 0.0, %v6078
    %v6080 = vpop.f32.mrf.mxu0
    %v6081 = vadd.f32 0.0, %v6080
    %6082 = vmatprep.mubr.bf16.mxu0 %v5663
    %6083 = vmatmul.mubr.bf16.gmra.mxu0 %v5662
    %v6084 = vpop.f32.mrf.mxu0
    %v6085 = vadd.f32 0.0, %v6084
    %v6086 = vpop.f32.mrf.mxu0
    %v6087 = vadd.f32 0.0, %v6086
    %v6088 = vpop.f32.mrf.mxu0
    %v6089 = vadd.f32 0.0, %v6088
    %v6090 = vpop.f32.mrf.mxu0
    %v6091 = vadd.f32 0.0, %v6090
    %6092 = vmatprep.mubr.bf16.mxu0 %v5667
    %6093 = vmatmul.mubr.bf16.gmra.mxu0 %v5666
    %v6094 = vpop.f32.mrf.mxu0
    %v6095 = vadd.f32 0.0, %v6094
    %v6096 = vpop.f32.mrf.mxu0
    %v6097 = vadd.f32 0.0, %v6096
    %v6098 = vpop.f32.mrf.mxu0
    %v6099 = vadd.f32 0.0, %v6098
    %v6100 = vpop.f32.mrf.mxu0
    %v6101 = vadd.f32 0.0, %v6100
    %6102 = vmatprep.mubr.bf16.mxu0 %v5671
    %6103 = vmatmul.mubr.bf16.gmra.mxu0 %v5670
    %v6104 = vpop.f32.mrf.mxu0
    %v6105 = vadd.f32 0.0, %v6104
    %v6106 = vpop.f32.mrf.mxu0
    %v6107 = vadd.f32 0.0, %v6106
    %v6108 = vpop.f32.mrf.mxu0
    %v6109 = vadd.f32 0.0, %v6108
    %v6110 = vpop.f32.mrf.mxu0
    %v6111 = vadd.f32 0.0, %v6110
    %6112 = vmatprep.mubr.bf16.mxu0 %v5675
    %6113 = vmatmul.mubr.bf16.gmra.mxu0 %v5674
    %v6114 = vpop.f32.mrf.mxu0
    %v6115 = vadd.f32 0.0, %v6114
    %v6116 = vpop.f32.mrf.mxu0
    %v6117 = vadd.f32 0.0, %v6116
    %v6118 = vpop.f32.mrf.mxu0
    %v6119 = vadd.f32 0.0, %v6118
    %v6120 = vpop.f32.mrf.mxu0
    %v6121 = vadd.f32 0.0, %v6120
    %6122 = vmatprep.mubr.bf16.mxu0 %v5679
    %6123 = vmatmul.mubr.bf16.gmra.mxu0 %v5678
    %v6124 = vpop.f32.mrf.mxu0
    %v6125 = vadd.f32 0.0, %v6124
    %v6126 = vpop.f32.mrf.mxu0
    %v6127 = vadd.f32 0.0, %v6126
    %v6128 = vpop.f32.mrf.mxu0
    %v6129 = vadd.f32 0.0, %v6128
    %v6130 = vpop.f32.mrf.mxu0
    %v6131 = vadd.f32 0.0, %v6130
    %6132 = vmatprep.mubr.bf16.mxu0 %v5683
    %6133 = vmatmul.mubr.bf16.gmra.mxu0 %v5682
    %v6134 = vpop.f32.mrf.mxu0
    %v6135 = vadd.f32 0.0, %v6134
    %v6136 = vpop.f32.mrf.mxu0
    %v6137 = vadd.f32 0.0, %v6136
    %v6138 = vpop.f32.mrf.mxu0
    %v6139 = vadd.f32 0.0, %v6138
    %v6140 = vpop.f32.mrf.mxu0
    %v6141 = vadd.f32 0.0, %v6140
    %6142 = vmatprep.mubr.bf16.mxu0 %v5687
    %6143 = vmatmul.mubr.bf16.gmra.mxu0 %v5686
    %v6144 = vpop.f32.mrf.mxu0
    %v6145 = vadd.f32 0.0, %v6144
    %v6146 = vpop.f32.mrf.mxu0
    %v6147 = vadd.f32 0.0, %v6146
    %v6148 = vpop.f32.mrf.mxu0
    %v6149 = vadd.f32 0.0, %v6148
    %v6150 = vpop.f32.mrf.mxu0
    %v6151 = vadd.f32 0.0, %v6150
    %6152 = vmatprep.mubr.bf16.mxu0 %v5691
    %6153 = vmatmul.mubr.bf16.gmra.mxu0 %v5690
    %v6154 = vpop.f32.mrf.mxu0
    %v6155 = vadd.f32 0.0, %v6154
    %v6156 = vpop.f32.mrf.mxu0
    %v6157 = vadd.f32 0.0, %v6156
    %v6158 = vpop.f32.mrf.mxu0
    %v6159 = vadd.f32 0.0, %v6158
    %v6160 = vpop.f32.mrf.mxu0
    %v6161 = vadd.f32 0.0, %v6160
    %6162 = vmatprep.mubr.bf16.mxu0 %v5695
    %6163 = vmatmul.mubr.bf16.gmra.mxu0 %v5694
    %v6164 = vpop.f32.mrf.mxu0
    %v6165 = vadd.f32 0.0, %v6164
    %v6166 = vpop.f32.mrf.mxu0
    %v6167 = vadd.f32 0.0, %v6166
    %v6168 = vpop.f32.mrf.mxu0
    %v6169 = vadd.f32 0.0, %v6168
    %v6170 = vpop.f32.mrf.mxu0
    %v6171 = vadd.f32 0.0, %v6170
    %6172 = vmatprep.mubr.bf16.mxu0 %v5699
    %6173 = vmatmul.mubr.bf16.gmra.mxu0 %v5698
    %v6174 = vpop.f32.mrf.mxu0
    %v6175 = vadd.f32 0.0, %v6174
    %v6176 = vpop.f32.mrf.mxu0
    %v6177 = vadd.f32 0.0, %v6176
    %v6178 = vpop.f32.mrf.mxu0
    %v6179 = vadd.f32 0.0, %v6178
    %v6180 = vpop.f32.mrf.mxu0
    %v6181 = vadd.f32 0.0, %v6180
    %6182 = vdwg.mxu0
    %6183 = vmatprep.subr.bf16.mxu0 %v5045
    %6184 = vmatpush1.bf16.msra.mxu0 %v5044
    %6185 = vmatprep.subr.bf16.mxu0 %v5043
    %6186 = vmatpush1.bf16.msra.mxu0 %v5042
    %6187 = vmatprep.subr.bf16.mxu0 %v5041
    %6188 = vmatpush1.bf16.msra.mxu0 %v5040
    %6189 = vmatprep.subr.bf16.mxu0 %v5039
    %6190 = vmatpush1.bf16.msra.mxu0 %v5038
    %6191 = vmatprep.subr.bf16.mxu0 %v5037
    %6192 = vmatpush1.bf16.msra.mxu0 %v5036
    %6193 = vmatprep.subr.bf16.mxu0 %v5035
    %6194 = vmatpush1.bf16.msra.mxu0 %v5034
    %6195 = vmatprep.subr.bf16.mxu0 %v5033
    %6196 = vmatpush1.bf16.msra.mxu0 %v5032
    %6197 = vmatprep.subr.bf16.mxu0 %v5031
    %6198 = vmatpush1.bf16.msra.mxu0 %v5030
    %6199 = vmatprep.subr.bf16.mxu0 %v5061
    %6200 = vmatpush2.bf16.msra.mxu0 %v5060
    %6201 = vmatprep.subr.bf16.mxu0 %v5059
    %6202 = vmatpush2.bf16.msra.mxu0 %v5058
    %6203 = vmatprep.subr.bf16.mxu0 %v5057
    %6204 = vmatpush2.bf16.msra.mxu0 %v5056
    %6205 = vmatprep.subr.bf16.mxu0 %v5055
    %6206 = vmatpush2.bf16.msra.mxu0 %v5054
    %6207 = vmatprep.subr.bf16.mxu0 %v5053
    %6208 = vmatpush2.bf16.msra.mxu0 %v5052
    %6209 = vmatprep.subr.bf16.mxu0 %v5051
    %6210 = vmatpush2.bf16.msra.mxu0 %v5050
    %6211 = vmatprep.subr.bf16.mxu0 %v5049
    %6212 = vmatpush2.bf16.msra.mxu0 %v5048
    %6213 = vmatprep.subr.bf16.mxu0 %v5047
    %6214 = vmatpush2.bf16.msra.mxu0 %v5046
    %6215 = vmatprep.mubr.bf16.mxu0 %v5577
    %6216 = vmatmul.mubr.bf16.gmra.mxu0 %v5576
    %v6217 = vpop.f32.mrf.mxu0
    %v6218 = vadd.f32 %v5865, %v6217
    %v6219 = vpop.f32.mrf.mxu0
    %v6220 = vadd.f32 %v5867, %v6219
    %v6221 = vpop.f32.mrf.mxu0
    %v6222 = vadd.f32 %v5869, %v6221
    %v6223 = vpop.f32.mrf.mxu0
    %v6224 = vadd.f32 %v5871, %v6223
    %6225 = vmatprep.mubr.bf16.mxu0 %v5581
    %6226 = vmatmul.mubr.bf16.gmra.mxu0 %v5580
    %v6227 = vpop.f32.mrf.mxu0
    %v6228 = vadd.f32 %v5875, %v6227
    %v6229 = vpop.f32.mrf.mxu0
    %v6230 = vadd.f32 %v5877, %v6229
    %v6231 = vpop.f32.mrf.mxu0
    %v6232 = vadd.f32 %v5879, %v6231
    %v6233 = vpop.f32.mrf.mxu0
    %v6234 = vadd.f32 %v5881, %v6233
    %6235 = vmatprep.mubr.bf16.mxu0 %v5585
    %6236 = vmatmul.mubr.bf16.gmra.mxu0 %v5584
    %v6237 = vpop.f32.mrf.mxu0
    %v6238 = vadd.f32 %v5885, %v6237
    %v6239 = vpop.f32.mrf.mxu0
    %v6240 = vadd.f32 %v5887, %v6239
    %v6241 = vpop.f32.mrf.mxu0
    %v6242 = vadd.f32 %v5889, %v6241
    %v6243 = vpop.f32.mrf.mxu0
    %v6244 = vadd.f32 %v5891, %v6243
    %6245 = vmatprep.mubr.bf16.mxu0 %v5589
    %6246 = vmatmul.mubr.bf16.gmra.mxu0 %v5588
    %v6247 = vpop.f32.mrf.mxu0
    %v6248 = vadd.f32 %v5895, %v6247
    %v6249 = vpop.f32.mrf.mxu0
    %v6250 = vadd.f32 %v5897, %v6249
    %v6251 = vpop.f32.mrf.mxu0
    %v6252 = vadd.f32 %v5899, %v6251
    %v6253 = vpop.f32.mrf.mxu0
    %v6254 = vadd.f32 %v5901, %v6253
    %6255 = vmatprep.mubr.bf16.mxu0 %v5593
    %6256 = vmatmul.mubr.bf16.gmra.mxu0 %v5592
    %v6257 = vpop.f32.mrf.mxu0
    %v6258 = vadd.f32 %v5905, %v6257
    %v6259 = vpop.f32.mrf.mxu0
    %v6260 = vadd.f32 %v5907, %v6259
    %v6261 = vpop.f32.mrf.mxu0
    %v6262 = vadd.f32 %v5909, %v6261
    %v6263 = vpop.f32.mrf.mxu0
    %v6264 = vadd.f32 %v5911, %v6263
    %6265 = vmatprep.mubr.bf16.mxu0 %v5597
    %6266 = vmatmul.mubr.bf16.gmra.mxu0 %v5596
    %v6267 = vpop.f32.mrf.mxu0
    %v6268 = vadd.f32 %v5915, %v6267
    %v6269 = vpop.f32.mrf.mxu0
    %v6270 = vadd.f32 %v5917, %v6269
    %v6271 = vpop.f32.mrf.mxu0
    %v6272 = vadd.f32 %v5919, %v6271
    %v6273 = vpop.f32.mrf.mxu0
    %v6274 = vadd.f32 %v5921, %v6273
    %6275 = vmatprep.mubr.bf16.mxu0 %v5601
    %6276 = vmatmul.mubr.bf16.gmra.mxu0 %v5600
    %v6277 = vpop.f32.mrf.mxu0
    %v6278 = vadd.f32 %v5925, %v6277
    %v6279 = vpop.f32.mrf.mxu0
    %v6280 = vadd.f32 %v5927, %v6279
    %v6281 = vpop.f32.mrf.mxu0
    %v6282 = vadd.f32 %v5929, %v6281
    %v6283 = vpop.f32.mrf.mxu0
    %v6284 = vadd.f32 %v5931, %v6283
    %6285 = vmatprep.mubr.bf16.mxu0 %v5605
    %6286 = vmatmul.mubr.bf16.gmra.mxu0 %v5604
    %v6287 = vpop.f32.mrf.mxu0
    %v6288 = vadd.f32 %v5935, %v6287
    %v6289 = vpop.f32.mrf.mxu0
    %v6290 = vadd.f32 %v5937, %v6289
    %v6291 = vpop.f32.mrf.mxu0
    %v6292 = vadd.f32 %v5939, %v6291
    %v6293 = vpop.f32.mrf.mxu0
    %v6294 = vadd.f32 %v5941, %v6293
    %6295 = vmatprep.mubr.bf16.mxu0 %v5609
    %6296 = vmatmul.mubr.bf16.gmra.mxu0 %v5608
    %v6297 = vpop.f32.mrf.mxu0
    %v6298 = vadd.f32 %v5945, %v6297
    %v6299 = vpop.f32.mrf.mxu0
    %v6300 = vadd.f32 %v5947, %v6299
    %v6301 = vpop.f32.mrf.mxu0
    %v6302 = vadd.f32 %v5949, %v6301
    %v6303 = vpop.f32.mrf.mxu0
    %v6304 = vadd.f32 %v5951, %v6303
    %6305 = vmatprep.mubr.bf16.mxu0 %v5613
    %6306 = vmatmul.mubr.bf16.gmra.mxu0 %v5612
    %v6307 = vpop.f32.mrf.mxu0
    %v6308 = vadd.f32 %v5955, %v6307
    %v6309 = vpop.f32.mrf.mxu0
    %v6310 = vadd.f32 %v5957, %v6309
    %v6311 = vpop.f32.mrf.mxu0
    %v6312 = vadd.f32 %v5959, %v6311
    %v6313 = vpop.f32.mrf.mxu0
    %v6314 = vadd.f32 %v5961, %v6313
    %6315 = vmatprep.mubr.bf16.mxu0 %v5617
    %6316 = vmatmul.mubr.bf16.gmra.mxu0 %v5616
    %v6317 = vpop.f32.mrf.mxu0
    %v6318 = vadd.f32 %v5965, %v6317
    %v6319 = vpop.f32.mrf.mxu0
    %v6320 = vadd.f32 %v5967, %v6319
    %v6321 = vpop.f32.mrf.mxu0
    %v6322 = vadd.f32 %v5969, %v6321
    %v6323 = vpop.f32.mrf.mxu0
    %v6324 = vadd.f32 %v5971, %v6323
    %6325 = vmatprep.mubr.bf16.mxu0 %v5621
    %6326 = vmatmul.mubr.bf16.gmra.mxu0 %v5620
    %v6327 = vpop.f32.mrf.mxu0
    %v6328 = vadd.f32 %v5975, %v6327
    %v6329 = vpop.f32.mrf.mxu0
    %v6330 = vadd.f32 %v5977, %v6329
    %v6331 = vpop.f32.mrf.mxu0
    %v6332 = vadd.f32 %v5979, %v6331
    %v6333 = vpop.f32.mrf.mxu0
    %v6334 = vadd.f32 %v5981, %v6333
    %6335 = vmatprep.mubr.bf16.mxu0 %v5625
    %6336 = vmatmul.mubr.bf16.gmra.mxu0 %v5624
    %v6337 = vpop.f32.mrf.mxu0
    %v6338 = vadd.f32 %v5985, %v6337
    %v6339 = vpop.f32.mrf.mxu0
    %v6340 = vadd.f32 %v5987, %v6339
    %v6341 = vpop.f32.mrf.mxu0
    %v6342 = vadd.f32 %v5989, %v6341
    %v6343 = vpop.f32.mrf.mxu0
    %v6344 = vadd.f32 %v5991, %v6343
    %6345 = vmatprep.mubr.bf16.mxu0 %v5629
    %6346 = vmatmul.mubr.bf16.gmra.mxu0 %v5628
    %v6347 = vpop.f32.mrf.mxu0
    %v6348 = vadd.f32 %v5995, %v6347
    %v6349 = vpop.f32.mrf.mxu0
    %v6350 = vadd.f32 %v5997, %v6349
    %v6351 = vpop.f32.mrf.mxu0
    %v6352 = vadd.f32 %v5999, %v6351
    %v6353 = vpop.f32.mrf.mxu0
    %v6354 = vadd.f32 %v6001, %v6353
    %6355 = vmatprep.mubr.bf16.mxu0 %v5633
    %6356 = vmatmul.mubr.bf16.gmra.mxu0 %v5632
    %v6357 = vpop.f32.mrf.mxu0
    %v6358 = vadd.f32 %v6005, %v6357
    %v6359 = vpop.f32.mrf.mxu0
    %v6360 = vadd.f32 %v6007, %v6359
    %v6361 = vpop.f32.mrf.mxu0
    %v6362 = vadd.f32 %v6009, %v6361
    %v6363 = vpop.f32.mrf.mxu0
    %v6364 = vadd.f32 %v6011, %v6363
    %6365 = vmatprep.mubr.bf16.mxu0 %v5637
    %6366 = vmatmul.mubr.bf16.gmra.mxu0 %v5636
    %v6367 = vpop.f32.mrf.mxu0
    %v6368 = vadd.f32 %v6015, %v6367
    %v6369 = vpop.f32.mrf.mxu0
    %v6370 = vadd.f32 %v6017, %v6369
    %v6371 = vpop.f32.mrf.mxu0
    %v6372 = vadd.f32 %v6019, %v6371
    %v6373 = vpop.f32.mrf.mxu0
    %v6374 = vadd.f32 %v6021, %v6373
    %6375 = vmatprep.mubr.bf16.mxu0 %v5641
    %6376 = vmatmul.mubr.bf16.gmra.mxu0 %v5640
    %v6377 = vpop.f32.mrf.mxu0
    %v6378 = vadd.f32 %v6025, %v6377
    %v6379 = vpop.f32.mrf.mxu0
    %v6380 = vadd.f32 %v6027, %v6379
    %v6381 = vpop.f32.mrf.mxu0
    %v6382 = vadd.f32 %v6029, %v6381
    %v6383 = vpop.f32.mrf.mxu0
    %v6384 = vadd.f32 %v6031, %v6383
    %6385 = vmatprep.mubr.bf16.mxu0 %v5645
    %6386 = vmatmul.mubr.bf16.gmra.mxu0 %v5644
    %v6387 = vpop.f32.mrf.mxu0
    %v6388 = vadd.f32 %v6035, %v6387
    %v6389 = vpop.f32.mrf.mxu0
    %v6390 = vadd.f32 %v6037, %v6389
    %v6391 = vpop.f32.mrf.mxu0
    %v6392 = vadd.f32 %v6039, %v6391
    %v6393 = vpop.f32.mrf.mxu0
    %v6394 = vadd.f32 %v6041, %v6393
    %6395 = vmatprep.mubr.bf16.mxu0 %v5649
    %6396 = vmatmul.mubr.bf16.gmra.mxu0 %v5648
    %v6397 = vpop.f32.mrf.mxu0
    %v6398 = vadd.f32 %v6045, %v6397
    %v6399 = vpop.f32.mrf.mxu0
    %v6400 = vadd.f32 %v6047, %v6399
    %v6401 = vpop.f32.mrf.mxu0
    %v6402 = vadd.f32 %v6049, %v6401
    %v6403 = vpop.f32.mrf.mxu0
    %v6404 = vadd.f32 %v6051, %v6403
    %6405 = vmatprep.mubr.bf16.mxu0 %v5653
    %6406 = vmatmul.mubr.bf16.gmra.mxu0 %v5652
    %v6407 = vpop.f32.mrf.mxu0
    %v6408 = vadd.f32 %v6055, %v6407
    %v6409 = vpop.f32.mrf.mxu0
    %v6410 = vadd.f32 %v6057, %v6409
    %v6411 = vpop.f32.mrf.mxu0
    %v6412 = vadd.f32 %v6059, %v6411
    %v6413 = vpop.f32.mrf.mxu0
    %v6414 = vadd.f32 %v6061, %v6413
    %6415 = vmatprep.mubr.bf16.mxu0 %v5657
    %6416 = vmatmul.mubr.bf16.gmra.mxu0 %v5656
    %v6417 = vpop.f32.mrf.mxu0
    %v6418 = vadd.f32 %v6065, %v6417
    %v6419 = vpop.f32.mrf.mxu0
    %v6420 = vadd.f32 %v6067, %v6419
    %v6421 = vpop.f32.mrf.mxu0
    %v6422 = vadd.f32 %v6069, %v6421
    %v6423 = vpop.f32.mrf.mxu0
    %v6424 = vadd.f32 %v6071, %v6423
    %6425 = vmatprep.mubr.bf16.mxu0 %v5661
    %6426 = vmatmul.mubr.bf16.gmra.mxu0 %v5660
    %v6427 = vpop.f32.mrf.mxu0
    %v6428 = vadd.f32 %v6075, %v6427
    %v6429 = vpop.f32.mrf.mxu0
    %v6430 = vadd.f32 %v6077, %v6429
    %v6431 = vpop.f32.mrf.mxu0
    %v6432 = vadd.f32 %v6079, %v6431
    %v6433 = vpop.f32.mrf.mxu0
    %v6434 = vadd.f32 %v6081, %v6433
    %6435 = vmatprep.mubr.bf16.mxu0 %v5665
    %6436 = vmatmul.mubr.bf16.gmra.mxu0 %v5664
    %v6437 = vpop.f32.mrf.mxu0
    %v6438 = vadd.f32 %v6085, %v6437
    %v6439 = vpop.f32.mrf.mxu0
    %v6440 = vadd.f32 %v6087, %v6439
    %v6441 = vpop.f32.mrf.mxu0
    %v6442 = vadd.f32 %v6089, %v6441
    %v6443 = vpop.f32.mrf.mxu0
    %v6444 = vadd.f32 %v6091, %v6443
    %6445 = vmatprep.mubr.bf16.mxu0 %v5669
    %6446 = vmatmul.mubr.bf16.gmra.mxu0 %v5668
    %v6447 = vpop.f32.mrf.mxu0
    %v6448 = vadd.f32 %v6095, %v6447
    %v6449 = vpop.f32.mrf.mxu0
    %v6450 = vadd.f32 %v6097, %v6449
    %v6451 = vpop.f32.mrf.mxu0
    %v6452 = vadd.f32 %v6099, %v6451
    %v6453 = vpop.f32.mrf.mxu0
    %v6454 = vadd.f32 %v6101, %v6453
    %6455 = vmatprep.mubr.bf16.mxu0 %v5673
    %6456 = vmatmul.mubr.bf16.gmra.mxu0 %v5672
    %v6457 = vpop.f32.mrf.mxu0
    %v6458 = vadd.f32 %v6105, %v6457
    %v6459 = vpop.f32.mrf.mxu0
    %v6460 = vadd.f32 %v6107, %v6459
    %v6461 = vpop.f32.mrf.mxu0
    %v6462 = vadd.f32 %v6109, %v6461
    %v6463 = vpop.f32.mrf.mxu0
    %v6464 = vadd.f32 %v6111, %v6463
    %6465 = vmatprep.mubr.bf16.mxu0 %v5677
    %6466 = vmatmul.mubr.bf16.gmra.mxu0 %v5676
    %v6467 = vpop.f32.mrf.mxu0
    %v6468 = vadd.f32 %v6115, %v6467
    %v6469 = vpop.f32.mrf.mxu0
    %v6470 = vadd.f32 %v6117, %v6469
    %v6471 = vpop.f32.mrf.mxu0
    %v6472 = vadd.f32 %v6119, %v6471
    %v6473 = vpop.f32.mrf.mxu0
    %v6474 = vadd.f32 %v6121, %v6473
    %6475 = vmatprep.mubr.bf16.mxu0 %v5681
    %6476 = vmatmul.mubr.bf16.gmra.mxu0 %v5680
    %v6477 = vpop.f32.mrf.mxu0
    %v6478 = vadd.f32 %v6125, %v6477
    %v6479 = vpop.f32.mrf.mxu0
    %v6480 = vadd.f32 %v6127, %v6479
    %v6481 = vpop.f32.mrf.mxu0
    %v6482 = vadd.f32 %v6129, %v6481
    %v6483 = vpop.f32.mrf.mxu0
    %v6484 = vadd.f32 %v6131, %v6483
    %6485 = vmatprep.mubr.bf16.mxu0 %v5685
    %6486 = vmatmul.mubr.bf16.gmra.mxu0 %v5684
    %v6487 = vpop.f32.mrf.mxu0
    %v6488 = vadd.f32 %v6135, %v6487
    %v6489 = vpop.f32.mrf.mxu0
    %v6490 = vadd.f32 %v6137, %v6489
    %v6491 = vpop.f32.mrf.mxu0
    %v6492 = vadd.f32 %v6139, %v6491
    %v6493 = vpop.f32.mrf.mxu0
    %v6494 = vadd.f32 %v6141, %v6493
    %6495 = vmatprep.mubr.bf16.mxu0 %v5689
    %6496 = vmatmul.mubr.bf16.gmra.mxu0 %v5688
    %v6497 = vpop.f32.mrf.mxu0
    %v6498 = vadd.f32 %v6145, %v6497
    %v6499 = vpop.f32.mrf.mxu0
    %v6500 = vadd.f32 %v6147, %v6499
    %v6501 = vpop.f32.mrf.mxu0
    %v6502 = vadd.f32 %v6149, %v6501
    %v6503 = vpop.f32.mrf.mxu0
    %v6504 = vadd.f32 %v6151, %v6503
    %6505 = vmatprep.mubr.bf16.mxu0 %v5693
    %6506 = vmatmul.mubr.bf16.gmra.mxu0 %v5692
    %v6507 = vpop.f32.mrf.mxu0
    %v6508 = vadd.f32 %v6155, %v6507
    %v6509 = vpop.f32.mrf.mxu0
    %v6510 = vadd.f32 %v6157, %v6509
    %v6511 = vpop.f32.mrf.mxu0
    %v6512 = vadd.f32 %v6159, %v6511
    %v6513 = vpop.f32.mrf.mxu0
    %v6514 = vadd.f32 %v6161, %v6513
    %6515 = vmatprep.mubr.bf16.mxu0 %v5697
    %6516 = vmatmul.mubr.bf16.gmra.mxu0 %v5696
    %v6517 = vpop.f32.mrf.mxu0
    %v6518 = vadd.f32 %v6165, %v6517
    %v6519 = vpop.f32.mrf.mxu0
    %v6520 = vadd.f32 %v6167, %v6519
    %v6521 = vpop.f32.mrf.mxu0
    %v6522 = vadd.f32 %v6169, %v6521
    %v6523 = vpop.f32.mrf.mxu0
    %v6524 = vadd.f32 %v6171, %v6523
    %6525 = vmatprep.mubr.bf16.mxu0 %v5701
    %6526 = vmatmul.mubr.bf16.gmra.mxu0 %v5700
    %v6527 = vpop.f32.mrf.mxu0
    %v6528 = vadd.f32 %v6175, %v6527
    %v6529 = vpop.f32.mrf.mxu0
    %v6530 = vadd.f32 %v6177, %v6529
    %v6531 = vpop.f32.mrf.mxu0
    %v6532 = vadd.f32 %v6179, %v6531
    %v6533 = vpop.f32.mrf.mxu0
    %v6534 = vadd.f32 %v6181, %v6533
    %6535 = vdwg.mxu0
    %v6536 = vpack.c.bf16 %v6222, %v6218
    %v6537 = vpack.c.bf16 %v6224, %v6220
    %v6538 = vpack.c.bf16 %v6232, %v6228
    %v6539 = vpack.c.bf16 %v6234, %v6230
    %v6540 = vpack.c.bf16 %v6242, %v6238
    %v6541 = vpack.c.bf16 %v6244, %v6240
    %v6542 = vpack.c.bf16 %v6252, %v6248
    %v6543 = vpack.c.bf16 %v6254, %v6250
    %v6544 = vpack.c.bf16 %v6262, %v6258
    %v6545 = vpack.c.bf16 %v6264, %v6260
    %v6546 = vpack.c.bf16 %v6272, %v6268
    %v6547 = vpack.c.bf16 %v6274, %v6270
    %v6548 = vpack.c.bf16 %v6282, %v6278
    %v6549 = vpack.c.bf16 %v6284, %v6280
    %v6550 = vpack.c.bf16 %v6292, %v6288
    %v6551 = vpack.c.bf16 %v6294, %v6290
    %v6552 = vpack.c.bf16 %v6302, %v6298
    %v6553 = vpack.c.bf16 %v6304, %v6300
    %v6554 = vpack.c.bf16 %v6312, %v6308
    %v6555 = vpack.c.bf16 %v6314, %v6310
    %v6556 = vpack.c.bf16 %v6322, %v6318
    %v6557 = vpack.c.bf16 %v6324, %v6320
    %v6558 = vpack.c.bf16 %v6332, %v6328
    %v6559 = vpack.c.bf16 %v6334, %v6330
    %v6560 = vpack.c.bf16 %v6342, %v6338
    %v6561 = vpack.c.bf16 %v6344, %v6340
    %v6562 = vpack.c.bf16 %v6352, %v6348
    %v6563 = vpack.c.bf16 %v6354, %v6350
    %v6564 = vpack.c.bf16 %v6362, %v6358
    %v6565 = vpack.c.bf16 %v6364, %v6360
    %v6566 = vpack.c.bf16 %v6372, %v6368
    %v6567 = vpack.c.bf16 %v6374, %v6370
    %v6568 = vpack.c.bf16 %v6382, %v6378
    %v6569 = vpack.c.bf16 %v6384, %v6380
    %v6570 = vpack.c.bf16 %v6392, %v6388
    %v6571 = vpack.c.bf16 %v6394, %v6390
    %v6572 = vpack.c.bf16 %v6402, %v6398
    %v6573 = vpack.c.bf16 %v6404, %v6400
    %v6574 = vpack.c.bf16 %v6412, %v6408
    %v6575 = vpack.c.bf16 %v6414, %v6410
    %v6576 = vpack.c.bf16 %v6422, %v6418
    %v6577 = vpack.c.bf16 %v6424, %v6420
    %v6578 = vpack.c.bf16 %v6432, %v6428
    %v6579 = vpack.c.bf16 %v6434, %v6430
    %v6580 = vpack.c.bf16 %v6442, %v6438
    %v6581 = vpack.c.bf16 %v6444, %v6440
    %v6582 = vpack.c.bf16 %v6452, %v6448
    %v6583 = vpack.c.bf16 %v6454, %v6450
    %v6584 = vpack.c.bf16 %v6462, %v6458
    %v6585 = vpack.c.bf16 %v6464, %v6460
    %v6586 = vpack.c.bf16 %v6472, %v6468
    %v6587 = vpack.c.bf16 %v6474, %v6470
    %v6588 = vpack.c.bf16 %v6482, %v6478
    %v6589 = vpack.c.bf16 %v6484, %v6480
    %v6590 = vpack.c.bf16 %v6492, %v6488
    %v6591 = vpack.c.bf16 %v6494, %v6490
    %v6592 = vpack.c.bf16 %v6502, %v6498
    %v6593 = vpack.c.bf16 %v6504, %v6500
    %v6594 = vpack.c.bf16 %v6512, %v6508
    %v6595 = vpack.c.bf16 %v6514, %v6510
    %v6596 = vpack.c.bf16 %v6522, %v6518
    %v6597 = vpack.c.bf16 %v6524, %v6520
    %v6598 = vpack.c.bf16 %v6532, %v6528
    %v6599 = vpack.c.bf16 %v6534, %v6530
    %v6600 = vld [vmem:[%s6] sm:$0xf]
    %v6601 = vld [vmem:[%s6 + $0x4] sm:$0xf]
    %v6602 = vld [vmem:[%s6 + $0x8] sm:$0xf]
    %v6603 = vld [vmem:[%s6 + $0xc] sm:$0xf]
    %v6604 = vld [vmem:[%s6 + $0x10] sm:$0xf]
    %v6605 = vld [vmem:[%s6 + $0x14] sm:$0xf]
    %v6606 = vld [vmem:[%s6 + $0x18] sm:$0xf]
    %v6607 = vld [vmem:[%s6 + $0x1c] sm:$0xf]
    %v6608 = vld [vmem:[%s6 + $0x20] sm:$0xf]
    %v6609 = vld [vmem:[%s6 + $0x24] sm:$0xf]
    %v6610 = vld [vmem:[%s6 + $0x28] sm:$0xf]
    %v6611 = vld [vmem:[%s6 + $0x2c] sm:$0xf]
    %v6612 = vld [vmem:[%s6 + $0x30] sm:$0xf]
    %v6613 = vld [vmem:[%s6 + $0x34] sm:$0xf]
    %v6614 = vld [vmem:[%s6 + $0x38] sm:$0xf]
    %v6615 = vld [vmem:[%s6 + $0x3c] sm:$0xf]
    %v6616 = vld [vmem:[%s6 + $0x40] sm:$0xf]
    %v6617 = vld [vmem:[%s6 + $0x44] sm:$0xf]
    %v6618 = vld [vmem:[%s6 + $0x48] sm:$0xf]
    %v6619 = vld [vmem:[%s6 + $0x4c] sm:$0xf]
    %v6620 = vld [vmem:[%s6 + $0x50] sm:$0xf]
    %v6621 = vld [vmem:[%s6 + $0x54] sm:$0xf]
    %v6622 = vld [vmem:[%s6 + $0x58] sm:$0xf]
    %v6623 = vld [vmem:[%s6 + $0x5c] sm:$0xf]
    %v6624 = vld [vmem:[%s6 + $0x60] sm:$0xf]
    %v6625 = vld [vmem:[%s6 + $0x64] sm:$0xf]
    %v6626 = vld [vmem:[%s6 + $0x68] sm:$0xf]
    %v6627 = vld [vmem:[%s6 + $0x6c] sm:$0xf]
    %v6628 = vld [vmem:[%s6 + $0x70] sm:$0xf]
    %v6629 = vld [vmem:[%s6 + $0x74] sm:$0xf]
    %v6630 = vld [vmem:[%s6 + $0x78] sm:$0xf]
    %v6631 = vld [vmem:[%s6 + $0x7c] sm:$0xf]
    %v6632 = vld [vmem:[%s6 + $0x80] sm:$0xf]
    %v6633 = vld [vmem:[%s6 + $0x84] sm:$0xf]
    %v6634 = vld [vmem:[%s6 + $0x88] sm:$0xf]
    %v6635 = vld [vmem:[%s6 + $0x8c] sm:$0xf]
    %v6636 = vld [vmem:[%s6 + $0x90] sm:$0xf]
    %v6637 = vld [vmem:[%s6 + $0x94] sm:$0xf]
    %v6638 = vld [vmem:[%s6 + $0x98] sm:$0xf]
    %v6639 = vld [vmem:[%s6 + $0x9c] sm:$0xf]
    %v6640 = vld [vmem:[%s6 + $0xa0] sm:$0xf]
    %v6641 = vld [vmem:[%s6 + $0xa4] sm:$0xf]
    %v6642 = vld [vmem:[%s6 + $0xa8] sm:$0xf]
    %v6643 = vld [vmem:[%s6 + $0xac] sm:$0xf]
    %v6644 = vld [vmem:[%s6 + $0xb0] sm:$0xf]
    %v6645 = vld [vmem:[%s6 + $0xb4] sm:$0xf]
    %v6646 = vld [vmem:[%s6 + $0xb8] sm:$0xf]
    %v6647 = vld [vmem:[%s6 + $0xbc] sm:$0xf]
    %v6648 = vld [vmem:[%s6 + $0xc0] sm:$0xf]
    %v6649 = vld [vmem:[%s6 + $0xc4] sm:$0xf]
    %v6650 = vld [vmem:[%s6 + $0xc8] sm:$0xf]
    %v6651 = vld [vmem:[%s6 + $0xcc] sm:$0xf]
    %v6652 = vld [vmem:[%s6 + $0xd0] sm:$0xf]
    %v6653 = vld [vmem:[%s6 + $0xd4] sm:$0xf]
    %v6654 = vld [vmem:[%s6 + $0xd8] sm:$0xf]
    %v6655 = vld [vmem:[%s6 + $0xdc] sm:$0xf]
    %v6656 = vld [vmem:[%s6 + $0xe0] sm:$0xf]
    %v6657 = vld [vmem:[%s6 + $0xe4] sm:$0xf]
    %v6658 = vld [vmem:[%s6 + $0xe8] sm:$0xf]
    %v6659 = vld [vmem:[%s6 + $0xec] sm:$0xf]
    %v6660 = vld [vmem:[%s6 + $0xf0] sm:$0xf]
    %v6661 = vld [vmem:[%s6 + $0xf4] sm:$0xf]
    %v6662 = vld [vmem:[%s6 + $0xf8] sm:$0xf]
    %v6663 = vld [vmem:[%s6 + $0xfc] sm:$0xf]
    %6665 = vset.pattern.permute.xlu0 0
    %6666 = vperm.xlu0 %6665, %v6600
    %v6667 = vpop.permute.xlu0 %6666
    %v6670 = vunpack.c.l.s4 839922192
    %v6671 = vunpack.c.0.s8 %v6670
    %v6672 = vlaneseq
    %v6673 = vshrl.u32 %v6672, 7
    %v6674 = vsub.s32 %v6671, %v6673
    %v6675 = vrot.slane %v6667, %v6674
    %6677 = vset.pattern.permute.xlu0 0
    %6678 = vperm.xlu0 %6677, %v6601
    %v6679 = vpop.permute.xlu0 %6678
    %v6682 = vunpack.c.l.s4 839922192
    %v6683 = vunpack.c.0.s8 %v6682
    %v6684 = vlaneseq
    %v6685 = vshrl.u32 %v6684, 7
    %v6686 = vsub.s32 %v6683, %v6685
    %v6687 = vrot.slane %v6679, %v6686
    %6689 = vset.pattern.permute.xlu0 0
    %6690 = vperm.xlu0 %6689, %v6602
    %v6691 = vpop.permute.xlu0 %6690
    %v6694 = vunpack.c.l.s4 839922192
    %v6695 = vunpack.c.0.s8 %v6694
    %v6696 = vlaneseq
    %v6697 = vshrl.u32 %v6696, 7
    %v6698 = vsub.s32 %v6695, %v6697
    %v6699 = vrot.slane %v6691, %v6698
    %6701 = vset.pattern.permute.xlu0 0
    %6702 = vperm.xlu0 %6701, %v6603
    %v6703 = vpop.permute.xlu0 %6702
    %v6706 = vunpack.c.l.s4 839922192
    %v6707 = vunpack.c.0.s8 %v6706
    %v6708 = vlaneseq
    %v6709 = vshrl.u32 %v6708, 7
    %v6710 = vsub.s32 %v6707, %v6709
    %v6711 = vrot.slane %v6703, %v6710
    %6713 = vset.pattern.permute.xlu0 0
    %6714 = vperm.xlu0 %6713, %v6604
    %v6715 = vpop.permute.xlu0 %6714
    %v6718 = vunpack.c.l.s4 839922192
    %v6719 = vunpack.c.0.s8 %v6718
    %v6720 = vlaneseq
    %v6721 = vshrl.u32 %v6720, 7
    %v6722 = vsub.s32 %v6719, %v6721
    %v6723 = vrot.slane %v6715, %v6722
    %6725 = vset.pattern.permute.xlu0 0
    %6726 = vperm.xlu0 %6725, %v6605
    %v6727 = vpop.permute.xlu0 %6726
    %v6730 = vunpack.c.l.s4 839922192
    %v6731 = vunpack.c.0.s8 %v6730
    %v6732 = vlaneseq
    %v6733 = vshrl.u32 %v6732, 7
    %v6734 = vsub.s32 %v6731, %v6733
    %v6735 = vrot.slane %v6727, %v6734
    %6737 = vset.pattern.permute.xlu0 0
    %6738 = vperm.xlu0 %6737, %v6606
    %v6739 = vpop.permute.xlu0 %6738
    %v6742 = vunpack.c.l.s4 839922192
    %v6743 = vunpack.c.0.s8 %v6742
    %v6744 = vlaneseq
    %v6745 = vshrl.u32 %v6744, 7
    %v6746 = vsub.s32 %v6743, %v6745
    %v6747 = vrot.slane %v6739, %v6746
    %6749 = vset.pattern.permute.xlu0 0
    %6750 = vperm.xlu0 %6749, %v6607
    %v6751 = vpop.permute.xlu0 %6750
    %v6754 = vunpack.c.l.s4 839922192
    %v6755 = vunpack.c.0.s8 %v6754
    %v6756 = vlaneseq
    %v6757 = vshrl.u32 %v6756, 7
    %v6758 = vsub.s32 %v6755, %v6757
    %v6759 = vrot.slane %v6751, %v6758
    %6761 = vset.pattern.permute.xlu0 0
    %6762 = vperm.xlu0 %6761, %v6608
    %v6763 = vpop.permute.xlu0 %6762
    %v6766 = vunpack.c.l.s4 839922192
    %v6767 = vunpack.c.0.s8 %v6766
    %v6768 = vlaneseq
    %v6769 = vshrl.u32 %v6768, 7
    %v6770 = vsub.s32 %v6767, %v6769
    %v6771 = vrot.slane %v6763, %v6770
    %6773 = vset.pattern.permute.xlu0 0
    %6774 = vperm.xlu0 %6773, %v6609
    %v6775 = vpop.permute.xlu0 %6774
    %v6778 = vunpack.c.l.s4 839922192
    %v6779 = vunpack.c.0.s8 %v6778
    %v6780 = vlaneseq
    %v6781 = vshrl.u32 %v6780, 7
    %v6782 = vsub.s32 %v6779, %v6781
    %v6783 = vrot.slane %v6775, %v6782
    %6785 = vset.pattern.permute.xlu0 0
    %6786 = vperm.xlu0 %6785, %v6610
    %v6787 = vpop.permute.xlu0 %6786
    %v6790 = vunpack.c.l.s4 839922192
    %v6791 = vunpack.c.0.s8 %v6790
    %v6792 = vlaneseq
    %v6793 = vshrl.u32 %v6792, 7
    %v6794 = vsub.s32 %v6791, %v6793
    %v6795 = vrot.slane %v6787, %v6794
    %6797 = vset.pattern.permute.xlu0 0
    %6798 = vperm.xlu0 %6797, %v6611
    %v6799 = vpop.permute.xlu0 %6798
    %v6802 = vunpack.c.l.s4 839922192
    %v6803 = vunpack.c.0.s8 %v6802
    %v6804 = vlaneseq
    %v6805 = vshrl.u32 %v6804, 7
    %v6806 = vsub.s32 %v6803, %v6805
    %v6807 = vrot.slane %v6799, %v6806
    %6809 = vset.pattern.permute.xlu0 0
    %6810 = vperm.xlu0 %6809, %v6612
    %v6811 = vpop.permute.xlu0 %6810
    %v6814 = vunpack.c.l.s4 839922192
    %v6815 = vunpack.c.0.s8 %v6814
    %v6816 = vlaneseq
    %v6817 = vshrl.u32 %v6816, 7
    %v6818 = vsub.s32 %v6815, %v6817
    %v6819 = vrot.slane %v6811, %v6818
    %6821 = vset.pattern.permute.xlu0 0
    %6822 = vperm.xlu0 %6821, %v6613
    %v6823 = vpop.permute.xlu0 %6822
    %v6826 = vunpack.c.l.s4 839922192
    %v6827 = vunpack.c.0.s8 %v6826
    %v6828 = vlaneseq
    %v6829 = vshrl.u32 %v6828, 7
    %v6830 = vsub.s32 %v6827, %v6829
    %v6831 = vrot.slane %v6823, %v6830
    %6833 = vset.pattern.permute.xlu0 0
    %6834 = vperm.xlu0 %6833, %v6614
    %v6835 = vpop.permute.xlu0 %6834
    %v6838 = vunpack.c.l.s4 839922192
    %v6839 = vunpack.c.0.s8 %v6838
    %v6840 = vlaneseq
    %v6841 = vshrl.u32 %v6840, 7
    %v6842 = vsub.s32 %v6839, %v6841
    %v6843 = vrot.slane %v6835, %v6842
    %6845 = vset.pattern.permute.xlu0 0
    %6846 = vperm.xlu0 %6845, %v6615
    %v6847 = vpop.permute.xlu0 %6846
    %v6850 = vunpack.c.l.s4 839922192
    %v6851 = vunpack.c.0.s8 %v6850
    %v6852 = vlaneseq
    %v6853 = vshrl.u32 %v6852, 7
    %v6854 = vsub.s32 %v6851, %v6853
    %v6855 = vrot.slane %v6847, %v6854
    %6857 = vset.pattern.permute.xlu0 0
    %6858 = vperm.xlu0 %6857, %v6616
    %v6859 = vpop.permute.xlu0 %6858
    %v6862 = vunpack.c.l.s4 839922192
    %v6863 = vunpack.c.0.s8 %v6862
    %v6864 = vlaneseq
    %v6865 = vshrl.u32 %v6864, 7
    %v6866 = vsub.s32 %v6863, %v6865
    %v6867 = vrot.slane %v6859, %v6866
    %6869 = vset.pattern.permute.xlu0 0
    %6870 = vperm.xlu0 %6869, %v6617
    %v6871 = vpop.permute.xlu0 %6870
    %v6874 = vunpack.c.l.s4 839922192
    %v6875 = vunpack.c.0.s8 %v6874
    %v6876 = vlaneseq
    %v6877 = vshrl.u32 %v6876, 7
    %v6878 = vsub.s32 %v6875, %v6877
    %v6879 = vrot.slane %v6871, %v6878
    %6881 = vset.pattern.permute.xlu0 0
    %6882 = vperm.xlu0 %6881, %v6618
    %v6883 = vpop.permute.xlu0 %6882
    %v6886 = vunpack.c.l.s4 839922192
    %v6887 = vunpack.c.0.s8 %v6886
    %v6888 = vlaneseq
    %v6889 = vshrl.u32 %v6888, 7
    %v6890 = vsub.s32 %v6887, %v6889
    %v6891 = vrot.slane %v6883, %v6890
    %6893 = vset.pattern.permute.xlu0 0
    %6894 = vperm.xlu0 %6893, %v6619
    %v6895 = vpop.permute.xlu0 %6894
    %v6898 = vunpack.c.l.s4 839922192
    %v6899 = vunpack.c.0.s8 %v6898
    %v6900 = vlaneseq
    %v6901 = vshrl.u32 %v6900, 7
    %v6902 = vsub.s32 %v6899, %v6901
    %v6903 = vrot.slane %v6895, %v6902
    %6905 = vset.pattern.permute.xlu0 0
    %6906 = vperm.xlu0 %6905, %v6620
    %v6907 = vpop.permute.xlu0 %6906
    %v6910 = vunpack.c.l.s4 839922192
    %v6911 = vunpack.c.0.s8 %v6910
    %v6912 = vlaneseq
    %v6913 = vshrl.u32 %v6912, 7
    %v6914 = vsub.s32 %v6911, %v6913
    %v6915 = vrot.slane %v6907, %v6914
    %6917 = vset.pattern.permute.xlu0 0
    %6918 = vperm.xlu0 %6917, %v6621
    %v6919 = vpop.permute.xlu0 %6918
    %v6922 = vunpack.c.l.s4 839922192
    %v6923 = vunpack.c.0.s8 %v6922
    %v6924 = vlaneseq
    %v6925 = vshrl.u32 %v6924, 7
    %v6926 = vsub.s32 %v6923, %v6925
    %v6927 = vrot.slane %v6919, %v6926
    %6929 = vset.pattern.permute.xlu0 0
    %6930 = vperm.xlu0 %6929, %v6622
    %v6931 = vpop.permute.xlu0 %6930
    %v6934 = vunpack.c.l.s4 839922192
    %v6935 = vunpack.c.0.s8 %v6934
    %v6936 = vlaneseq
    %v6937 = vshrl.u32 %v6936, 7
    %v6938 = vsub.s32 %v6935, %v6937
    %v6939 = vrot.slane %v6931, %v6938
    %6941 = vset.pattern.permute.xlu0 0
    %6942 = vperm.xlu0 %6941, %v6623
    %v6943 = vpop.permute.xlu0 %6942
    %v6946 = vunpack.c.l.s4 839922192
    %v6947 = vunpack.c.0.s8 %v6946
    %v6948 = vlaneseq
    %v6949 = vshrl.u32 %v6948, 7
    %v6950 = vsub.s32 %v6947, %v6949
    %v6951 = vrot.slane %v6943, %v6950
    %6953 = vset.pattern.permute.xlu0 0
    %6954 = vperm.xlu0 %6953, %v6624
    %v6955 = vpop.permute.xlu0 %6954
    %v6958 = vunpack.c.l.s4 839922192
    %v6959 = vunpack.c.0.s8 %v6958
    %v6960 = vlaneseq
    %v6961 = vshrl.u32 %v6960, 7
    %v6962 = vsub.s32 %v6959, %v6961
    %v6963 = vrot.slane %v6955, %v6962
    %6965 = vset.pattern.permute.xlu0 0
    %6966 = vperm.xlu0 %6965, %v6625
    %v6967 = vpop.permute.xlu0 %6966
    %v6970 = vunpack.c.l.s4 839922192
    %v6971 = vunpack.c.0.s8 %v6970
    %v6972 = vlaneseq
    %v6973 = vshrl.u32 %v6972, 7
    %v6974 = vsub.s32 %v6971, %v6973
    %v6975 = vrot.slane %v6967, %v6974
    %6977 = vset.pattern.permute.xlu0 0
    %6978 = vperm.xlu0 %6977, %v6626
    %v6979 = vpop.permute.xlu0 %6978
    %v6982 = vunpack.c.l.s4 839922192
    %v6983 = vunpack.c.0.s8 %v6982
    %v6984 = vlaneseq
    %v6985 = vshrl.u32 %v6984, 7
    %v6986 = vsub.s32 %v6983, %v6985
    %v6987 = vrot.slane %v6979, %v6986
    %6989 = vset.pattern.permute.xlu0 0
    %6990 = vperm.xlu0 %6989, %v6627
    %v6991 = vpop.permute.xlu0 %6990
    %v6994 = vunpack.c.l.s4 839922192
    %v6995 = vunpack.c.0.s8 %v6994
    %v6996 = vlaneseq
    %v6997 = vshrl.u32 %v6996, 7
    %v6998 = vsub.s32 %v6995, %v6997
    %v6999 = vrot.slane %v6991, %v6998
    %7001 = vset.pattern.permute.xlu0 0
    %7002 = vperm.xlu0 %7001, %v6628
    %v7003 = vpop.permute.xlu0 %7002
    %v7006 = vunpack.c.l.s4 839922192
    %v7007 = vunpack.c.0.s8 %v7006
    %v7008 = vlaneseq
    %v7009 = vshrl.u32 %v7008, 7
    %v7010 = vsub.s32 %v7007, %v7009
    %v7011 = vrot.slane %v7003, %v7010
    %7013 = vset.pattern.permute.xlu0 0
    %7014 = vperm.xlu0 %7013, %v6629
    %v7015 = vpop.permute.xlu0 %7014
    %v7018 = vunpack.c.l.s4 839922192
    %v7019 = vunpack.c.0.s8 %v7018
    %v7020 = vlaneseq
    %v7021 = vshrl.u32 %v7020, 7
    %v7022 = vsub.s32 %v7019, %v7021
    %v7023 = vrot.slane %v7015, %v7022
    %7025 = vset.pattern.permute.xlu0 0
    %7026 = vperm.xlu0 %7025, %v6630
    %v7027 = vpop.permute.xlu0 %7026
    %v7030 = vunpack.c.l.s4 839922192
    %v7031 = vunpack.c.0.s8 %v7030
    %v7032 = vlaneseq
    %v7033 = vshrl.u32 %v7032, 7
    %v7034 = vsub.s32 %v7031, %v7033
    %v7035 = vrot.slane %v7027, %v7034
    %7037 = vset.pattern.permute.xlu0 0
    %7038 = vperm.xlu0 %7037, %v6631
    %v7039 = vpop.permute.xlu0 %7038
    %v7042 = vunpack.c.l.s4 839922192
    %v7043 = vunpack.c.0.s8 %v7042
    %v7044 = vlaneseq
    %v7045 = vshrl.u32 %v7044, 7
    %v7046 = vsub.s32 %v7043, %v7045
    %v7047 = vrot.slane %v7039, %v7046
    %7049 = vset.pattern.permute.xlu0 0
    %7050 = vperm.xlu0 %7049, %v6632
    %v7051 = vpop.permute.xlu0 %7050
    %v7054 = vunpack.c.l.s4 839922192
    %v7055 = vunpack.c.0.s8 %v7054
    %v7056 = vlaneseq
    %v7057 = vshrl.u32 %v7056, 7
    %v7058 = vsub.s32 %v7055, %v7057
    %v7059 = vrot.slane %v7051, %v7058
    %7061 = vset.pattern.permute.xlu0 0
    %7062 = vperm.xlu0 %7061, %v6633
    %v7063 = vpop.permute.xlu0 %7062
    %v7066 = vunpack.c.l.s4 839922192
    %v7067 = vunpack.c.0.s8 %v7066
    %v7068 = vlaneseq
    %v7069 = vshrl.u32 %v7068, 7
    %v7070 = vsub.s32 %v7067, %v7069
    %v7071 = vrot.slane %v7063, %v7070
    %7073 = vset.pattern.permute.xlu0 0
    %7074 = vperm.xlu0 %7073, %v6634
    %v7075 = vpop.permute.xlu0 %7074
    %v7078 = vunpack.c.l.s4 839922192
    %v7079 = vunpack.c.0.s8 %v7078
    %v7080 = vlaneseq
    %v7081 = vshrl.u32 %v7080, 7
    %v7082 = vsub.s32 %v7079, %v7081
    %v7083 = vrot.slane %v7075, %v7082
    %7085 = vset.pattern.permute.xlu0 0
    %7086 = vperm.xlu0 %7085, %v6635
    %v7087 = vpop.permute.xlu0 %7086
    %v7090 = vunpack.c.l.s4 839922192
    %v7091 = vunpack.c.0.s8 %v7090
    %v7092 = vlaneseq
    %v7093 = vshrl.u32 %v7092, 7
    %v7094 = vsub.s32 %v7091, %v7093
    %v7095 = vrot.slane %v7087, %v7094
    %7097 = vset.pattern.permute.xlu0 0
    %7098 = vperm.xlu0 %7097, %v6636
    %v7099 = vpop.permute.xlu0 %7098
    %v7102 = vunpack.c.l.s4 839922192
    %v7103 = vunpack.c.0.s8 %v7102
    %v7104 = vlaneseq
    %v7105 = vshrl.u32 %v7104, 7
    %v7106 = vsub.s32 %v7103, %v7105
    %v7107 = vrot.slane %v7099, %v7106
    %7109 = vset.pattern.permute.xlu0 0
    %7110 = vperm.xlu0 %7109, %v6637
    %v7111 = vpop.permute.xlu0 %7110
    %v7114 = vunpack.c.l.s4 839922192
    %v7115 = vunpack.c.0.s8 %v7114
    %v7116 = vlaneseq
    %v7117 = vshrl.u32 %v7116, 7
    %v7118 = vsub.s32 %v7115, %v7117
    %v7119 = vrot.slane %v7111, %v7118
    %7121 = vset.pattern.permute.xlu0 0
    %7122 = vperm.xlu0 %7121, %v6638
    %v7123 = vpop.permute.xlu0 %7122
    %v7126 = vunpack.c.l.s4 839922192
    %v7127 = vunpack.c.0.s8 %v7126
    %v7128 = vlaneseq
    %v7129 = vshrl.u32 %v7128, 7
    %v7130 = vsub.s32 %v7127, %v7129
    %v7131 = vrot.slane %v7123, %v7130
    %7133 = vset.pattern.permute.xlu0 0
    %7134 = vperm.xlu0 %7133, %v6639
    %v7135 = vpop.permute.xlu0 %7134
    %v7138 = vunpack.c.l.s4 839922192
    %v7139 = vunpack.c.0.s8 %v7138
    %v7140 = vlaneseq
    %v7141 = vshrl.u32 %v7140, 7
    %v7142 = vsub.s32 %v7139, %v7141
    %v7143 = vrot.slane %v7135, %v7142
    %7145 = vset.pattern.permute.xlu0 0
    %7146 = vperm.xlu0 %7145, %v6640
    %v7147 = vpop.permute.xlu0 %7146
    %v7150 = vunpack.c.l.s4 839922192
    %v7151 = vunpack.c.0.s8 %v7150
    %v7152 = vlaneseq
    %v7153 = vshrl.u32 %v7152, 7
    %v7154 = vsub.s32 %v7151, %v7153
    %v7155 = vrot.slane %v7147, %v7154
    %7157 = vset.pattern.permute.xlu0 0
    %7158 = vperm.xlu0 %7157, %v6641
    %v7159 = vpop.permute.xlu0 %7158
    %v7162 = vunpack.c.l.s4 839922192
    %v7163 = vunpack.c.0.s8 %v7162
    %v7164 = vlaneseq
    %v7165 = vshrl.u32 %v7164, 7
    %v7166 = vsub.s32 %v7163, %v7165
    %v7167 = vrot.slane %v7159, %v7166
    %7169 = vset.pattern.permute.xlu0 0
    %7170 = vperm.xlu0 %7169, %v6642
    %v7171 = vpop.permute.xlu0 %7170
    %v7174 = vunpack.c.l.s4 839922192
    %v7175 = vunpack.c.0.s8 %v7174
    %v7176 = vlaneseq
    %v7177 = vshrl.u32 %v7176, 7
    %v7178 = vsub.s32 %v7175, %v7177
    %v7179 = vrot.slane %v7171, %v7178
    %7181 = vset.pattern.permute.xlu0 0
    %7182 = vperm.xlu0 %7181, %v6643
    %v7183 = vpop.permute.xlu0 %7182
    %v7186 = vunpack.c.l.s4 839922192
    %v7187 = vunpack.c.0.s8 %v7186
    %v7188 = vlaneseq
    %v7189 = vshrl.u32 %v7188, 7
    %v7190 = vsub.s32 %v7187, %v7189
    %v7191 = vrot.slane %v7183, %v7190
    %7193 = vset.pattern.permute.xlu0 0
    %7194 = vperm.xlu0 %7193, %v6644
    %v7195 = vpop.permute.xlu0 %7194
    %v7198 = vunpack.c.l.s4 839922192
    %v7199 = vunpack.c.0.s8 %v7198
    %v7200 = vlaneseq
    %v7201 = vshrl.u32 %v7200, 7
    %v7202 = vsub.s32 %v7199, %v7201
    %v7203 = vrot.slane %v7195, %v7202
    %7205 = vset.pattern.permute.xlu0 0
    %7206 = vperm.xlu0 %7205, %v6645
    %v7207 = vpop.permute.xlu0 %7206
    %v7210 = vunpack.c.l.s4 839922192
    %v7211 = vunpack.c.0.s8 %v7210
    %v7212 = vlaneseq
    %v7213 = vshrl.u32 %v7212, 7
    %v7214 = vsub.s32 %v7211, %v7213
    %v7215 = vrot.slane %v7207, %v7214
    %7217 = vset.pattern.permute.xlu0 0
    %7218 = vperm.xlu0 %7217, %v6646
    %v7219 = vpop.permute.xlu0 %7218
    %v7222 = vunpack.c.l.s4 839922192
    %v7223 = vunpack.c.0.s8 %v7222
    %v7224 = vlaneseq
    %v7225 = vshrl.u32 %v7224, 7
    %v7226 = vsub.s32 %v7223, %v7225
    %v7227 = vrot.slane %v7219, %v7226
    %7229 = vset.pattern.permute.xlu0 0
    %7230 = vperm.xlu0 %7229, %v6647
    %v7231 = vpop.permute.xlu0 %7230
    %v7234 = vunpack.c.l.s4 839922192
    %v7235 = vunpack.c.0.s8 %v7234
    %v7236 = vlaneseq
    %v7237 = vshrl.u32 %v7236, 7
    %v7238 = vsub.s32 %v7235, %v7237
    %v7239 = vrot.slane %v7231, %v7238
    %7241 = vset.pattern.permute.xlu0 0
    %7242 = vperm.xlu0 %7241, %v6648
    %v7243 = vpop.permute.xlu0 %7242
    %v7246 = vunpack.c.l.s4 839922192
    %v7247 = vunpack.c.0.s8 %v7246
    %v7248 = vlaneseq
    %v7249 = vshrl.u32 %v7248, 7
    %v7250 = vsub.s32 %v7247, %v7249
    %v7251 = vrot.slane %v7243, %v7250
    %7253 = vset.pattern.permute.xlu0 0
    %7254 = vperm.xlu0 %7253, %v6649
    %v7255 = vpop.permute.xlu0 %7254
    %v7258 = vunpack.c.l.s4 839922192
    %v7259 = vunpack.c.0.s8 %v7258
    %v7260 = vlaneseq
    %v7261 = vshrl.u32 %v7260, 7
    %v7262 = vsub.s32 %v7259, %v7261
    %v7263 = vrot.slane %v7255, %v7262
    %7265 = vset.pattern.permute.xlu0 0
    %7266 = vperm.xlu0 %7265, %v6650
    %v7267 = vpop.permute.xlu0 %7266
    %v7270 = vunpack.c.l.s4 839922192
    %v7271 = vunpack.c.0.s8 %v7270
    %v7272 = vlaneseq
    %v7273 = vshrl.u32 %v7272, 7
    %v7274 = vsub.s32 %v7271, %v7273
    %v7275 = vrot.slane %v7267, %v7274
    %7277 = vset.pattern.permute.xlu0 0
    %7278 = vperm.xlu0 %7277, %v6651
    %v7279 = vpop.permute.xlu0 %7278
    %v7282 = vunpack.c.l.s4 839922192
    %v7283 = vunpack.c.0.s8 %v7282
    %v7284 = vlaneseq
    %v7285 = vshrl.u32 %v7284, 7
    %v7286 = vsub.s32 %v7283, %v7285
    %v7287 = vrot.slane %v7279, %v7286
    %7289 = vset.pattern.permute.xlu0 0
    %7290 = vperm.xlu0 %7289, %v6652
    %v7291 = vpop.permute.xlu0 %7290
    %v7294 = vunpack.c.l.s4 839922192
    %v7295 = vunpack.c.0.s8 %v7294
    %v7296 = vlaneseq
    %v7297 = vshrl.u32 %v7296, 7
    %v7298 = vsub.s32 %v7295, %v7297
    %v7299 = vrot.slane %v7291, %v7298
    %7301 = vset.pattern.permute.xlu0 0
    %7302 = vperm.xlu0 %7301, %v6653
    %v7303 = vpop.permute.xlu0 %7302
    %v7306 = vunpack.c.l.s4 839922192
    %v7307 = vunpack.c.0.s8 %v7306
    %v7308 = vlaneseq
    %v7309 = vshrl.u32 %v7308, 7
    %v7310 = vsub.s32 %v7307, %v7309
    %v7311 = vrot.slane %v7303, %v7310
    %7313 = vset.pattern.permute.xlu0 0
    %7314 = vperm.xlu0 %7313, %v6654
    %v7315 = vpop.permute.xlu0 %7314
    %v7318 = vunpack.c.l.s4 839922192
    %v7319 = vunpack.c.0.s8 %v7318
    %v7320 = vlaneseq
    %v7321 = vshrl.u32 %v7320, 7
    %v7322 = vsub.s32 %v7319, %v7321
    %v7323 = vrot.slane %v7315, %v7322
    %7325 = vset.pattern.permute.xlu0 0
    %7326 = vperm.xlu0 %7325, %v6655
    %v7327 = vpop.permute.xlu0 %7326
    %v7330 = vunpack.c.l.s4 839922192
    %v7331 = vunpack.c.0.s8 %v7330
    %v7332 = vlaneseq
    %v7333 = vshrl.u32 %v7332, 7
    %v7334 = vsub.s32 %v7331, %v7333
    %v7335 = vrot.slane %v7327, %v7334
    %7337 = vset.pattern.permute.xlu0 0
    %7338 = vperm.xlu0 %7337, %v6656
    %v7339 = vpop.permute.xlu0 %7338
    %v7342 = vunpack.c.l.s4 839922192
    %v7343 = vunpack.c.0.s8 %v7342
    %v7344 = vlaneseq
    %v7345 = vshrl.u32 %v7344, 7
    %v7346 = vsub.s32 %v7343, %v7345
    %v7347 = vrot.slane %v7339, %v7346
    %7349 = vset.pattern.permute.xlu0 0
    %7350 = vperm.xlu0 %7349, %v6657
    %v7351 = vpop.permute.xlu0 %7350
    %v7354 = vunpack.c.l.s4 839922192
    %v7355 = vunpack.c.0.s8 %v7354
    %v7356 = vlaneseq
    %v7357 = vshrl.u32 %v7356, 7
    %v7358 = vsub.s32 %v7355, %v7357
    %v7359 = vrot.slane %v7351, %v7358
    %7361 = vset.pattern.permute.xlu0 0
    %7362 = vperm.xlu0 %7361, %v6658
    %v7363 = vpop.permute.xlu0 %7362
    %v7366 = vunpack.c.l.s4 839922192
    %v7367 = vunpack.c.0.s8 %v7366
    %v7368 = vlaneseq
    %v7369 = vshrl.u32 %v7368, 7
    %v7370 = vsub.s32 %v7367, %v7369
    %v7371 = vrot.slane %v7363, %v7370
    %7373 = vset.pattern.permute.xlu0 0
    %7374 = vperm.xlu0 %7373, %v6659
    %v7375 = vpop.permute.xlu0 %7374
    %v7378 = vunpack.c.l.s4 839922192
    %v7379 = vunpack.c.0.s8 %v7378
    %v7380 = vlaneseq
    %v7381 = vshrl.u32 %v7380, 7
    %v7382 = vsub.s32 %v7379, %v7381
    %v7383 = vrot.slane %v7375, %v7382
    %7385 = vset.pattern.permute.xlu0 0
    %7386 = vperm.xlu0 %7385, %v6660
    %v7387 = vpop.permute.xlu0 %7386
    %v7390 = vunpack.c.l.s4 839922192
    %v7391 = vunpack.c.0.s8 %v7390
    %v7392 = vlaneseq
    %v7393 = vshrl.u32 %v7392, 7
    %v7394 = vsub.s32 %v7391, %v7393
    %v7395 = vrot.slane %v7387, %v7394
    %7397 = vset.pattern.permute.xlu0 0
    %7398 = vperm.xlu0 %7397, %v6661
    %v7399 = vpop.permute.xlu0 %7398
    %v7402 = vunpack.c.l.s4 839922192
    %v7403 = vunpack.c.0.s8 %v7402
    %v7404 = vlaneseq
    %v7405 = vshrl.u32 %v7404, 7
    %v7406 = vsub.s32 %v7403, %v7405
    %v7407 = vrot.slane %v7399, %v7406
    %7409 = vset.pattern.permute.xlu0 0
    %7410 = vperm.xlu0 %7409, %v6662
    %v7411 = vpop.permute.xlu0 %7410
    %v7414 = vunpack.c.l.s4 839922192
    %v7415 = vunpack.c.0.s8 %v7414
    %v7416 = vlaneseq
    %v7417 = vshrl.u32 %v7416, 7
    %v7418 = vsub.s32 %v7415, %v7417
    %v7419 = vrot.slane %v7411, %v7418
    %7421 = vset.pattern.permute.xlu0 0
    %7422 = vperm.xlu0 %7421, %v6663
    %v7423 = vpop.permute.xlu0 %7422
    %v7426 = vunpack.c.l.s4 839922192
    %v7427 = vunpack.c.0.s8 %v7426
    %v7428 = vlaneseq
    %v7429 = vshrl.u32 %v7428, 7
    %v7430 = vsub.s32 %v7427, %v7429
    %v7431 = vrot.slane %v7423, %v7430
    %v7496 = vunpack.c.l.b16 %v6675
    %v7497 = vunpack.c.l.b16 %v6687
    %v7498 = vunpack.c.l.b16 %v6699
    %v7499 = vunpack.c.l.b16 %v6711
    %v7500 = vunpack.c.l.b16 %v6723
    %v7501 = vunpack.c.l.b16 %v6735
    %v7502 = vunpack.c.l.b16 %v6747
    %v7503 = vunpack.c.l.b16 %v6759
    %v7504 = vunpack.c.l.b16 %v6771
    %v7505 = vunpack.c.l.b16 %v6783
    %v7506 = vunpack.c.l.b16 %v6795
    %v7507 = vunpack.c.l.b16 %v6807
    %v7508 = vunpack.c.l.b16 %v6819
    %v7509 = vunpack.c.l.b16 %v6831
    %v7510 = vunpack.c.l.b16 %v6843
    %v7511 = vunpack.c.l.b16 %v6855
    %v7512 = vunpack.c.l.b16 %v6867
    %v7513 = vunpack.c.l.b16 %v6879
    %v7514 = vunpack.c.l.b16 %v6891
    %v7515 = vunpack.c.l.b16 %v6903
    %v7516 = vunpack.c.l.b16 %v6915
    %v7517 = vunpack.c.l.b16 %v6927
    %v7518 = vunpack.c.l.b16 %v6939
    %v7519 = vunpack.c.l.b16 %v6951
    %v7520 = vunpack.c.l.b16 %v6963
    %v7521 = vunpack.c.l.b16 %v6975
    %v7522 = vunpack.c.l.b16 %v6987
    %v7523 = vunpack.c.l.b16 %v6999
    %v7524 = vunpack.c.l.b16 %v7011
    %v7525 = vunpack.c.l.b16 %v7023
    %v7526 = vunpack.c.l.b16 %v7035
    %v7527 = vunpack.c.l.b16 %v7047
    %v7528 = vunpack.c.l.b16 %v7059
    %v7529 = vunpack.c.l.b16 %v7071
    %v7530 = vunpack.c.l.b16 %v7083
    %v7531 = vunpack.c.l.b16 %v7095
    %v7532 = vunpack.c.l.b16 %v7107
    %v7533 = vunpack.c.l.b16 %v7119
    %v7534 = vunpack.c.l.b16 %v7131
    %v7535 = vunpack.c.l.b16 %v7143
    %v7536 = vunpack.c.l.b16 %v7155
    %v7537 = vunpack.c.l.b16 %v7167
    %v7538 = vunpack.c.l.b16 %v7179
    %v7539 = vunpack.c.l.b16 %v7191
    %v7540 = vunpack.c.l.b16 %v7203
    %v7541 = vunpack.c.l.b16 %v7215
    %v7542 = vunpack.c.l.b16 %v7227
    %v7543 = vunpack.c.l.b16 %v7239
    %v7544 = vunpack.c.l.b16 %v7251
    %v7545 = vunpack.c.l.b16 %v7263
    %v7546 = vunpack.c.l.b16 %v7275
    %v7547 = vunpack.c.l.b16 %v7287
    %v7548 = vunpack.c.l.b16 %v7299
    %v7549 = vunpack.c.l.b16 %v7311
    %v7550 = vunpack.c.l.b16 %v7323
    %v7551 = vunpack.c.l.b16 %v7335
    %v7552 = vunpack.c.l.b16 %v7347
    %v7553 = vunpack.c.l.b16 %v7359
    %v7554 = vunpack.c.l.b16 %v7371
    %v7555 = vunpack.c.l.b16 %v7383
    %v7556 = vunpack.c.l.b16 %v7395
    %v7557 = vunpack.c.l.b16 %v7407
    %v7558 = vunpack.c.l.b16 %v7419
    %v7559 = vunpack.c.l.b16 %v7431
    %v7560 = vpack.c.b16 %v7497, %v7496
    %v7561 = vpack.c.b16 %v7499, %v7498
    %v7562 = vpack.c.b16 %v7501, %v7500
    %v7563 = vpack.c.b16 %v7503, %v7502
    %v7564 = vpack.c.b16 %v7505, %v7504
    %v7565 = vpack.c.b16 %v7507, %v7506
    %v7566 = vpack.c.b16 %v7509, %v7508
    %v7567 = vpack.c.b16 %v7511, %v7510
    %v7568 = vpack.c.b16 %v7513, %v7512
    %v7569 = vpack.c.b16 %v7515, %v7514
    %v7570 = vpack.c.b16 %v7517, %v7516
    %v7571 = vpack.c.b16 %v7519, %v7518
    %v7572 = vpack.c.b16 %v7521, %v7520
    %v7573 = vpack.c.b16 %v7523, %v7522
    %v7574 = vpack.c.b16 %v7525, %v7524
    %v7575 = vpack.c.b16 %v7527, %v7526
    %v7576 = vpack.c.b16 %v7529, %v7528
    %v7577 = vpack.c.b16 %v7531, %v7530
    %v7578 = vpack.c.b16 %v7533, %v7532
    %v7579 = vpack.c.b16 %v7535, %v7534
    %v7580 = vpack.c.b16 %v7537, %v7536
    %v7581 = vpack.c.b16 %v7539, %v7538
    %v7582 = vpack.c.b16 %v7541, %v7540
    %v7583 = vpack.c.b16 %v7543, %v7542
    %v7584 = vpack.c.b16 %v7545, %v7544
    %v7585 = vpack.c.b16 %v7547, %v7546
    %v7586 = vpack.c.b16 %v7549, %v7548
    %v7587 = vpack.c.b16 %v7551, %v7550
    %v7588 = vpack.c.b16 %v7553, %v7552
    %v7589 = vpack.c.b16 %v7555, %v7554
    %v7590 = vpack.c.b16 %v7557, %v7556
    %v7591 = vpack.c.b16 %v7559, %v7558
    %v7624 = vadd.bf16 %v6536, %v7560
    %v7625 = vadd.bf16 %v6537, %v7560
    %v7626 = vadd.bf16 %v6538, %v7561
    %v7627 = vadd.bf16 %v6539, %v7561
    %v7628 = vadd.bf16 %v6540, %v7562
    %v7629 = vadd.bf16 %v6541, %v7562
    %v7630 = vadd.bf16 %v6542, %v7563
    %v7631 = vadd.bf16 %v6543, %v7563
    %v7632 = vadd.bf16 %v6544, %v7564
    %v7633 = vadd.bf16 %v6545, %v7564
    %v7634 = vadd.bf16 %v6546, %v7565
    %v7635 = vadd.bf16 %v6547, %v7565
    %v7636 = vadd.bf16 %v6548, %v7566
    %v7637 = vadd.bf16 %v6549, %v7566
    %v7638 = vadd.bf16 %v6550, %v7567
    %v7639 = vadd.bf16 %v6551, %v7567
    %v7640 = vadd.bf16 %v6552, %v7568
    %v7641 = vadd.bf16 %v6553, %v7568
    %v7642 = vadd.bf16 %v6554, %v7569
    %v7643 = vadd.bf16 %v6555, %v7569
    %v7644 = vadd.bf16 %v6556, %v7570
    %v7645 = vadd.bf16 %v6557, %v7570
    %v7646 = vadd.bf16 %v6558, %v7571
    %v7647 = vadd.bf16 %v6559, %v7571
    %v7648 = vadd.bf16 %v6560, %v7572
    %v7649 = vadd.bf16 %v6561, %v7572
    %v7650 = vadd.bf16 %v6562, %v7573
    %v7651 = vadd.bf16 %v6563, %v7573
    %v7652 = vadd.bf16 %v6564, %v7574
    %v7653 = vadd.bf16 %v6565, %v7574
    %v7654 = vadd.bf16 %v6566, %v7575
    %v7655 = vadd.bf16 %v6567, %v7575
    %v7656 = vadd.bf16 %v6568, %v7576
    %v7657 = vadd.bf16 %v6569, %v7576
    %v7658 = vadd.bf16 %v6570, %v7577
    %v7659 = vadd.bf16 %v6571, %v7577
    %v7660 = vadd.bf16 %v6572, %v7578
    %v7661 = vadd.bf16 %v6573, %v7578
    %v7662 = vadd.bf16 %v6574, %v7579
    %v7663 = vadd.bf16 %v6575, %v7579
    %v7664 = vadd.bf16 %v6576, %v7580
    %v7665 = vadd.bf16 %v6577, %v7580
    %v7666 = vadd.bf16 %v6578, %v7581
    %v7667 = vadd.bf16 %v6579, %v7581
    %v7668 = vadd.bf16 %v6580, %v7582
    %v7669 = vadd.bf16 %v6581, %v7582
    %v7670 = vadd.bf16 %v6582, %v7583
    %v7671 = vadd.bf16 %v6583, %v7583
    %v7672 = vadd.bf16 %v6584, %v7584
    %v7673 = vadd.bf16 %v6585, %v7584
    %v7674 = vadd.bf16 %v6586, %v7585
    %v7675 = vadd.bf16 %v6587, %v7585
    %v7676 = vadd.bf16 %v6588, %v7586
    %v7677 = vadd.bf16 %v6589, %v7586
    %v7678 = vadd.bf16 %v6590, %v7587
    %v7679 = vadd.bf16 %v6591, %v7587
    %v7680 = vadd.bf16 %v6592, %v7588
    %v7681 = vadd.bf16 %v6593, %v7588
    %v7682 = vadd.bf16 %v6594, %v7589
    %v7683 = vadd.bf16 %v6595, %v7589
    %v7684 = vadd.bf16 %v6596, %v7590
    %v7685 = vadd.bf16 %v6597, %v7590
    %v7686 = vadd.bf16 %v6598, %v7591
    %v7687 = vadd.bf16 %v6599, %v7591
    %v7688 = vmax.bf16 %v7624, 0
    %v7689 = vmax.bf16 %v7625, 0
    %v7690 = vmax.bf16 %v7626, 0
    %v7691 = vmax.bf16 %v7627, 0
    %v7692 = vmax.bf16 %v7628, 0
    %v7693 = vmax.bf16 %v7629, 0
    %v7694 = vmax.bf16 %v7630, 0
    %v7695 = vmax.bf16 %v7631, 0
    %v7696 = vmax.bf16 %v7632, 0
    %v7697 = vmax.bf16 %v7633, 0
    %v7698 = vmax.bf16 %v7634, 0
    %v7699 = vmax.bf16 %v7635, 0
    %v7700 = vmax.bf16 %v7636, 0
    %v7701 = vmax.bf16 %v7637, 0
    %v7702 = vmax.bf16 %v7638, 0
    %v7703 = vmax.bf16 %v7639, 0
    %v7704 = vmax.bf16 %v7640, 0
    %v7705 = vmax.bf16 %v7641, 0
    %v7706 = vmax.bf16 %v7642, 0
    %v7707 = vmax.bf16 %v7643, 0
    %v7708 = vmax.bf16 %v7644, 0
    %v7709 = vmax.bf16 %v7645, 0
    %v7710 = vmax.bf16 %v7646, 0
    %v7711 = vmax.bf16 %v7647, 0
    %v7712 = vmax.bf16 %v7648, 0
    %v7713 = vmax.bf16 %v7649, 0
    %v7714 = vmax.bf16 %v7650, 0
    %v7715 = vmax.bf16 %v7651, 0
    %v7716 = vmax.bf16 %v7652, 0
    %v7717 = vmax.bf16 %v7653, 0
    %v7718 = vmax.bf16 %v7654, 0
    %v7719 = vmax.bf16 %v7655, 0
    %v7720 = vmax.bf16 %v7656, 0
    %v7721 = vmax.bf16 %v7657, 0
    %v7722 = vmax.bf16 %v7658, 0
    %v7723 = vmax.bf16 %v7659, 0
    %v7724 = vmax.bf16 %v7660, 0
    %v7725 = vmax.bf16 %v7661, 0
    %v7726 = vmax.bf16 %v7662, 0
    %v7727 = vmax.bf16 %v7663, 0
    %v7728 = vmax.bf16 %v7664, 0
    %v7729 = vmax.bf16 %v7665, 0
    %v7730 = vmax.bf16 %v7666, 0
    %v7731 = vmax.bf16 %v7667, 0
    %v7732 = vmax.bf16 %v7668, 0
    %v7733 = vmax.bf16 %v7669, 0
    %v7734 = vmax.bf16 %v7670, 0
    %v7735 = vmax.bf16 %v7671, 0
    %v7736 = vmax.bf16 %v7672, 0
    %v7737 = vmax.bf16 %v7673, 0
    %v7738 = vmax.bf16 %v7674, 0
    %v7739 = vmax.bf16 %v7675, 0
    %v7740 = vmax.bf16 %v7676, 0
    %v7741 = vmax.bf16 %v7677, 0
    %v7742 = vmax.bf16 %v7678, 0
    %v7743 = vmax.bf16 %v7679, 0
    %v7744 = vmax.bf16 %v7680, 0
    %v7745 = vmax.bf16 %v7681, 0
    %v7746 = vmax.bf16 %v7682, 0
    %v7747 = vmax.bf16 %v7683, 0
    %v7748 = vmax.bf16 %v7684, 0
    %v7749 = vmax.bf16 %v7685, 0
    %v7750 = vmax.bf16 %v7686, 0
    %v7751 = vmax.bf16 %v7687, 0
    %v7752 = vld [vmem:[#allocation3] sm:$0xff]
    %v7753 = vld [vmem:[#allocation3 + $0x8] sm:$0xff]
    %v7754 = vld [vmem:[#allocation3 + $0x10] sm:$0xff]
    %v7755 = vld [vmem:[#allocation3 + $0x18] sm:$0xff]
    %v7756 = vld [vmem:[#allocation3 + $0x20] sm:$0xff]
    %v7757 = vld [vmem:[#allocation3 + $0x28] sm:$0xff]
    %v7758 = vld [vmem:[#allocation3 + $0x30] sm:$0xff]
    %v7759 = vld [vmem:[#allocation3 + $0x38] sm:$0xff]
    %v7760 = vld [vmem:[#allocation3 + $0x40] sm:$0xff]
    %v7761 = vld [vmem:[#allocation3 + $0x48] sm:$0xff]
    %v7762 = vld [vmem:[#allocation3 + $0x50] sm:$0xff]
    %v7763 = vld [vmem:[#allocation3 + $0x58] sm:$0xff]
    %v7764 = vld [vmem:[#allocation3 + $0x60] sm:$0xff]
    %v7765 = vld [vmem:[#allocation3 + $0x68] sm:$0xff]
    %v7766 = vld [vmem:[#allocation3 + $0x70] sm:$0xff]
    %v7767 = vld [vmem:[#allocation3 + $0x78] sm:$0xff]
    %v7768 = vld [vmem:[#allocation3 + $0x80] sm:$0xff]
    %v7769 = vld [vmem:[#allocation3 + $0x88] sm:$0xff]
    %v7770 = vld [vmem:[#allocation3 + $0x90] sm:$0xff]
    %v7771 = vld [vmem:[#allocation3 + $0x98] sm:$0xff]
    %v7772 = vld [vmem:[#allocation3 + $0xa0] sm:$0xff]
    %v7773 = vld [vmem:[#allocation3 + $0xa8] sm:$0xff]
    %v7774 = vld [vmem:[#allocation3 + $0xb0] sm:$0xff]
    %v7775 = vld [vmem:[#allocation3 + $0xb8] sm:$0xff]
    %v7776 = vld [vmem:[#allocation3 + $0xc0] sm:$0xff]
    %v7777 = vld [vmem:[#allocation3 + $0xc8] sm:$0xff]
    %v7778 = vld [vmem:[#allocation3 + $0xd0] sm:$0xff]
    %v7779 = vld [vmem:[#allocation3 + $0xd8] sm:$0xff]
    %v7780 = vld [vmem:[#allocation3 + $0xe0] sm:$0xff]
    %v7781 = vld [vmem:[#allocation3 + $0xe8] sm:$0xff]
    %v7782 = vld [vmem:[#allocation3 + $0xf0] sm:$0xff]
    %v7783 = vld [vmem:[#allocation3 + $0xf8] sm:$0xff]
    %v7784 = vld [vmem:[#allocation3 + $0x100] sm:$0xff]
    %v7785 = vld [vmem:[#allocation3 + $0x108] sm:$0xff]
    %v7786 = vld [vmem:[#allocation3 + $0x110] sm:$0xff]
    %v7787 = vld [vmem:[#allocation3 + $0x118] sm:$0xff]
    %v7788 = vld [vmem:[#allocation3 + $0x120] sm:$0xff]
    %v7789 = vld [vmem:[#allocation3 + $0x128] sm:$0xff]
    %v7790 = vld [vmem:[#allocation3 + $0x130] sm:$0xff]
    %v7791 = vld [vmem:[#allocation3 + $0x138] sm:$0xff]
    %v7792 = vld [vmem:[#allocation3 + $0x140] sm:$0xff]
    %v7793 = vld [vmem:[#allocation3 + $0x148] sm:$0xff]
    %v7794 = vld [vmem:[#allocation3 + $0x150] sm:$0xff]
    %v7795 = vld [vmem:[#allocation3 + $0x158] sm:$0xff]
    %v7796 = vld [vmem:[#allocation3 + $0x160] sm:$0xff]
    %v7797 = vld [vmem:[#allocation3 + $0x168] sm:$0xff]
    %v7798 = vld [vmem:[#allocation3 + $0x170] sm:$0xff]
    %v7799 = vld [vmem:[#allocation3 + $0x178] sm:$0xff]
    %v7800 = vld [vmem:[#allocation3 + $0x180] sm:$0xff]
    %v7801 = vld [vmem:[#allocation3 + $0x188] sm:$0xff]
    %v7802 = vld [vmem:[#allocation3 + $0x190] sm:$0xff]
    %v7803 = vld [vmem:[#allocation3 + $0x198] sm:$0xff]
    %v7804 = vld [vmem:[#allocation3 + $0x1a0] sm:$0xff]
    %v7805 = vld [vmem:[#allocation3 + $0x1a8] sm:$0xff]
    %v7806 = vld [vmem:[#allocation3 + $0x1b0] sm:$0xff]
    %v7807 = vld [vmem:[#allocation3 + $0x1b8] sm:$0xff]
    %v7808 = vld [vmem:[#allocation3 + $0x1c0] sm:$0xff]
    %v7809 = vld [vmem:[#allocation3 + $0x1c8] sm:$0xff]
    %v7810 = vld [vmem:[#allocation3 + $0x1d0] sm:$0xff]
    %v7811 = vld [vmem:[#allocation3 + $0x1d8] sm:$0xff]
    %v7812 = vld [vmem:[#allocation3 + $0x1e0] sm:$0xff]
    %v7813 = vld [vmem:[#allocation3 + $0x1e8] sm:$0xff]
    %v7814 = vld [vmem:[#allocation3 + $0x1f0] sm:$0xff]
    %v7815 = vld [vmem:[#allocation3 + $0x1f8] sm:$0xff]
    %v7816 = vld [vmem:[#allocation3 + $0x200] sm:$0xff]
    %v7817 = vld [vmem:[#allocation3 + $0x208] sm:$0xff]
    %v7818 = vld [vmem:[#allocation3 + $0x210] sm:$0xff]
    %v7819 = vld [vmem:[#allocation3 + $0x218] sm:$0xff]
    %v7820 = vld [vmem:[#allocation3 + $0x220] sm:$0xff]
    %v7821 = vld [vmem:[#allocation3 + $0x228] sm:$0xff]
    %v7822 = vld [vmem:[#allocation3 + $0x230] sm:$0xff]
    %v7823 = vld [vmem:[#allocation3 + $0x238] sm:$0xff]
    %v7824 = vld [vmem:[#allocation3 + $0x240] sm:$0xff]
    %v7825 = vld [vmem:[#allocation3 + $0x248] sm:$0xff]
    %v7826 = vld [vmem:[#allocation3 + $0x250] sm:$0xff]
    %v7827 = vld [vmem:[#allocation3 + $0x258] sm:$0xff]
    %v7828 = vld [vmem:[#allocation3 + $0x260] sm:$0xff]
    %v7829 = vld [vmem:[#allocation3 + $0x268] sm:$0xff]
    %v7830 = vld [vmem:[#allocation3 + $0x270] sm:$0xff]
    %v7831 = vld [vmem:[#allocation3 + $0x278] sm:$0xff]
    %v7832 = vld [vmem:[#allocation3 + $0x280] sm:$0xff]
    %v7833 = vld [vmem:[#allocation3 + $0x288] sm:$0xff]
    %v7834 = vld [vmem:[#allocation3 + $0x290] sm:$0xff]
    %v7835 = vld [vmem:[#allocation3 + $0x298] sm:$0xff]
    %v7836 = vld [vmem:[#allocation3 + $0x2a0] sm:$0xff]
    %v7837 = vld [vmem:[#allocation3 + $0x2a8] sm:$0xff]
    %v7838 = vld [vmem:[#allocation3 + $0x2b0] sm:$0xff]
    %v7839 = vld [vmem:[#allocation3 + $0x2b8] sm:$0xff]
    %v7840 = vld [vmem:[#allocation3 + $0x2c0] sm:$0xff]
    %v7841 = vld [vmem:[#allocation3 + $0x2c8] sm:$0xff]
    %v7842 = vld [vmem:[#allocation3 + $0x2d0] sm:$0xff]
    %v7843 = vld [vmem:[#allocation3 + $0x2d8] sm:$0xff]
    %v7844 = vld [vmem:[#allocation3 + $0x2e0] sm:$0xff]
    %v7845 = vld [vmem:[#allocation3 + $0x2e8] sm:$0xff]
    %v7846 = vld [vmem:[#allocation3 + $0x2f0] sm:$0xff]
    %v7847 = vld [vmem:[#allocation3 + $0x2f8] sm:$0xff]
    %v7848 = vld [vmem:[#allocation3 + $0x300] sm:$0xff]
    %v7849 = vld [vmem:[#allocation3 + $0x308] sm:$0xff]
    %v7850 = vld [vmem:[#allocation3 + $0x310] sm:$0xff]
    %v7851 = vld [vmem:[#allocation3 + $0x318] sm:$0xff]
    %v7852 = vld [vmem:[#allocation3 + $0x320] sm:$0xff]
    %v7853 = vld [vmem:[#allocation3 + $0x328] sm:$0xff]
    %v7854 = vld [vmem:[#allocation3 + $0x330] sm:$0xff]
    %v7855 = vld [vmem:[#allocation3 + $0x338] sm:$0xff]
    %v7856 = vld [vmem:[#allocation3 + $0x340] sm:$0xff]
    %v7857 = vld [vmem:[#allocation3 + $0x348] sm:$0xff]
    %v7858 = vld [vmem:[#allocation3 + $0x350] sm:$0xff]
    %v7859 = vld [vmem:[#allocation3 + $0x358] sm:$0xff]
    %v7860 = vld [vmem:[#allocation3 + $0x360] sm:$0xff]
    %v7861 = vld [vmem:[#allocation3 + $0x368] sm:$0xff]
    %v7862 = vld [vmem:[#allocation3 + $0x370] sm:$0xff]
    %v7863 = vld [vmem:[#allocation3 + $0x378] sm:$0xff]
    %v7864 = vld [vmem:[#allocation3 + $0x380] sm:$0xff]
    %v7865 = vld [vmem:[#allocation3 + $0x388] sm:$0xff]
    %v7866 = vld [vmem:[#allocation3 + $0x390] sm:$0xff]
    %v7867 = vld [vmem:[#allocation3 + $0x398] sm:$0xff]
    %v7868 = vld [vmem:[#allocation3 + $0x3a0] sm:$0xff]
    %v7869 = vld [vmem:[#allocation3 + $0x3a8] sm:$0xff]
    %v7870 = vld [vmem:[#allocation3 + $0x3b0] sm:$0xff]
    %v7871 = vld [vmem:[#allocation3 + $0x3b8] sm:$0xff]
    %v7872 = vld [vmem:[#allocation3 + $0x3c0] sm:$0xff]
    %v7873 = vld [vmem:[#allocation3 + $0x3c8] sm:$0xff]
    %v7874 = vld [vmem:[#allocation3 + $0x3d0] sm:$0xff]
    %v7875 = vld [vmem:[#allocation3 + $0x3d8] sm:$0xff]
    %v7876 = vld [vmem:[#allocation3 + $0x3e0] sm:$0xff]
    %v7877 = vld [vmem:[#allocation3 + $0x3e8] sm:$0xff]
    %v7878 = vld [vmem:[#allocation3 + $0x3f0] sm:$0xff]
    %v7879 = vld [vmem:[#allocation3 + $0x3f8] sm:$0xff]
    %v8008 = vunpack.c.l.b16 %v7752
    %v8009 = vunpack.c.h.b16 %v7752
    %v8010 = vunpack.c.l.b16 %v7753
    %v8011 = vunpack.c.h.b16 %v7753
    %v8012 = vunpack.c.l.b16 %v7754
    %v8013 = vunpack.c.h.b16 %v7754
    %v8014 = vunpack.c.l.b16 %v7755
    %v8015 = vunpack.c.h.b16 %v7755
    %v8016 = vunpack.c.l.b16 %v7756
    %v8017 = vunpack.c.h.b16 %v7756
    %v8018 = vunpack.c.l.b16 %v7757
    %v8019 = vunpack.c.h.b16 %v7757
    %v8020 = vunpack.c.l.b16 %v7758
    %v8021 = vunpack.c.h.b16 %v7758
    %v8022 = vunpack.c.l.b16 %v7759
    %v8023 = vunpack.c.h.b16 %v7759
    %v8024 = vunpack.c.l.b16 %v7760
    %v8025 = vunpack.c.h.b16 %v7760
    %v8026 = vunpack.c.l.b16 %v7761
    %v8027 = vunpack.c.h.b16 %v7761
    %v8028 = vunpack.c.l.b16 %v7762
    %v8029 = vunpack.c.h.b16 %v7762
    %v8030 = vunpack.c.l.b16 %v7763
    %v8031 = vunpack.c.h.b16 %v7763
    %v8032 = vunpack.c.l.b16 %v7764
    %v8033 = vunpack.c.h.b16 %v7764
    %v8034 = vunpack.c.l.b16 %v7765
    %v8035 = vunpack.c.h.b16 %v7765
    %v8036 = vunpack.c.l.b16 %v7766
    %v8037 = vunpack.c.h.b16 %v7766
    %v8038 = vunpack.c.l.b16 %v7767
    %v8039 = vunpack.c.h.b16 %v7767
    %v8040 = vunpack.c.l.b16 %v7768
    %v8041 = vunpack.c.h.b16 %v7768
    %v8042 = vunpack.c.l.b16 %v7769
    %v8043 = vunpack.c.h.b16 %v7769
    %v8044 = vunpack.c.l.b16 %v7770
    %v8045 = vunpack.c.h.b16 %v7770
    %v8046 = vunpack.c.l.b16 %v7771
    %v8047 = vunpack.c.h.b16 %v7771
    %v8048 = vunpack.c.l.b16 %v7772
    %v8049 = vunpack.c.h.b16 %v7772
    %v8050 = vunpack.c.l.b16 %v7773
    %v8051 = vunpack.c.h.b16 %v7773
    %v8052 = vunpack.c.l.b16 %v7774
    %v8053 = vunpack.c.h.b16 %v7774
    %v8054 = vunpack.c.l.b16 %v7775
    %v8055 = vunpack.c.h.b16 %v7775
    %v8056 = vunpack.c.l.b16 %v7776
    %v8057 = vunpack.c.h.b16 %v7776
    %v8058 = vunpack.c.l.b16 %v7777
    %v8059 = vunpack.c.h.b16 %v7777
    %v8060 = vunpack.c.l.b16 %v7778
    %v8061 = vunpack.c.h.b16 %v7778
    %v8062 = vunpack.c.l.b16 %v7779
    %v8063 = vunpack.c.h.b16 %v7779
    %v8064 = vunpack.c.l.b16 %v7780
    %v8065 = vunpack.c.h.b16 %v7780
    %v8066 = vunpack.c.l.b16 %v7781
    %v8067 = vunpack.c.h.b16 %v7781
    %v8068 = vunpack.c.l.b16 %v7782
    %v8069 = vunpack.c.h.b16 %v7782
    %v8070 = vunpack.c.l.b16 %v7783
    %v8071 = vunpack.c.h.b16 %v7783
    %v8072 = vunpack.c.l.b16 %v7784
    %v8073 = vunpack.c.h.b16 %v7784
    %v8074 = vunpack.c.l.b16 %v7785
    %v8075 = vunpack.c.h.b16 %v7785
    %v8076 = vunpack.c.l.b16 %v7786
    %v8077 = vunpack.c.h.b16 %v7786
    %v8078 = vunpack.c.l.b16 %v7787
    %v8079 = vunpack.c.h.b16 %v7787
    %v8080 = vunpack.c.l.b16 %v7788
    %v8081 = vunpack.c.h.b16 %v7788
    %v8082 = vunpack.c.l.b16 %v7789
    %v8083 = vunpack.c.h.b16 %v7789
    %v8084 = vunpack.c.l.b16 %v7790
    %v8085 = vunpack.c.h.b16 %v7790
    %v8086 = vunpack.c.l.b16 %v7791
    %v8087 = vunpack.c.h.b16 %v7791
    %v8088 = vunpack.c.l.b16 %v7792
    %v8089 = vunpack.c.h.b16 %v7792
    %v8090 = vunpack.c.l.b16 %v7793
    %v8091 = vunpack.c.h.b16 %v7793
    %v8092 = vunpack.c.l.b16 %v7794
    %v8093 = vunpack.c.h.b16 %v7794
    %v8094 = vunpack.c.l.b16 %v7795
    %v8095 = vunpack.c.h.b16 %v7795
    %v8096 = vunpack.c.l.b16 %v7796
    %v8097 = vunpack.c.h.b16 %v7796
    %v8098 = vunpack.c.l.b16 %v7797
    %v8099 = vunpack.c.h.b16 %v7797
    %v8100 = vunpack.c.l.b16 %v7798
    %v8101 = vunpack.c.h.b16 %v7798
    %v8102 = vunpack.c.l.b16 %v7799
    %v8103 = vunpack.c.h.b16 %v7799
    %v8104 = vunpack.c.l.b16 %v7800
    %v8105 = vunpack.c.h.b16 %v7800
    %v8106 = vunpack.c.l.b16 %v7801
    %v8107 = vunpack.c.h.b16 %v7801
    %v8108 = vunpack.c.l.b16 %v7802
    %v8109 = vunpack.c.h.b16 %v7802
    %v8110 = vunpack.c.l.b16 %v7803
    %v8111 = vunpack.c.h.b16 %v7803
    %v8112 = vunpack.c.l.b16 %v7804
    %v8113 = vunpack.c.h.b16 %v7804
    %v8114 = vunpack.c.l.b16 %v7805
    %v8115 = vunpack.c.h.b16 %v7805
    %v8116 = vunpack.c.l.b16 %v7806
    %v8117 = vunpack.c.h.b16 %v7806
    %v8118 = vunpack.c.l.b16 %v7807
    %v8119 = vunpack.c.h.b16 %v7807
    %v8120 = vunpack.c.l.b16 %v7808
    %v8121 = vunpack.c.h.b16 %v7808
    %v8122 = vunpack.c.l.b16 %v7809
    %v8123 = vunpack.c.h.b16 %v7809
    %v8124 = vunpack.c.l.b16 %v7810
    %v8125 = vunpack.c.h.b16 %v7810
    %v8126 = vunpack.c.l.b16 %v7811
    %v8127 = vunpack.c.h.b16 %v7811
    %v8128 = vunpack.c.l.b16 %v7812
    %v8129 = vunpack.c.h.b16 %v7812
    %v8130 = vunpack.c.l.b16 %v7813
    %v8131 = vunpack.c.h.b16 %v7813
    %v8132 = vunpack.c.l.b16 %v7814
    %v8133 = vunpack.c.h.b16 %v7814
    %v8134 = vunpack.c.l.b16 %v7815
    %v8135 = vunpack.c.h.b16 %v7815
    %v8136 = vunpack.c.l.b16 %v7816
    %v8137 = vunpack.c.h.b16 %v7816
    %v8138 = vunpack.c.l.b16 %v7817
    %v8139 = vunpack.c.h.b16 %v7817
    %v8140 = vunpack.c.l.b16 %v7818
    %v8141 = vunpack.c.h.b16 %v7818
    %v8142 = vunpack.c.l.b16 %v7819
    %v8143 = vunpack.c.h.b16 %v7819
    %v8144 = vunpack.c.l.b16 %v7820
    %v8145 = vunpack.c.h.b16 %v7820
    %v8146 = vunpack.c.l.b16 %v7821
    %v8147 = vunpack.c.h.b16 %v7821
    %v8148 = vunpack.c.l.b16 %v7822
    %v8149 = vunpack.c.h.b16 %v7822
    %v8150 = vunpack.c.l.b16 %v7823
    %v8151 = vunpack.c.h.b16 %v7823
    %v8152 = vunpack.c.l.b16 %v7824
    %v8153 = vunpack.c.h.b16 %v7824
    %v8154 = vunpack.c.l.b16 %v7825
    %v8155 = vunpack.c.h.b16 %v7825
    %v8156 = vunpack.c.l.b16 %v7826
    %v8157 = vunpack.c.h.b16 %v7826
    %v8158 = vunpack.c.l.b16 %v7827
    %v8159 = vunpack.c.h.b16 %v7827
    %v8160 = vunpack.c.l.b16 %v7828
    %v8161 = vunpack.c.h.b16 %v7828
    %v8162 = vunpack.c.l.b16 %v7829
    %v8163 = vunpack.c.h.b16 %v7829
    %v8164 = vunpack.c.l.b16 %v7830
    %v8165 = vunpack.c.h.b16 %v7830
    %v8166 = vunpack.c.l.b16 %v7831
    %v8167 = vunpack.c.h.b16 %v7831
    %v8168 = vunpack.c.l.b16 %v7832
    %v8169 = vunpack.c.h.b16 %v7832
    %v8170 = vunpack.c.l.b16 %v7833
    %v8171 = vunpack.c.h.b16 %v7833
    %v8172 = vunpack.c.l.b16 %v7834
    %v8173 = vunpack.c.h.b16 %v7834
    %v8174 = vunpack.c.l.b16 %v7835
    %v8175 = vunpack.c.h.b16 %v7835
    %v8176 = vunpack.c.l.b16 %v7836
    %v8177 = vunpack.c.h.b16 %v7836
    %v8178 = vunpack.c.l.b16 %v7837
    %v8179 = vunpack.c.h.b16 %v7837
    %v8180 = vunpack.c.l.b16 %v7838
    %v8181 = vunpack.c.h.b16 %v7838
    %v8182 = vunpack.c.l.b16 %v7839
    %v8183 = vunpack.c.h.b16 %v7839
    %v8184 = vunpack.c.l.b16 %v7840
    %v8185 = vunpack.c.h.b16 %v7840
    %v8186 = vunpack.c.l.b16 %v7841
    %v8187 = vunpack.c.h.b16 %v7841
    %v8188 = vunpack.c.l.b16 %v7842
    %v8189 = vunpack.c.h.b16 %v7842
    %v8190 = vunpack.c.l.b16 %v7843
    %v8191 = vunpack.c.h.b16 %v7843
    %v8192 = vunpack.c.l.b16 %v7844
    %v8193 = vunpack.c.h.b16 %v7844
    %v8194 = vunpack.c.l.b16 %v7845
    %v8195 = vunpack.c.h.b16 %v7845
    %v8196 = vunpack.c.l.b16 %v7846
    %v8197 = vunpack.c.h.b16 %v7846
    %v8198 = vunpack.c.l.b16 %v7847
    %v8199 = vunpack.c.h.b16 %v7847
    %v8200 = vunpack.c.l.b16 %v7848
    %v8201 = vunpack.c.h.b16 %v7848
    %v8202 = vunpack.c.l.b16 %v7849
    %v8203 = vunpack.c.h.b16 %v7849
    %v8204 = vunpack.c.l.b16 %v7850
    %v8205 = vunpack.c.h.b16 %v7850
    %v8206 = vunpack.c.l.b16 %v7851
    %v8207 = vunpack.c.h.b16 %v7851
    %v8208 = vunpack.c.l.b16 %v7852
    %v8209 = vunpack.c.h.b16 %v7852
    %v8210 = vunpack.c.l.b16 %v7853
    %v8211 = vunpack.c.h.b16 %v7853
    %v8212 = vunpack.c.l.b16 %v7854
    %v8213 = vunpack.c.h.b16 %v7854
    %v8214 = vunpack.c.l.b16 %v7855
    %v8215 = vunpack.c.h.b16 %v7855
    %v8216 = vunpack.c.l.b16 %v7856
    %v8217 = vunpack.c.h.b16 %v7856
    %v8218 = vunpack.c.l.b16 %v7857
    %v8219 = vunpack.c.h.b16 %v7857
    %v8220 = vunpack.c.l.b16 %v7858
    %v8221 = vunpack.c.h.b16 %v7858
    %v8222 = vunpack.c.l.b16 %v7859
    %v8223 = vunpack.c.h.b16 %v7859
    %v8224 = vunpack.c.l.b16 %v7860
    %v8225 = vunpack.c.h.b16 %v7860
    %v8226 = vunpack.c.l.b16 %v7861
    %v8227 = vunpack.c.h.b16 %v7861
    %v8228 = vunpack.c.l.b16 %v7862
    %v8229 = vunpack.c.h.b16 %v7862
    %v8230 = vunpack.c.l.b16 %v7863
    %v8231 = vunpack.c.h.b16 %v7863
    %v8232 = vunpack.c.l.b16 %v7864
    %v8233 = vunpack.c.h.b16 %v7864
    %v8234 = vunpack.c.l.b16 %v7865
    %v8235 = vunpack.c.h.b16 %v7865
    %v8236 = vunpack.c.l.b16 %v7866
    %v8237 = vunpack.c.h.b16 %v7866
    %v8238 = vunpack.c.l.b16 %v7867
    %v8239 = vunpack.c.h.b16 %v7867
    %v8240 = vunpack.c.l.b16 %v7868
    %v8241 = vunpack.c.h.b16 %v7868
    %v8242 = vunpack.c.l.b16 %v7869
    %v8243 = vunpack.c.h.b16 %v7869
    %v8244 = vunpack.c.l.b16 %v7870
    %v8245 = vunpack.c.h.b16 %v7870
    %v8246 = vunpack.c.l.b16 %v7871
    %v8247 = vunpack.c.h.b16 %v7871
    %v8248 = vunpack.c.l.b16 %v7872
    %v8249 = vunpack.c.h.b16 %v7872
    %v8250 = vunpack.c.l.b16 %v7873
    %v8251 = vunpack.c.h.b16 %v7873
    %v8252 = vunpack.c.l.b16 %v7874
    %v8253 = vunpack.c.h.b16 %v7874
    %v8254 = vunpack.c.l.b16 %v7875
    %v8255 = vunpack.c.h.b16 %v7875
    %v8256 = vunpack.c.l.b16 %v7876
    %v8257 = vunpack.c.h.b16 %v7876
    %v8258 = vunpack.c.l.b16 %v7877
    %v8259 = vunpack.c.h.b16 %v7877
    %v8260 = vunpack.c.l.b16 %v7878
    %v8261 = vunpack.c.h.b16 %v7878
    %v8262 = vunpack.c.l.b16 %v7879
    %v8263 = vunpack.c.h.b16 %v7879
    %v8264 = vpack.c.b16 %v8012, %v8008
    %v8265 = vpack.c.b16 %v8013, %v8009
    %v8266 = vpack.c.b16 %v8014, %v8010
    %v8267 = vpack.c.b16 %v8015, %v8011
    %v8268 = vpack.c.b16 %v8020, %v8016
    %v8269 = vpack.c.b16 %v8021, %v8017
    %v8270 = vpack.c.b16 %v8022, %v8018
    %v8271 = vpack.c.b16 %v8023, %v8019
    %v8272 = vpack.c.b16 %v8028, %v8024
    %v8273 = vpack.c.b16 %v8029, %v8025
    %v8274 = vpack.c.b16 %v8030, %v8026
    %v8275 = vpack.c.b16 %v8031, %v8027
    %v8276 = vpack.c.b16 %v8036, %v8032
    %v8277 = vpack.c.b16 %v8037, %v8033
    %v8278 = vpack.c.b16 %v8038, %v8034
    %v8279 = vpack.c.b16 %v8039, %v8035
    %v8280 = vpack.c.b16 %v8044, %v8040
    %v8281 = vpack.c.b16 %v8045, %v8041
    %v8282 = vpack.c.b16 %v8046, %v8042
    %v8283 = vpack.c.b16 %v8047, %v8043
    %v8284 = vpack.c.b16 %v8052, %v8048
    %v8285 = vpack.c.b16 %v8053, %v8049
    %v8286 = vpack.c.b16 %v8054, %v8050
    %v8287 = vpack.c.b16 %v8055, %v8051
    %v8288 = vpack.c.b16 %v8060, %v8056
    %v8289 = vpack.c.b16 %v8061, %v8057
    %v8290 = vpack.c.b16 %v8062, %v8058
    %v8291 = vpack.c.b16 %v8063, %v8059
    %v8292 = vpack.c.b16 %v8068, %v8064
    %v8293 = vpack.c.b16 %v8069, %v8065
    %v8294 = vpack.c.b16 %v8070, %v8066
    %v8295 = vpack.c.b16 %v8071, %v8067
    %v8296 = vpack.c.b16 %v8076, %v8072
    %v8297 = vpack.c.b16 %v8077, %v8073
    %v8298 = vpack.c.b16 %v8078, %v8074
    %v8299 = vpack.c.b16 %v8079, %v8075
    %v8300 = vpack.c.b16 %v8084, %v8080
    %v8301 = vpack.c.b16 %v8085, %v8081
    %v8302 = vpack.c.b16 %v8086, %v8082
    %v8303 = vpack.c.b16 %v8087, %v8083
    %v8304 = vpack.c.b16 %v8092, %v8088
    %v8305 = vpack.c.b16 %v8093, %v8089
    %v8306 = vpack.c.b16 %v8094, %v8090
    %v8307 = vpack.c.b16 %v8095, %v8091
    %v8308 = vpack.c.b16 %v8100, %v8096
    %v8309 = vpack.c.b16 %v8101, %v8097
    %v8310 = vpack.c.b16 %v8102, %v8098
    %v8311 = vpack.c.b16 %v8103, %v8099
    %v8312 = vpack.c.b16 %v8108, %v8104
    %v8313 = vpack.c.b16 %v8109, %v8105
    %v8314 = vpack.c.b16 %v8110, %v8106
    %v8315 = vpack.c.b16 %v8111, %v8107
    %v8316 = vpack.c.b16 %v8116, %v8112
    %v8317 = vpack.c.b16 %v8117, %v8113
    %v8318 = vpack.c.b16 %v8118, %v8114
    %v8319 = vpack.c.b16 %v8119, %v8115
    %v8320 = vpack.c.b16 %v8124, %v8120
    %v8321 = vpack.c.b16 %v8125, %v8121
    %v8322 = vpack.c.b16 %v8126, %v8122
    %v8323 = vpack.c.b16 %v8127, %v8123
    %v8324 = vpack.c.b16 %v8132, %v8128
    %v8325 = vpack.c.b16 %v8133, %v8129
    %v8326 = vpack.c.b16 %v8134, %v8130
    %v8327 = vpack.c.b16 %v8135, %v8131
    %v8328 = vpack.c.b16 %v8140, %v8136
    %v8329 = vpack.c.b16 %v8141, %v8137
    %v8330 = vpack.c.b16 %v8142, %v8138
    %v8331 = vpack.c.b16 %v8143, %v8139
    %v8332 = vpack.c.b16 %v8148, %v8144
    %v8333 = vpack.c.b16 %v8149, %v8145
    %v8334 = vpack.c.b16 %v8150, %v8146
    %v8335 = vpack.c.b16 %v8151, %v8147
    %v8336 = vpack.c.b16 %v8156, %v8152
    %v8337 = vpack.c.b16 %v8157, %v8153
    %v8338 = vpack.c.b16 %v8158, %v8154
    %v8339 = vpack.c.b16 %v8159, %v8155
    %v8340 = vpack.c.b16 %v8164, %v8160
    %v8341 = vpack.c.b16 %v8165, %v8161
    %v8342 = vpack.c.b16 %v8166, %v8162
    %v8343 = vpack.c.b16 %v8167, %v8163
    %v8344 = vpack.c.b16 %v8172, %v8168
    %v8345 = vpack.c.b16 %v8173, %v8169
    %v8346 = vpack.c.b16 %v8174, %v8170
    %v8347 = vpack.c.b16 %v8175, %v8171
    %v8348 = vpack.c.b16 %v8180, %v8176
    %v8349 = vpack.c.b16 %v8181, %v8177
    %v8350 = vpack.c.b16 %v8182, %v8178
    %v8351 = vpack.c.b16 %v8183, %v8179
    %v8352 = vpack.c.b16 %v8188, %v8184
    %v8353 = vpack.c.b16 %v8189, %v8185
    %v8354 = vpack.c.b16 %v8190, %v8186
    %v8355 = vpack.c.b16 %v8191, %v8187
    %v8356 = vpack.c.b16 %v8196, %v8192
    %v8357 = vpack.c.b16 %v8197, %v8193
    %v8358 = vpack.c.b16 %v8198, %v8194
    %v8359 = vpack.c.b16 %v8199, %v8195
    %v8360 = vpack.c.b16 %v8204, %v8200
    %v8361 = vpack.c.b16 %v8205, %v8201
    %v8362 = vpack.c.b16 %v8206, %v8202
    %v8363 = vpack.c.b16 %v8207, %v8203
    %v8364 = vpack.c.b16 %v8212, %v8208
    %v8365 = vpack.c.b16 %v8213, %v8209
    %v8366 = vpack.c.b16 %v8214, %v8210
    %v8367 = vpack.c.b16 %v8215, %v8211
    %v8368 = vpack.c.b16 %v8220, %v8216
    %v8369 = vpack.c.b16 %v8221, %v8217
    %v8370 = vpack.c.b16 %v8222, %v8218
    %v8371 = vpack.c.b16 %v8223, %v8219
    %v8372 = vpack.c.b16 %v8228, %v8224
    %v8373 = vpack.c.b16 %v8229, %v8225
    %v8374 = vpack.c.b16 %v8230, %v8226
    %v8375 = vpack.c.b16 %v8231, %v8227
    %v8376 = vpack.c.b16 %v8236, %v8232
    %v8377 = vpack.c.b16 %v8237, %v8233
    %v8378 = vpack.c.b16 %v8238, %v8234
    %v8379 = vpack.c.b16 %v8239, %v8235
    %v8380 = vpack.c.b16 %v8244, %v8240
    %v8381 = vpack.c.b16 %v8245, %v8241
    %v8382 = vpack.c.b16 %v8246, %v8242
    %v8383 = vpack.c.b16 %v8247, %v8243
    %v8384 = vpack.c.b16 %v8252, %v8248
    %v8385 = vpack.c.b16 %v8253, %v8249
    %v8386 = vpack.c.b16 %v8254, %v8250
    %v8387 = vpack.c.b16 %v8255, %v8251
    %v8388 = vpack.c.b16 %v8260, %v8256
    %v8389 = vpack.c.b16 %v8261, %v8257
    %v8390 = vpack.c.b16 %v8262, %v8258
    %v8391 = vpack.c.b16 %v8263, %v8259
    %8520 = vmatprep.subr.bf16.mxu0 %v7703
    %8521 = vmatpush1.bf16.msra.mxu0 %v7702
    %8522 = vmatprep.subr.bf16.mxu0 %v7701
    %8523 = vmatpush1.bf16.msra.mxu0 %v7700
    %8524 = vmatprep.subr.bf16.mxu0 %v7699
    %8525 = vmatpush1.bf16.msra.mxu0 %v7698
    %8526 = vmatprep.subr.bf16.mxu0 %v7697
    %8527 = vmatpush1.bf16.msra.mxu0 %v7696
    %8528 = vmatprep.subr.bf16.mxu0 %v7695
    %8529 = vmatpush1.bf16.msra.mxu0 %v7694
    %8530 = vmatprep.subr.bf16.mxu0 %v7693
    %8531 = vmatpush1.bf16.msra.mxu0 %v7692
    %8532 = vmatprep.subr.bf16.mxu0 %v7691
    %8533 = vmatpush1.bf16.msra.mxu0 %v7690
    %8534 = vmatprep.subr.bf16.mxu0 %v7689
    %8535 = vmatpush1.bf16.msra.mxu0 %v7688
    %8536 = vmatprep.subr.bf16.mxu0 %v7719
    %8537 = vmatpush2.bf16.msra.mxu0 %v7718
    %8538 = vmatprep.subr.bf16.mxu0 %v7717
    %8539 = vmatpush2.bf16.msra.mxu0 %v7716
    %8540 = vmatprep.subr.bf16.mxu0 %v7715
    %8541 = vmatpush2.bf16.msra.mxu0 %v7714
    %8542 = vmatprep.subr.bf16.mxu0 %v7713
    %8543 = vmatpush2.bf16.msra.mxu0 %v7712
    %8544 = vmatprep.subr.bf16.mxu0 %v7711
    %8545 = vmatpush2.bf16.msra.mxu0 %v7710
    %8546 = vmatprep.subr.bf16.mxu0 %v7709
    %8547 = vmatpush2.bf16.msra.mxu0 %v7708
    %8548 = vmatprep.subr.bf16.mxu0 %v7707
    %8549 = vmatpush2.bf16.msra.mxu0 %v7706
    %8550 = vmatprep.subr.bf16.mxu0 %v7705
    %8551 = vmatpush2.bf16.msra.mxu0 %v7704
    %8552 = vmatprep.mubr.bf16.mxu0 %v8265
    %8553 = vmatmul.mubr.bf16.gmra.mxu0 %v8264
    %v8554 = vpop.f32.mrf.mxu0
    %v8555 = vadd.f32 0.0, %v8554
    %v8556 = vpop.f32.mrf.mxu0
    %v8557 = vadd.f32 0.0, %v8556
    %v8558 = vpop.f32.mrf.mxu0
    %v8559 = vadd.f32 0.0, %v8558
    %v8560 = vpop.f32.mrf.mxu0
    %v8561 = vadd.f32 0.0, %v8560
    %8562 = vmatprep.mubr.bf16.mxu0 %v8269
    %8563 = vmatmul.mubr.bf16.gmra.mxu0 %v8268
    %v8564 = vpop.f32.mrf.mxu0
    %v8565 = vadd.f32 0.0, %v8564
    %v8566 = vpop.f32.mrf.mxu0
    %v8567 = vadd.f32 0.0, %v8566
    %v8568 = vpop.f32.mrf.mxu0
    %v8569 = vadd.f32 0.0, %v8568
    %v8570 = vpop.f32.mrf.mxu0
    %v8571 = vadd.f32 0.0, %v8570
    %8572 = vmatprep.mubr.bf16.mxu0 %v8273
    %8573 = vmatmul.mubr.bf16.gmra.mxu0 %v8272
    %v8574 = vpop.f32.mrf.mxu0
    %v8575 = vadd.f32 0.0, %v8574
    %v8576 = vpop.f32.mrf.mxu0
    %v8577 = vadd.f32 0.0, %v8576
    %v8578 = vpop.f32.mrf.mxu0
    %v8579 = vadd.f32 0.0, %v8578
    %v8580 = vpop.f32.mrf.mxu0
    %v8581 = vadd.f32 0.0, %v8580
    %8582 = vmatprep.mubr.bf16.mxu0 %v8277
    %8583 = vmatmul.mubr.bf16.gmra.mxu0 %v8276
    %v8584 = vpop.f32.mrf.mxu0
    %v8585 = vadd.f32 0.0, %v8584
    %v8586 = vpop.f32.mrf.mxu0
    %v8587 = vadd.f32 0.0, %v8586
    %v8588 = vpop.f32.mrf.mxu0
    %v8589 = vadd.f32 0.0, %v8588
    %v8590 = vpop.f32.mrf.mxu0
    %v8591 = vadd.f32 0.0, %v8590
    %8592 = vmatprep.mubr.bf16.mxu0 %v8281
    %8593 = vmatmul.mubr.bf16.gmra.mxu0 %v8280
    %v8594 = vpop.f32.mrf.mxu0
    %v8595 = vadd.f32 0.0, %v8594
    %v8596 = vpop.f32.mrf.mxu0
    %v8597 = vadd.f32 0.0, %v8596
    %v8598 = vpop.f32.mrf.mxu0
    %v8599 = vadd.f32 0.0, %v8598
    %v8600 = vpop.f32.mrf.mxu0
    %v8601 = vadd.f32 0.0, %v8600
    %8602 = vmatprep.mubr.bf16.mxu0 %v8285
    %8603 = vmatmul.mubr.bf16.gmra.mxu0 %v8284
    %v8604 = vpop.f32.mrf.mxu0
    %v8605 = vadd.f32 0.0, %v8604
    %v8606 = vpop.f32.mrf.mxu0
    %v8607 = vadd.f32 0.0, %v8606
    %v8608 = vpop.f32.mrf.mxu0
    %v8609 = vadd.f32 0.0, %v8608
    %v8610 = vpop.f32.mrf.mxu0
    %v8611 = vadd.f32 0.0, %v8610
    %8612 = vmatprep.mubr.bf16.mxu0 %v8289
    %8613 = vmatmul.mubr.bf16.gmra.mxu0 %v8288
    %v8614 = vpop.f32.mrf.mxu0
    %v8615 = vadd.f32 0.0, %v8614
    %v8616 = vpop.f32.mrf.mxu0
    %v8617 = vadd.f32 0.0, %v8616
    %v8618 = vpop.f32.mrf.mxu0
    %v8619 = vadd.f32 0.0, %v8618
    %v8620 = vpop.f32.mrf.mxu0
    %v8621 = vadd.f32 0.0, %v8620
    %8622 = vmatprep.mubr.bf16.mxu0 %v8293
    %8623 = vmatmul.mubr.bf16.gmra.mxu0 %v8292
    %v8624 = vpop.f32.mrf.mxu0
    %v8625 = vadd.f32 0.0, %v8624
    %v8626 = vpop.f32.mrf.mxu0
    %v8627 = vadd.f32 0.0, %v8626
    %v8628 = vpop.f32.mrf.mxu0
    %v8629 = vadd.f32 0.0, %v8628
    %v8630 = vpop.f32.mrf.mxu0
    %v8631 = vadd.f32 0.0, %v8630
    %8632 = vmatprep.mubr.bf16.mxu0 %v8297
    %8633 = vmatmul.mubr.bf16.gmra.mxu0 %v8296
    %v8634 = vpop.f32.mrf.mxu0
    %v8635 = vadd.f32 0.0, %v8634
    %v8636 = vpop.f32.mrf.mxu0
    %v8637 = vadd.f32 0.0, %v8636
    %v8638 = vpop.f32.mrf.mxu0
    %v8639 = vadd.f32 0.0, %v8638
    %v8640 = vpop.f32.mrf.mxu0
    %v8641 = vadd.f32 0.0, %v8640
    %8642 = vmatprep.mubr.bf16.mxu0 %v8301
    %8643 = vmatmul.mubr.bf16.gmra.mxu0 %v8300
    %v8644 = vpop.f32.mrf.mxu0
    %v8645 = vadd.f32 0.0, %v8644
    %v8646 = vpop.f32.mrf.mxu0
    %v8647 = vadd.f32 0.0, %v8646
    %v8648 = vpop.f32.mrf.mxu0
    %v8649 = vadd.f32 0.0, %v8648
    %v8650 = vpop.f32.mrf.mxu0
    %v8651 = vadd.f32 0.0, %v8650
    %8652 = vmatprep.mubr.bf16.mxu0 %v8305
    %8653 = vmatmul.mubr.bf16.gmra.mxu0 %v8304
    %v8654 = vpop.f32.mrf.mxu0
    %v8655 = vadd.f32 0.0, %v8654
    %v8656 = vpop.f32.mrf.mxu0
    %v8657 = vadd.f32 0.0, %v8656
    %v8658 = vpop.f32.mrf.mxu0
    %v8659 = vadd.f32 0.0, %v8658
    %v8660 = vpop.f32.mrf.mxu0
    %v8661 = vadd.f32 0.0, %v8660
    %8662 = vmatprep.mubr.bf16.mxu0 %v8309
    %8663 = vmatmul.mubr.bf16.gmra.mxu0 %v8308
    %v8664 = vpop.f32.mrf.mxu0
    %v8665 = vadd.f32 0.0, %v8664
    %v8666 = vpop.f32.mrf.mxu0
    %v8667 = vadd.f32 0.0, %v8666
    %v8668 = vpop.f32.mrf.mxu0
    %v8669 = vadd.f32 0.0, %v8668
    %v8670 = vpop.f32.mrf.mxu0
    %v8671 = vadd.f32 0.0, %v8670
    %8672 = vmatprep.mubr.bf16.mxu0 %v8313
    %8673 = vmatmul.mubr.bf16.gmra.mxu0 %v8312
    %v8674 = vpop.f32.mrf.mxu0
    %v8675 = vadd.f32 0.0, %v8674
    %v8676 = vpop.f32.mrf.mxu0
    %v8677 = vadd.f32 0.0, %v8676
    %v8678 = vpop.f32.mrf.mxu0
    %v8679 = vadd.f32 0.0, %v8678
    %v8680 = vpop.f32.mrf.mxu0
    %v8681 = vadd.f32 0.0, %v8680
    %8682 = vmatprep.mubr.bf16.mxu0 %v8317
    %8683 = vmatmul.mubr.bf16.gmra.mxu0 %v8316
    %v8684 = vpop.f32.mrf.mxu0
    %v8685 = vadd.f32 0.0, %v8684
    %v8686 = vpop.f32.mrf.mxu0
    %v8687 = vadd.f32 0.0, %v8686
    %v8688 = vpop.f32.mrf.mxu0
    %v8689 = vadd.f32 0.0, %v8688
    %v8690 = vpop.f32.mrf.mxu0
    %v8691 = vadd.f32 0.0, %v8690
    %8692 = vmatprep.mubr.bf16.mxu0 %v8321
    %8693 = vmatmul.mubr.bf16.gmra.mxu0 %v8320
    %v8694 = vpop.f32.mrf.mxu0
    %v8695 = vadd.f32 0.0, %v8694
    %v8696 = vpop.f32.mrf.mxu0
    %v8697 = vadd.f32 0.0, %v8696
    %v8698 = vpop.f32.mrf.mxu0
    %v8699 = vadd.f32 0.0, %v8698
    %v8700 = vpop.f32.mrf.mxu0
    %v8701 = vadd.f32 0.0, %v8700
    %8702 = vmatprep.mubr.bf16.mxu0 %v8325
    %8703 = vmatmul.mubr.bf16.gmra.mxu0 %v8324
    %v8704 = vpop.f32.mrf.mxu0
    %v8705 = vadd.f32 0.0, %v8704
    %v8706 = vpop.f32.mrf.mxu0
    %v8707 = vadd.f32 0.0, %v8706
    %v8708 = vpop.f32.mrf.mxu0
    %v8709 = vadd.f32 0.0, %v8708
    %v8710 = vpop.f32.mrf.mxu0
    %v8711 = vadd.f32 0.0, %v8710
    %8712 = vmatprep.mubr.bf16.mxu0 %v8329
    %8713 = vmatmul.mubr.bf16.gmra.mxu0 %v8328
    %v8714 = vpop.f32.mrf.mxu0
    %v8715 = vadd.f32 0.0, %v8714
    %v8716 = vpop.f32.mrf.mxu0
    %v8717 = vadd.f32 0.0, %v8716
    %v8718 = vpop.f32.mrf.mxu0
    %v8719 = vadd.f32 0.0, %v8718
    %v8720 = vpop.f32.mrf.mxu0
    %v8721 = vadd.f32 0.0, %v8720
    %8722 = vmatprep.mubr.bf16.mxu0 %v8333
    %8723 = vmatmul.mubr.bf16.gmra.mxu0 %v8332
    %v8724 = vpop.f32.mrf.mxu0
    %v8725 = vadd.f32 0.0, %v8724
    %v8726 = vpop.f32.mrf.mxu0
    %v8727 = vadd.f32 0.0, %v8726
    %v8728 = vpop.f32.mrf.mxu0
    %v8729 = vadd.f32 0.0, %v8728
    %v8730 = vpop.f32.mrf.mxu0
    %v8731 = vadd.f32 0.0, %v8730
    %8732 = vmatprep.mubr.bf16.mxu0 %v8337
    %8733 = vmatmul.mubr.bf16.gmra.mxu0 %v8336
    %v8734 = vpop.f32.mrf.mxu0
    %v8735 = vadd.f32 0.0, %v8734
    %v8736 = vpop.f32.mrf.mxu0
    %v8737 = vadd.f32 0.0, %v8736
    %v8738 = vpop.f32.mrf.mxu0
    %v8739 = vadd.f32 0.0, %v8738
    %v8740 = vpop.f32.mrf.mxu0
    %v8741 = vadd.f32 0.0, %v8740
    %8742 = vmatprep.mubr.bf16.mxu0 %v8341
    %8743 = vmatmul.mubr.bf16.gmra.mxu0 %v8340
    %v8744 = vpop.f32.mrf.mxu0
    %v8745 = vadd.f32 0.0, %v8744
    %v8746 = vpop.f32.mrf.mxu0
    %v8747 = vadd.f32 0.0, %v8746
    %v8748 = vpop.f32.mrf.mxu0
    %v8749 = vadd.f32 0.0, %v8748
    %v8750 = vpop.f32.mrf.mxu0
    %v8751 = vadd.f32 0.0, %v8750
    %8752 = vmatprep.mubr.bf16.mxu0 %v8345
    %8753 = vmatmul.mubr.bf16.gmra.mxu0 %v8344
    %v8754 = vpop.f32.mrf.mxu0
    %v8755 = vadd.f32 0.0, %v8754
    %v8756 = vpop.f32.mrf.mxu0
    %v8757 = vadd.f32 0.0, %v8756
    %v8758 = vpop.f32.mrf.mxu0
    %v8759 = vadd.f32 0.0, %v8758
    %v8760 = vpop.f32.mrf.mxu0
    %v8761 = vadd.f32 0.0, %v8760
    %8762 = vmatprep.mubr.bf16.mxu0 %v8349
    %8763 = vmatmul.mubr.bf16.gmra.mxu0 %v8348
    %v8764 = vpop.f32.mrf.mxu0
    %v8765 = vadd.f32 0.0, %v8764
    %v8766 = vpop.f32.mrf.mxu0
    %v8767 = vadd.f32 0.0, %v8766
    %v8768 = vpop.f32.mrf.mxu0
    %v8769 = vadd.f32 0.0, %v8768
    %v8770 = vpop.f32.mrf.mxu0
    %v8771 = vadd.f32 0.0, %v8770
    %8772 = vmatprep.mubr.bf16.mxu0 %v8353
    %8773 = vmatmul.mubr.bf16.gmra.mxu0 %v8352
    %v8774 = vpop.f32.mrf.mxu0
    %v8775 = vadd.f32 0.0, %v8774
    %v8776 = vpop.f32.mrf.mxu0
    %v8777 = vadd.f32 0.0, %v8776
    %v8778 = vpop.f32.mrf.mxu0
    %v8779 = vadd.f32 0.0, %v8778
    %v8780 = vpop.f32.mrf.mxu0
    %v8781 = vadd.f32 0.0, %v8780
    %8782 = vmatprep.mubr.bf16.mxu0 %v8357
    %8783 = vmatmul.mubr.bf16.gmra.mxu0 %v8356
    %v8784 = vpop.f32.mrf.mxu0
    %v8785 = vadd.f32 0.0, %v8784
    %v8786 = vpop.f32.mrf.mxu0
    %v8787 = vadd.f32 0.0, %v8786
    %v8788 = vpop.f32.mrf.mxu0
    %v8789 = vadd.f32 0.0, %v8788
    %v8790 = vpop.f32.mrf.mxu0
    %v8791 = vadd.f32 0.0, %v8790
    %8792 = vmatprep.mubr.bf16.mxu0 %v8361
    %8793 = vmatmul.mubr.bf16.gmra.mxu0 %v8360
    %v8794 = vpop.f32.mrf.mxu0
    %v8795 = vadd.f32 0.0, %v8794
    %v8796 = vpop.f32.mrf.mxu0
    %v8797 = vadd.f32 0.0, %v8796
    %v8798 = vpop.f32.mrf.mxu0
    %v8799 = vadd.f32 0.0, %v8798
    %v8800 = vpop.f32.mrf.mxu0
    %v8801 = vadd.f32 0.0, %v8800
    %8802 = vmatprep.mubr.bf16.mxu0 %v8365
    %8803 = vmatmul.mubr.bf16.gmra.mxu0 %v8364
    %v8804 = vpop.f32.mrf.mxu0
    %v8805 = vadd.f32 0.0, %v8804
    %v8806 = vpop.f32.mrf.mxu0
    %v8807 = vadd.f32 0.0, %v8806
    %v8808 = vpop.f32.mrf.mxu0
    %v8809 = vadd.f32 0.0, %v8808
    %v8810 = vpop.f32.mrf.mxu0
    %v8811 = vadd.f32 0.0, %v8810
    %8812 = vmatprep.mubr.bf16.mxu0 %v8369
    %8813 = vmatmul.mubr.bf16.gmra.mxu0 %v8368
    %v8814 = vpop.f32.mrf.mxu0
    %v8815 = vadd.f32 0.0, %v8814
    %v8816 = vpop.f32.mrf.mxu0
    %v8817 = vadd.f32 0.0, %v8816
    %v8818 = vpop.f32.mrf.mxu0
    %v8819 = vadd.f32 0.0, %v8818
    %v8820 = vpop.f32.mrf.mxu0
    %v8821 = vadd.f32 0.0, %v8820
    %8822 = vmatprep.mubr.bf16.mxu0 %v8373
    %8823 = vmatmul.mubr.bf16.gmra.mxu0 %v8372
    %v8824 = vpop.f32.mrf.mxu0
    %v8825 = vadd.f32 0.0, %v8824
    %v8826 = vpop.f32.mrf.mxu0
    %v8827 = vadd.f32 0.0, %v8826
    %v8828 = vpop.f32.mrf.mxu0
    %v8829 = vadd.f32 0.0, %v8828
    %v8830 = vpop.f32.mrf.mxu0
    %v8831 = vadd.f32 0.0, %v8830
    %8832 = vmatprep.mubr.bf16.mxu0 %v8377
    %8833 = vmatmul.mubr.bf16.gmra.mxu0 %v8376
    %v8834 = vpop.f32.mrf.mxu0
    %v8835 = vadd.f32 0.0, %v8834
    %v8836 = vpop.f32.mrf.mxu0
    %v8837 = vadd.f32 0.0, %v8836
    %v8838 = vpop.f32.mrf.mxu0
    %v8839 = vadd.f32 0.0, %v8838
    %v8840 = vpop.f32.mrf.mxu0
    %v8841 = vadd.f32 0.0, %v8840
    %8842 = vmatprep.mubr.bf16.mxu0 %v8381
    %8843 = vmatmul.mubr.bf16.gmra.mxu0 %v8380
    %v8844 = vpop.f32.mrf.mxu0
    %v8845 = vadd.f32 0.0, %v8844
    %v8846 = vpop.f32.mrf.mxu0
    %v8847 = vadd.f32 0.0, %v8846
    %v8848 = vpop.f32.mrf.mxu0
    %v8849 = vadd.f32 0.0, %v8848
    %v8850 = vpop.f32.mrf.mxu0
    %v8851 = vadd.f32 0.0, %v8850
    %8852 = vmatprep.mubr.bf16.mxu0 %v8385
    %8853 = vmatmul.mubr.bf16.gmra.mxu0 %v8384
    %v8854 = vpop.f32.mrf.mxu0
    %v8855 = vadd.f32 0.0, %v8854
    %v8856 = vpop.f32.mrf.mxu0
    %v8857 = vadd.f32 0.0, %v8856
    %v8858 = vpop.f32.mrf.mxu0
    %v8859 = vadd.f32 0.0, %v8858
    %v8860 = vpop.f32.mrf.mxu0
    %v8861 = vadd.f32 0.0, %v8860
    %8862 = vmatprep.mubr.bf16.mxu0 %v8389
    %8863 = vmatmul.mubr.bf16.gmra.mxu0 %v8388
    %v8864 = vpop.f32.mrf.mxu0
    %v8865 = vadd.f32 0.0, %v8864
    %v8866 = vpop.f32.mrf.mxu0
    %v8867 = vadd.f32 0.0, %v8866
    %v8868 = vpop.f32.mrf.mxu0
    %v8869 = vadd.f32 0.0, %v8868
    %v8870 = vpop.f32.mrf.mxu0
    %v8871 = vadd.f32 0.0, %v8870
    %8872 = vdwg.mxu0
    %8873 = vmatprep.subr.bf16.mxu0 %v7735
    %8874 = vmatpush1.bf16.msra.mxu0 %v7734
    %8875 = vmatprep.subr.bf16.mxu0 %v7733
    %8876 = vmatpush1.bf16.msra.mxu0 %v7732
    %8877 = vmatprep.subr.bf16.mxu0 %v7731
    %8878 = vmatpush1.bf16.msra.mxu0 %v7730
    %8879 = vmatprep.subr.bf16.mxu0 %v7729
    %8880 = vmatpush1.bf16.msra.mxu0 %v7728
    %8881 = vmatprep.subr.bf16.mxu0 %v7727
    %8882 = vmatpush1.bf16.msra.mxu0 %v7726
    %8883 = vmatprep.subr.bf16.mxu0 %v7725
    %8884 = vmatpush1.bf16.msra.mxu0 %v7724
    %8885 = vmatprep.subr.bf16.mxu0 %v7723
    %8886 = vmatpush1.bf16.msra.mxu0 %v7722
    %8887 = vmatprep.subr.bf16.mxu0 %v7721
    %8888 = vmatpush1.bf16.msra.mxu0 %v7720
    %8889 = vmatprep.subr.bf16.mxu0 %v7751
    %8890 = vmatpush2.bf16.msra.mxu0 %v7750
    %8891 = vmatprep.subr.bf16.mxu0 %v7749
    %8892 = vmatpush2.bf16.msra.mxu0 %v7748
    %8893 = vmatprep.subr.bf16.mxu0 %v7747
    %8894 = vmatpush2.bf16.msra.mxu0 %v7746
    %8895 = vmatprep.subr.bf16.mxu0 %v7745
    %8896 = vmatpush2.bf16.msra.mxu0 %v7744
    %8897 = vmatprep.subr.bf16.mxu0 %v7743
    %8898 = vmatpush2.bf16.msra.mxu0 %v7742
    %8899 = vmatprep.subr.bf16.mxu0 %v7741
    %8900 = vmatpush2.bf16.msra.mxu0 %v7740
    %8901 = vmatprep.subr.bf16.mxu0 %v7739
    %8902 = vmatpush2.bf16.msra.mxu0 %v7738
    %8903 = vmatprep.subr.bf16.mxu0 %v7737
    %8904 = vmatpush2.bf16.msra.mxu0 %v7736
    %8905 = vmatprep.mubr.bf16.mxu0 %v8267
    %8906 = vmatmul.mubr.bf16.gmra.mxu0 %v8266
    %v8907 = vpop.f32.mrf.mxu0
    %v8908 = vadd.f32 %v8555, %v8907
    %v8909 = vpop.f32.mrf.mxu0
    %v8910 = vadd.f32 %v8557, %v8909
    %v8911 = vpop.f32.mrf.mxu0
    %v8912 = vadd.f32 %v8559, %v8911
    %v8913 = vpop.f32.mrf.mxu0
    %v8914 = vadd.f32 %v8561, %v8913
    %8915 = vmatprep.mubr.bf16.mxu0 %v8271
    %8916 = vmatmul.mubr.bf16.gmra.mxu0 %v8270
    %v8917 = vpop.f32.mrf.mxu0
    %v8918 = vadd.f32 %v8565, %v8917
    %v8919 = vpop.f32.mrf.mxu0
    %v8920 = vadd.f32 %v8567, %v8919
    %v8921 = vpop.f32.mrf.mxu0
    %v8922 = vadd.f32 %v8569, %v8921
    %v8923 = vpop.f32.mrf.mxu0
    %v8924 = vadd.f32 %v8571, %v8923
    %8925 = vmatprep.mubr.bf16.mxu0 %v8275
    %8926 = vmatmul.mubr.bf16.gmra.mxu0 %v8274
    %v8927 = vpop.f32.mrf.mxu0
    %v8928 = vadd.f32 %v8575, %v8927
    %v8929 = vpop.f32.mrf.mxu0
    %v8930 = vadd.f32 %v8577, %v8929
    %v8931 = vpop.f32.mrf.mxu0
    %v8932 = vadd.f32 %v8579, %v8931
    %v8933 = vpop.f32.mrf.mxu0
    %v8934 = vadd.f32 %v8581, %v8933
    %8935 = vmatprep.mubr.bf16.mxu0 %v8279
    %8936 = vmatmul.mubr.bf16.gmra.mxu0 %v8278
    %v8937 = vpop.f32.mrf.mxu0
    %v8938 = vadd.f32 %v8585, %v8937
    %v8939 = vpop.f32.mrf.mxu0
    %v8940 = vadd.f32 %v8587, %v8939
    %v8941 = vpop.f32.mrf.mxu0
    %v8942 = vadd.f32 %v8589, %v8941
    %v8943 = vpop.f32.mrf.mxu0
    %v8944 = vadd.f32 %v8591, %v8943
    %8945 = vmatprep.mubr.bf16.mxu0 %v8283
    %8946 = vmatmul.mubr.bf16.gmra.mxu0 %v8282
    %v8947 = vpop.f32.mrf.mxu0
    %v8948 = vadd.f32 %v8595, %v8947
    %v8949 = vpop.f32.mrf.mxu0
    %v8950 = vadd.f32 %v8597, %v8949
    %v8951 = vpop.f32.mrf.mxu0
    %v8952 = vadd.f32 %v8599, %v8951
    %v8953 = vpop.f32.mrf.mxu0
    %v8954 = vadd.f32 %v8601, %v8953
    %8955 = vmatprep.mubr.bf16.mxu0 %v8287
    %8956 = vmatmul.mubr.bf16.gmra.mxu0 %v8286
    %v8957 = vpop.f32.mrf.mxu0
    %v8958 = vadd.f32 %v8605, %v8957
    %v8959 = vpop.f32.mrf.mxu0
    %v8960 = vadd.f32 %v8607, %v8959
    %v8961 = vpop.f32.mrf.mxu0
    %v8962 = vadd.f32 %v8609, %v8961
    %v8963 = vpop.f32.mrf.mxu0
    %v8964 = vadd.f32 %v8611, %v8963
    %8965 = vmatprep.mubr.bf16.mxu0 %v8291
    %8966 = vmatmul.mubr.bf16.gmra.mxu0 %v8290
    %v8967 = vpop.f32.mrf.mxu0
    %v8968 = vadd.f32 %v8615, %v8967
    %v8969 = vpop.f32.mrf.mxu0
    %v8970 = vadd.f32 %v8617, %v8969
    %v8971 = vpop.f32.mrf.mxu0
    %v8972 = vadd.f32 %v8619, %v8971
    %v8973 = vpop.f32.mrf.mxu0
    %v8974 = vadd.f32 %v8621, %v8973
    %8975 = vmatprep.mubr.bf16.mxu0 %v8295
    %8976 = vmatmul.mubr.bf16.gmra.mxu0 %v8294
    %v8977 = vpop.f32.mrf.mxu0
    %v8978 = vadd.f32 %v8625, %v8977
    %v8979 = vpop.f32.mrf.mxu0
    %v8980 = vadd.f32 %v8627, %v8979
    %v8981 = vpop.f32.mrf.mxu0
    %v8982 = vadd.f32 %v8629, %v8981
    %v8983 = vpop.f32.mrf.mxu0
    %v8984 = vadd.f32 %v8631, %v8983
    %8985 = vmatprep.mubr.bf16.mxu0 %v8299
    %8986 = vmatmul.mubr.bf16.gmra.mxu0 %v8298
    %v8987 = vpop.f32.mrf.mxu0
    %v8988 = vadd.f32 %v8635, %v8987
    %v8989 = vpop.f32.mrf.mxu0
    %v8990 = vadd.f32 %v8637, %v8989
    %v8991 = vpop.f32.mrf.mxu0
    %v8992 = vadd.f32 %v8639, %v8991
    %v8993 = vpop.f32.mrf.mxu0
    %v8994 = vadd.f32 %v8641, %v8993
    %8995 = vmatprep.mubr.bf16.mxu0 %v8303
    %8996 = vmatmul.mubr.bf16.gmra.mxu0 %v8302
    %v8997 = vpop.f32.mrf.mxu0
    %v8998 = vadd.f32 %v8645, %v8997
    %v8999 = vpop.f32.mrf.mxu0
    %v9000 = vadd.f32 %v8647, %v8999
    %v9001 = vpop.f32.mrf.mxu0
    %v9002 = vadd.f32 %v8649, %v9001
    %v9003 = vpop.f32.mrf.mxu0
    %v9004 = vadd.f32 %v8651, %v9003
    %9005 = vmatprep.mubr.bf16.mxu0 %v8307
    %9006 = vmatmul.mubr.bf16.gmra.mxu0 %v8306
    %v9007 = vpop.f32.mrf.mxu0
    %v9008 = vadd.f32 %v8655, %v9007
    %v9009 = vpop.f32.mrf.mxu0
    %v9010 = vadd.f32 %v8657, %v9009
    %v9011 = vpop.f32.mrf.mxu0
    %v9012 = vadd.f32 %v8659, %v9011
    %v9013 = vpop.f32.mrf.mxu0
    %v9014 = vadd.f32 %v8661, %v9013
    %9015 = vmatprep.mubr.bf16.mxu0 %v8311
    %9016 = vmatmul.mubr.bf16.gmra.mxu0 %v8310
    %v9017 = vpop.f32.mrf.mxu0
    %v9018 = vadd.f32 %v8665, %v9017
    %v9019 = vpop.f32.mrf.mxu0
    %v9020 = vadd.f32 %v8667, %v9019
    %v9021 = vpop.f32.mrf.mxu0
    %v9022 = vadd.f32 %v8669, %v9021
    %v9023 = vpop.f32.mrf.mxu0
    %v9024 = vadd.f32 %v8671, %v9023
    %9025 = vmatprep.mubr.bf16.mxu0 %v8315
    %9026 = vmatmul.mubr.bf16.gmra.mxu0 %v8314
    %v9027 = vpop.f32.mrf.mxu0
    %v9028 = vadd.f32 %v8675, %v9027
    %v9029 = vpop.f32.mrf.mxu0
    %v9030 = vadd.f32 %v8677, %v9029
    %v9031 = vpop.f32.mrf.mxu0
    %v9032 = vadd.f32 %v8679, %v9031
    %v9033 = vpop.f32.mrf.mxu0
    %v9034 = vadd.f32 %v8681, %v9033
    %9035 = vmatprep.mubr.bf16.mxu0 %v8319
    %9036 = vmatmul.mubr.bf16.gmra.mxu0 %v8318
    %v9037 = vpop.f32.mrf.mxu0
    %v9038 = vadd.f32 %v8685, %v9037
    %v9039 = vpop.f32.mrf.mxu0
    %v9040 = vadd.f32 %v8687, %v9039
    %v9041 = vpop.f32.mrf.mxu0
    %v9042 = vadd.f32 %v8689, %v9041
    %v9043 = vpop.f32.mrf.mxu0
    %v9044 = vadd.f32 %v8691, %v9043
    %9045 = vmatprep.mubr.bf16.mxu0 %v8323
    %9046 = vmatmul.mubr.bf16.gmra.mxu0 %v8322
    %v9047 = vpop.f32.mrf.mxu0
    %v9048 = vadd.f32 %v8695, %v9047
    %v9049 = vpop.f32.mrf.mxu0
    %v9050 = vadd.f32 %v8697, %v9049
    %v9051 = vpop.f32.mrf.mxu0
    %v9052 = vadd.f32 %v8699, %v9051
    %v9053 = vpop.f32.mrf.mxu0
    %v9054 = vadd.f32 %v8701, %v9053
    %9055 = vmatprep.mubr.bf16.mxu0 %v8327
    %9056 = vmatmul.mubr.bf16.gmra.mxu0 %v8326
    %v9057 = vpop.f32.mrf.mxu0
    %v9058 = vadd.f32 %v8705, %v9057
    %v9059 = vpop.f32.mrf.mxu0
    %v9060 = vadd.f32 %v8707, %v9059
    %v9061 = vpop.f32.mrf.mxu0
    %v9062 = vadd.f32 %v8709, %v9061
    %v9063 = vpop.f32.mrf.mxu0
    %v9064 = vadd.f32 %v8711, %v9063
    %9065 = vmatprep.mubr.bf16.mxu0 %v8331
    %9066 = vmatmul.mubr.bf16.gmra.mxu0 %v8330
    %v9067 = vpop.f32.mrf.mxu0
    %v9068 = vadd.f32 %v8715, %v9067
    %v9069 = vpop.f32.mrf.mxu0
    %v9070 = vadd.f32 %v8717, %v9069
    %v9071 = vpop.f32.mrf.mxu0
    %v9072 = vadd.f32 %v8719, %v9071
    %v9073 = vpop.f32.mrf.mxu0
    %v9074 = vadd.f32 %v8721, %v9073
    %9075 = vmatprep.mubr.bf16.mxu0 %v8335
    %9076 = vmatmul.mubr.bf16.gmra.mxu0 %v8334
    %v9077 = vpop.f32.mrf.mxu0
    %v9078 = vadd.f32 %v8725, %v9077
    %v9079 = vpop.f32.mrf.mxu0
    %v9080 = vadd.f32 %v8727, %v9079
    %v9081 = vpop.f32.mrf.mxu0
    %v9082 = vadd.f32 %v8729, %v9081
    %v9083 = vpop.f32.mrf.mxu0
    %v9084 = vadd.f32 %v8731, %v9083
    %9085 = vmatprep.mubr.bf16.mxu0 %v8339
    %9086 = vmatmul.mubr.bf16.gmra.mxu0 %v8338
    %v9087 = vpop.f32.mrf.mxu0
    %v9088 = vadd.f32 %v8735, %v9087
    %v9089 = vpop.f32.mrf.mxu0
    %v9090 = vadd.f32 %v8737, %v9089
    %v9091 = vpop.f32.mrf.mxu0
    %v9092 = vadd.f32 %v8739, %v9091
    %v9093 = vpop.f32.mrf.mxu0
    %v9094 = vadd.f32 %v8741, %v9093
    %9095 = vmatprep.mubr.bf16.mxu0 %v8343
    %9096 = vmatmul.mubr.bf16.gmra.mxu0 %v8342
    %v9097 = vpop.f32.mrf.mxu0
    %v9098 = vadd.f32 %v8745, %v9097
    %v9099 = vpop.f32.mrf.mxu0
    %v9100 = vadd.f32 %v8747, %v9099
    %v9101 = vpop.f32.mrf.mxu0
    %v9102 = vadd.f32 %v8749, %v9101
    %v9103 = vpop.f32.mrf.mxu0
    %v9104 = vadd.f32 %v8751, %v9103
    %9105 = vmatprep.mubr.bf16.mxu0 %v8347
    %9106 = vmatmul.mubr.bf16.gmra.mxu0 %v8346
    %v9107 = vpop.f32.mrf.mxu0
    %v9108 = vadd.f32 %v8755, %v9107
    %v9109 = vpop.f32.mrf.mxu0
    %v9110 = vadd.f32 %v8757, %v9109
    %v9111 = vpop.f32.mrf.mxu0
    %v9112 = vadd.f32 %v8759, %v9111
    %v9113 = vpop.f32.mrf.mxu0
    %v9114 = vadd.f32 %v8761, %v9113
    %9115 = vmatprep.mubr.bf16.mxu0 %v8351
    %9116 = vmatmul.mubr.bf16.gmra.mxu0 %v8350
    %v9117 = vpop.f32.mrf.mxu0
    %v9118 = vadd.f32 %v8765, %v9117
    %v9119 = vpop.f32.mrf.mxu0
    %v9120 = vadd.f32 %v8767, %v9119
    %v9121 = vpop.f32.mrf.mxu0
    %v9122 = vadd.f32 %v8769, %v9121
    %v9123 = vpop.f32.mrf.mxu0
    %v9124 = vadd.f32 %v8771, %v9123
    %9125 = vmatprep.mubr.bf16.mxu0 %v8355
    %9126 = vmatmul.mubr.bf16.gmra.mxu0 %v8354
    %v9127 = vpop.f32.mrf.mxu0
    %v9128 = vadd.f32 %v8775, %v9127
    %v9129 = vpop.f32.mrf.mxu0
    %v9130 = vadd.f32 %v8777, %v9129
    %v9131 = vpop.f32.mrf.mxu0
    %v9132 = vadd.f32 %v8779, %v9131
    %v9133 = vpop.f32.mrf.mxu0
    %v9134 = vadd.f32 %v8781, %v9133
    %9135 = vmatprep.mubr.bf16.mxu0 %v8359
    %9136 = vmatmul.mubr.bf16.gmra.mxu0 %v8358
    %v9137 = vpop.f32.mrf.mxu0
    %v9138 = vadd.f32 %v8785, %v9137
    %v9139 = vpop.f32.mrf.mxu0
    %v9140 = vadd.f32 %v8787, %v9139
    %v9141 = vpop.f32.mrf.mxu0
    %v9142 = vadd.f32 %v8789, %v9141
    %v9143 = vpop.f32.mrf.mxu0
    %v9144 = vadd.f32 %v8791, %v9143
    %9145 = vmatprep.mubr.bf16.mxu0 %v8363
    %9146 = vmatmul.mubr.bf16.gmra.mxu0 %v8362
    %v9147 = vpop.f32.mrf.mxu0
    %v9148 = vadd.f32 %v8795, %v9147
    %v9149 = vpop.f32.mrf.mxu0
    %v9150 = vadd.f32 %v8797, %v9149
    %v9151 = vpop.f32.mrf.mxu0
    %v9152 = vadd.f32 %v8799, %v9151
    %v9153 = vpop.f32.mrf.mxu0
    %v9154 = vadd.f32 %v8801, %v9153
    %9155 = vmatprep.mubr.bf16.mxu0 %v8367
    %9156 = vmatmul.mubr.bf16.gmra.mxu0 %v8366
    %v9157 = vpop.f32.mrf.mxu0
    %v9158 = vadd.f32 %v8805, %v9157
    %v9159 = vpop.f32.mrf.mxu0
    %v9160 = vadd.f32 %v8807, %v9159
    %v9161 = vpop.f32.mrf.mxu0
    %v9162 = vadd.f32 %v8809, %v9161
    %v9163 = vpop.f32.mrf.mxu0
    %v9164 = vadd.f32 %v8811, %v9163
    %9165 = vmatprep.mubr.bf16.mxu0 %v8371
    %9166 = vmatmul.mubr.bf16.gmra.mxu0 %v8370
    %v9167 = vpop.f32.mrf.mxu0
    %v9168 = vadd.f32 %v8815, %v9167
    %v9169 = vpop.f32.mrf.mxu0
    %v9170 = vadd.f32 %v8817, %v9169
    %v9171 = vpop.f32.mrf.mxu0
    %v9172 = vadd.f32 %v8819, %v9171
    %v9173 = vpop.f32.mrf.mxu0
    %v9174 = vadd.f32 %v8821, %v9173
    %9175 = vmatprep.mubr.bf16.mxu0 %v8375
    %9176 = vmatmul.mubr.bf16.gmra.mxu0 %v8374
    %v9177 = vpop.f32.mrf.mxu0
    %v9178 = vadd.f32 %v8825, %v9177
    %v9179 = vpop.f32.mrf.mxu0
    %v9180 = vadd.f32 %v8827, %v9179
    %v9181 = vpop.f32.mrf.mxu0
    %v9182 = vadd.f32 %v8829, %v9181
    %v9183 = vpop.f32.mrf.mxu0
    %v9184 = vadd.f32 %v8831, %v9183
    %9185 = vmatprep.mubr.bf16.mxu0 %v8379
    %9186 = vmatmul.mubr.bf16.gmra.mxu0 %v8378
    %v9187 = vpop.f32.mrf.mxu0
    %v9188 = vadd.f32 %v8835, %v9187
    %v9189 = vpop.f32.mrf.mxu0
    %v9190 = vadd.f32 %v8837, %v9189
    %v9191 = vpop.f32.mrf.mxu0
    %v9192 = vadd.f32 %v8839, %v9191
    %v9193 = vpop.f32.mrf.mxu0
    %v9194 = vadd.f32 %v8841, %v9193
    %9195 = vmatprep.mubr.bf16.mxu0 %v8383
    %9196 = vmatmul.mubr.bf16.gmra.mxu0 %v8382
    %v9197 = vpop.f32.mrf.mxu0
    %v9198 = vadd.f32 %v8845, %v9197
    %v9199 = vpop.f32.mrf.mxu0
    %v9200 = vadd.f32 %v8847, %v9199
    %v9201 = vpop.f32.mrf.mxu0
    %v9202 = vadd.f32 %v8849, %v9201
    %v9203 = vpop.f32.mrf.mxu0
    %v9204 = vadd.f32 %v8851, %v9203
    %9205 = vmatprep.mubr.bf16.mxu0 %v8387
    %9206 = vmatmul.mubr.bf16.gmra.mxu0 %v8386
    %v9207 = vpop.f32.mrf.mxu0
    %v9208 = vadd.f32 %v8855, %v9207
    %v9209 = vpop.f32.mrf.mxu0
    %v9210 = vadd.f32 %v8857, %v9209
    %v9211 = vpop.f32.mrf.mxu0
    %v9212 = vadd.f32 %v8859, %v9211
    %v9213 = vpop.f32.mrf.mxu0
    %v9214 = vadd.f32 %v8861, %v9213
    %9215 = vmatprep.mubr.bf16.mxu0 %v8391
    %9216 = vmatmul.mubr.bf16.gmra.mxu0 %v8390
    %v9217 = vpop.f32.mrf.mxu0
    %v9218 = vadd.f32 %v8865, %v9217
    %v9219 = vpop.f32.mrf.mxu0
    %v9220 = vadd.f32 %v8867, %v9219
    %v9221 = vpop.f32.mrf.mxu0
    %v9222 = vadd.f32 %v8869, %v9221
    %v9223 = vpop.f32.mrf.mxu0
    %v9224 = vadd.f32 %v8871, %v9223
    %9225 = vdwg.mxu0
    %v9226 = vpack.c.bf16 %v8912, %v8908
    %v9227 = vpack.c.bf16 %v8914, %v8910
    %v9228 = vpack.c.bf16 %v8922, %v8918
    %v9229 = vpack.c.bf16 %v8924, %v8920
    %v9230 = vpack.c.bf16 %v8932, %v8928
    %v9231 = vpack.c.bf16 %v8934, %v8930
    %v9232 = vpack.c.bf16 %v8942, %v8938
    %v9233 = vpack.c.bf16 %v8944, %v8940
    %v9234 = vpack.c.bf16 %v8952, %v8948
    %v9235 = vpack.c.bf16 %v8954, %v8950
    %v9236 = vpack.c.bf16 %v8962, %v8958
    %v9237 = vpack.c.bf16 %v8964, %v8960
    %v9238 = vpack.c.bf16 %v8972, %v8968
    %v9239 = vpack.c.bf16 %v8974, %v8970
    %v9240 = vpack.c.bf16 %v8982, %v8978
    %v9241 = vpack.c.bf16 %v8984, %v8980
    %v9242 = vpack.c.bf16 %v8992, %v8988
    %v9243 = vpack.c.bf16 %v8994, %v8990
    %v9244 = vpack.c.bf16 %v9002, %v8998
    %v9245 = vpack.c.bf16 %v9004, %v9000
    %v9246 = vpack.c.bf16 %v9012, %v9008
    %v9247 = vpack.c.bf16 %v9014, %v9010
    %v9248 = vpack.c.bf16 %v9022, %v9018
    %v9249 = vpack.c.bf16 %v9024, %v9020
    %v9250 = vpack.c.bf16 %v9032, %v9028
    %v9251 = vpack.c.bf16 %v9034, %v9030
    %v9252 = vpack.c.bf16 %v9042, %v9038
    %v9253 = vpack.c.bf16 %v9044, %v9040
    %v9254 = vpack.c.bf16 %v9052, %v9048
    %v9255 = vpack.c.bf16 %v9054, %v9050
    %v9256 = vpack.c.bf16 %v9062, %v9058
    %v9257 = vpack.c.bf16 %v9064, %v9060
    %v9258 = vpack.c.bf16 %v9072, %v9068
    %v9259 = vpack.c.bf16 %v9074, %v9070
    %v9260 = vpack.c.bf16 %v9082, %v9078
    %v9261 = vpack.c.bf16 %v9084, %v9080
    %v9262 = vpack.c.bf16 %v9092, %v9088
    %v9263 = vpack.c.bf16 %v9094, %v9090
    %v9264 = vpack.c.bf16 %v9102, %v9098
    %v9265 = vpack.c.bf16 %v9104, %v9100
    %v9266 = vpack.c.bf16 %v9112, %v9108
    %v9267 = vpack.c.bf16 %v9114, %v9110
    %v9268 = vpack.c.bf16 %v9122, %v9118
    %v9269 = vpack.c.bf16 %v9124, %v9120
    %v9270 = vpack.c.bf16 %v9132, %v9128
    %v9271 = vpack.c.bf16 %v9134, %v9130
    %v9272 = vpack.c.bf16 %v9142, %v9138
    %v9273 = vpack.c.bf16 %v9144, %v9140
    %v9274 = vpack.c.bf16 %v9152, %v9148
    %v9275 = vpack.c.bf16 %v9154, %v9150
    %v9276 = vpack.c.bf16 %v9162, %v9158
    %v9277 = vpack.c.bf16 %v9164, %v9160
    %v9278 = vpack.c.bf16 %v9172, %v9168
    %v9279 = vpack.c.bf16 %v9174, %v9170
    %v9280 = vpack.c.bf16 %v9182, %v9178
    %v9281 = vpack.c.bf16 %v9184, %v9180
    %v9282 = vpack.c.bf16 %v9192, %v9188
    %v9283 = vpack.c.bf16 %v9194, %v9190
    %v9284 = vpack.c.bf16 %v9202, %v9198
    %v9285 = vpack.c.bf16 %v9204, %v9200
    %v9286 = vpack.c.bf16 %v9212, %v9208
    %v9287 = vpack.c.bf16 %v9214, %v9210
    %v9288 = vpack.c.bf16 %v9222, %v9218
    %v9289 = vpack.c.bf16 %v9224, %v9220
    %v9290 = vld [vmem:[%s8] sm:$0xf]
    %v9291 = vld [vmem:[%s8 + $0x4] sm:$0xf]
    %v9292 = vld [vmem:[%s8 + $0x8] sm:$0xf]
    %v9293 = vld [vmem:[%s8 + $0xc] sm:$0xf]
    %v9294 = vld [vmem:[%s8 + $0x10] sm:$0xf]
    %v9295 = vld [vmem:[%s8 + $0x14] sm:$0xf]
    %v9296 = vld [vmem:[%s8 + $0x18] sm:$0xf]
    %v9297 = vld [vmem:[%s8 + $0x1c] sm:$0xf]
    %v9298 = vld [vmem:[%s8 + $0x20] sm:$0xf]
    %v9299 = vld [vmem:[%s8 + $0x24] sm:$0xf]
    %v9300 = vld [vmem:[%s8 + $0x28] sm:$0xf]
    %v9301 = vld [vmem:[%s8 + $0x2c] sm:$0xf]
    %v9302 = vld [vmem:[%s8 + $0x30] sm:$0xf]
    %v9303 = vld [vmem:[%s8 + $0x34] sm:$0xf]
    %v9304 = vld [vmem:[%s8 + $0x38] sm:$0xf]
    %v9305 = vld [vmem:[%s8 + $0x3c] sm:$0xf]
    %v9306 = vld [vmem:[%s8 + $0x40] sm:$0xf]
    %v9307 = vld [vmem:[%s8 + $0x44] sm:$0xf]
    %v9308 = vld [vmem:[%s8 + $0x48] sm:$0xf]
    %v9309 = vld [vmem:[%s8 + $0x4c] sm:$0xf]
    %v9310 = vld [vmem:[%s8 + $0x50] sm:$0xf]
    %v9311 = vld [vmem:[%s8 + $0x54] sm:$0xf]
    %v9312 = vld [vmem:[%s8 + $0x58] sm:$0xf]
    %v9313 = vld [vmem:[%s8 + $0x5c] sm:$0xf]
    %v9314 = vld [vmem:[%s8 + $0x60] sm:$0xf]
    %v9315 = vld [vmem:[%s8 + $0x64] sm:$0xf]
    %v9316 = vld [vmem:[%s8 + $0x68] sm:$0xf]
    %v9317 = vld [vmem:[%s8 + $0x6c] sm:$0xf]
    %v9318 = vld [vmem:[%s8 + $0x70] sm:$0xf]
    %v9319 = vld [vmem:[%s8 + $0x74] sm:$0xf]
    %v9320 = vld [vmem:[%s8 + $0x78] sm:$0xf]
    %v9321 = vld [vmem:[%s8 + $0x7c] sm:$0xf]
    %v9322 = vld [vmem:[%s8 + $0x80] sm:$0xf]
    %v9323 = vld [vmem:[%s8 + $0x84] sm:$0xf]
    %v9324 = vld [vmem:[%s8 + $0x88] sm:$0xf]
    %v9325 = vld [vmem:[%s8 + $0x8c] sm:$0xf]
    %v9326 = vld [vmem:[%s8 + $0x90] sm:$0xf]
    %v9327 = vld [vmem:[%s8 + $0x94] sm:$0xf]
    %v9328 = vld [vmem:[%s8 + $0x98] sm:$0xf]
    %v9329 = vld [vmem:[%s8 + $0x9c] sm:$0xf]
    %v9330 = vld [vmem:[%s8 + $0xa0] sm:$0xf]
    %v9331 = vld [vmem:[%s8 + $0xa4] sm:$0xf]
    %v9332 = vld [vmem:[%s8 + $0xa8] sm:$0xf]
    %v9333 = vld [vmem:[%s8 + $0xac] sm:$0xf]
    %v9334 = vld [vmem:[%s8 + $0xb0] sm:$0xf]
    %v9335 = vld [vmem:[%s8 + $0xb4] sm:$0xf]
    %v9336 = vld [vmem:[%s8 + $0xb8] sm:$0xf]
    %v9337 = vld [vmem:[%s8 + $0xbc] sm:$0xf]
    %v9338 = vld [vmem:[%s8 + $0xc0] sm:$0xf]
    %v9339 = vld [vmem:[%s8 + $0xc4] sm:$0xf]
    %v9340 = vld [vmem:[%s8 + $0xc8] sm:$0xf]
    %v9341 = vld [vmem:[%s8 + $0xcc] sm:$0xf]
    %v9342 = vld [vmem:[%s8 + $0xd0] sm:$0xf]
    %v9343 = vld [vmem:[%s8 + $0xd4] sm:$0xf]
    %v9344 = vld [vmem:[%s8 + $0xd8] sm:$0xf]
    %v9345 = vld [vmem:[%s8 + $0xdc] sm:$0xf]
    %v9346 = vld [vmem:[%s8 + $0xe0] sm:$0xf]
    %v9347 = vld [vmem:[%s8 + $0xe4] sm:$0xf]
    %v9348 = vld [vmem:[%s8 + $0xe8] sm:$0xf]
    %v9349 = vld [vmem:[%s8 + $0xec] sm:$0xf]
    %v9350 = vld [vmem:[%s8 + $0xf0] sm:$0xf]
    %v9351 = vld [vmem:[%s8 + $0xf4] sm:$0xf]
    %v9352 = vld [vmem:[%s8 + $0xf8] sm:$0xf]
    %v9353 = vld [vmem:[%s8 + $0xfc] sm:$0xf]
    %9355 = vset.pattern.permute.xlu0 0
    %9356 = vperm.xlu0 %9355, %v9290
    %v9357 = vpop.permute.xlu0 %9356
    %v9360 = vunpack.c.l.s4 839922192
    %v9361 = vunpack.c.0.s8 %v9360
    %v9362 = vlaneseq
    %v9363 = vshrl.u32 %v9362, 7
    %v9364 = vsub.s32 %v9361, %v9363
    %v9365 = vrot.slane %v9357, %v9364
    %9367 = vset.pattern.permute.xlu0 0
    %9368 = vperm.xlu0 %9367, %v9291
    %v9369 = vpop.permute.xlu0 %9368
    %v9372 = vunpack.c.l.s4 839922192
    %v9373 = vunpack.c.0.s8 %v9372
    %v9374 = vlaneseq
    %v9375 = vshrl.u32 %v9374, 7
    %v9376 = vsub.s32 %v9373, %v9375
    %v9377 = vrot.slane %v9369, %v9376
    %9379 = vset.pattern.permute.xlu0 0
    %9380 = vperm.xlu0 %9379, %v9292
    %v9381 = vpop.permute.xlu0 %9380
    %v9384 = vunpack.c.l.s4 839922192
    %v9385 = vunpack.c.0.s8 %v9384
    %v9386 = vlaneseq
    %v9387 = vshrl.u32 %v9386, 7
    %v9388 = vsub.s32 %v9385, %v9387
    %v9389 = vrot.slane %v9381, %v9388
    %9391 = vset.pattern.permute.xlu0 0
    %9392 = vperm.xlu0 %9391, %v9293
    %v9393 = vpop.permute.xlu0 %9392
    %v9396 = vunpack.c.l.s4 839922192
    %v9397 = vunpack.c.0.s8 %v9396
    %v9398 = vlaneseq
    %v9399 = vshrl.u32 %v9398, 7
    %v9400 = vsub.s32 %v9397, %v9399
    %v9401 = vrot.slane %v9393, %v9400
    %9403 = vset.pattern.permute.xlu0 0
    %9404 = vperm.xlu0 %9403, %v9294
    %v9405 = vpop.permute.xlu0 %9404
    %v9408 = vunpack.c.l.s4 839922192
    %v9409 = vunpack.c.0.s8 %v9408
    %v9410 = vlaneseq
    %v9411 = vshrl.u32 %v9410, 7
    %v9412 = vsub.s32 %v9409, %v9411
    %v9413 = vrot.slane %v9405, %v9412
    %9415 = vset.pattern.permute.xlu0 0
    %9416 = vperm.xlu0 %9415, %v9295
    %v9417 = vpop.permute.xlu0 %9416
    %v9420 = vunpack.c.l.s4 839922192
    %v9421 = vunpack.c.0.s8 %v9420
    %v9422 = vlaneseq
    %v9423 = vshrl.u32 %v9422, 7
    %v9424 = vsub.s32 %v9421, %v9423
    %v9425 = vrot.slane %v9417, %v9424
    %9427 = vset.pattern.permute.xlu0 0
    %9428 = vperm.xlu0 %9427, %v9296
    %v9429 = vpop.permute.xlu0 %9428
    %v9432 = vunpack.c.l.s4 839922192
    %v9433 = vunpack.c.0.s8 %v9432
    %v9434 = vlaneseq
    %v9435 = vshrl.u32 %v9434, 7
    %v9436 = vsub.s32 %v9433, %v9435
    %v9437 = vrot.slane %v9429, %v9436
    %9439 = vset.pattern.permute.xlu0 0
    %9440 = vperm.xlu0 %9439, %v9297
    %v9441 = vpop.permute.xlu0 %9440
    %v9444 = vunpack.c.l.s4 839922192
    %v9445 = vunpack.c.0.s8 %v9444
    %v9446 = vlaneseq
    %v9447 = vshrl.u32 %v9446, 7
    %v9448 = vsub.s32 %v9445, %v9447
    %v9449 = vrot.slane %v9441, %v9448
    %9451 = vset.pattern.permute.xlu0 0
    %9452 = vperm.xlu0 %9451, %v9298
    %v9453 = vpop.permute.xlu0 %9452
    %v9456 = vunpack.c.l.s4 839922192
    %v9457 = vunpack.c.0.s8 %v9456
    %v9458 = vlaneseq
    %v9459 = vshrl.u32 %v9458, 7
    %v9460 = vsub.s32 %v9457, %v9459
    %v9461 = vrot.slane %v9453, %v9460
    %9463 = vset.pattern.permute.xlu0 0
    %9464 = vperm.xlu0 %9463, %v9299
    %v9465 = vpop.permute.xlu0 %9464
    %v9468 = vunpack.c.l.s4 839922192
    %v9469 = vunpack.c.0.s8 %v9468
    %v9470 = vlaneseq
    %v9471 = vshrl.u32 %v9470, 7
    %v9472 = vsub.s32 %v9469, %v9471
    %v9473 = vrot.slane %v9465, %v9472
    %9475 = vset.pattern.permute.xlu0 0
    %9476 = vperm.xlu0 %9475, %v9300
    %v9477 = vpop.permute.xlu0 %9476
    %v9480 = vunpack.c.l.s4 839922192
    %v9481 = vunpack.c.0.s8 %v9480
    %v9482 = vlaneseq
    %v9483 = vshrl.u32 %v9482, 7
    %v9484 = vsub.s32 %v9481, %v9483
    %v9485 = vrot.slane %v9477, %v9484
    %9487 = vset.pattern.permute.xlu0 0
    %9488 = vperm.xlu0 %9487, %v9301
    %v9489 = vpop.permute.xlu0 %9488
    %v9492 = vunpack.c.l.s4 839922192
    %v9493 = vunpack.c.0.s8 %v9492
    %v9494 = vlaneseq
    %v9495 = vshrl.u32 %v9494, 7
    %v9496 = vsub.s32 %v9493, %v9495
    %v9497 = vrot.slane %v9489, %v9496
    %9499 = vset.pattern.permute.xlu0 0
    %9500 = vperm.xlu0 %9499, %v9302
    %v9501 = vpop.permute.xlu0 %9500
    %v9504 = vunpack.c.l.s4 839922192
    %v9505 = vunpack.c.0.s8 %v9504
    %v9506 = vlaneseq
    %v9507 = vshrl.u32 %v9506, 7
    %v9508 = vsub.s32 %v9505, %v9507
    %v9509 = vrot.slane %v9501, %v9508
    %9511 = vset.pattern.permute.xlu0 0
    %9512 = vperm.xlu0 %9511, %v9303
    %v9513 = vpop.permute.xlu0 %9512
    %v9516 = vunpack.c.l.s4 839922192
    %v9517 = vunpack.c.0.s8 %v9516
    %v9518 = vlaneseq
    %v9519 = vshrl.u32 %v9518, 7
    %v9520 = vsub.s32 %v9517, %v9519
    %v9521 = vrot.slane %v9513, %v9520
    %9523 = vset.pattern.permute.xlu0 0
    %9524 = vperm.xlu0 %9523, %v9304
    %v9525 = vpop.permute.xlu0 %9524
    %v9528 = vunpack.c.l.s4 839922192
    %v9529 = vunpack.c.0.s8 %v9528
    %v9530 = vlaneseq
    %v9531 = vshrl.u32 %v9530, 7
    %v9532 = vsub.s32 %v9529, %v9531
    %v9533 = vrot.slane %v9525, %v9532
    %9535 = vset.pattern.permute.xlu0 0
    %9536 = vperm.xlu0 %9535, %v9305
    %v9537 = vpop.permute.xlu0 %9536
    %v9540 = vunpack.c.l.s4 839922192
    %v9541 = vunpack.c.0.s8 %v9540
    %v9542 = vlaneseq
    %v9543 = vshrl.u32 %v9542, 7
    %v9544 = vsub.s32 %v9541, %v9543
    %v9545 = vrot.slane %v9537, %v9544
    %9547 = vset.pattern.permute.xlu0 0
    %9548 = vperm.xlu0 %9547, %v9306
    %v9549 = vpop.permute.xlu0 %9548
    %v9552 = vunpack.c.l.s4 839922192
    %v9553 = vunpack.c.0.s8 %v9552
    %v9554 = vlaneseq
    %v9555 = vshrl.u32 %v9554, 7
    %v9556 = vsub.s32 %v9553, %v9555
    %v9557 = vrot.slane %v9549, %v9556
    %9559 = vset.pattern.permute.xlu0 0
    %9560 = vperm.xlu0 %9559, %v9307
    %v9561 = vpop.permute.xlu0 %9560
    %v9564 = vunpack.c.l.s4 839922192
    %v9565 = vunpack.c.0.s8 %v9564
    %v9566 = vlaneseq
    %v9567 = vshrl.u32 %v9566, 7
    %v9568 = vsub.s32 %v9565, %v9567
    %v9569 = vrot.slane %v9561, %v9568
    %9571 = vset.pattern.permute.xlu0 0
    %9572 = vperm.xlu0 %9571, %v9308
    %v9573 = vpop.permute.xlu0 %9572
    %v9576 = vunpack.c.l.s4 839922192
    %v9577 = vunpack.c.0.s8 %v9576
    %v9578 = vlaneseq
    %v9579 = vshrl.u32 %v9578, 7
    %v9580 = vsub.s32 %v9577, %v9579
    %v9581 = vrot.slane %v9573, %v9580
    %9583 = vset.pattern.permute.xlu0 0
    %9584 = vperm.xlu0 %9583, %v9309
    %v9585 = vpop.permute.xlu0 %9584
    %v9588 = vunpack.c.l.s4 839922192
    %v9589 = vunpack.c.0.s8 %v9588
    %v9590 = vlaneseq
    %v9591 = vshrl.u32 %v9590, 7
    %v9592 = vsub.s32 %v9589, %v9591
    %v9593 = vrot.slane %v9585, %v9592
    %9595 = vset.pattern.permute.xlu0 0
    %9596 = vperm.xlu0 %9595, %v9310
    %v9597 = vpop.permute.xlu0 %9596
    %v9600 = vunpack.c.l.s4 839922192
    %v9601 = vunpack.c.0.s8 %v9600
    %v9602 = vlaneseq
    %v9603 = vshrl.u32 %v9602, 7
    %v9604 = vsub.s32 %v9601, %v9603
    %v9605 = vrot.slane %v9597, %v9604
    %9607 = vset.pattern.permute.xlu0 0
    %9608 = vperm.xlu0 %9607, %v9311
    %v9609 = vpop.permute.xlu0 %9608
    %v9612 = vunpack.c.l.s4 839922192
    %v9613 = vunpack.c.0.s8 %v9612
    %v9614 = vlaneseq
    %v9615 = vshrl.u32 %v9614, 7
    %v9616 = vsub.s32 %v9613, %v9615
    %v9617 = vrot.slane %v9609, %v9616
    %9619 = vset.pattern.permute.xlu0 0
    %9620 = vperm.xlu0 %9619, %v9312
    %v9621 = vpop.permute.xlu0 %9620
    %v9624 = vunpack.c.l.s4 839922192
    %v9625 = vunpack.c.0.s8 %v9624
    %v9626 = vlaneseq
    %v9627 = vshrl.u32 %v9626, 7
    %v9628 = vsub.s32 %v9625, %v9627
    %v9629 = vrot.slane %v9621, %v9628
    %9631 = vset.pattern.permute.xlu0 0
    %9632 = vperm.xlu0 %9631, %v9313
    %v9633 = vpop.permute.xlu0 %9632
    %v9636 = vunpack.c.l.s4 839922192
    %v9637 = vunpack.c.0.s8 %v9636
    %v9638 = vlaneseq
    %v9639 = vshrl.u32 %v9638, 7
    %v9640 = vsub.s32 %v9637, %v9639
    %v9641 = vrot.slane %v9633, %v9640
    %9643 = vset.pattern.permute.xlu0 0
    %9644 = vperm.xlu0 %9643, %v9314
    %v9645 = vpop.permute.xlu0 %9644
    %v9648 = vunpack.c.l.s4 839922192
    %v9649 = vunpack.c.0.s8 %v9648
    %v9650 = vlaneseq
    %v9651 = vshrl.u32 %v9650, 7
    %v9652 = vsub.s32 %v9649, %v9651
    %v9653 = vrot.slane %v9645, %v9652
    %9655 = vset.pattern.permute.xlu0 0
    %9656 = vperm.xlu0 %9655, %v9315
    %v9657 = vpop.permute.xlu0 %9656
    %v9660 = vunpack.c.l.s4 839922192
    %v9661 = vunpack.c.0.s8 %v9660
    %v9662 = vlaneseq
    %v9663 = vshrl.u32 %v9662, 7
    %v9664 = vsub.s32 %v9661, %v9663
    %v9665 = vrot.slane %v9657, %v9664
    %9667 = vset.pattern.permute.xlu0 0
    %9668 = vperm.xlu0 %9667, %v9316
    %v9669 = vpop.permute.xlu0 %9668
    %v9672 = vunpack.c.l.s4 839922192
    %v9673 = vunpack.c.0.s8 %v9672
    %v9674 = vlaneseq
    %v9675 = vshrl.u32 %v9674, 7
    %v9676 = vsub.s32 %v9673, %v9675
    %v9677 = vrot.slane %v9669, %v9676
    %9679 = vset.pattern.permute.xlu0 0
    %9680 = vperm.xlu0 %9679, %v9317
    %v9681 = vpop.permute.xlu0 %9680
    %v9684 = vunpack.c.l.s4 839922192
    %v9685 = vunpack.c.0.s8 %v9684
    %v9686 = vlaneseq
    %v9687 = vshrl.u32 %v9686, 7
    %v9688 = vsub.s32 %v9685, %v9687
    %v9689 = vrot.slane %v9681, %v9688
    %9691 = vset.pattern.permute.xlu0 0
    %9692 = vperm.xlu0 %9691, %v9318
    %v9693 = vpop.permute.xlu0 %9692
    %v9696 = vunpack.c.l.s4 839922192
    %v9697 = vunpack.c.0.s8 %v9696
    %v9698 = vlaneseq
    %v9699 = vshrl.u32 %v9698, 7
    %v9700 = vsub.s32 %v9697, %v9699
    %v9701 = vrot.slane %v9693, %v9700
    %9703 = vset.pattern.permute.xlu0 0
    %9704 = vperm.xlu0 %9703, %v9319
    %v9705 = vpop.permute.xlu0 %9704
    %v9708 = vunpack.c.l.s4 839922192
    %v9709 = vunpack.c.0.s8 %v9708
    %v9710 = vlaneseq
    %v9711 = vshrl.u32 %v9710, 7
    %v9712 = vsub.s32 %v9709, %v9711
    %v9713 = vrot.slane %v9705, %v9712
    %9715 = vset.pattern.permute.xlu0 0
    %9716 = vperm.xlu0 %9715, %v9320
    %v9717 = vpop.permute.xlu0 %9716
    %v9720 = vunpack.c.l.s4 839922192
    %v9721 = vunpack.c.0.s8 %v9720
    %v9722 = vlaneseq
    %v9723 = vshrl.u32 %v9722, 7
    %v9724 = vsub.s32 %v9721, %v9723
    %v9725 = vrot.slane %v9717, %v9724
    %9727 = vset.pattern.permute.xlu0 0
    %9728 = vperm.xlu0 %9727, %v9321
    %v9729 = vpop.permute.xlu0 %9728
    %v9732 = vunpack.c.l.s4 839922192
    %v9733 = vunpack.c.0.s8 %v9732
    %v9734 = vlaneseq
    %v9735 = vshrl.u32 %v9734, 7
    %v9736 = vsub.s32 %v9733, %v9735
    %v9737 = vrot.slane %v9729, %v9736
    %9739 = vset.pattern.permute.xlu0 0
    %9740 = vperm.xlu0 %9739, %v9322
    %v9741 = vpop.permute.xlu0 %9740
    %v9744 = vunpack.c.l.s4 839922192
    %v9745 = vunpack.c.0.s8 %v9744
    %v9746 = vlaneseq
    %v9747 = vshrl.u32 %v9746, 7
    %v9748 = vsub.s32 %v9745, %v9747
    %v9749 = vrot.slane %v9741, %v9748
    %9751 = vset.pattern.permute.xlu0 0
    %9752 = vperm.xlu0 %9751, %v9323
    %v9753 = vpop.permute.xlu0 %9752
    %v9756 = vunpack.c.l.s4 839922192
    %v9757 = vunpack.c.0.s8 %v9756
    %v9758 = vlaneseq
    %v9759 = vshrl.u32 %v9758, 7
    %v9760 = vsub.s32 %v9757, %v9759
    %v9761 = vrot.slane %v9753, %v9760
    %9763 = vset.pattern.permute.xlu0 0
    %9764 = vperm.xlu0 %9763, %v9324
    %v9765 = vpop.permute.xlu0 %9764
    %v9768 = vunpack.c.l.s4 839922192
    %v9769 = vunpack.c.0.s8 %v9768
    %v9770 = vlaneseq
    %v9771 = vshrl.u32 %v9770, 7
    %v9772 = vsub.s32 %v9769, %v9771
    %v9773 = vrot.slane %v9765, %v9772
    %9775 = vset.pattern.permute.xlu0 0
    %9776 = vperm.xlu0 %9775, %v9325
    %v9777 = vpop.permute.xlu0 %9776
    %v9780 = vunpack.c.l.s4 839922192
    %v9781 = vunpack.c.0.s8 %v9780
    %v9782 = vlaneseq
    %v9783 = vshrl.u32 %v9782, 7
    %v9784 = vsub.s32 %v9781, %v9783
    %v9785 = vrot.slane %v9777, %v9784
    %9787 = vset.pattern.permute.xlu0 0
    %9788 = vperm.xlu0 %9787, %v9326
    %v9789 = vpop.permute.xlu0 %9788
    %v9792 = vunpack.c.l.s4 839922192
    %v9793 = vunpack.c.0.s8 %v9792
    %v9794 = vlaneseq
    %v9795 = vshrl.u32 %v9794, 7
    %v9796 = vsub.s32 %v9793, %v9795
    %v9797 = vrot.slane %v9789, %v9796
    %9799 = vset.pattern.permute.xlu0 0
    %9800 = vperm.xlu0 %9799, %v9327
    %v9801 = vpop.permute.xlu0 %9800
    %v9804 = vunpack.c.l.s4 839922192
    %v9805 = vunpack.c.0.s8 %v9804
    %v9806 = vlaneseq
    %v9807 = vshrl.u32 %v9806, 7
    %v9808 = vsub.s32 %v9805, %v9807
    %v9809 = vrot.slane %v9801, %v9808
    %9811 = vset.pattern.permute.xlu0 0
    %9812 = vperm.xlu0 %9811, %v9328
    %v9813 = vpop.permute.xlu0 %9812
    %v9816 = vunpack.c.l.s4 839922192
    %v9817 = vunpack.c.0.s8 %v9816
    %v9818 = vlaneseq
    %v9819 = vshrl.u32 %v9818, 7
    %v9820 = vsub.s32 %v9817, %v9819
    %v9821 = vrot.slane %v9813, %v9820
    %9823 = vset.pattern.permute.xlu0 0
    %9824 = vperm.xlu0 %9823, %v9329
    %v9825 = vpop.permute.xlu0 %9824
    %v9828 = vunpack.c.l.s4 839922192
    %v9829 = vunpack.c.0.s8 %v9828
    %v9830 = vlaneseq
    %v9831 = vshrl.u32 %v9830, 7
    %v9832 = vsub.s32 %v9829, %v9831
    %v9833 = vrot.slane %v9825, %v9832
    %9835 = vset.pattern.permute.xlu0 0
    %9836 = vperm.xlu0 %9835, %v9330
    %v9837 = vpop.permute.xlu0 %9836
    %v9840 = vunpack.c.l.s4 839922192
    %v9841 = vunpack.c.0.s8 %v9840
    %v9842 = vlaneseq
    %v9843 = vshrl.u32 %v9842, 7
    %v9844 = vsub.s32 %v9841, %v9843
    %v9845 = vrot.slane %v9837, %v9844
    %9847 = vset.pattern.permute.xlu0 0
    %9848 = vperm.xlu0 %9847, %v9331
    %v9849 = vpop.permute.xlu0 %9848
    %v9852 = vunpack.c.l.s4 839922192
    %v9853 = vunpack.c.0.s8 %v9852
    %v9854 = vlaneseq
    %v9855 = vshrl.u32 %v9854, 7
    %v9856 = vsub.s32 %v9853, %v9855
    %v9857 = vrot.slane %v9849, %v9856
    %9859 = vset.pattern.permute.xlu0 0
    %9860 = vperm.xlu0 %9859, %v9332
    %v9861 = vpop.permute.xlu0 %9860
    %v9864 = vunpack.c.l.s4 839922192
    %v9865 = vunpack.c.0.s8 %v9864
    %v9866 = vlaneseq
    %v9867 = vshrl.u32 %v9866, 7
    %v9868 = vsub.s32 %v9865, %v9867
    %v9869 = vrot.slane %v9861, %v9868
    %9871 = vset.pattern.permute.xlu0 0
    %9872 = vperm.xlu0 %9871, %v9333
    %v9873 = vpop.permute.xlu0 %9872
    %v9876 = vunpack.c.l.s4 839922192
    %v9877 = vunpack.c.0.s8 %v9876
    %v9878 = vlaneseq
    %v9879 = vshrl.u32 %v9878, 7
    %v9880 = vsub.s32 %v9877, %v9879
    %v9881 = vrot.slane %v9873, %v9880
    %9883 = vset.pattern.permute.xlu0 0
    %9884 = vperm.xlu0 %9883, %v9334
    %v9885 = vpop.permute.xlu0 %9884
    %v9888 = vunpack.c.l.s4 839922192
    %v9889 = vunpack.c.0.s8 %v9888
    %v9890 = vlaneseq
    %v9891 = vshrl.u32 %v9890, 7
    %v9892 = vsub.s32 %v9889, %v9891
    %v9893 = vrot.slane %v9885, %v9892
    %9895 = vset.pattern.permute.xlu0 0
    %9896 = vperm.xlu0 %9895, %v9335
    %v9897 = vpop.permute.xlu0 %9896
    %v9900 = vunpack.c.l.s4 839922192
    %v9901 = vunpack.c.0.s8 %v9900
    %v9902 = vlaneseq
    %v9903 = vshrl.u32 %v9902, 7
    %v9904 = vsub.s32 %v9901, %v9903
    %v9905 = vrot.slane %v9897, %v9904
    %9907 = vset.pattern.permute.xlu0 0
    %9908 = vperm.xlu0 %9907, %v9336
    %v9909 = vpop.permute.xlu0 %9908
    %v9912 = vunpack.c.l.s4 839922192
    %v9913 = vunpack.c.0.s8 %v9912
    %v9914 = vlaneseq
    %v9915 = vshrl.u32 %v9914, 7
    %v9916 = vsub.s32 %v9913, %v9915
    %v9917 = vrot.slane %v9909, %v9916
    %9919 = vset.pattern.permute.xlu0 0
    %9920 = vperm.xlu0 %9919, %v9337
    %v9921 = vpop.permute.xlu0 %9920
    %v9924 = vunpack.c.l.s4 839922192
    %v9925 = vunpack.c.0.s8 %v9924
    %v9926 = vlaneseq
    %v9927 = vshrl.u32 %v9926, 7
    %v9928 = vsub.s32 %v9925, %v9927
    %v9929 = vrot.slane %v9921, %v9928
    %9931 = vset.pattern.permute.xlu0 0
    %9932 = vperm.xlu0 %9931, %v9338
    %v9933 = vpop.permute.xlu0 %9932
    %v9936 = vunpack.c.l.s4 839922192
    %v9937 = vunpack.c.0.s8 %v9936
    %v9938 = vlaneseq
    %v9939 = vshrl.u32 %v9938, 7
    %v9940 = vsub.s32 %v9937, %v9939
    %v9941 = vrot.slane %v9933, %v9940
    %9943 = vset.pattern.permute.xlu0 0
    %9944 = vperm.xlu0 %9943, %v9339
    %v9945 = vpop.permute.xlu0 %9944
    %v9948 = vunpack.c.l.s4 839922192
    %v9949 = vunpack.c.0.s8 %v9948
    %v9950 = vlaneseq
    %v9951 = vshrl.u32 %v9950, 7
    %v9952 = vsub.s32 %v9949, %v9951
    %v9953 = vrot.slane %v9945, %v9952
    %9955 = vset.pattern.permute.xlu0 0
    %9956 = vperm.xlu0 %9955, %v9340
    %v9957 = vpop.permute.xlu0 %9956
    %v9960 = vunpack.c.l.s4 839922192
    %v9961 = vunpack.c.0.s8 %v9960
    %v9962 = vlaneseq
    %v9963 = vshrl.u32 %v9962, 7
    %v9964 = vsub.s32 %v9961, %v9963
    %v9965 = vrot.slane %v9957, %v9964
    %9967 = vset.pattern.permute.xlu0 0
    %9968 = vperm.xlu0 %9967, %v9341
    %v9969 = vpop.permute.xlu0 %9968
    %v9972 = vunpack.c.l.s4 839922192
    %v9973 = vunpack.c.0.s8 %v9972
    %v9974 = vlaneseq
    %v9975 = vshrl.u32 %v9974, 7
    %v9976 = vsub.s32 %v9973, %v9975
    %v9977 = vrot.slane %v9969, %v9976
    %9979 = vset.pattern.permute.xlu0 0
    %9980 = vperm.xlu0 %9979, %v9342
    %v9981 = vpop.permute.xlu0 %9980
    %v9984 = vunpack.c.l.s4 839922192
    %v9985 = vunpack.c.0.s8 %v9984
    %v9986 = vlaneseq
    %v9987 = vshrl.u32 %v9986, 7
    %v9988 = vsub.s32 %v9985, %v9987
    %v9989 = vrot.slane %v9981, %v9988
    %9991 = vset.pattern.permute.xlu0 0
    %9992 = vperm.xlu0 %9991, %v9343
    %v9993 = vpop.permute.xlu0 %9992
    %v9996 = vunpack.c.l.s4 839922192
    %v9997 = vunpack.c.0.s8 %v9996
    %v9998 = vlaneseq
    %v9999 = vshrl.u32 %v9998, 7
    %v10000 = vsub.s32 %v9997, %v9999
    %v10001 = vrot.slane %v9993, %v10000
    %10003 = vset.pattern.permute.xlu0 0
    %10004 = vperm.xlu0 %10003, %v9344
    %v10005 = vpop.permute.xlu0 %10004
    %v10008 = vunpack.c.l.s4 839922192
    %v10009 = vunpack.c.0.s8 %v10008
    %v10010 = vlaneseq
    %v10011 = vshrl.u32 %v10010, 7
    %v10012 = vsub.s32 %v10009, %v10011
    %v10013 = vrot.slane %v10005, %v10012
    %10015 = vset.pattern.permute.xlu0 0
    %10016 = vperm.xlu0 %10015, %v9345
    %v10017 = vpop.permute.xlu0 %10016
    %v10020 = vunpack.c.l.s4 839922192
    %v10021 = vunpack.c.0.s8 %v10020
    %v10022 = vlaneseq
    %v10023 = vshrl.u32 %v10022, 7
    %v10024 = vsub.s32 %v10021, %v10023
    %v10025 = vrot.slane %v10017, %v10024
    %10027 = vset.pattern.permute.xlu0 0
    %10028 = vperm.xlu0 %10027, %v9346
    %v10029 = vpop.permute.xlu0 %10028
    %v10032 = vunpack.c.l.s4 839922192
    %v10033 = vunpack.c.0.s8 %v10032
    %v10034 = vlaneseq
    %v10035 = vshrl.u32 %v10034, 7
    %v10036 = vsub.s32 %v10033, %v10035
    %v10037 = vrot.slane %v10029, %v10036
    %10039 = vset.pattern.permute.xlu0 0
    %10040 = vperm.xlu0 %10039, %v9347
    %v10041 = vpop.permute.xlu0 %10040
    %v10044 = vunpack.c.l.s4 839922192
    %v10045 = vunpack.c.0.s8 %v10044
    %v10046 = vlaneseq
    %v10047 = vshrl.u32 %v10046, 7
    %v10048 = vsub.s32 %v10045, %v10047
    %v10049 = vrot.slane %v10041, %v10048
    %10051 = vset.pattern.permute.xlu0 0
    %10052 = vperm.xlu0 %10051, %v9348
    %v10053 = vpop.permute.xlu0 %10052
    %v10056 = vunpack.c.l.s4 839922192
    %v10057 = vunpack.c.0.s8 %v10056
    %v10058 = vlaneseq
    %v10059 = vshrl.u32 %v10058, 7
    %v10060 = vsub.s32 %v10057, %v10059
    %v10061 = vrot.slane %v10053, %v10060
    %10063 = vset.pattern.permute.xlu0 0
    %10064 = vperm.xlu0 %10063, %v9349
    %v10065 = vpop.permute.xlu0 %10064
    %v10068 = vunpack.c.l.s4 839922192
    %v10069 = vunpack.c.0.s8 %v10068
    %v10070 = vlaneseq
    %v10071 = vshrl.u32 %v10070, 7
    %v10072 = vsub.s32 %v10069, %v10071
    %v10073 = vrot.slane %v10065, %v10072
    %10075 = vset.pattern.permute.xlu0 0
    %10076 = vperm.xlu0 %10075, %v9350
    %v10077 = vpop.permute.xlu0 %10076
    %v10080 = vunpack.c.l.s4 839922192
    %v10081 = vunpack.c.0.s8 %v10080
    %v10082 = vlaneseq
    %v10083 = vshrl.u32 %v10082, 7
    %v10084 = vsub.s32 %v10081, %v10083
    %v10085 = vrot.slane %v10077, %v10084
    %10087 = vset.pattern.permute.xlu0 0
    %10088 = vperm.xlu0 %10087, %v9351
    %v10089 = vpop.permute.xlu0 %10088
    %v10092 = vunpack.c.l.s4 839922192
    %v10093 = vunpack.c.0.s8 %v10092
    %v10094 = vlaneseq
    %v10095 = vshrl.u32 %v10094, 7
    %v10096 = vsub.s32 %v10093, %v10095
    %v10097 = vrot.slane %v10089, %v10096
    %10099 = vset.pattern.permute.xlu0 0
    %10100 = vperm.xlu0 %10099, %v9352
    %v10101 = vpop.permute.xlu0 %10100
    %v10104 = vunpack.c.l.s4 839922192
    %v10105 = vunpack.c.0.s8 %v10104
    %v10106 = vlaneseq
    %v10107 = vshrl.u32 %v10106, 7
    %v10108 = vsub.s32 %v10105, %v10107
    %v10109 = vrot.slane %v10101, %v10108
    %10111 = vset.pattern.permute.xlu0 0
    %10112 = vperm.xlu0 %10111, %v9353
    %v10113 = vpop.permute.xlu0 %10112
    %v10116 = vunpack.c.l.s4 839922192
    %v10117 = vunpack.c.0.s8 %v10116
    %v10118 = vlaneseq
    %v10119 = vshrl.u32 %v10118, 7
    %v10120 = vsub.s32 %v10117, %v10119
    %v10121 = vrot.slane %v10113, %v10120
    %v10186 = vunpack.c.l.b16 %v9365
    %v10187 = vunpack.c.l.b16 %v9377
    %v10188 = vunpack.c.l.b16 %v9389
    %v10189 = vunpack.c.l.b16 %v9401
    %v10190 = vunpack.c.l.b16 %v9413
    %v10191 = vunpack.c.l.b16 %v9425
    %v10192 = vunpack.c.l.b16 %v9437
    %v10193 = vunpack.c.l.b16 %v9449
    %v10194 = vunpack.c.l.b16 %v9461
    %v10195 = vunpack.c.l.b16 %v9473
    %v10196 = vunpack.c.l.b16 %v9485
    %v10197 = vunpack.c.l.b16 %v9497
    %v10198 = vunpack.c.l.b16 %v9509
    %v10199 = vunpack.c.l.b16 %v9521
    %v10200 = vunpack.c.l.b16 %v9533
    %v10201 = vunpack.c.l.b16 %v9545
    %v10202 = vunpack.c.l.b16 %v9557
    %v10203 = vunpack.c.l.b16 %v9569
    %v10204 = vunpack.c.l.b16 %v9581
    %v10205 = vunpack.c.l.b16 %v9593
    %v10206 = vunpack.c.l.b16 %v9605
    %v10207 = vunpack.c.l.b16 %v9617
    %v10208 = vunpack.c.l.b16 %v9629
    %v10209 = vunpack.c.l.b16 %v9641
    %v10210 = vunpack.c.l.b16 %v9653
    %v10211 = vunpack.c.l.b16 %v9665
    %v10212 = vunpack.c.l.b16 %v9677
    %v10213 = vunpack.c.l.b16 %v9689
    %v10214 = vunpack.c.l.b16 %v9701
    %v10215 = vunpack.c.l.b16 %v9713
    %v10216 = vunpack.c.l.b16 %v9725
    %v10217 = vunpack.c.l.b16 %v9737
    %v10218 = vunpack.c.l.b16 %v9749
    %v10219 = vunpack.c.l.b16 %v9761
    %v10220 = vunpack.c.l.b16 %v9773
    %v10221 = vunpack.c.l.b16 %v9785
    %v10222 = vunpack.c.l.b16 %v9797
    %v10223 = vunpack.c.l.b16 %v9809
    %v10224 = vunpack.c.l.b16 %v9821
    %v10225 = vunpack.c.l.b16 %v9833
    %v10226 = vunpack.c.l.b16 %v9845
    %v10227 = vunpack.c.l.b16 %v9857
    %v10228 = vunpack.c.l.b16 %v9869
    %v10229 = vunpack.c.l.b16 %v9881
    %v10230 = vunpack.c.l.b16 %v9893
    %v10231 = vunpack.c.l.b16 %v9905
    %v10232 = vunpack.c.l.b16 %v9917
    %v10233 = vunpack.c.l.b16 %v9929
    %v10234 = vunpack.c.l.b16 %v9941
    %v10235 = vunpack.c.l.b16 %v9953
    %v10236 = vunpack.c.l.b16 %v9965
    %v10237 = vunpack.c.l.b16 %v9977
    %v10238 = vunpack.c.l.b16 %v9989
    %v10239 = vunpack.c.l.b16 %v10001
    %v10240 = vunpack.c.l.b16 %v10013
    %v10241 = vunpack.c.l.b16 %v10025
    %v10242 = vunpack.c.l.b16 %v10037
    %v10243 = vunpack.c.l.b16 %v10049
    %v10244 = vunpack.c.l.b16 %v10061
    %v10245 = vunpack.c.l.b16 %v10073
    %v10246 = vunpack.c.l.b16 %v10085
    %v10247 = vunpack.c.l.b16 %v10097
    %v10248 = vunpack.c.l.b16 %v10109
    %v10249 = vunpack.c.l.b16 %v10121
    %v10250 = vpack.c.b16 %v10187, %v10186
    %v10251 = vpack.c.b16 %v10189, %v10188
    %v10252 = vpack.c.b16 %v10191, %v10190
    %v10253 = vpack.c.b16 %v10193, %v10192
    %v10254 = vpack.c.b16 %v10195, %v10194
    %v10255 = vpack.c.b16 %v10197, %v10196
    %v10256 = vpack.c.b16 %v10199, %v10198
    %v10257 = vpack.c.b16 %v10201, %v10200
    %v10258 = vpack.c.b16 %v10203, %v10202
    %v10259 = vpack.c.b16 %v10205, %v10204
    %v10260 = vpack.c.b16 %v10207, %v10206
    %v10261 = vpack.c.b16 %v10209, %v10208
    %v10262 = vpack.c.b16 %v10211, %v10210
    %v10263 = vpack.c.b16 %v10213, %v10212
    %v10264 = vpack.c.b16 %v10215, %v10214
    %v10265 = vpack.c.b16 %v10217, %v10216
    %v10266 = vpack.c.b16 %v10219, %v10218
    %v10267 = vpack.c.b16 %v10221, %v10220
    %v10268 = vpack.c.b16 %v10223, %v10222
    %v10269 = vpack.c.b16 %v10225, %v10224
    %v10270 = vpack.c.b16 %v10227, %v10226
    %v10271 = vpack.c.b16 %v10229, %v10228
    %v10272 = vpack.c.b16 %v10231, %v10230
    %v10273 = vpack.c.b16 %v10233, %v10232
    %v10274 = vpack.c.b16 %v10235, %v10234
    %v10275 = vpack.c.b16 %v10237, %v10236
    %v10276 = vpack.c.b16 %v10239, %v10238
    %v10277 = vpack.c.b16 %v10241, %v10240
    %v10278 = vpack.c.b16 %v10243, %v10242
    %v10279 = vpack.c.b16 %v10245, %v10244
    %v10280 = vpack.c.b16 %v10247, %v10246
    %v10281 = vpack.c.b16 %v10249, %v10248
    %v10314 = vadd.bf16 %v9226, %v10250
    %v10315 = vadd.bf16 %v9227, %v10250
    %v10316 = vadd.bf16 %v9228, %v10251
    %v10317 = vadd.bf16 %v9229, %v10251
    %v10318 = vadd.bf16 %v9230, %v10252
    %v10319 = vadd.bf16 %v9231, %v10252
    %v10320 = vadd.bf16 %v9232, %v10253
    %v10321 = vadd.bf16 %v9233, %v10253
    %v10322 = vadd.bf16 %v9234, %v10254
    %v10323 = vadd.bf16 %v9235, %v10254
    %v10324 = vadd.bf16 %v9236, %v10255
    %v10325 = vadd.bf16 %v9237, %v10255
    %v10326 = vadd.bf16 %v9238, %v10256
    %v10327 = vadd.bf16 %v9239, %v10256
    %v10328 = vadd.bf16 %v9240, %v10257
    %v10329 = vadd.bf16 %v9241, %v10257
    %v10330 = vadd.bf16 %v9242, %v10258
    %v10331 = vadd.bf16 %v9243, %v10258
    %v10332 = vadd.bf16 %v9244, %v10259
    %v10333 = vadd.bf16 %v9245, %v10259
    %v10334 = vadd.bf16 %v9246, %v10260
    %v10335 = vadd.bf16 %v9247, %v10260
    %v10336 = vadd.bf16 %v9248, %v10261
    %v10337 = vadd.bf16 %v9249, %v10261
    %v10338 = vadd.bf16 %v9250, %v10262
    %v10339 = vadd.bf16 %v9251, %v10262
    %v10340 = vadd.bf16 %v9252, %v10263
    %v10341 = vadd.bf16 %v9253, %v10263
    %v10342 = vadd.bf16 %v9254, %v10264
    %v10343 = vadd.bf16 %v9255, %v10264
    %v10344 = vadd.bf16 %v9256, %v10265
    %v10345 = vadd.bf16 %v9257, %v10265
    %v10346 = vadd.bf16 %v9258, %v10266
    %v10347 = vadd.bf16 %v9259, %v10266
    %v10348 = vadd.bf16 %v9260, %v10267
    %v10349 = vadd.bf16 %v9261, %v10267
    %v10350 = vadd.bf16 %v9262, %v10268
    %v10351 = vadd.bf16 %v9263, %v10268
    %v10352 = vadd.bf16 %v9264, %v10269
    %v10353 = vadd.bf16 %v9265, %v10269
    %v10354 = vadd.bf16 %v9266, %v10270
    %v10355 = vadd.bf16 %v9267, %v10270
    %v10356 = vadd.bf16 %v9268, %v10271
    %v10357 = vadd.bf16 %v9269, %v10271
    %v10358 = vadd.bf16 %v9270, %v10272
    %v10359 = vadd.bf16 %v9271, %v10272
    %v10360 = vadd.bf16 %v9272, %v10273
    %v10361 = vadd.bf16 %v9273, %v10273
    %v10362 = vadd.bf16 %v9274, %v10274
    %v10363 = vadd.bf16 %v9275, %v10274
    %v10364 = vadd.bf16 %v9276, %v10275
    %v10365 = vadd.bf16 %v9277, %v10275
    %v10366 = vadd.bf16 %v9278, %v10276
    %v10367 = vadd.bf16 %v9279, %v10276
    %v10368 = vadd.bf16 %v9280, %v10277
    %v10369 = vadd.bf16 %v9281, %v10277
    %v10370 = vadd.bf16 %v9282, %v10278
    %v10371 = vadd.bf16 %v9283, %v10278
    %v10372 = vadd.bf16 %v9284, %v10279
    %v10373 = vadd.bf16 %v9285, %v10279
    %v10374 = vadd.bf16 %v9286, %v10280
    %v10375 = vadd.bf16 %v9287, %v10280
    %v10376 = vadd.bf16 %v9288, %v10281
    %v10377 = vadd.bf16 %v9289, %v10281
    %v10378 = vmax.bf16 %v10314, 0
    %v10379 = vmax.bf16 %v10315, 0
    %v10380 = vmax.bf16 %v10316, 0
    %v10381 = vmax.bf16 %v10317, 0
    %v10382 = vmax.bf16 %v10318, 0
    %v10383 = vmax.bf16 %v10319, 0
    %v10384 = vmax.bf16 %v10320, 0
    %v10385 = vmax.bf16 %v10321, 0
    %v10386 = vmax.bf16 %v10322, 0
    %v10387 = vmax.bf16 %v10323, 0
    %v10388 = vmax.bf16 %v10324, 0
    %v10389 = vmax.bf16 %v10325, 0
    %v10390 = vmax.bf16 %v10326, 0
    %v10391 = vmax.bf16 %v10327, 0
    %v10392 = vmax.bf16 %v10328, 0
    %v10393 = vmax.bf16 %v10329, 0
    %v10394 = vmax.bf16 %v10330, 0
    %v10395 = vmax.bf16 %v10331, 0
    %v10396 = vmax.bf16 %v10332, 0
    %v10397 = vmax.bf16 %v10333, 0
    %v10398 = vmax.bf16 %v10334, 0
    %v10399 = vmax.bf16 %v10335, 0
    %v10400 = vmax.bf16 %v10336, 0
    %v10401 = vmax.bf16 %v10337, 0
    %v10402 = vmax.bf16 %v10338, 0
    %v10403 = vmax.bf16 %v10339, 0
    %v10404 = vmax.bf16 %v10340, 0
    %v10405 = vmax.bf16 %v10341, 0
    %v10406 = vmax.bf16 %v10342, 0
    %v10407 = vmax.bf16 %v10343, 0
    %v10408 = vmax.bf16 %v10344, 0
    %v10409 = vmax.bf16 %v10345, 0
    %v10410 = vmax.bf16 %v10346, 0
    %v10411 = vmax.bf16 %v10347, 0
    %v10412 = vmax.bf16 %v10348, 0
    %v10413 = vmax.bf16 %v10349, 0
    %v10414 = vmax.bf16 %v10350, 0
    %v10415 = vmax.bf16 %v10351, 0
    %v10416 = vmax.bf16 %v10352, 0
    %v10417 = vmax.bf16 %v10353, 0
    %v10418 = vmax.bf16 %v10354, 0
    %v10419 = vmax.bf16 %v10355, 0
    %v10420 = vmax.bf16 %v10356, 0
    %v10421 = vmax.bf16 %v10357, 0
    %v10422 = vmax.bf16 %v10358, 0
    %v10423 = vmax.bf16 %v10359, 0
    %v10424 = vmax.bf16 %v10360, 0
    %v10425 = vmax.bf16 %v10361, 0
    %v10426 = vmax.bf16 %v10362, 0
    %v10427 = vmax.bf16 %v10363, 0
    %v10428 = vmax.bf16 %v10364, 0
    %v10429 = vmax.bf16 %v10365, 0
    %v10430 = vmax.bf16 %v10366, 0
    %v10431 = vmax.bf16 %v10367, 0
    %v10432 = vmax.bf16 %v10368, 0
    %v10433 = vmax.bf16 %v10369, 0
    %v10434 = vmax.bf16 %v10370, 0
    %v10435 = vmax.bf16 %v10371, 0
    %v10436 = vmax.bf16 %v10372, 0
    %v10437 = vmax.bf16 %v10373, 0
    %v10438 = vmax.bf16 %v10374, 0
    %v10439 = vmax.bf16 %v10375, 0
    %v10440 = vmax.bf16 %v10376, 0
    %v10441 = vmax.bf16 %v10377, 0
    %v10442 = vld [vmem:[#allocation6] sm:$0xff]
    %v10443 = vld [vmem:[#allocation6 + $0x8] sm:$0xff]
    %v10444 = vld [vmem:[#allocation6 + $0x10] sm:$0xff]
    %v10445 = vld [vmem:[#allocation6 + $0x18] sm:$0xff]
    %v10446 = vld [vmem:[#allocation6 + $0x20] sm:$0xff]
    %v10447 = vld [vmem:[#allocation6 + $0x28] sm:$0xff]
    %v10448 = vld [vmem:[#allocation6 + $0x30] sm:$0xff]
    %v10449 = vld [vmem:[#allocation6 + $0x38] sm:$0xff]
    %v10450 = vld [vmem:[#allocation6 + $0x40] sm:$0xff]
    %v10451 = vld [vmem:[#allocation6 + $0x48] sm:$0xff]
    %v10452 = vld [vmem:[#allocation6 + $0x50] sm:$0xff]
    %v10453 = vld [vmem:[#allocation6 + $0x58] sm:$0xff]
    %v10454 = vld [vmem:[#allocation6 + $0x60] sm:$0xff]
    %v10455 = vld [vmem:[#allocation6 + $0x68] sm:$0xff]
    %v10456 = vld [vmem:[#allocation6 + $0x70] sm:$0xff]
    %v10457 = vld [vmem:[#allocation6 + $0x78] sm:$0xff]
    %v10458 = vld [vmem:[#allocation6 + $0x80] sm:$0xff]
    %v10459 = vld [vmem:[#allocation6 + $0x88] sm:$0xff]
    %v10460 = vld [vmem:[#allocation6 + $0x90] sm:$0xff]
    %v10461 = vld [vmem:[#allocation6 + $0x98] sm:$0xff]
    %v10462 = vld [vmem:[#allocation6 + $0xa0] sm:$0xff]
    %v10463 = vld [vmem:[#allocation6 + $0xa8] sm:$0xff]
    %v10464 = vld [vmem:[#allocation6 + $0xb0] sm:$0xff]
    %v10465 = vld [vmem:[#allocation6 + $0xb8] sm:$0xff]
    %v10466 = vld [vmem:[#allocation6 + $0xc0] sm:$0xff]
    %v10467 = vld [vmem:[#allocation6 + $0xc8] sm:$0xff]
    %v10468 = vld [vmem:[#allocation6 + $0xd0] sm:$0xff]
    %v10469 = vld [vmem:[#allocation6 + $0xd8] sm:$0xff]
    %v10470 = vld [vmem:[#allocation6 + $0xe0] sm:$0xff]
    %v10471 = vld [vmem:[#allocation6 + $0xe8] sm:$0xff]
    %v10472 = vld [vmem:[#allocation6 + $0xf0] sm:$0xff]
    %v10473 = vld [vmem:[#allocation6 + $0xf8] sm:$0xff]
    %v10474 = vld [vmem:[#allocation6 + $0x100] sm:$0xff]
    %v10475 = vld [vmem:[#allocation6 + $0x108] sm:$0xff]
    %v10476 = vld [vmem:[#allocation6 + $0x110] sm:$0xff]
    %v10477 = vld [vmem:[#allocation6 + $0x118] sm:$0xff]
    %v10478 = vld [vmem:[#allocation6 + $0x120] sm:$0xff]
    %v10479 = vld [vmem:[#allocation6 + $0x128] sm:$0xff]
    %v10480 = vld [vmem:[#allocation6 + $0x130] sm:$0xff]
    %v10481 = vld [vmem:[#allocation6 + $0x138] sm:$0xff]
    %v10482 = vld [vmem:[#allocation6 + $0x140] sm:$0xff]
    %v10483 = vld [vmem:[#allocation6 + $0x148] sm:$0xff]
    %v10484 = vld [vmem:[#allocation6 + $0x150] sm:$0xff]
    %v10485 = vld [vmem:[#allocation6 + $0x158] sm:$0xff]
    %v10486 = vld [vmem:[#allocation6 + $0x160] sm:$0xff]
    %v10487 = vld [vmem:[#allocation6 + $0x168] sm:$0xff]
    %v10488 = vld [vmem:[#allocation6 + $0x170] sm:$0xff]
    %v10489 = vld [vmem:[#allocation6 + $0x178] sm:$0xff]
    %v10490 = vld [vmem:[#allocation6 + $0x180] sm:$0xff]
    %v10491 = vld [vmem:[#allocation6 + $0x188] sm:$0xff]
    %v10492 = vld [vmem:[#allocation6 + $0x190] sm:$0xff]
    %v10493 = vld [vmem:[#allocation6 + $0x198] sm:$0xff]
    %v10494 = vld [vmem:[#allocation6 + $0x1a0] sm:$0xff]
    %v10495 = vld [vmem:[#allocation6 + $0x1a8] sm:$0xff]
    %v10496 = vld [vmem:[#allocation6 + $0x1b0] sm:$0xff]
    %v10497 = vld [vmem:[#allocation6 + $0x1b8] sm:$0xff]
    %v10498 = vld [vmem:[#allocation6 + $0x1c0] sm:$0xff]
    %v10499 = vld [vmem:[#allocation6 + $0x1c8] sm:$0xff]
    %v10500 = vld [vmem:[#allocation6 + $0x1d0] sm:$0xff]
    %v10501 = vld [vmem:[#allocation6 + $0x1d8] sm:$0xff]
    %v10502 = vld [vmem:[#allocation6 + $0x1e0] sm:$0xff]
    %v10503 = vld [vmem:[#allocation6 + $0x1e8] sm:$0xff]
    %v10504 = vld [vmem:[#allocation6 + $0x1f0] sm:$0xff]
    %v10505 = vld [vmem:[#allocation6 + $0x1f8] sm:$0xff]
    %v10506 = vld [vmem:[#allocation6 + $0x200] sm:$0xff]
    %v10507 = vld [vmem:[#allocation6 + $0x208] sm:$0xff]
    %v10508 = vld [vmem:[#allocation6 + $0x210] sm:$0xff]
    %v10509 = vld [vmem:[#allocation6 + $0x218] sm:$0xff]
    %v10510 = vld [vmem:[#allocation6 + $0x220] sm:$0xff]
    %v10511 = vld [vmem:[#allocation6 + $0x228] sm:$0xff]
    %v10512 = vld [vmem:[#allocation6 + $0x230] sm:$0xff]
    %v10513 = vld [vmem:[#allocation6 + $0x238] sm:$0xff]
    %v10514 = vld [vmem:[#allocation6 + $0x240] sm:$0xff]
    %v10515 = vld [vmem:[#allocation6 + $0x248] sm:$0xff]
    %v10516 = vld [vmem:[#allocation6 + $0x250] sm:$0xff]
    %v10517 = vld [vmem:[#allocation6 + $0x258] sm:$0xff]
    %v10518 = vld [vmem:[#allocation6 + $0x260] sm:$0xff]
    %v10519 = vld [vmem:[#allocation6 + $0x268] sm:$0xff]
    %v10520 = vld [vmem:[#allocation6 + $0x270] sm:$0xff]
    %v10521 = vld [vmem:[#allocation6 + $0x278] sm:$0xff]
    %v10522 = vld [vmem:[#allocation6 + $0x280] sm:$0xff]
    %v10523 = vld [vmem:[#allocation6 + $0x288] sm:$0xff]
    %v10524 = vld [vmem:[#allocation6 + $0x290] sm:$0xff]
    %v10525 = vld [vmem:[#allocation6 + $0x298] sm:$0xff]
    %v10526 = vld [vmem:[#allocation6 + $0x2a0] sm:$0xff]
    %v10527 = vld [vmem:[#allocation6 + $0x2a8] sm:$0xff]
    %v10528 = vld [vmem:[#allocation6 + $0x2b0] sm:$0xff]
    %v10529 = vld [vmem:[#allocation6 + $0x2b8] sm:$0xff]
    %v10530 = vld [vmem:[#allocation6 + $0x2c0] sm:$0xff]
    %v10531 = vld [vmem:[#allocation6 + $0x2c8] sm:$0xff]
    %v10532 = vld [vmem:[#allocation6 + $0x2d0] sm:$0xff]
    %v10533 = vld [vmem:[#allocation6 + $0x2d8] sm:$0xff]
    %v10534 = vld [vmem:[#allocation6 + $0x2e0] sm:$0xff]
    %v10535 = vld [vmem:[#allocation6 + $0x2e8] sm:$0xff]
    %v10536 = vld [vmem:[#allocation6 + $0x2f0] sm:$0xff]
    %v10537 = vld [vmem:[#allocation6 + $0x2f8] sm:$0xff]
    %v10538 = vld [vmem:[#allocation6 + $0x300] sm:$0xff]
    %v10539 = vld [vmem:[#allocation6 + $0x308] sm:$0xff]
    %v10540 = vld [vmem:[#allocation6 + $0x310] sm:$0xff]
    %v10541 = vld [vmem:[#allocation6 + $0x318] sm:$0xff]
    %v10542 = vld [vmem:[#allocation6 + $0x320] sm:$0xff]
    %v10543 = vld [vmem:[#allocation6 + $0x328] sm:$0xff]
    %v10544 = vld [vmem:[#allocation6 + $0x330] sm:$0xff]
    %v10545 = vld [vmem:[#allocation6 + $0x338] sm:$0xff]
    %v10546 = vld [vmem:[#allocation6 + $0x340] sm:$0xff]
    %v10547 = vld [vmem:[#allocation6 + $0x348] sm:$0xff]
    %v10548 = vld [vmem:[#allocation6 + $0x350] sm:$0xff]
    %v10549 = vld [vmem:[#allocation6 + $0x358] sm:$0xff]
    %v10550 = vld [vmem:[#allocation6 + $0x360] sm:$0xff]
    %v10551 = vld [vmem:[#allocation6 + $0x368] sm:$0xff]
    %v10552 = vld [vmem:[#allocation6 + $0x370] sm:$0xff]
    %v10553 = vld [vmem:[#allocation6 + $0x378] sm:$0xff]
    %v10554 = vld [vmem:[#allocation6 + $0x380] sm:$0xff]
    %v10555 = vld [vmem:[#allocation6 + $0x388] sm:$0xff]
    %v10556 = vld [vmem:[#allocation6 + $0x390] sm:$0xff]
    %v10557 = vld [vmem:[#allocation6 + $0x398] sm:$0xff]
    %v10558 = vld [vmem:[#allocation6 + $0x3a0] sm:$0xff]
    %v10559 = vld [vmem:[#allocation6 + $0x3a8] sm:$0xff]
    %v10560 = vld [vmem:[#allocation6 + $0x3b0] sm:$0xff]
    %v10561 = vld [vmem:[#allocation6 + $0x3b8] sm:$0xff]
    %v10562 = vld [vmem:[#allocation6 + $0x3c0] sm:$0xff]
    %v10563 = vld [vmem:[#allocation6 + $0x3c8] sm:$0xff]
    %v10564 = vld [vmem:[#allocation6 + $0x3d0] sm:$0xff]
    %v10565 = vld [vmem:[#allocation6 + $0x3d8] sm:$0xff]
    %v10566 = vld [vmem:[#allocation6 + $0x3e0] sm:$0xff]
    %v10567 = vld [vmem:[#allocation6 + $0x3e8] sm:$0xff]
    %v10568 = vld [vmem:[#allocation6 + $0x3f0] sm:$0xff]
    %v10569 = vld [vmem:[#allocation6 + $0x3f8] sm:$0xff]
    %v10698 = vunpack.c.l.b16 %v10442
    %v10699 = vunpack.c.h.b16 %v10442
    %v10700 = vunpack.c.l.b16 %v10443
    %v10701 = vunpack.c.h.b16 %v10443
    %v10702 = vunpack.c.l.b16 %v10444
    %v10703 = vunpack.c.h.b16 %v10444
    %v10704 = vunpack.c.l.b16 %v10445
    %v10705 = vunpack.c.h.b16 %v10445
    %v10706 = vunpack.c.l.b16 %v10446
    %v10707 = vunpack.c.h.b16 %v10446
    %v10708 = vunpack.c.l.b16 %v10447
    %v10709 = vunpack.c.h.b16 %v10447
    %v10710 = vunpack.c.l.b16 %v10448
    %v10711 = vunpack.c.h.b16 %v10448
    %v10712 = vunpack.c.l.b16 %v10449
    %v10713 = vunpack.c.h.b16 %v10449
    %v10714 = vunpack.c.l.b16 %v10450
    %v10715 = vunpack.c.h.b16 %v10450
    %v10716 = vunpack.c.l.b16 %v10451
    %v10717 = vunpack.c.h.b16 %v10451
    %v10718 = vunpack.c.l.b16 %v10452
    %v10719 = vunpack.c.h.b16 %v10452
    %v10720 = vunpack.c.l.b16 %v10453
    %v10721 = vunpack.c.h.b16 %v10453
    %v10722 = vunpack.c.l.b16 %v10454
    %v10723 = vunpack.c.h.b16 %v10454
    %v10724 = vunpack.c.l.b16 %v10455
    %v10725 = vunpack.c.h.b16 %v10455
    %v10726 = vunpack.c.l.b16 %v10456
    %v10727 = vunpack.c.h.b16 %v10456
    %v10728 = vunpack.c.l.b16 %v10457
    %v10729 = vunpack.c.h.b16 %v10457
    %v10730 = vunpack.c.l.b16 %v10458
    %v10731 = vunpack.c.h.b16 %v10458
    %v10732 = vunpack.c.l.b16 %v10459
    %v10733 = vunpack.c.h.b16 %v10459
    %v10734 = vunpack.c.l.b16 %v10460
    %v10735 = vunpack.c.h.b16 %v10460
    %v10736 = vunpack.c.l.b16 %v10461
    %v10737 = vunpack.c.h.b16 %v10461
    %v10738 = vunpack.c.l.b16 %v10462
    %v10739 = vunpack.c.h.b16 %v10462
    %v10740 = vunpack.c.l.b16 %v10463
    %v10741 = vunpack.c.h.b16 %v10463
    %v10742 = vunpack.c.l.b16 %v10464
    %v10743 = vunpack.c.h.b16 %v10464
    %v10744 = vunpack.c.l.b16 %v10465
    %v10745 = vunpack.c.h.b16 %v10465
    %v10746 = vunpack.c.l.b16 %v10466
    %v10747 = vunpack.c.h.b16 %v10466
    %v10748 = vunpack.c.l.b16 %v10467
    %v10749 = vunpack.c.h.b16 %v10467
    %v10750 = vunpack.c.l.b16 %v10468
    %v10751 = vunpack.c.h.b16 %v10468
    %v10752 = vunpack.c.l.b16 %v10469
    %v10753 = vunpack.c.h.b16 %v10469
    %v10754 = vunpack.c.l.b16 %v10470
    %v10755 = vunpack.c.h.b16 %v10470
    %v10756 = vunpack.c.l.b16 %v10471
    %v10757 = vunpack.c.h.b16 %v10471
    %v10758 = vunpack.c.l.b16 %v10472
    %v10759 = vunpack.c.h.b16 %v10472
    %v10760 = vunpack.c.l.b16 %v10473
    %v10761 = vunpack.c.h.b16 %v10473
    %v10762 = vunpack.c.l.b16 %v10474
    %v10763 = vunpack.c.h.b16 %v10474
    %v10764 = vunpack.c.l.b16 %v10475
    %v10765 = vunpack.c.h.b16 %v10475
    %v10766 = vunpack.c.l.b16 %v10476
    %v10767 = vunpack.c.h.b16 %v10476
    %v10768 = vunpack.c.l.b16 %v10477
    %v10769 = vunpack.c.h.b16 %v10477
    %v10770 = vunpack.c.l.b16 %v10478
    %v10771 = vunpack.c.h.b16 %v10478
    %v10772 = vunpack.c.l.b16 %v10479
    %v10773 = vunpack.c.h.b16 %v10479
    %v10774 = vunpack.c.l.b16 %v10480
    %v10775 = vunpack.c.h.b16 %v10480
    %v10776 = vunpack.c.l.b16 %v10481
    %v10777 = vunpack.c.h.b16 %v10481
    %v10778 = vunpack.c.l.b16 %v10482
    %v10779 = vunpack.c.h.b16 %v10482
    %v10780 = vunpack.c.l.b16 %v10483
    %v10781 = vunpack.c.h.b16 %v10483
    %v10782 = vunpack.c.l.b16 %v10484
    %v10783 = vunpack.c.h.b16 %v10484
    %v10784 = vunpack.c.l.b16 %v10485
    %v10785 = vunpack.c.h.b16 %v10485
    %v10786 = vunpack.c.l.b16 %v10486
    %v10787 = vunpack.c.h.b16 %v10486
    %v10788 = vunpack.c.l.b16 %v10487
    %v10789 = vunpack.c.h.b16 %v10487
    %v10790 = vunpack.c.l.b16 %v10488
    %v10791 = vunpack.c.h.b16 %v10488
    %v10792 = vunpack.c.l.b16 %v10489
    %v10793 = vunpack.c.h.b16 %v10489
    %v10794 = vunpack.c.l.b16 %v10490
    %v10795 = vunpack.c.h.b16 %v10490
    %v10796 = vunpack.c.l.b16 %v10491
    %v10797 = vunpack.c.h.b16 %v10491
    %v10798 = vunpack.c.l.b16 %v10492
    %v10799 = vunpack.c.h.b16 %v10492
    %v10800 = vunpack.c.l.b16 %v10493
    %v10801 = vunpack.c.h.b16 %v10493
    %v10802 = vunpack.c.l.b16 %v10494
    %v10803 = vunpack.c.h.b16 %v10494
    %v10804 = vunpack.c.l.b16 %v10495
    %v10805 = vunpack.c.h.b16 %v10495
    %v10806 = vunpack.c.l.b16 %v10496
    %v10807 = vunpack.c.h.b16 %v10496
    %v10808 = vunpack.c.l.b16 %v10497
    %v10809 = vunpack.c.h.b16 %v10497
    %v10810 = vunpack.c.l.b16 %v10498
    %v10811 = vunpack.c.h.b16 %v10498
    %v10812 = vunpack.c.l.b16 %v10499
    %v10813 = vunpack.c.h.b16 %v10499
    %v10814 = vunpack.c.l.b16 %v10500
    %v10815 = vunpack.c.h.b16 %v10500
    %v10816 = vunpack.c.l.b16 %v10501
    %v10817 = vunpack.c.h.b16 %v10501
    %v10818 = vunpack.c.l.b16 %v10502
    %v10819 = vunpack.c.h.b16 %v10502
    %v10820 = vunpack.c.l.b16 %v10503
    %v10821 = vunpack.c.h.b16 %v10503
    %v10822 = vunpack.c.l.b16 %v10504
    %v10823 = vunpack.c.h.b16 %v10504
    %v10824 = vunpack.c.l.b16 %v10505
    %v10825 = vunpack.c.h.b16 %v10505
    %v10826 = vunpack.c.l.b16 %v10506
    %v10827 = vunpack.c.h.b16 %v10506
    %v10828 = vunpack.c.l.b16 %v10507
    %v10829 = vunpack.c.h.b16 %v10507
    %v10830 = vunpack.c.l.b16 %v10508
    %v10831 = vunpack.c.h.b16 %v10508
    %v10832 = vunpack.c.l.b16 %v10509
    %v10833 = vunpack.c.h.b16 %v10509
    %v10834 = vunpack.c.l.b16 %v10510
    %v10835 = vunpack.c.h.b16 %v10510
    %v10836 = vunpack.c.l.b16 %v10511
    %v10837 = vunpack.c.h.b16 %v10511
    %v10838 = vunpack.c.l.b16 %v10512
    %v10839 = vunpack.c.h.b16 %v10512
    %v10840 = vunpack.c.l.b16 %v10513
    %v10841 = vunpack.c.h.b16 %v10513
    %v10842 = vunpack.c.l.b16 %v10514
    %v10843 = vunpack.c.h.b16 %v10514
    %v10844 = vunpack.c.l.b16 %v10515
    %v10845 = vunpack.c.h.b16 %v10515
    %v10846 = vunpack.c.l.b16 %v10516
    %v10847 = vunpack.c.h.b16 %v10516
    %v10848 = vunpack.c.l.b16 %v10517
    %v10849 = vunpack.c.h.b16 %v10517
    %v10850 = vunpack.c.l.b16 %v10518
    %v10851 = vunpack.c.h.b16 %v10518
    %v10852 = vunpack.c.l.b16 %v10519
    %v10853 = vunpack.c.h.b16 %v10519
    %v10854 = vunpack.c.l.b16 %v10520
    %v10855 = vunpack.c.h.b16 %v10520
    %v10856 = vunpack.c.l.b16 %v10521
    %v10857 = vunpack.c.h.b16 %v10521
    %v10858 = vunpack.c.l.b16 %v10522
    %v10859 = vunpack.c.h.b16 %v10522
    %v10860 = vunpack.c.l.b16 %v10523
    %v10861 = vunpack.c.h.b16 %v10523
    %v10862 = vunpack.c.l.b16 %v10524
    %v10863 = vunpack.c.h.b16 %v10524
    %v10864 = vunpack.c.l.b16 %v10525
    %v10865 = vunpack.c.h.b16 %v10525
    %v10866 = vunpack.c.l.b16 %v10526
    %v10867 = vunpack.c.h.b16 %v10526
    %v10868 = vunpack.c.l.b16 %v10527
    %v10869 = vunpack.c.h.b16 %v10527
    %v10870 = vunpack.c.l.b16 %v10528
    %v10871 = vunpack.c.h.b16 %v10528
    %v10872 = vunpack.c.l.b16 %v10529
    %v10873 = vunpack.c.h.b16 %v10529
    %v10874 = vunpack.c.l.b16 %v10530
    %v10875 = vunpack.c.h.b16 %v10530
    %v10876 = vunpack.c.l.b16 %v10531
    %v10877 = vunpack.c.h.b16 %v10531
    %v10878 = vunpack.c.l.b16 %v10532
    %v10879 = vunpack.c.h.b16 %v10532
    %v10880 = vunpack.c.l.b16 %v10533
    %v10881 = vunpack.c.h.b16 %v10533
    %v10882 = vunpack.c.l.b16 %v10534
    %v10883 = vunpack.c.h.b16 %v10534
    %v10884 = vunpack.c.l.b16 %v10535
    %v10885 = vunpack.c.h.b16 %v10535
    %v10886 = vunpack.c.l.b16 %v10536
    %v10887 = vunpack.c.h.b16 %v10536
    %v10888 = vunpack.c.l.b16 %v10537
    %v10889 = vunpack.c.h.b16 %v10537
    %v10890 = vunpack.c.l.b16 %v10538
    %v10891 = vunpack.c.h.b16 %v10538
    %v10892 = vunpack.c.l.b16 %v10539
    %v10893 = vunpack.c.h.b16 %v10539
    %v10894 = vunpack.c.l.b16 %v10540
    %v10895 = vunpack.c.h.b16 %v10540
    %v10896 = vunpack.c.l.b16 %v10541
    %v10897 = vunpack.c.h.b16 %v10541
    %v10898 = vunpack.c.l.b16 %v10542
    %v10899 = vunpack.c.h.b16 %v10542
    %v10900 = vunpack.c.l.b16 %v10543
    %v10901 = vunpack.c.h.b16 %v10543
    %v10902 = vunpack.c.l.b16 %v10544
    %v10903 = vunpack.c.h.b16 %v10544
    %v10904 = vunpack.c.l.b16 %v10545
    %v10905 = vunpack.c.h.b16 %v10545
    %v10906 = vunpack.c.l.b16 %v10546
    %v10907 = vunpack.c.h.b16 %v10546
    %v10908 = vunpack.c.l.b16 %v10547
    %v10909 = vunpack.c.h.b16 %v10547
    %v10910 = vunpack.c.l.b16 %v10548
    %v10911 = vunpack.c.h.b16 %v10548
    %v10912 = vunpack.c.l.b16 %v10549
    %v10913 = vunpack.c.h.b16 %v10549
    %v10914 = vunpack.c.l.b16 %v10550
    %v10915 = vunpack.c.h.b16 %v10550
    %v10916 = vunpack.c.l.b16 %v10551
    %v10917 = vunpack.c.h.b16 %v10551
    %v10918 = vunpack.c.l.b16 %v10552
    %v10919 = vunpack.c.h.b16 %v10552
    %v10920 = vunpack.c.l.b16 %v10553
    %v10921 = vunpack.c.h.b16 %v10553
    %v10922 = vunpack.c.l.b16 %v10554
    %v10923 = vunpack.c.h.b16 %v10554
    %v10924 = vunpack.c.l.b16 %v10555
    %v10925 = vunpack.c.h.b16 %v10555
    %v10926 = vunpack.c.l.b16 %v10556
    %v10927 = vunpack.c.h.b16 %v10556
    %v10928 = vunpack.c.l.b16 %v10557
    %v10929 = vunpack.c.h.b16 %v10557
    %v10930 = vunpack.c.l.b16 %v10558
    %v10931 = vunpack.c.h.b16 %v10558
    %v10932 = vunpack.c.l.b16 %v10559
    %v10933 = vunpack.c.h.b16 %v10559
    %v10934 = vunpack.c.l.b16 %v10560
    %v10935 = vunpack.c.h.b16 %v10560
    %v10936 = vunpack.c.l.b16 %v10561
    %v10937 = vunpack.c.h.b16 %v10561
    %v10938 = vunpack.c.l.b16 %v10562
    %v10939 = vunpack.c.h.b16 %v10562
    %v10940 = vunpack.c.l.b16 %v10563
    %v10941 = vunpack.c.h.b16 %v10563
    %v10942 = vunpack.c.l.b16 %v10564
    %v10943 = vunpack.c.h.b16 %v10564
    %v10944 = vunpack.c.l.b16 %v10565
    %v10945 = vunpack.c.h.b16 %v10565
    %v10946 = vunpack.c.l.b16 %v10566
    %v10947 = vunpack.c.h.b16 %v10566
    %v10948 = vunpack.c.l.b16 %v10567
    %v10949 = vunpack.c.h.b16 %v10567
    %v10950 = vunpack.c.l.b16 %v10568
    %v10951 = vunpack.c.h.b16 %v10568
    %v10952 = vunpack.c.l.b16 %v10569
    %v10953 = vunpack.c.h.b16 %v10569
    %v10954 = vpack.c.b16 %v10702, %v10698
    %v10955 = vpack.c.b16 %v10703, %v10699
    %v10956 = vpack.c.b16 %v10704, %v10700
    %v10957 = vpack.c.b16 %v10705, %v10701
    %v10958 = vpack.c.b16 %v10710, %v10706
    %v10959 = vpack.c.b16 %v10711, %v10707
    %v10960 = vpack.c.b16 %v10712, %v10708
    %v10961 = vpack.c.b16 %v10713, %v10709
    %v10962 = vpack.c.b16 %v10718, %v10714
    %v10963 = vpack.c.b16 %v10719, %v10715
    %v10964 = vpack.c.b16 %v10720, %v10716
    %v10965 = vpack.c.b16 %v10721, %v10717
    %v10966 = vpack.c.b16 %v10726, %v10722
    %v10967 = vpack.c.b16 %v10727, %v10723
    %v10968 = vpack.c.b16 %v10728, %v10724
    %v10969 = vpack.c.b16 %v10729, %v10725
    %v10970 = vpack.c.b16 %v10734, %v10730
    %v10971 = vpack.c.b16 %v10735, %v10731
    %v10972 = vpack.c.b16 %v10736, %v10732
    %v10973 = vpack.c.b16 %v10737, %v10733
    %v10974 = vpack.c.b16 %v10742, %v10738
    %v10975 = vpack.c.b16 %v10743, %v10739
    %v10976 = vpack.c.b16 %v10744, %v10740
    %v10977 = vpack.c.b16 %v10745, %v10741
    %v10978 = vpack.c.b16 %v10750, %v10746
    %v10979 = vpack.c.b16 %v10751, %v10747
    %v10980 = vpack.c.b16 %v10752, %v10748
    %v10981 = vpack.c.b16 %v10753, %v10749
    %v10982 = vpack.c.b16 %v10758, %v10754
    %v10983 = vpack.c.b16 %v10759, %v10755
    %v10984 = vpack.c.b16 %v10760, %v10756
    %v10985 = vpack.c.b16 %v10761, %v10757
    %v10986 = vpack.c.b16 %v10766, %v10762
    %v10987 = vpack.c.b16 %v10767, %v10763
    %v10988 = vpack.c.b16 %v10768, %v10764
    %v10989 = vpack.c.b16 %v10769, %v10765
    %v10990 = vpack.c.b16 %v10774, %v10770
    %v10991 = vpack.c.b16 %v10775, %v10771
    %v10992 = vpack.c.b16 %v10776, %v10772
    %v10993 = vpack.c.b16 %v10777, %v10773
    %v10994 = vpack.c.b16 %v10782, %v10778
    %v10995 = vpack.c.b16 %v10783, %v10779
    %v10996 = vpack.c.b16 %v10784, %v10780
    %v10997 = vpack.c.b16 %v10785, %v10781
    %v10998 = vpack.c.b16 %v10790, %v10786
    %v10999 = vpack.c.b16 %v10791, %v10787
    %v11000 = vpack.c.b16 %v10792, %v10788
    %v11001 = vpack.c.b16 %v10793, %v10789
    %v11002 = vpack.c.b16 %v10798, %v10794
    %v11003 = vpack.c.b16 %v10799, %v10795
    %v11004 = vpack.c.b16 %v10800, %v10796
    %v11005 = vpack.c.b16 %v10801, %v10797
    %v11006 = vpack.c.b16 %v10806, %v10802
    %v11007 = vpack.c.b16 %v10807, %v10803
    %v11008 = vpack.c.b16 %v10808, %v10804
    %v11009 = vpack.c.b16 %v10809, %v10805
    %v11010 = vpack.c.b16 %v10814, %v10810
    %v11011 = vpack.c.b16 %v10815, %v10811
    %v11012 = vpack.c.b16 %v10816, %v10812
    %v11013 = vpack.c.b16 %v10817, %v10813
    %v11014 = vpack.c.b16 %v10822, %v10818
    %v11015 = vpack.c.b16 %v10823, %v10819
    %v11016 = vpack.c.b16 %v10824, %v10820
    %v11017 = vpack.c.b16 %v10825, %v10821
    %v11018 = vpack.c.b16 %v10830, %v10826
    %v11019 = vpack.c.b16 %v10831, %v10827
    %v11020 = vpack.c.b16 %v10832, %v10828
    %v11021 = vpack.c.b16 %v10833, %v10829
    %v11022 = vpack.c.b16 %v10838, %v10834
    %v11023 = vpack.c.b16 %v10839, %v10835
    %v11024 = vpack.c.b16 %v10840, %v10836
    %v11025 = vpack.c.b16 %v10841, %v10837
    %v11026 = vpack.c.b16 %v10846, %v10842
    %v11027 = vpack.c.b16 %v10847, %v10843
    %v11028 = vpack.c.b16 %v10848, %v10844
    %v11029 = vpack.c.b16 %v10849, %v10845
    %v11030 = vpack.c.b16 %v10854, %v10850
    %v11031 = vpack.c.b16 %v10855, %v10851
    %v11032 = vpack.c.b16 %v10856, %v10852
    %v11033 = vpack.c.b16 %v10857, %v10853
    %v11034 = vpack.c.b16 %v10862, %v10858
    %v11035 = vpack.c.b16 %v10863, %v10859
    %v11036 = vpack.c.b16 %v10864, %v10860
    %v11037 = vpack.c.b16 %v10865, %v10861
    %v11038 = vpack.c.b16 %v10870, %v10866
    %v11039 = vpack.c.b16 %v10871, %v10867
    %v11040 = vpack.c.b16 %v10872, %v10868
    %v11041 = vpack.c.b16 %v10873, %v10869
    %v11042 = vpack.c.b16 %v10878, %v10874
    %v11043 = vpack.c.b16 %v10879, %v10875
    %v11044 = vpack.c.b16 %v10880, %v10876
    %v11045 = vpack.c.b16 %v10881, %v10877
    %v11046 = vpack.c.b16 %v10886, %v10882
    %v11047 = vpack.c.b16 %v10887, %v10883
    %v11048 = vpack.c.b16 %v10888, %v10884
    %v11049 = vpack.c.b16 %v10889, %v10885
    %v11050 = vpack.c.b16 %v10894, %v10890
    %v11051 = vpack.c.b16 %v10895, %v10891
    %v11052 = vpack.c.b16 %v10896, %v10892
    %v11053 = vpack.c.b16 %v10897, %v10893
    %v11054 = vpack.c.b16 %v10902, %v10898
    %v11055 = vpack.c.b16 %v10903, %v10899
    %v11056 = vpack.c.b16 %v10904, %v10900
    %v11057 = vpack.c.b16 %v10905, %v10901
    %v11058 = vpack.c.b16 %v10910, %v10906
    %v11059 = vpack.c.b16 %v10911, %v10907
    %v11060 = vpack.c.b16 %v10912, %v10908
    %v11061 = vpack.c.b16 %v10913, %v10909
    %v11062 = vpack.c.b16 %v10918, %v10914
    %v11063 = vpack.c.b16 %v10919, %v10915
    %v11064 = vpack.c.b16 %v10920, %v10916
    %v11065 = vpack.c.b16 %v10921, %v10917
    %v11066 = vpack.c.b16 %v10926, %v10922
    %v11067 = vpack.c.b16 %v10927, %v10923
    %v11068 = vpack.c.b16 %v10928, %v10924
    %v11069 = vpack.c.b16 %v10929, %v10925
    %v11070 = vpack.c.b16 %v10934, %v10930
    %v11071 = vpack.c.b16 %v10935, %v10931
    %v11072 = vpack.c.b16 %v10936, %v10932
    %v11073 = vpack.c.b16 %v10937, %v10933
    %v11074 = vpack.c.b16 %v10942, %v10938
    %v11075 = vpack.c.b16 %v10943, %v10939
    %v11076 = vpack.c.b16 %v10944, %v10940
    %v11077 = vpack.c.b16 %v10945, %v10941
    %v11078 = vpack.c.b16 %v10950, %v10946
    %v11079 = vpack.c.b16 %v10951, %v10947
    %v11080 = vpack.c.b16 %v10952, %v10948
    %v11081 = vpack.c.b16 %v10953, %v10949
    %11210 = vmatprep.subr.bf16.mxu0 %v10393
    %11211 = vmatpush1.bf16.msra.mxu0 %v10392
    %11212 = vmatprep.subr.bf16.mxu0 %v10391
    %11213 = vmatpush1.bf16.msra.mxu0 %v10390
    %11214 = vmatprep.subr.bf16.mxu0 %v10389
    %11215 = vmatpush1.bf16.msra.mxu0 %v10388
    %11216 = vmatprep.subr.bf16.mxu0 %v10387
    %11217 = vmatpush1.bf16.msra.mxu0 %v10386
    %11218 = vmatprep.subr.bf16.mxu0 %v10385
    %11219 = vmatpush1.bf16.msra.mxu0 %v10384
    %11220 = vmatprep.subr.bf16.mxu0 %v10383
    %11221 = vmatpush1.bf16.msra.mxu0 %v10382
    %11222 = vmatprep.subr.bf16.mxu0 %v10381
    %11223 = vmatpush1.bf16.msra.mxu0 %v10380
    %11224 = vmatprep.subr.bf16.mxu0 %v10379
    %11225 = vmatpush1.bf16.msra.mxu0 %v10378
    %11226 = vmatprep.subr.bf16.mxu0 %v10409
    %11227 = vmatpush2.bf16.msra.mxu0 %v10408
    %11228 = vmatprep.subr.bf16.mxu0 %v10407
    %11229 = vmatpush2.bf16.msra.mxu0 %v10406
    %11230 = vmatprep.subr.bf16.mxu0 %v10405
    %11231 = vmatpush2.bf16.msra.mxu0 %v10404
    %11232 = vmatprep.subr.bf16.mxu0 %v10403
    %11233 = vmatpush2.bf16.msra.mxu0 %v10402
    %11234 = vmatprep.subr.bf16.mxu0 %v10401
    %11235 = vmatpush2.bf16.msra.mxu0 %v10400
    %11236 = vmatprep.subr.bf16.mxu0 %v10399
    %11237 = vmatpush2.bf16.msra.mxu0 %v10398
    %11238 = vmatprep.subr.bf16.mxu0 %v10397
    %11239 = vmatpush2.bf16.msra.mxu0 %v10396
    %11240 = vmatprep.subr.bf16.mxu0 %v10395
    %11241 = vmatpush2.bf16.msra.mxu0 %v10394
    %11242 = vmatprep.mubr.bf16.mxu0 %v10955
    %11243 = vmatmul.mubr.bf16.gmra.mxu0 %v10954
    %v11244 = vpop.f32.mrf.mxu0
    %v11245 = vadd.f32 0.0, %v11244
    %v11246 = vpop.f32.mrf.mxu0
    %v11247 = vadd.f32 0.0, %v11246
    %v11248 = vpop.f32.mrf.mxu0
    %v11249 = vadd.f32 0.0, %v11248
    %v11250 = vpop.f32.mrf.mxu0
    %v11251 = vadd.f32 0.0, %v11250
    %11252 = vmatprep.mubr.bf16.mxu0 %v10959
    %11253 = vmatmul.mubr.bf16.gmra.mxu0 %v10958
    %v11254 = vpop.f32.mrf.mxu0
    %v11255 = vadd.f32 0.0, %v11254
    %v11256 = vpop.f32.mrf.mxu0
    %v11257 = vadd.f32 0.0, %v11256
    %v11258 = vpop.f32.mrf.mxu0
    %v11259 = vadd.f32 0.0, %v11258
    %v11260 = vpop.f32.mrf.mxu0
    %v11261 = vadd.f32 0.0, %v11260
    %11262 = vmatprep.mubr.bf16.mxu0 %v10963
    %11263 = vmatmul.mubr.bf16.gmra.mxu0 %v10962
    %v11264 = vpop.f32.mrf.mxu0
    %v11265 = vadd.f32 0.0, %v11264
    %v11266 = vpop.f32.mrf.mxu0
    %v11267 = vadd.f32 0.0, %v11266
    %v11268 = vpop.f32.mrf.mxu0
    %v11269 = vadd.f32 0.0, %v11268
    %v11270 = vpop.f32.mrf.mxu0
    %v11271 = vadd.f32 0.0, %v11270
    %11272 = vmatprep.mubr.bf16.mxu0 %v10967
    %11273 = vmatmul.mubr.bf16.gmra.mxu0 %v10966
    %v11274 = vpop.f32.mrf.mxu0
    %v11275 = vadd.f32 0.0, %v11274
    %v11276 = vpop.f32.mrf.mxu0
    %v11277 = vadd.f32 0.0, %v11276
    %v11278 = vpop.f32.mrf.mxu0
    %v11279 = vadd.f32 0.0, %v11278
    %v11280 = vpop.f32.mrf.mxu0
    %v11281 = vadd.f32 0.0, %v11280
    %11282 = vmatprep.mubr.bf16.mxu0 %v10971
    %11283 = vmatmul.mubr.bf16.gmra.mxu0 %v10970
    %v11284 = vpop.f32.mrf.mxu0
    %v11285 = vadd.f32 0.0, %v11284
    %v11286 = vpop.f32.mrf.mxu0
    %v11287 = vadd.f32 0.0, %v11286
    %v11288 = vpop.f32.mrf.mxu0
    %v11289 = vadd.f32 0.0, %v11288
    %v11290 = vpop.f32.mrf.mxu0
    %v11291 = vadd.f32 0.0, %v11290
    %11292 = vmatprep.mubr.bf16.mxu0 %v10975
    %11293 = vmatmul.mubr.bf16.gmra.mxu0 %v10974
    %v11294 = vpop.f32.mrf.mxu0
    %v11295 = vadd.f32 0.0, %v11294
    %v11296 = vpop.f32.mrf.mxu0
    %v11297 = vadd.f32 0.0, %v11296
    %v11298 = vpop.f32.mrf.mxu0
    %v11299 = vadd.f32 0.0, %v11298
    %v11300 = vpop.f32.mrf.mxu0
    %v11301 = vadd.f32 0.0, %v11300
    %11302 = vmatprep.mubr.bf16.mxu0 %v10979
    %11303 = vmatmul.mubr.bf16.gmra.mxu0 %v10978
    %v11304 = vpop.f32.mrf.mxu0
    %v11305 = vadd.f32 0.0, %v11304
    %v11306 = vpop.f32.mrf.mxu0
    %v11307 = vadd.f32 0.0, %v11306
    %v11308 = vpop.f32.mrf.mxu0
    %v11309 = vadd.f32 0.0, %v11308
    %v11310 = vpop.f32.mrf.mxu0
    %v11311 = vadd.f32 0.0, %v11310
    %11312 = vmatprep.mubr.bf16.mxu0 %v10983
    %11313 = vmatmul.mubr.bf16.gmra.mxu0 %v10982
    %v11314 = vpop.f32.mrf.mxu0
    %v11315 = vadd.f32 0.0, %v11314
    %v11316 = vpop.f32.mrf.mxu0
    %v11317 = vadd.f32 0.0, %v11316
    %v11318 = vpop.f32.mrf.mxu0
    %v11319 = vadd.f32 0.0, %v11318
    %v11320 = vpop.f32.mrf.mxu0
    %v11321 = vadd.f32 0.0, %v11320
    %11322 = vmatprep.mubr.bf16.mxu0 %v10987
    %11323 = vmatmul.mubr.bf16.gmra.mxu0 %v10986
    %v11324 = vpop.f32.mrf.mxu0
    %v11325 = vadd.f32 0.0, %v11324
    %v11326 = vpop.f32.mrf.mxu0
    %v11327 = vadd.f32 0.0, %v11326
    %v11328 = vpop.f32.mrf.mxu0
    %v11329 = vadd.f32 0.0, %v11328
    %v11330 = vpop.f32.mrf.mxu0
    %v11331 = vadd.f32 0.0, %v11330
    %11332 = vmatprep.mubr.bf16.mxu0 %v10991
    %11333 = vmatmul.mubr.bf16.gmra.mxu0 %v10990
    %v11334 = vpop.f32.mrf.mxu0
    %v11335 = vadd.f32 0.0, %v11334
    %v11336 = vpop.f32.mrf.mxu0
    %v11337 = vadd.f32 0.0, %v11336
    %v11338 = vpop.f32.mrf.mxu0
    %v11339 = vadd.f32 0.0, %v11338
    %v11340 = vpop.f32.mrf.mxu0
    %v11341 = vadd.f32 0.0, %v11340
    %11342 = vmatprep.mubr.bf16.mxu0 %v10995
    %11343 = vmatmul.mubr.bf16.gmra.mxu0 %v10994
    %v11344 = vpop.f32.mrf.mxu0
    %v11345 = vadd.f32 0.0, %v11344
    %v11346 = vpop.f32.mrf.mxu0
    %v11347 = vadd.f32 0.0, %v11346
    %v11348 = vpop.f32.mrf.mxu0
    %v11349 = vadd.f32 0.0, %v11348
    %v11350 = vpop.f32.mrf.mxu0
    %v11351 = vadd.f32 0.0, %v11350
    %11352 = vmatprep.mubr.bf16.mxu0 %v10999
    %11353 = vmatmul.mubr.bf16.gmra.mxu0 %v10998
    %v11354 = vpop.f32.mrf.mxu0
    %v11355 = vadd.f32 0.0, %v11354
    %v11356 = vpop.f32.mrf.mxu0
    %v11357 = vadd.f32 0.0, %v11356
    %v11358 = vpop.f32.mrf.mxu0
    %v11359 = vadd.f32 0.0, %v11358
    %v11360 = vpop.f32.mrf.mxu0
    %v11361 = vadd.f32 0.0, %v11360
    %11362 = vmatprep.mubr.bf16.mxu0 %v11003
    %11363 = vmatmul.mubr.bf16.gmra.mxu0 %v11002
    %v11364 = vpop.f32.mrf.mxu0
    %v11365 = vadd.f32 0.0, %v11364
    %v11366 = vpop.f32.mrf.mxu0
    %v11367 = vadd.f32 0.0, %v11366
    %v11368 = vpop.f32.mrf.mxu0
    %v11369 = vadd.f32 0.0, %v11368
    %v11370 = vpop.f32.mrf.mxu0
    %v11371 = vadd.f32 0.0, %v11370
    %11372 = vmatprep.mubr.bf16.mxu0 %v11007
    %11373 = vmatmul.mubr.bf16.gmra.mxu0 %v11006
    %v11374 = vpop.f32.mrf.mxu0
    %v11375 = vadd.f32 0.0, %v11374
    %v11376 = vpop.f32.mrf.mxu0
    %v11377 = vadd.f32 0.0, %v11376
    %v11378 = vpop.f32.mrf.mxu0
    %v11379 = vadd.f32 0.0, %v11378
    %v11380 = vpop.f32.mrf.mxu0
    %v11381 = vadd.f32 0.0, %v11380
    %11382 = vmatprep.mubr.bf16.mxu0 %v11011
    %11383 = vmatmul.mubr.bf16.gmra.mxu0 %v11010
    %v11384 = vpop.f32.mrf.mxu0
    %v11385 = vadd.f32 0.0, %v11384
    %v11386 = vpop.f32.mrf.mxu0
    %v11387 = vadd.f32 0.0, %v11386
    %v11388 = vpop.f32.mrf.mxu0
    %v11389 = vadd.f32 0.0, %v11388
    %v11390 = vpop.f32.mrf.mxu0
    %v11391 = vadd.f32 0.0, %v11390
    %11392 = vmatprep.mubr.bf16.mxu0 %v11015
    %11393 = vmatmul.mubr.bf16.gmra.mxu0 %v11014
    %v11394 = vpop.f32.mrf.mxu0
    %v11395 = vadd.f32 0.0, %v11394
    %v11396 = vpop.f32.mrf.mxu0
    %v11397 = vadd.f32 0.0, %v11396
    %v11398 = vpop.f32.mrf.mxu0
    %v11399 = vadd.f32 0.0, %v11398
    %v11400 = vpop.f32.mrf.mxu0
    %v11401 = vadd.f32 0.0, %v11400
    %11402 = vmatprep.mubr.bf16.mxu0 %v11019
    %11403 = vmatmul.mubr.bf16.gmra.mxu0 %v11018
    %v11404 = vpop.f32.mrf.mxu0
    %v11405 = vadd.f32 0.0, %v11404
    %v11406 = vpop.f32.mrf.mxu0
    %v11407 = vadd.f32 0.0, %v11406
    %v11408 = vpop.f32.mrf.mxu0
    %v11409 = vadd.f32 0.0, %v11408
    %v11410 = vpop.f32.mrf.mxu0
    %v11411 = vadd.f32 0.0, %v11410
    %11412 = vmatprep.mubr.bf16.mxu0 %v11023
    %11413 = vmatmul.mubr.bf16.gmra.mxu0 %v11022
    %v11414 = vpop.f32.mrf.mxu0
    %v11415 = vadd.f32 0.0, %v11414
    %v11416 = vpop.f32.mrf.mxu0
    %v11417 = vadd.f32 0.0, %v11416
    %v11418 = vpop.f32.mrf.mxu0
    %v11419 = vadd.f32 0.0, %v11418
    %v11420 = vpop.f32.mrf.mxu0
    %v11421 = vadd.f32 0.0, %v11420
    %11422 = vmatprep.mubr.bf16.mxu0 %v11027
    %11423 = vmatmul.mubr.bf16.gmra.mxu0 %v11026
    %v11424 = vpop.f32.mrf.mxu0
    %v11425 = vadd.f32 0.0, %v11424
    %v11426 = vpop.f32.mrf.mxu0
    %v11427 = vadd.f32 0.0, %v11426
    %v11428 = vpop.f32.mrf.mxu0
    %v11429 = vadd.f32 0.0, %v11428
    %v11430 = vpop.f32.mrf.mxu0
    %v11431 = vadd.f32 0.0, %v11430
    %11432 = vmatprep.mubr.bf16.mxu0 %v11031
    %11433 = vmatmul.mubr.bf16.gmra.mxu0 %v11030
    %v11434 = vpop.f32.mrf.mxu0
    %v11435 = vadd.f32 0.0, %v11434
    %v11436 = vpop.f32.mrf.mxu0
    %v11437 = vadd.f32 0.0, %v11436
    %v11438 = vpop.f32.mrf.mxu0
    %v11439 = vadd.f32 0.0, %v11438
    %v11440 = vpop.f32.mrf.mxu0
    %v11441 = vadd.f32 0.0, %v11440
    %11442 = vmatprep.mubr.bf16.mxu0 %v11035
    %11443 = vmatmul.mubr.bf16.gmra.mxu0 %v11034
    %v11444 = vpop.f32.mrf.mxu0
    %v11445 = vadd.f32 0.0, %v11444
    %v11446 = vpop.f32.mrf.mxu0
    %v11447 = vadd.f32 0.0, %v11446
    %v11448 = vpop.f32.mrf.mxu0
    %v11449 = vadd.f32 0.0, %v11448
    %v11450 = vpop.f32.mrf.mxu0
    %v11451 = vadd.f32 0.0, %v11450
    %11452 = vmatprep.mubr.bf16.mxu0 %v11039
    %11453 = vmatmul.mubr.bf16.gmra.mxu0 %v11038
    %v11454 = vpop.f32.mrf.mxu0
    %v11455 = vadd.f32 0.0, %v11454
    %v11456 = vpop.f32.mrf.mxu0
    %v11457 = vadd.f32 0.0, %v11456
    %v11458 = vpop.f32.mrf.mxu0
    %v11459 = vadd.f32 0.0, %v11458
    %v11460 = vpop.f32.mrf.mxu0
    %v11461 = vadd.f32 0.0, %v11460
    %11462 = vmatprep.mubr.bf16.mxu0 %v11043
    %11463 = vmatmul.mubr.bf16.gmra.mxu0 %v11042
    %v11464 = vpop.f32.mrf.mxu0
    %v11465 = vadd.f32 0.0, %v11464
    %v11466 = vpop.f32.mrf.mxu0
    %v11467 = vadd.f32 0.0, %v11466
    %v11468 = vpop.f32.mrf.mxu0
    %v11469 = vadd.f32 0.0, %v11468
    %v11470 = vpop.f32.mrf.mxu0
    %v11471 = vadd.f32 0.0, %v11470
    %11472 = vmatprep.mubr.bf16.mxu0 %v11047
    %11473 = vmatmul.mubr.bf16.gmra.mxu0 %v11046
    %v11474 = vpop.f32.mrf.mxu0
    %v11475 = vadd.f32 0.0, %v11474
    %v11476 = vpop.f32.mrf.mxu0
    %v11477 = vadd.f32 0.0, %v11476
    %v11478 = vpop.f32.mrf.mxu0
    %v11479 = vadd.f32 0.0, %v11478
    %v11480 = vpop.f32.mrf.mxu0
    %v11481 = vadd.f32 0.0, %v11480
    %11482 = vmatprep.mubr.bf16.mxu0 %v11051
    %11483 = vmatmul.mubr.bf16.gmra.mxu0 %v11050
    %v11484 = vpop.f32.mrf.mxu0
    %v11485 = vadd.f32 0.0, %v11484
    %v11486 = vpop.f32.mrf.mxu0
    %v11487 = vadd.f32 0.0, %v11486
    %v11488 = vpop.f32.mrf.mxu0
    %v11489 = vadd.f32 0.0, %v11488
    %v11490 = vpop.f32.mrf.mxu0
    %v11491 = vadd.f32 0.0, %v11490
    %11492 = vmatprep.mubr.bf16.mxu0 %v11055
    %11493 = vmatmul.mubr.bf16.gmra.mxu0 %v11054
    %v11494 = vpop.f32.mrf.mxu0
    %v11495 = vadd.f32 0.0, %v11494
    %v11496 = vpop.f32.mrf.mxu0
    %v11497 = vadd.f32 0.0, %v11496
    %v11498 = vpop.f32.mrf.mxu0
    %v11499 = vadd.f32 0.0, %v11498
    %v11500 = vpop.f32.mrf.mxu0
    %v11501 = vadd.f32 0.0, %v11500
    %11502 = vmatprep.mubr.bf16.mxu0 %v11059
    %11503 = vmatmul.mubr.bf16.gmra.mxu0 %v11058
    %v11504 = vpop.f32.mrf.mxu0
    %v11505 = vadd.f32 0.0, %v11504
    %v11506 = vpop.f32.mrf.mxu0
    %v11507 = vadd.f32 0.0, %v11506
    %v11508 = vpop.f32.mrf.mxu0
    %v11509 = vadd.f32 0.0, %v11508
    %v11510 = vpop.f32.mrf.mxu0
    %v11511 = vadd.f32 0.0, %v11510
    %11512 = vmatprep.mubr.bf16.mxu0 %v11063
    %11513 = vmatmul.mubr.bf16.gmra.mxu0 %v11062
    %v11514 = vpop.f32.mrf.mxu0
    %v11515 = vadd.f32 0.0, %v11514
    %v11516 = vpop.f32.mrf.mxu0
    %v11517 = vadd.f32 0.0, %v11516
    %v11518 = vpop.f32.mrf.mxu0
    %v11519 = vadd.f32 0.0, %v11518
    %v11520 = vpop.f32.mrf.mxu0
    %v11521 = vadd.f32 0.0, %v11520
    %11522 = vmatprep.mubr.bf16.mxu0 %v11067
    %11523 = vmatmul.mubr.bf16.gmra.mxu0 %v11066
    %v11524 = vpop.f32.mrf.mxu0
    %v11525 = vadd.f32 0.0, %v11524
    %v11526 = vpop.f32.mrf.mxu0
    %v11527 = vadd.f32 0.0, %v11526
    %v11528 = vpop.f32.mrf.mxu0
    %v11529 = vadd.f32 0.0, %v11528
    %v11530 = vpop.f32.mrf.mxu0
    %v11531 = vadd.f32 0.0, %v11530
    %11532 = vmatprep.mubr.bf16.mxu0 %v11071
    %11533 = vmatmul.mubr.bf16.gmra.mxu0 %v11070
    %v11534 = vpop.f32.mrf.mxu0
    %v11535 = vadd.f32 0.0, %v11534
    %v11536 = vpop.f32.mrf.mxu0
    %v11537 = vadd.f32 0.0, %v11536
    %v11538 = vpop.f32.mrf.mxu0
    %v11539 = vadd.f32 0.0, %v11538
    %v11540 = vpop.f32.mrf.mxu0
    %v11541 = vadd.f32 0.0, %v11540
    %11542 = vmatprep.mubr.bf16.mxu0 %v11075
    %11543 = vmatmul.mubr.bf16.gmra.mxu0 %v11074
    %v11544 = vpop.f32.mrf.mxu0
    %v11545 = vadd.f32 0.0, %v11544
    %v11546 = vpop.f32.mrf.mxu0
    %v11547 = vadd.f32 0.0, %v11546
    %v11548 = vpop.f32.mrf.mxu0
    %v11549 = vadd.f32 0.0, %v11548
    %v11550 = vpop.f32.mrf.mxu0
    %v11551 = vadd.f32 0.0, %v11550
    %11552 = vmatprep.mubr.bf16.mxu0 %v11079
    %11553 = vmatmul.mubr.bf16.gmra.mxu0 %v11078
    %v11554 = vpop.f32.mrf.mxu0
    %v11555 = vadd.f32 0.0, %v11554
    %v11556 = vpop.f32.mrf.mxu0
    %v11557 = vadd.f32 0.0, %v11556
    %v11558 = vpop.f32.mrf.mxu0
    %v11559 = vadd.f32 0.0, %v11558
    %v11560 = vpop.f32.mrf.mxu0
    %v11561 = vadd.f32 0.0, %v11560
    %11562 = vdwg.mxu0
    %11563 = vmatprep.subr.bf16.mxu0 %v10425
    %11564 = vmatpush1.bf16.msra.mxu0 %v10424
    %11565 = vmatprep.subr.bf16.mxu0 %v10423
    %11566 = vmatpush1.bf16.msra.mxu0 %v10422
    %11567 = vmatprep.subr.bf16.mxu0 %v10421
    %11568 = vmatpush1.bf16.msra.mxu0 %v10420
    %11569 = vmatprep.subr.bf16.mxu0 %v10419
    %11570 = vmatpush1.bf16.msra.mxu0 %v10418
    %11571 = vmatprep.subr.bf16.mxu0 %v10417
    %11572 = vmatpush1.bf16.msra.mxu0 %v10416
    %11573 = vmatprep.subr.bf16.mxu0 %v10415
    %11574 = vmatpush1.bf16.msra.mxu0 %v10414
    %11575 = vmatprep.subr.bf16.mxu0 %v10413
    %11576 = vmatpush1.bf16.msra.mxu0 %v10412
    %11577 = vmatprep.subr.bf16.mxu0 %v10411
    %11578 = vmatpush1.bf16.msra.mxu0 %v10410
    %11579 = vmatprep.subr.bf16.mxu0 %v10441
    %11580 = vmatpush2.bf16.msra.mxu0 %v10440
    %11581 = vmatprep.subr.bf16.mxu0 %v10439
    %11582 = vmatpush2.bf16.msra.mxu0 %v10438
    %11583 = vmatprep.subr.bf16.mxu0 %v10437
    %11584 = vmatpush2.bf16.msra.mxu0 %v10436
    %11585 = vmatprep.subr.bf16.mxu0 %v10435
    %11586 = vmatpush2.bf16.msra.mxu0 %v10434
    %11587 = vmatprep.subr.bf16.mxu0 %v10433
    %11588 = vmatpush2.bf16.msra.mxu0 %v10432
    %11589 = vmatprep.subr.bf16.mxu0 %v10431
    %11590 = vmatpush2.bf16.msra.mxu0 %v10430
    %11591 = vmatprep.subr.bf16.mxu0 %v10429
    %11592 = vmatpush2.bf16.msra.mxu0 %v10428
    %11593 = vmatprep.subr.bf16.mxu0 %v10427
    %11594 = vmatpush2.bf16.msra.mxu0 %v10426
    %11595 = vmatprep.mubr.bf16.mxu0 %v10957
    %11596 = vmatmul.mubr.bf16.gmra.mxu0 %v10956
    %v11597 = vpop.f32.mrf.mxu0
    %v11598 = vadd.f32 %v11245, %v11597
    %v11599 = vpop.f32.mrf.mxu0
    %v11600 = vadd.f32 %v11247, %v11599
    %v11601 = vpop.f32.mrf.mxu0
    %v11602 = vadd.f32 %v11249, %v11601
    %v11603 = vpop.f32.mrf.mxu0
    %v11604 = vadd.f32 %v11251, %v11603
    %11605 = vmatprep.mubr.bf16.mxu0 %v10961
    %11606 = vmatmul.mubr.bf16.gmra.mxu0 %v10960
    %v11607 = vpop.f32.mrf.mxu0
    %v11608 = vadd.f32 %v11255, %v11607
    %v11609 = vpop.f32.mrf.mxu0
    %v11610 = vadd.f32 %v11257, %v11609
    %v11611 = vpop.f32.mrf.mxu0
    %v11612 = vadd.f32 %v11259, %v11611
    %v11613 = vpop.f32.mrf.mxu0
    %v11614 = vadd.f32 %v11261, %v11613
    %11615 = vmatprep.mubr.bf16.mxu0 %v10965
    %11616 = vmatmul.mubr.bf16.gmra.mxu0 %v10964
    %v11617 = vpop.f32.mrf.mxu0
    %v11618 = vadd.f32 %v11265, %v11617
    %v11619 = vpop.f32.mrf.mxu0
    %v11620 = vadd.f32 %v11267, %v11619
    %v11621 = vpop.f32.mrf.mxu0
    %v11622 = vadd.f32 %v11269, %v11621
    %v11623 = vpop.f32.mrf.mxu0
    %v11624 = vadd.f32 %v11271, %v11623
    %11625 = vmatprep.mubr.bf16.mxu0 %v10969
    %11626 = vmatmul.mubr.bf16.gmra.mxu0 %v10968
    %v11627 = vpop.f32.mrf.mxu0
    %v11628 = vadd.f32 %v11275, %v11627
    %v11629 = vpop.f32.mrf.mxu0
    %v11630 = vadd.f32 %v11277, %v11629
    %v11631 = vpop.f32.mrf.mxu0
    %v11632 = vadd.f32 %v11279, %v11631
    %v11633 = vpop.f32.mrf.mxu0
    %v11634 = vadd.f32 %v11281, %v11633
    %11635 = vmatprep.mubr.bf16.mxu0 %v10973
    %11636 = vmatmul.mubr.bf16.gmra.mxu0 %v10972
    %v11637 = vpop.f32.mrf.mxu0
    %v11638 = vadd.f32 %v11285, %v11637
    %v11639 = vpop.f32.mrf.mxu0
    %v11640 = vadd.f32 %v11287, %v11639
    %v11641 = vpop.f32.mrf.mxu0
    %v11642 = vadd.f32 %v11289, %v11641
    %v11643 = vpop.f32.mrf.mxu0
    %v11644 = vadd.f32 %v11291, %v11643
    %11645 = vmatprep.mubr.bf16.mxu0 %v10977
    %11646 = vmatmul.mubr.bf16.gmra.mxu0 %v10976
    %v11647 = vpop.f32.mrf.mxu0
    %v11648 = vadd.f32 %v11295, %v11647
    %v11649 = vpop.f32.mrf.mxu0
    %v11650 = vadd.f32 %v11297, %v11649
    %v11651 = vpop.f32.mrf.mxu0
    %v11652 = vadd.f32 %v11299, %v11651
    %v11653 = vpop.f32.mrf.mxu0
    %v11654 = vadd.f32 %v11301, %v11653
    %11655 = vmatprep.mubr.bf16.mxu0 %v10981
    %11656 = vmatmul.mubr.bf16.gmra.mxu0 %v10980
    %v11657 = vpop.f32.mrf.mxu0
    %v11658 = vadd.f32 %v11305, %v11657
    %v11659 = vpop.f32.mrf.mxu0
    %v11660 = vadd.f32 %v11307, %v11659
    %v11661 = vpop.f32.mrf.mxu0
    %v11662 = vadd.f32 %v11309, %v11661
    %v11663 = vpop.f32.mrf.mxu0
    %v11664 = vadd.f32 %v11311, %v11663
    %11665 = vmatprep.mubr.bf16.mxu0 %v10985
    %11666 = vmatmul.mubr.bf16.gmra.mxu0 %v10984
    %v11667 = vpop.f32.mrf.mxu0
    %v11668 = vadd.f32 %v11315, %v11667
    %v11669 = vpop.f32.mrf.mxu0
    %v11670 = vadd.f32 %v11317, %v11669
    %v11671 = vpop.f32.mrf.mxu0
    %v11672 = vadd.f32 %v11319, %v11671
    %v11673 = vpop.f32.mrf.mxu0
    %v11674 = vadd.f32 %v11321, %v11673
    %11675 = vmatprep.mubr.bf16.mxu0 %v10989
    %11676 = vmatmul.mubr.bf16.gmra.mxu0 %v10988
    %v11677 = vpop.f32.mrf.mxu0
    %v11678 = vadd.f32 %v11325, %v11677
    %v11679 = vpop.f32.mrf.mxu0
    %v11680 = vadd.f32 %v11327, %v11679
    %v11681 = vpop.f32.mrf.mxu0
    %v11682 = vadd.f32 %v11329, %v11681
    %v11683 = vpop.f32.mrf.mxu0
    %v11684 = vadd.f32 %v11331, %v11683
    %11685 = vmatprep.mubr.bf16.mxu0 %v10993
    %11686 = vmatmul.mubr.bf16.gmra.mxu0 %v10992
    %v11687 = vpop.f32.mrf.mxu0
    %v11688 = vadd.f32 %v11335, %v11687
    %v11689 = vpop.f32.mrf.mxu0
    %v11690 = vadd.f32 %v11337, %v11689
    %v11691 = vpop.f32.mrf.mxu0
    %v11692 = vadd.f32 %v11339, %v11691
    %v11693 = vpop.f32.mrf.mxu0
    %v11694 = vadd.f32 %v11341, %v11693
    %11695 = vmatprep.mubr.bf16.mxu0 %v10997
    %11696 = vmatmul.mubr.bf16.gmra.mxu0 %v10996
    %v11697 = vpop.f32.mrf.mxu0
    %v11698 = vadd.f32 %v11345, %v11697
    %v11699 = vpop.f32.mrf.mxu0
    %v11700 = vadd.f32 %v11347, %v11699
    %v11701 = vpop.f32.mrf.mxu0
    %v11702 = vadd.f32 %v11349, %v11701
    %v11703 = vpop.f32.mrf.mxu0
    %v11704 = vadd.f32 %v11351, %v11703
    %11705 = vmatprep.mubr.bf16.mxu0 %v11001
    %11706 = vmatmul.mubr.bf16.gmra.mxu0 %v11000
    %v11707 = vpop.f32.mrf.mxu0
    %v11708 = vadd.f32 %v11355, %v11707
    %v11709 = vpop.f32.mrf.mxu0
    %v11710 = vadd.f32 %v11357, %v11709
    %v11711 = vpop.f32.mrf.mxu0
    %v11712 = vadd.f32 %v11359, %v11711
    %v11713 = vpop.f32.mrf.mxu0
    %v11714 = vadd.f32 %v11361, %v11713
    %11715 = vmatprep.mubr.bf16.mxu0 %v11005
    %11716 = vmatmul.mubr.bf16.gmra.mxu0 %v11004
    %v11717 = vpop.f32.mrf.mxu0
    %v11718 = vadd.f32 %v11365, %v11717
    %v11719 = vpop.f32.mrf.mxu0
    %v11720 = vadd.f32 %v11367, %v11719
    %v11721 = vpop.f32.mrf.mxu0
    %v11722 = vadd.f32 %v11369, %v11721
    %v11723 = vpop.f32.mrf.mxu0
    %v11724 = vadd.f32 %v11371, %v11723
    %11725 = vmatprep.mubr.bf16.mxu0 %v11009
    %11726 = vmatmul.mubr.bf16.gmra.mxu0 %v11008
    %v11727 = vpop.f32.mrf.mxu0
    %v11728 = vadd.f32 %v11375, %v11727
    %v11729 = vpop.f32.mrf.mxu0
    %v11730 = vadd.f32 %v11377, %v11729
    %v11731 = vpop.f32.mrf.mxu0
    %v11732 = vadd.f32 %v11379, %v11731
    %v11733 = vpop.f32.mrf.mxu0
    %v11734 = vadd.f32 %v11381, %v11733
    %11735 = vmatprep.mubr.bf16.mxu0 %v11013
    %11736 = vmatmul.mubr.bf16.gmra.mxu0 %v11012
    %v11737 = vpop.f32.mrf.mxu0
    %v11738 = vadd.f32 %v11385, %v11737
    %v11739 = vpop.f32.mrf.mxu0
    %v11740 = vadd.f32 %v11387, %v11739
    %v11741 = vpop.f32.mrf.mxu0
    %v11742 = vadd.f32 %v11389, %v11741
    %v11743 = vpop.f32.mrf.mxu0
    %v11744 = vadd.f32 %v11391, %v11743
    %11745 = vmatprep.mubr.bf16.mxu0 %v11017
    %11746 = vmatmul.mubr.bf16.gmra.mxu0 %v11016
    %v11747 = vpop.f32.mrf.mxu0
    %v11748 = vadd.f32 %v11395, %v11747
    %v11749 = vpop.f32.mrf.mxu0
    %v11750 = vadd.f32 %v11397, %v11749
    %v11751 = vpop.f32.mrf.mxu0
    %v11752 = vadd.f32 %v11399, %v11751
    %v11753 = vpop.f32.mrf.mxu0
    %v11754 = vadd.f32 %v11401, %v11753
    %11755 = vmatprep.mubr.bf16.mxu0 %v11021
    %11756 = vmatmul.mubr.bf16.gmra.mxu0 %v11020
    %v11757 = vpop.f32.mrf.mxu0
    %v11758 = vadd.f32 %v11405, %v11757
    %v11759 = vpop.f32.mrf.mxu0
    %v11760 = vadd.f32 %v11407, %v11759
    %v11761 = vpop.f32.mrf.mxu0
    %v11762 = vadd.f32 %v11409, %v11761
    %v11763 = vpop.f32.mrf.mxu0
    %v11764 = vadd.f32 %v11411, %v11763
    %11765 = vmatprep.mubr.bf16.mxu0 %v11025
    %11766 = vmatmul.mubr.bf16.gmra.mxu0 %v11024
    %v11767 = vpop.f32.mrf.mxu0
    %v11768 = vadd.f32 %v11415, %v11767
    %v11769 = vpop.f32.mrf.mxu0
    %v11770 = vadd.f32 %v11417, %v11769
    %v11771 = vpop.f32.mrf.mxu0
    %v11772 = vadd.f32 %v11419, %v11771
    %v11773 = vpop.f32.mrf.mxu0
    %v11774 = vadd.f32 %v11421, %v11773
    %11775 = vmatprep.mubr.bf16.mxu0 %v11029
    %11776 = vmatmul.mubr.bf16.gmra.mxu0 %v11028
    %v11777 = vpop.f32.mrf.mxu0
    %v11778 = vadd.f32 %v11425, %v11777
    %v11779 = vpop.f32.mrf.mxu0
    %v11780 = vadd.f32 %v11427, %v11779
    %v11781 = vpop.f32.mrf.mxu0
    %v11782 = vadd.f32 %v11429, %v11781
    %v11783 = vpop.f32.mrf.mxu0
    %v11784 = vadd.f32 %v11431, %v11783
    %11785 = vmatprep.mubr.bf16.mxu0 %v11033
    %11786 = vmatmul.mubr.bf16.gmra.mxu0 %v11032
    %v11787 = vpop.f32.mrf.mxu0
    %v11788 = vadd.f32 %v11435, %v11787
    %v11789 = vpop.f32.mrf.mxu0
    %v11790 = vadd.f32 %v11437, %v11789
    %v11791 = vpop.f32.mrf.mxu0
    %v11792 = vadd.f32 %v11439, %v11791
    %v11793 = vpop.f32.mrf.mxu0
    %v11794 = vadd.f32 %v11441, %v11793
    %11795 = vmatprep.mubr.bf16.mxu0 %v11037
    %11796 = vmatmul.mubr.bf16.gmra.mxu0 %v11036
    %v11797 = vpop.f32.mrf.mxu0
    %v11798 = vadd.f32 %v11445, %v11797
    %v11799 = vpop.f32.mrf.mxu0
    %v11800 = vadd.f32 %v11447, %v11799
    %v11801 = vpop.f32.mrf.mxu0
    %v11802 = vadd.f32 %v11449, %v11801
    %v11803 = vpop.f32.mrf.mxu0
    %v11804 = vadd.f32 %v11451, %v11803
    %11805 = vmatprep.mubr.bf16.mxu0 %v11041
    %11806 = vmatmul.mubr.bf16.gmra.mxu0 %v11040
    %v11807 = vpop.f32.mrf.mxu0
    %v11808 = vadd.f32 %v11455, %v11807
    %v11809 = vpop.f32.mrf.mxu0
    %v11810 = vadd.f32 %v11457, %v11809
    %v11811 = vpop.f32.mrf.mxu0
    %v11812 = vadd.f32 %v11459, %v11811
    %v11813 = vpop.f32.mrf.mxu0
    %v11814 = vadd.f32 %v11461, %v11813
    %11815 = vmatprep.mubr.bf16.mxu0 %v11045
    %11816 = vmatmul.mubr.bf16.gmra.mxu0 %v11044
    %v11817 = vpop.f32.mrf.mxu0
    %v11818 = vadd.f32 %v11465, %v11817
    %v11819 = vpop.f32.mrf.mxu0
    %v11820 = vadd.f32 %v11467, %v11819
    %v11821 = vpop.f32.mrf.mxu0
    %v11822 = vadd.f32 %v11469, %v11821
    %v11823 = vpop.f32.mrf.mxu0
    %v11824 = vadd.f32 %v11471, %v11823
    %11825 = vmatprep.mubr.bf16.mxu0 %v11049
    %11826 = vmatmul.mubr.bf16.gmra.mxu0 %v11048
    %v11827 = vpop.f32.mrf.mxu0
    %v11828 = vadd.f32 %v11475, %v11827
    %v11829 = vpop.f32.mrf.mxu0
    %v11830 = vadd.f32 %v11477, %v11829
    %v11831 = vpop.f32.mrf.mxu0
    %v11832 = vadd.f32 %v11479, %v11831
    %v11833 = vpop.f32.mrf.mxu0
    %v11834 = vadd.f32 %v11481, %v11833
    %11835 = vmatprep.mubr.bf16.mxu0 %v11053
    %11836 = vmatmul.mubr.bf16.gmra.mxu0 %v11052
    %v11837 = vpop.f32.mrf.mxu0
    %v11838 = vadd.f32 %v11485, %v11837
    %v11839 = vpop.f32.mrf.mxu0
    %v11840 = vadd.f32 %v11487, %v11839
    %v11841 = vpop.f32.mrf.mxu0
    %v11842 = vadd.f32 %v11489, %v11841
    %v11843 = vpop.f32.mrf.mxu0
    %v11844 = vadd.f32 %v11491, %v11843
    %11845 = vmatprep.mubr.bf16.mxu0 %v11057
    %11846 = vmatmul.mubr.bf16.gmra.mxu0 %v11056
    %v11847 = vpop.f32.mrf.mxu0
    %v11848 = vadd.f32 %v11495, %v11847
    %v11849 = vpop.f32.mrf.mxu0
    %v11850 = vadd.f32 %v11497, %v11849
    %v11851 = vpop.f32.mrf.mxu0
    %v11852 = vadd.f32 %v11499, %v11851
    %v11853 = vpop.f32.mrf.mxu0
    %v11854 = vadd.f32 %v11501, %v11853
    %11855 = vmatprep.mubr.bf16.mxu0 %v11061
    %11856 = vmatmul.mubr.bf16.gmra.mxu0 %v11060
    %v11857 = vpop.f32.mrf.mxu0
    %v11858 = vadd.f32 %v11505, %v11857
    %v11859 = vpop.f32.mrf.mxu0
    %v11860 = vadd.f32 %v11507, %v11859
    %v11861 = vpop.f32.mrf.mxu0
    %v11862 = vadd.f32 %v11509, %v11861
    %v11863 = vpop.f32.mrf.mxu0
    %v11864 = vadd.f32 %v11511, %v11863
    %11865 = vmatprep.mubr.bf16.mxu0 %v11065
    %11866 = vmatmul.mubr.bf16.gmra.mxu0 %v11064
    %v11867 = vpop.f32.mrf.mxu0
    %v11868 = vadd.f32 %v11515, %v11867
    %v11869 = vpop.f32.mrf.mxu0
    %v11870 = vadd.f32 %v11517, %v11869
    %v11871 = vpop.f32.mrf.mxu0
    %v11872 = vadd.f32 %v11519, %v11871
    %v11873 = vpop.f32.mrf.mxu0
    %v11874 = vadd.f32 %v11521, %v11873
    %11875 = vmatprep.mubr.bf16.mxu0 %v11069
    %11876 = vmatmul.mubr.bf16.gmra.mxu0 %v11068
    %v11877 = vpop.f32.mrf.mxu0
    %v11878 = vadd.f32 %v11525, %v11877
    %v11879 = vpop.f32.mrf.mxu0
    %v11880 = vadd.f32 %v11527, %v11879
    %v11881 = vpop.f32.mrf.mxu0
    %v11882 = vadd.f32 %v11529, %v11881
    %v11883 = vpop.f32.mrf.mxu0
    %v11884 = vadd.f32 %v11531, %v11883
    %11885 = vmatprep.mubr.bf16.mxu0 %v11073
    %11886 = vmatmul.mubr.bf16.gmra.mxu0 %v11072
    %v11887 = vpop.f32.mrf.mxu0
    %v11888 = vadd.f32 %v11535, %v11887
    %v11889 = vpop.f32.mrf.mxu0
    %v11890 = vadd.f32 %v11537, %v11889
    %v11891 = vpop.f32.mrf.mxu0
    %v11892 = vadd.f32 %v11539, %v11891
    %v11893 = vpop.f32.mrf.mxu0
    %v11894 = vadd.f32 %v11541, %v11893
    %11895 = vmatprep.mubr.bf16.mxu0 %v11077
    %11896 = vmatmul.mubr.bf16.gmra.mxu0 %v11076
    %v11897 = vpop.f32.mrf.mxu0
    %v11898 = vadd.f32 %v11545, %v11897
    %v11899 = vpop.f32.mrf.mxu0
    %v11900 = vadd.f32 %v11547, %v11899
    %v11901 = vpop.f32.mrf.mxu0
    %v11902 = vadd.f32 %v11549, %v11901
    %v11903 = vpop.f32.mrf.mxu0
    %v11904 = vadd.f32 %v11551, %v11903
    %11905 = vmatprep.mubr.bf16.mxu0 %v11081
    %11906 = vmatmul.mubr.bf16.gmra.mxu0 %v11080
    %v11907 = vpop.f32.mrf.mxu0
    %v11908 = vadd.f32 %v11555, %v11907
    %v11909 = vpop.f32.mrf.mxu0
    %v11910 = vadd.f32 %v11557, %v11909
    %v11911 = vpop.f32.mrf.mxu0
    %v11912 = vadd.f32 %v11559, %v11911
    %v11913 = vpop.f32.mrf.mxu0
    %v11914 = vadd.f32 %v11561, %v11913
    %11915 = vdwg.mxu0
    %v11916 = vpack.c.bf16 %v11602, %v11598
    %v11917 = vpack.c.bf16 %v11604, %v11600
    %v11918 = vpack.c.bf16 %v11612, %v11608
    %v11919 = vpack.c.bf16 %v11614, %v11610
    %v11920 = vpack.c.bf16 %v11622, %v11618
    %v11921 = vpack.c.bf16 %v11624, %v11620
    %v11922 = vpack.c.bf16 %v11632, %v11628
    %v11923 = vpack.c.bf16 %v11634, %v11630
    %v11924 = vpack.c.bf16 %v11642, %v11638
    %v11925 = vpack.c.bf16 %v11644, %v11640
    %v11926 = vpack.c.bf16 %v11652, %v11648
    %v11927 = vpack.c.bf16 %v11654, %v11650
    %v11928 = vpack.c.bf16 %v11662, %v11658
    %v11929 = vpack.c.bf16 %v11664, %v11660
    %v11930 = vpack.c.bf16 %v11672, %v11668
    %v11931 = vpack.c.bf16 %v11674, %v11670
    %v11932 = vpack.c.bf16 %v11682, %v11678
    %v11933 = vpack.c.bf16 %v11684, %v11680
    %v11934 = vpack.c.bf16 %v11692, %v11688
    %v11935 = vpack.c.bf16 %v11694, %v11690
    %v11936 = vpack.c.bf16 %v11702, %v11698
    %v11937 = vpack.c.bf16 %v11704, %v11700
    %v11938 = vpack.c.bf16 %v11712, %v11708
    %v11939 = vpack.c.bf16 %v11714, %v11710
    %v11940 = vpack.c.bf16 %v11722, %v11718
    %v11941 = vpack.c.bf16 %v11724, %v11720
    %v11942 = vpack.c.bf16 %v11732, %v11728
    %v11943 = vpack.c.bf16 %v11734, %v11730
    %v11944 = vpack.c.bf16 %v11742, %v11738
    %v11945 = vpack.c.bf16 %v11744, %v11740
    %v11946 = vpack.c.bf16 %v11752, %v11748
    %v11947 = vpack.c.bf16 %v11754, %v11750
    %v11948 = vpack.c.bf16 %v11762, %v11758
    %v11949 = vpack.c.bf16 %v11764, %v11760
    %v11950 = vpack.c.bf16 %v11772, %v11768
    %v11951 = vpack.c.bf16 %v11774, %v11770
    %v11952 = vpack.c.bf16 %v11782, %v11778
    %v11953 = vpack.c.bf16 %v11784, %v11780
    %v11954 = vpack.c.bf16 %v11792, %v11788
    %v11955 = vpack.c.bf16 %v11794, %v11790
    %v11956 = vpack.c.bf16 %v11802, %v11798
    %v11957 = vpack.c.bf16 %v11804, %v11800
    %v11958 = vpack.c.bf16 %v11812, %v11808
    %v11959 = vpack.c.bf16 %v11814, %v11810
    %v11960 = vpack.c.bf16 %v11822, %v11818
    %v11961 = vpack.c.bf16 %v11824, %v11820
    %v11962 = vpack.c.bf16 %v11832, %v11828
    %v11963 = vpack.c.bf16 %v11834, %v11830
    %v11964 = vpack.c.bf16 %v11842, %v11838
    %v11965 = vpack.c.bf16 %v11844, %v11840
    %v11966 = vpack.c.bf16 %v11852, %v11848
    %v11967 = vpack.c.bf16 %v11854, %v11850
    %v11968 = vpack.c.bf16 %v11862, %v11858
    %v11969 = vpack.c.bf16 %v11864, %v11860
    %v11970 = vpack.c.bf16 %v11872, %v11868
    %v11971 = vpack.c.bf16 %v11874, %v11870
    %v11972 = vpack.c.bf16 %v11882, %v11878
    %v11973 = vpack.c.bf16 %v11884, %v11880
    %v11974 = vpack.c.bf16 %v11892, %v11888
    %v11975 = vpack.c.bf16 %v11894, %v11890
    %v11976 = vpack.c.bf16 %v11902, %v11898
    %v11977 = vpack.c.bf16 %v11904, %v11900
    %v11978 = vpack.c.bf16 %v11912, %v11908
    %v11979 = vpack.c.bf16 %v11914, %v11910
    %v11980 = vld [vmem:[%s10] sm:$0xf]
    %v11981 = vld [vmem:[%s10 + $0x4] sm:$0xf]
    %v11982 = vld [vmem:[%s10 + $0x8] sm:$0xf]
    %v11983 = vld [vmem:[%s10 + $0xc] sm:$0xf]
    %v11984 = vld [vmem:[%s10 + $0x10] sm:$0xf]
    %v11985 = vld [vmem:[%s10 + $0x14] sm:$0xf]
    %v11986 = vld [vmem:[%s10 + $0x18] sm:$0xf]
    %v11987 = vld [vmem:[%s10 + $0x1c] sm:$0xf]
    %v11988 = vld [vmem:[%s10 + $0x20] sm:$0xf]
    %v11989 = vld [vmem:[%s10 + $0x24] sm:$0xf]
    %v11990 = vld [vmem:[%s10 + $0x28] sm:$0xf]
    %v11991 = vld [vmem:[%s10 + $0x2c] sm:$0xf]
    %v11992 = vld [vmem:[%s10 + $0x30] sm:$0xf]
    %v11993 = vld [vmem:[%s10 + $0x34] sm:$0xf]
    %v11994 = vld [vmem:[%s10 + $0x38] sm:$0xf]
    %v11995 = vld [vmem:[%s10 + $0x3c] sm:$0xf]
    %v11996 = vld [vmem:[%s10 + $0x40] sm:$0xf]
    %v11997 = vld [vmem:[%s10 + $0x44] sm:$0xf]
    %v11998 = vld [vmem:[%s10 + $0x48] sm:$0xf]
    %v11999 = vld [vmem:[%s10 + $0x4c] sm:$0xf]
    %v12000 = vld [vmem:[%s10 + $0x50] sm:$0xf]
    %v12001 = vld [vmem:[%s10 + $0x54] sm:$0xf]
    %v12002 = vld [vmem:[%s10 + $0x58] sm:$0xf]
    %v12003 = vld [vmem:[%s10 + $0x5c] sm:$0xf]
    %v12004 = vld [vmem:[%s10 + $0x60] sm:$0xf]
    %v12005 = vld [vmem:[%s10 + $0x64] sm:$0xf]
    %v12006 = vld [vmem:[%s10 + $0x68] sm:$0xf]
    %v12007 = vld [vmem:[%s10 + $0x6c] sm:$0xf]
    %v12008 = vld [vmem:[%s10 + $0x70] sm:$0xf]
    %v12009 = vld [vmem:[%s10 + $0x74] sm:$0xf]
    %v12010 = vld [vmem:[%s10 + $0x78] sm:$0xf]
    %v12011 = vld [vmem:[%s10 + $0x7c] sm:$0xf]
    %v12012 = vld [vmem:[%s10 + $0x80] sm:$0xf]
    %v12013 = vld [vmem:[%s10 + $0x84] sm:$0xf]
    %v12014 = vld [vmem:[%s10 + $0x88] sm:$0xf]
    %v12015 = vld [vmem:[%s10 + $0x8c] sm:$0xf]
    %v12016 = vld [vmem:[%s10 + $0x90] sm:$0xf]
    %v12017 = vld [vmem:[%s10 + $0x94] sm:$0xf]
    %v12018 = vld [vmem:[%s10 + $0x98] sm:$0xf]
    %v12019 = vld [vmem:[%s10 + $0x9c] sm:$0xf]
    %v12020 = vld [vmem:[%s10 + $0xa0] sm:$0xf]
    %v12021 = vld [vmem:[%s10 + $0xa4] sm:$0xf]
    %v12022 = vld [vmem:[%s10 + $0xa8] sm:$0xf]
    %v12023 = vld [vmem:[%s10 + $0xac] sm:$0xf]
    %v12024 = vld [vmem:[%s10 + $0xb0] sm:$0xf]
    %v12025 = vld [vmem:[%s10 + $0xb4] sm:$0xf]
    %v12026 = vld [vmem:[%s10 + $0xb8] sm:$0xf]
    %v12027 = vld [vmem:[%s10 + $0xbc] sm:$0xf]
    %v12028 = vld [vmem:[%s10 + $0xc0] sm:$0xf]
    %v12029 = vld [vmem:[%s10 + $0xc4] sm:$0xf]
    %v12030 = vld [vmem:[%s10 + $0xc8] sm:$0xf]
    %v12031 = vld [vmem:[%s10 + $0xcc] sm:$0xf]
    %v12032 = vld [vmem:[%s10 + $0xd0] sm:$0xf]
    %v12033 = vld [vmem:[%s10 + $0xd4] sm:$0xf]
    %v12034 = vld [vmem:[%s10 + $0xd8] sm:$0xf]
    %v12035 = vld [vmem:[%s10 + $0xdc] sm:$0xf]
    %v12036 = vld [vmem:[%s10 + $0xe0] sm:$0xf]
    %v12037 = vld [vmem:[%s10 + $0xe4] sm:$0xf]
    %v12038 = vld [vmem:[%s10 + $0xe8] sm:$0xf]
    %v12039 = vld [vmem:[%s10 + $0xec] sm:$0xf]
    %v12040 = vld [vmem:[%s10 + $0xf0] sm:$0xf]
    %v12041 = vld [vmem:[%s10 + $0xf4] sm:$0xf]
    %v12042 = vld [vmem:[%s10 + $0xf8] sm:$0xf]
    %v12043 = vld [vmem:[%s10 + $0xfc] sm:$0xf]
    %12045 = vset.pattern.permute.xlu0 0
    %12046 = vperm.xlu0 %12045, %v11980
    %v12047 = vpop.permute.xlu0 %12046
    %v12050 = vunpack.c.l.s4 839922192
    %v12051 = vunpack.c.0.s8 %v12050
    %v12052 = vlaneseq
    %v12053 = vshrl.u32 %v12052, 7
    %v12054 = vsub.s32 %v12051, %v12053
    %v12055 = vrot.slane %v12047, %v12054
    %12057 = vset.pattern.permute.xlu0 0
    %12058 = vperm.xlu0 %12057, %v11981
    %v12059 = vpop.permute.xlu0 %12058
    %v12062 = vunpack.c.l.s4 839922192
    %v12063 = vunpack.c.0.s8 %v12062
    %v12064 = vlaneseq
    %v12065 = vshrl.u32 %v12064, 7
    %v12066 = vsub.s32 %v12063, %v12065
    %v12067 = vrot.slane %v12059, %v12066
    %12069 = vset.pattern.permute.xlu0 0
    %12070 = vperm.xlu0 %12069, %v11982
    %v12071 = vpop.permute.xlu0 %12070
    %v12074 = vunpack.c.l.s4 839922192
    %v12075 = vunpack.c.0.s8 %v12074
    %v12076 = vlaneseq
    %v12077 = vshrl.u32 %v12076, 7
    %v12078 = vsub.s32 %v12075, %v12077
    %v12079 = vrot.slane %v12071, %v12078
    %12081 = vset.pattern.permute.xlu0 0
    %12082 = vperm.xlu0 %12081, %v11983
    %v12083 = vpop.permute.xlu0 %12082
    %v12086 = vunpack.c.l.s4 839922192
    %v12087 = vunpack.c.0.s8 %v12086
    %v12088 = vlaneseq
    %v12089 = vshrl.u32 %v12088, 7
    %v12090 = vsub.s32 %v12087, %v12089
    %v12091 = vrot.slane %v12083, %v12090
    %12093 = vset.pattern.permute.xlu0 0
    %12094 = vperm.xlu0 %12093, %v11984
    %v12095 = vpop.permute.xlu0 %12094
    %v12098 = vunpack.c.l.s4 839922192
    %v12099 = vunpack.c.0.s8 %v12098
    %v12100 = vlaneseq
    %v12101 = vshrl.u32 %v12100, 7
    %v12102 = vsub.s32 %v12099, %v12101
    %v12103 = vrot.slane %v12095, %v12102
    %12105 = vset.pattern.permute.xlu0 0
    %12106 = vperm.xlu0 %12105, %v11985
    %v12107 = vpop.permute.xlu0 %12106
    %v12110 = vunpack.c.l.s4 839922192
    %v12111 = vunpack.c.0.s8 %v12110
    %v12112 = vlaneseq
    %v12113 = vshrl.u32 %v12112, 7
    %v12114 = vsub.s32 %v12111, %v12113
    %v12115 = vrot.slane %v12107, %v12114
    %12117 = vset.pattern.permute.xlu0 0
    %12118 = vperm.xlu0 %12117, %v11986
    %v12119 = vpop.permute.xlu0 %12118
    %v12122 = vunpack.c.l.s4 839922192
    %v12123 = vunpack.c.0.s8 %v12122
    %v12124 = vlaneseq
    %v12125 = vshrl.u32 %v12124, 7
    %v12126 = vsub.s32 %v12123, %v12125
    %v12127 = vrot.slane %v12119, %v12126
    %12129 = vset.pattern.permute.xlu0 0
    %12130 = vperm.xlu0 %12129, %v11987
    %v12131 = vpop.permute.xlu0 %12130
    %v12134 = vunpack.c.l.s4 839922192
    %v12135 = vunpack.c.0.s8 %v12134
    %v12136 = vlaneseq
    %v12137 = vshrl.u32 %v12136, 7
    %v12138 = vsub.s32 %v12135, %v12137
    %v12139 = vrot.slane %v12131, %v12138
    %12141 = vset.pattern.permute.xlu0 0
    %12142 = vperm.xlu0 %12141, %v11988
    %v12143 = vpop.permute.xlu0 %12142
    %v12146 = vunpack.c.l.s4 839922192
    %v12147 = vunpack.c.0.s8 %v12146
    %v12148 = vlaneseq
    %v12149 = vshrl.u32 %v12148, 7
    %v12150 = vsub.s32 %v12147, %v12149
    %v12151 = vrot.slane %v12143, %v12150
    %12153 = vset.pattern.permute.xlu0 0
    %12154 = vperm.xlu0 %12153, %v11989
    %v12155 = vpop.permute.xlu0 %12154
    %v12158 = vunpack.c.l.s4 839922192
    %v12159 = vunpack.c.0.s8 %v12158
    %v12160 = vlaneseq
    %v12161 = vshrl.u32 %v12160, 7
    %v12162 = vsub.s32 %v12159, %v12161
    %v12163 = vrot.slane %v12155, %v12162
    %12165 = vset.pattern.permute.xlu0 0
    %12166 = vperm.xlu0 %12165, %v11990
    %v12167 = vpop.permute.xlu0 %12166
    %v12170 = vunpack.c.l.s4 839922192
    %v12171 = vunpack.c.0.s8 %v12170
    %v12172 = vlaneseq
    %v12173 = vshrl.u32 %v12172, 7
    %v12174 = vsub.s32 %v12171, %v12173
    %v12175 = vrot.slane %v12167, %v12174
    %12177 = vset.pattern.permute.xlu0 0
    %12178 = vperm.xlu0 %12177, %v11991
    %v12179 = vpop.permute.xlu0 %12178
    %v12182 = vunpack.c.l.s4 839922192
    %v12183 = vunpack.c.0.s8 %v12182
    %v12184 = vlaneseq
    %v12185 = vshrl.u32 %v12184, 7
    %v12186 = vsub.s32 %v12183, %v12185
    %v12187 = vrot.slane %v12179, %v12186
    %12189 = vset.pattern.permute.xlu0 0
    %12190 = vperm.xlu0 %12189, %v11992
    %v12191 = vpop.permute.xlu0 %12190
    %v12194 = vunpack.c.l.s4 839922192
    %v12195 = vunpack.c.0.s8 %v12194
    %v12196 = vlaneseq
    %v12197 = vshrl.u32 %v12196, 7
    %v12198 = vsub.s32 %v12195, %v12197
    %v12199 = vrot.slane %v12191, %v12198
    %12201 = vset.pattern.permute.xlu0 0
    %12202 = vperm.xlu0 %12201, %v11993
    %v12203 = vpop.permute.xlu0 %12202
    %v12206 = vunpack.c.l.s4 839922192
    %v12207 = vunpack.c.0.s8 %v12206
    %v12208 = vlaneseq
    %v12209 = vshrl.u32 %v12208, 7
    %v12210 = vsub.s32 %v12207, %v12209
    %v12211 = vrot.slane %v12203, %v12210
    %12213 = vset.pattern.permute.xlu0 0
    %12214 = vperm.xlu0 %12213, %v11994
    %v12215 = vpop.permute.xlu0 %12214
    %v12218 = vunpack.c.l.s4 839922192
    %v12219 = vunpack.c.0.s8 %v12218
    %v12220 = vlaneseq
    %v12221 = vshrl.u32 %v12220, 7
    %v12222 = vsub.s32 %v12219, %v12221
    %v12223 = vrot.slane %v12215, %v12222
    %12225 = vset.pattern.permute.xlu0 0
    %12226 = vperm.xlu0 %12225, %v11995
    %v12227 = vpop.permute.xlu0 %12226
    %v12230 = vunpack.c.l.s4 839922192
    %v12231 = vunpack.c.0.s8 %v12230
    %v12232 = vlaneseq
    %v12233 = vshrl.u32 %v12232, 7
    %v12234 = vsub.s32 %v12231, %v12233
    %v12235 = vrot.slane %v12227, %v12234
    %12237 = vset.pattern.permute.xlu0 0
    %12238 = vperm.xlu0 %12237, %v11996
    %v12239 = vpop.permute.xlu0 %12238
    %v12242 = vunpack.c.l.s4 839922192
    %v12243 = vunpack.c.0.s8 %v12242
    %v12244 = vlaneseq
    %v12245 = vshrl.u32 %v12244, 7
    %v12246 = vsub.s32 %v12243, %v12245
    %v12247 = vrot.slane %v12239, %v12246
    %12249 = vset.pattern.permute.xlu0 0
    %12250 = vperm.xlu0 %12249, %v11997
    %v12251 = vpop.permute.xlu0 %12250
    %v12254 = vunpack.c.l.s4 839922192
    %v12255 = vunpack.c.0.s8 %v12254
    %v12256 = vlaneseq
    %v12257 = vshrl.u32 %v12256, 7
    %v12258 = vsub.s32 %v12255, %v12257
    %v12259 = vrot.slane %v12251, %v12258
    %12261 = vset.pattern.permute.xlu0 0
    %12262 = vperm.xlu0 %12261, %v11998
    %v12263 = vpop.permute.xlu0 %12262
    %v12266 = vunpack.c.l.s4 839922192
    %v12267 = vunpack.c.0.s8 %v12266
    %v12268 = vlaneseq
    %v12269 = vshrl.u32 %v12268, 7
    %v12270 = vsub.s32 %v12267, %v12269
    %v12271 = vrot.slane %v12263, %v12270
    %12273 = vset.pattern.permute.xlu0 0
    %12274 = vperm.xlu0 %12273, %v11999
    %v12275 = vpop.permute.xlu0 %12274
    %v12278 = vunpack.c.l.s4 839922192
    %v12279 = vunpack.c.0.s8 %v12278
    %v12280 = vlaneseq
    %v12281 = vshrl.u32 %v12280, 7
    %v12282 = vsub.s32 %v12279, %v12281
    %v12283 = vrot.slane %v12275, %v12282
    %12285 = vset.pattern.permute.xlu0 0
    %12286 = vperm.xlu0 %12285, %v12000
    %v12287 = vpop.permute.xlu0 %12286
    %v12290 = vunpack.c.l.s4 839922192
    %v12291 = vunpack.c.0.s8 %v12290
    %v12292 = vlaneseq
    %v12293 = vshrl.u32 %v12292, 7
    %v12294 = vsub.s32 %v12291, %v12293
    %v12295 = vrot.slane %v12287, %v12294
    %12297 = vset.pattern.permute.xlu0 0
    %12298 = vperm.xlu0 %12297, %v12001
    %v12299 = vpop.permute.xlu0 %12298
    %v12302 = vunpack.c.l.s4 839922192
    %v12303 = vunpack.c.0.s8 %v12302
    %v12304 = vlaneseq
    %v12305 = vshrl.u32 %v12304, 7
    %v12306 = vsub.s32 %v12303, %v12305
    %v12307 = vrot.slane %v12299, %v12306
    %12309 = vset.pattern.permute.xlu0 0
    %12310 = vperm.xlu0 %12309, %v12002
    %v12311 = vpop.permute.xlu0 %12310
    %v12314 = vunpack.c.l.s4 839922192
    %v12315 = vunpack.c.0.s8 %v12314
    %v12316 = vlaneseq
    %v12317 = vshrl.u32 %v12316, 7
    %v12318 = vsub.s32 %v12315, %v12317
    %v12319 = vrot.slane %v12311, %v12318
    %12321 = vset.pattern.permute.xlu0 0
    %12322 = vperm.xlu0 %12321, %v12003
    %v12323 = vpop.permute.xlu0 %12322
    %v12326 = vunpack.c.l.s4 839922192
    %v12327 = vunpack.c.0.s8 %v12326
    %v12328 = vlaneseq
    %v12329 = vshrl.u32 %v12328, 7
    %v12330 = vsub.s32 %v12327, %v12329
    %v12331 = vrot.slane %v12323, %v12330
    %12333 = vset.pattern.permute.xlu0 0
    %12334 = vperm.xlu0 %12333, %v12004
    %v12335 = vpop.permute.xlu0 %12334
    %v12338 = vunpack.c.l.s4 839922192
    %v12339 = vunpack.c.0.s8 %v12338
    %v12340 = vlaneseq
    %v12341 = vshrl.u32 %v12340, 7
    %v12342 = vsub.s32 %v12339, %v12341
    %v12343 = vrot.slane %v12335, %v12342
    %12345 = vset.pattern.permute.xlu0 0
    %12346 = vperm.xlu0 %12345, %v12005
    %v12347 = vpop.permute.xlu0 %12346
    %v12350 = vunpack.c.l.s4 839922192
    %v12351 = vunpack.c.0.s8 %v12350
    %v12352 = vlaneseq
    %v12353 = vshrl.u32 %v12352, 7
    %v12354 = vsub.s32 %v12351, %v12353
    %v12355 = vrot.slane %v12347, %v12354
    %12357 = vset.pattern.permute.xlu0 0
    %12358 = vperm.xlu0 %12357, %v12006
    %v12359 = vpop.permute.xlu0 %12358
    %v12362 = vunpack.c.l.s4 839922192
    %v12363 = vunpack.c.0.s8 %v12362
    %v12364 = vlaneseq
    %v12365 = vshrl.u32 %v12364, 7
    %v12366 = vsub.s32 %v12363, %v12365
    %v12367 = vrot.slane %v12359, %v12366
    %12369 = vset.pattern.permute.xlu0 0
    %12370 = vperm.xlu0 %12369, %v12007
    %v12371 = vpop.permute.xlu0 %12370
    %v12374 = vunpack.c.l.s4 839922192
    %v12375 = vunpack.c.0.s8 %v12374
    %v12376 = vlaneseq
    %v12377 = vshrl.u32 %v12376, 7
    %v12378 = vsub.s32 %v12375, %v12377
    %v12379 = vrot.slane %v12371, %v12378
    %12381 = vset.pattern.permute.xlu0 0
    %12382 = vperm.xlu0 %12381, %v12008
    %v12383 = vpop.permute.xlu0 %12382
    %v12386 = vunpack.c.l.s4 839922192
    %v12387 = vunpack.c.0.s8 %v12386
    %v12388 = vlaneseq
    %v12389 = vshrl.u32 %v12388, 7
    %v12390 = vsub.s32 %v12387, %v12389
    %v12391 = vrot.slane %v12383, %v12390
    %12393 = vset.pattern.permute.xlu0 0
    %12394 = vperm.xlu0 %12393, %v12009
    %v12395 = vpop.permute.xlu0 %12394
    %v12398 = vunpack.c.l.s4 839922192
    %v12399 = vunpack.c.0.s8 %v12398
    %v12400 = vlaneseq
    %v12401 = vshrl.u32 %v12400, 7
    %v12402 = vsub.s32 %v12399, %v12401
    %v12403 = vrot.slane %v12395, %v12402
    %12405 = vset.pattern.permute.xlu0 0
    %12406 = vperm.xlu0 %12405, %v12010
    %v12407 = vpop.permute.xlu0 %12406
    %v12410 = vunpack.c.l.s4 839922192
    %v12411 = vunpack.c.0.s8 %v12410
    %v12412 = vlaneseq
    %v12413 = vshrl.u32 %v12412, 7
    %v12414 = vsub.s32 %v12411, %v12413
    %v12415 = vrot.slane %v12407, %v12414
    %12417 = vset.pattern.permute.xlu0 0
    %12418 = vperm.xlu0 %12417, %v12011
    %v12419 = vpop.permute.xlu0 %12418
    %v12422 = vunpack.c.l.s4 839922192
    %v12423 = vunpack.c.0.s8 %v12422
    %v12424 = vlaneseq
    %v12425 = vshrl.u32 %v12424, 7
    %v12426 = vsub.s32 %v12423, %v12425
    %v12427 = vrot.slane %v12419, %v12426
    %12429 = vset.pattern.permute.xlu0 0
    %12430 = vperm.xlu0 %12429, %v12012
    %v12431 = vpop.permute.xlu0 %12430
    %v12434 = vunpack.c.l.s4 839922192
    %v12435 = vunpack.c.0.s8 %v12434
    %v12436 = vlaneseq
    %v12437 = vshrl.u32 %v12436, 7
    %v12438 = vsub.s32 %v12435, %v12437
    %v12439 = vrot.slane %v12431, %v12438
    %12441 = vset.pattern.permute.xlu0 0
    %12442 = vperm.xlu0 %12441, %v12013
    %v12443 = vpop.permute.xlu0 %12442
    %v12446 = vunpack.c.l.s4 839922192
    %v12447 = vunpack.c.0.s8 %v12446
    %v12448 = vlaneseq
    %v12449 = vshrl.u32 %v12448, 7
    %v12450 = vsub.s32 %v12447, %v12449
    %v12451 = vrot.slane %v12443, %v12450
    %12453 = vset.pattern.permute.xlu0 0
    %12454 = vperm.xlu0 %12453, %v12014
    %v12455 = vpop.permute.xlu0 %12454
    %v12458 = vunpack.c.l.s4 839922192
    %v12459 = vunpack.c.0.s8 %v12458
    %v12460 = vlaneseq
    %v12461 = vshrl.u32 %v12460, 7
    %v12462 = vsub.s32 %v12459, %v12461
    %v12463 = vrot.slane %v12455, %v12462
    %12465 = vset.pattern.permute.xlu0 0
    %12466 = vperm.xlu0 %12465, %v12015
    %v12467 = vpop.permute.xlu0 %12466
    %v12470 = vunpack.c.l.s4 839922192
    %v12471 = vunpack.c.0.s8 %v12470
    %v12472 = vlaneseq
    %v12473 = vshrl.u32 %v12472, 7
    %v12474 = vsub.s32 %v12471, %v12473
    %v12475 = vrot.slane %v12467, %v12474
    %12477 = vset.pattern.permute.xlu0 0
    %12478 = vperm.xlu0 %12477, %v12016
    %v12479 = vpop.permute.xlu0 %12478
    %v12482 = vunpack.c.l.s4 839922192
    %v12483 = vunpack.c.0.s8 %v12482
    %v12484 = vlaneseq
    %v12485 = vshrl.u32 %v12484, 7
    %v12486 = vsub.s32 %v12483, %v12485
    %v12487 = vrot.slane %v12479, %v12486
    %12489 = vset.pattern.permute.xlu0 0
    %12490 = vperm.xlu0 %12489, %v12017
    %v12491 = vpop.permute.xlu0 %12490
    %v12494 = vunpack.c.l.s4 839922192
    %v12495 = vunpack.c.0.s8 %v12494
    %v12496 = vlaneseq
    %v12497 = vshrl.u32 %v12496, 7
    %v12498 = vsub.s32 %v12495, %v12497
    %v12499 = vrot.slane %v12491, %v12498
    %12501 = vset.pattern.permute.xlu0 0
    %12502 = vperm.xlu0 %12501, %v12018
    %v12503 = vpop.permute.xlu0 %12502
    %v12506 = vunpack.c.l.s4 839922192
    %v12507 = vunpack.c.0.s8 %v12506
    %v12508 = vlaneseq
    %v12509 = vshrl.u32 %v12508, 7
    %v12510 = vsub.s32 %v12507, %v12509
    %v12511 = vrot.slane %v12503, %v12510
    %12513 = vset.pattern.permute.xlu0 0
    %12514 = vperm.xlu0 %12513, %v12019
    %v12515 = vpop.permute.xlu0 %12514
    %v12518 = vunpack.c.l.s4 839922192
    %v12519 = vunpack.c.0.s8 %v12518
    %v12520 = vlaneseq
    %v12521 = vshrl.u32 %v12520, 7
    %v12522 = vsub.s32 %v12519, %v12521
    %v12523 = vrot.slane %v12515, %v12522
    %12525 = vset.pattern.permute.xlu0 0
    %12526 = vperm.xlu0 %12525, %v12020
    %v12527 = vpop.permute.xlu0 %12526
    %v12530 = vunpack.c.l.s4 839922192
    %v12531 = vunpack.c.0.s8 %v12530
    %v12532 = vlaneseq
    %v12533 = vshrl.u32 %v12532, 7
    %v12534 = vsub.s32 %v12531, %v12533
    %v12535 = vrot.slane %v12527, %v12534
    %12537 = vset.pattern.permute.xlu0 0
    %12538 = vperm.xlu0 %12537, %v12021
    %v12539 = vpop.permute.xlu0 %12538
    %v12542 = vunpack.c.l.s4 839922192
    %v12543 = vunpack.c.0.s8 %v12542
    %v12544 = vlaneseq
    %v12545 = vshrl.u32 %v12544, 7
    %v12546 = vsub.s32 %v12543, %v12545
    %v12547 = vrot.slane %v12539, %v12546
    %12549 = vset.pattern.permute.xlu0 0
    %12550 = vperm.xlu0 %12549, %v12022
    %v12551 = vpop.permute.xlu0 %12550
    %v12554 = vunpack.c.l.s4 839922192
    %v12555 = vunpack.c.0.s8 %v12554
    %v12556 = vlaneseq
    %v12557 = vshrl.u32 %v12556, 7
    %v12558 = vsub.s32 %v12555, %v12557
    %v12559 = vrot.slane %v12551, %v12558
    %12561 = vset.pattern.permute.xlu0 0
    %12562 = vperm.xlu0 %12561, %v12023
    %v12563 = vpop.permute.xlu0 %12562
    %v12566 = vunpack.c.l.s4 839922192
    %v12567 = vunpack.c.0.s8 %v12566
    %v12568 = vlaneseq
    %v12569 = vshrl.u32 %v12568, 7
    %v12570 = vsub.s32 %v12567, %v12569
    %v12571 = vrot.slane %v12563, %v12570
    %12573 = vset.pattern.permute.xlu0 0
    %12574 = vperm.xlu0 %12573, %v12024
    %v12575 = vpop.permute.xlu0 %12574
    %v12578 = vunpack.c.l.s4 839922192
    %v12579 = vunpack.c.0.s8 %v12578
    %v12580 = vlaneseq
    %v12581 = vshrl.u32 %v12580, 7
    %v12582 = vsub.s32 %v12579, %v12581
    %v12583 = vrot.slane %v12575, %v12582
    %12585 = vset.pattern.permute.xlu0 0
    %12586 = vperm.xlu0 %12585, %v12025
    %v12587 = vpop.permute.xlu0 %12586
    %v12590 = vunpack.c.l.s4 839922192
    %v12591 = vunpack.c.0.s8 %v12590
    %v12592 = vlaneseq
    %v12593 = vshrl.u32 %v12592, 7
    %v12594 = vsub.s32 %v12591, %v12593
    %v12595 = vrot.slane %v12587, %v12594
    %12597 = vset.pattern.permute.xlu0 0
    %12598 = vperm.xlu0 %12597, %v12026
    %v12599 = vpop.permute.xlu0 %12598
    %v12602 = vunpack.c.l.s4 839922192
    %v12603 = vunpack.c.0.s8 %v12602
    %v12604 = vlaneseq
    %v12605 = vshrl.u32 %v12604, 7
    %v12606 = vsub.s32 %v12603, %v12605
    %v12607 = vrot.slane %v12599, %v12606
    %12609 = vset.pattern.permute.xlu0 0
    %12610 = vperm.xlu0 %12609, %v12027
    %v12611 = vpop.permute.xlu0 %12610
    %v12614 = vunpack.c.l.s4 839922192
    %v12615 = vunpack.c.0.s8 %v12614
    %v12616 = vlaneseq
    %v12617 = vshrl.u32 %v12616, 7
    %v12618 = vsub.s32 %v12615, %v12617
    %v12619 = vrot.slane %v12611, %v12618
    %12621 = vset.pattern.permute.xlu0 0
    %12622 = vperm.xlu0 %12621, %v12028
    %v12623 = vpop.permute.xlu0 %12622
    %v12626 = vunpack.c.l.s4 839922192
    %v12627 = vunpack.c.0.s8 %v12626
    %v12628 = vlaneseq
    %v12629 = vshrl.u32 %v12628, 7
    %v12630 = vsub.s32 %v12627, %v12629
    %v12631 = vrot.slane %v12623, %v12630
    %12633 = vset.pattern.permute.xlu0 0
    %12634 = vperm.xlu0 %12633, %v12029
    %v12635 = vpop.permute.xlu0 %12634
    %v12638 = vunpack.c.l.s4 839922192
    %v12639 = vunpack.c.0.s8 %v12638
    %v12640 = vlaneseq
    %v12641 = vshrl.u32 %v12640, 7
    %v12642 = vsub.s32 %v12639, %v12641
    %v12643 = vrot.slane %v12635, %v12642
    %12645 = vset.pattern.permute.xlu0 0
    %12646 = vperm.xlu0 %12645, %v12030
    %v12647 = vpop.permute.xlu0 %12646
    %v12650 = vunpack.c.l.s4 839922192
    %v12651 = vunpack.c.0.s8 %v12650
    %v12652 = vlaneseq
    %v12653 = vshrl.u32 %v12652, 7
    %v12654 = vsub.s32 %v12651, %v12653
    %v12655 = vrot.slane %v12647, %v12654
    %12657 = vset.pattern.permute.xlu0 0
    %12658 = vperm.xlu0 %12657, %v12031
    %v12659 = vpop.permute.xlu0 %12658
    %v12662 = vunpack.c.l.s4 839922192
    %v12663 = vunpack.c.0.s8 %v12662
    %v12664 = vlaneseq
    %v12665 = vshrl.u32 %v12664, 7
    %v12666 = vsub.s32 %v12663, %v12665
    %v12667 = vrot.slane %v12659, %v12666
    %12669 = vset.pattern.permute.xlu0 0
    %12670 = vperm.xlu0 %12669, %v12032
    %v12671 = vpop.permute.xlu0 %12670
    %v12674 = vunpack.c.l.s4 839922192
    %v12675 = vunpack.c.0.s8 %v12674
    %v12676 = vlaneseq
    %v12677 = vshrl.u32 %v12676, 7
    %v12678 = vsub.s32 %v12675, %v12677
    %v12679 = vrot.slane %v12671, %v12678
    %12681 = vset.pattern.permute.xlu0 0
    %12682 = vperm.xlu0 %12681, %v12033
    %v12683 = vpop.permute.xlu0 %12682
    %v12686 = vunpack.c.l.s4 839922192
    %v12687 = vunpack.c.0.s8 %v12686
    %v12688 = vlaneseq
    %v12689 = vshrl.u32 %v12688, 7
    %v12690 = vsub.s32 %v12687, %v12689
    %v12691 = vrot.slane %v12683, %v12690
    %12693 = vset.pattern.permute.xlu0 0
    %12694 = vperm.xlu0 %12693, %v12034
    %v12695 = vpop.permute.xlu0 %12694
    %v12698 = vunpack.c.l.s4 839922192
    %v12699 = vunpack.c.0.s8 %v12698
    %v12700 = vlaneseq
    %v12701 = vshrl.u32 %v12700, 7
    %v12702 = vsub.s32 %v12699, %v12701
    %v12703 = vrot.slane %v12695, %v12702
    %12705 = vset.pattern.permute.xlu0 0
    %12706 = vperm.xlu0 %12705, %v12035
    %v12707 = vpop.permute.xlu0 %12706
    %v12710 = vunpack.c.l.s4 839922192
    %v12711 = vunpack.c.0.s8 %v12710
    %v12712 = vlaneseq
    %v12713 = vshrl.u32 %v12712, 7
    %v12714 = vsub.s32 %v12711, %v12713
    %v12715 = vrot.slane %v12707, %v12714
    %12717 = vset.pattern.permute.xlu0 0
    %12718 = vperm.xlu0 %12717, %v12036
    %v12719 = vpop.permute.xlu0 %12718
    %v12722 = vunpack.c.l.s4 839922192
    %v12723 = vunpack.c.0.s8 %v12722
    %v12724 = vlaneseq
    %v12725 = vshrl.u32 %v12724, 7
    %v12726 = vsub.s32 %v12723, %v12725
    %v12727 = vrot.slane %v12719, %v12726
    %12729 = vset.pattern.permute.xlu0 0
    %12730 = vperm.xlu0 %12729, %v12037
    %v12731 = vpop.permute.xlu0 %12730
    %v12734 = vunpack.c.l.s4 839922192
    %v12735 = vunpack.c.0.s8 %v12734
    %v12736 = vlaneseq
    %v12737 = vshrl.u32 %v12736, 7
    %v12738 = vsub.s32 %v12735, %v12737
    %v12739 = vrot.slane %v12731, %v12738
    %12741 = vset.pattern.permute.xlu0 0
    %12742 = vperm.xlu0 %12741, %v12038
    %v12743 = vpop.permute.xlu0 %12742
    %v12746 = vunpack.c.l.s4 839922192
    %v12747 = vunpack.c.0.s8 %v12746
    %v12748 = vlaneseq
    %v12749 = vshrl.u32 %v12748, 7
    %v12750 = vsub.s32 %v12747, %v12749
    %v12751 = vrot.slane %v12743, %v12750
    %12753 = vset.pattern.permute.xlu0 0
    %12754 = vperm.xlu0 %12753, %v12039
    %v12755 = vpop.permute.xlu0 %12754
    %v12758 = vunpack.c.l.s4 839922192
    %v12759 = vunpack.c.0.s8 %v12758
    %v12760 = vlaneseq
    %v12761 = vshrl.u32 %v12760, 7
    %v12762 = vsub.s32 %v12759, %v12761
    %v12763 = vrot.slane %v12755, %v12762
    %12765 = vset.pattern.permute.xlu0 0
    %12766 = vperm.xlu0 %12765, %v12040
    %v12767 = vpop.permute.xlu0 %12766
    %v12770 = vunpack.c.l.s4 839922192
    %v12771 = vunpack.c.0.s8 %v12770
    %v12772 = vlaneseq
    %v12773 = vshrl.u32 %v12772, 7
    %v12774 = vsub.s32 %v12771, %v12773
    %v12775 = vrot.slane %v12767, %v12774
    %12777 = vset.pattern.permute.xlu0 0
    %12778 = vperm.xlu0 %12777, %v12041
    %v12779 = vpop.permute.xlu0 %12778
    %v12782 = vunpack.c.l.s4 839922192
    %v12783 = vunpack.c.0.s8 %v12782
    %v12784 = vlaneseq
    %v12785 = vshrl.u32 %v12784, 7
    %v12786 = vsub.s32 %v12783, %v12785
    %v12787 = vrot.slane %v12779, %v12786
    %12789 = vset.pattern.permute.xlu0 0
    %12790 = vperm.xlu0 %12789, %v12042
    %v12791 = vpop.permute.xlu0 %12790
    %v12794 = vunpack.c.l.s4 839922192
    %v12795 = vunpack.c.0.s8 %v12794
    %v12796 = vlaneseq
    %v12797 = vshrl.u32 %v12796, 7
    %v12798 = vsub.s32 %v12795, %v12797
    %v12799 = vrot.slane %v12791, %v12798
    %12801 = vset.pattern.permute.xlu0 0
    %12802 = vperm.xlu0 %12801, %v12043
    %v12803 = vpop.permute.xlu0 %12802
    %v12806 = vunpack.c.l.s4 839922192
    %v12807 = vunpack.c.0.s8 %v12806
    %v12808 = vlaneseq
    %v12809 = vshrl.u32 %v12808, 7
    %v12810 = vsub.s32 %v12807, %v12809
    %v12811 = vrot.slane %v12803, %v12810
    %v12876 = vunpack.c.l.b16 %v12055
    %v12877 = vunpack.c.l.b16 %v12067
    %v12878 = vunpack.c.l.b16 %v12079
    %v12879 = vunpack.c.l.b16 %v12091
    %v12880 = vunpack.c.l.b16 %v12103
    %v12881 = vunpack.c.l.b16 %v12115
    %v12882 = vunpack.c.l.b16 %v12127
    %v12883 = vunpack.c.l.b16 %v12139
    %v12884 = vunpack.c.l.b16 %v12151
    %v12885 = vunpack.c.l.b16 %v12163
    %v12886 = vunpack.c.l.b16 %v12175
    %v12887 = vunpack.c.l.b16 %v12187
    %v12888 = vunpack.c.l.b16 %v12199
    %v12889 = vunpack.c.l.b16 %v12211
    %v12890 = vunpack.c.l.b16 %v12223
    %v12891 = vunpack.c.l.b16 %v12235
    %v12892 = vunpack.c.l.b16 %v12247
    %v12893 = vunpack.c.l.b16 %v12259
    %v12894 = vunpack.c.l.b16 %v12271
    %v12895 = vunpack.c.l.b16 %v12283
    %v12896 = vunpack.c.l.b16 %v12295
    %v12897 = vunpack.c.l.b16 %v12307
    %v12898 = vunpack.c.l.b16 %v12319
    %v12899 = vunpack.c.l.b16 %v12331
    %v12900 = vunpack.c.l.b16 %v12343
    %v12901 = vunpack.c.l.b16 %v12355
    %v12902 = vunpack.c.l.b16 %v12367
    %v12903 = vunpack.c.l.b16 %v12379
    %v12904 = vunpack.c.l.b16 %v12391
    %v12905 = vunpack.c.l.b16 %v12403
    %v12906 = vunpack.c.l.b16 %v12415
    %v12907 = vunpack.c.l.b16 %v12427
    %v12908 = vunpack.c.l.b16 %v12439
    %v12909 = vunpack.c.l.b16 %v12451
    %v12910 = vunpack.c.l.b16 %v12463
    %v12911 = vunpack.c.l.b16 %v12475
    %v12912 = vunpack.c.l.b16 %v12487
    %v12913 = vunpack.c.l.b16 %v12499
    %v12914 = vunpack.c.l.b16 %v12511
    %v12915 = vunpack.c.l.b16 %v12523
    %v12916 = vunpack.c.l.b16 %v12535
    %v12917 = vunpack.c.l.b16 %v12547
    %v12918 = vunpack.c.l.b16 %v12559
    %v12919 = vunpack.c.l.b16 %v12571
    %v12920 = vunpack.c.l.b16 %v12583
    %v12921 = vunpack.c.l.b16 %v12595
    %v12922 = vunpack.c.l.b16 %v12607
    %v12923 = vunpack.c.l.b16 %v12619
    %v12924 = vunpack.c.l.b16 %v12631
    %v12925 = vunpack.c.l.b16 %v12643
    %v12926 = vunpack.c.l.b16 %v12655
    %v12927 = vunpack.c.l.b16 %v12667
    %v12928 = vunpack.c.l.b16 %v12679
    %v12929 = vunpack.c.l.b16 %v12691
    %v12930 = vunpack.c.l.b16 %v12703
    %v12931 = vunpack.c.l.b16 %v12715
    %v12932 = vunpack.c.l.b16 %v12727
    %v12933 = vunpack.c.l.b16 %v12739
    %v12934 = vunpack.c.l.b16 %v12751
    %v12935 = vunpack.c.l.b16 %v12763
    %v12936 = vunpack.c.l.b16 %v12775
    %v12937 = vunpack.c.l.b16 %v12787
    %v12938 = vunpack.c.l.b16 %v12799
    %v12939 = vunpack.c.l.b16 %v12811
    %v12940 = vpack.c.b16 %v12877, %v12876
    %v12941 = vpack.c.b16 %v12879, %v12878
    %v12942 = vpack.c.b16 %v12881, %v12880
    %v12943 = vpack.c.b16 %v12883, %v12882
    %v12944 = vpack.c.b16 %v12885, %v12884
    %v12945 = vpack.c.b16 %v12887, %v12886
    %v12946 = vpack.c.b16 %v12889, %v12888
    %v12947 = vpack.c.b16 %v12891, %v12890
    %v12948 = vpack.c.b16 %v12893, %v12892
    %v12949 = vpack.c.b16 %v12895, %v12894
    %v12950 = vpack.c.b16 %v12897, %v12896
    %v12951 = vpack.c.b16 %v12899, %v12898
    %v12952 = vpack.c.b16 %v12901, %v12900
    %v12953 = vpack.c.b16 %v12903, %v12902
    %v12954 = vpack.c.b16 %v12905, %v12904
    %v12955 = vpack.c.b16 %v12907, %v12906
    %v12956 = vpack.c.b16 %v12909, %v12908
    %v12957 = vpack.c.b16 %v12911, %v12910
    %v12958 = vpack.c.b16 %v12913, %v12912
    %v12959 = vpack.c.b16 %v12915, %v12914
    %v12960 = vpack.c.b16 %v12917, %v12916
    %v12961 = vpack.c.b16 %v12919, %v12918
    %v12962 = vpack.c.b16 %v12921, %v12920
    %v12963 = vpack.c.b16 %v12923, %v12922
    %v12964 = vpack.c.b16 %v12925, %v12924
    %v12965 = vpack.c.b16 %v12927, %v12926
    %v12966 = vpack.c.b16 %v12929, %v12928
    %v12967 = vpack.c.b16 %v12931, %v12930
    %v12968 = vpack.c.b16 %v12933, %v12932
    %v12969 = vpack.c.b16 %v12935, %v12934
    %v12970 = vpack.c.b16 %v12937, %v12936
    %v12971 = vpack.c.b16 %v12939, %v12938
    %v13004 = vadd.bf16 %v11916, %v12940
    %v13005 = vadd.bf16 %v11917, %v12940
    %v13006 = vadd.bf16 %v11918, %v12941
    %v13007 = vadd.bf16 %v11919, %v12941
    %v13008 = vadd.bf16 %v11920, %v12942
    %v13009 = vadd.bf16 %v11921, %v12942
    %v13010 = vadd.bf16 %v11922, %v12943
    %v13011 = vadd.bf16 %v11923, %v12943
    %v13012 = vadd.bf16 %v11924, %v12944
    %v13013 = vadd.bf16 %v11925, %v12944
    %v13014 = vadd.bf16 %v11926, %v12945
    %v13015 = vadd.bf16 %v11927, %v12945
    %v13016 = vadd.bf16 %v11928, %v12946
    %v13017 = vadd.bf16 %v11929, %v12946
    %v13018 = vadd.bf16 %v11930, %v12947
    %v13019 = vadd.bf16 %v11931, %v12947
    %v13020 = vadd.bf16 %v11932, %v12948
    %v13021 = vadd.bf16 %v11933, %v12948
    %v13022 = vadd.bf16 %v11934, %v12949
    %v13023 = vadd.bf16 %v11935, %v12949
    %v13024 = vadd.bf16 %v11936, %v12950
    %v13025 = vadd.bf16 %v11937, %v12950
    %v13026 = vadd.bf16 %v11938, %v12951
    %v13027 = vadd.bf16 %v11939, %v12951
    %v13028 = vadd.bf16 %v11940, %v12952
    %v13029 = vadd.bf16 %v11941, %v12952
    %v13030 = vadd.bf16 %v11942, %v12953
    %v13031 = vadd.bf16 %v11943, %v12953
    %v13032 = vadd.bf16 %v11944, %v12954
    %v13033 = vadd.bf16 %v11945, %v12954
    %v13034 = vadd.bf16 %v11946, %v12955
    %v13035 = vadd.bf16 %v11947, %v12955
    %v13036 = vadd.bf16 %v11948, %v12956
    %v13037 = vadd.bf16 %v11949, %v12956
    %v13038 = vadd.bf16 %v11950, %v12957
    %v13039 = vadd.bf16 %v11951, %v12957
    %v13040 = vadd.bf16 %v11952, %v12958
    %v13041 = vadd.bf16 %v11953, %v12958
    %v13042 = vadd.bf16 %v11954, %v12959
    %v13043 = vadd.bf16 %v11955, %v12959
    %v13044 = vadd.bf16 %v11956, %v12960
    %v13045 = vadd.bf16 %v11957, %v12960
    %v13046 = vadd.bf16 %v11958, %v12961
    %v13047 = vadd.bf16 %v11959, %v12961
    %v13048 = vadd.bf16 %v11960, %v12962
    %v13049 = vadd.bf16 %v11961, %v12962
    %v13050 = vadd.bf16 %v11962, %v12963
    %v13051 = vadd.bf16 %v11963, %v12963
    %v13052 = vadd.bf16 %v11964, %v12964
    %v13053 = vadd.bf16 %v11965, %v12964
    %v13054 = vadd.bf16 %v11966, %v12965
    %v13055 = vadd.bf16 %v11967, %v12965
    %v13056 = vadd.bf16 %v11968, %v12966
    %v13057 = vadd.bf16 %v11969, %v12966
    %v13058 = vadd.bf16 %v11970, %v12967
    %v13059 = vadd.bf16 %v11971, %v12967
    %v13060 = vadd.bf16 %v11972, %v12968
    %v13061 = vadd.bf16 %v11973, %v12968
    %v13062 = vadd.bf16 %v11974, %v12969
    %v13063 = vadd.bf16 %v11975, %v12969
    %v13064 = vadd.bf16 %v11976, %v12970
    %v13065 = vadd.bf16 %v11977, %v12970
    %v13066 = vadd.bf16 %v11978, %v12971
    %v13067 = vadd.bf16 %v11979, %v12971
    %v13068 = vmax.bf16 %v13004, 0
    %v13069 = vmax.bf16 %v13005, 0
    %v13070 = vmax.bf16 %v13006, 0
    %v13071 = vmax.bf16 %v13007, 0
    %v13072 = vmax.bf16 %v13008, 0
    %v13073 = vmax.bf16 %v13009, 0
    %v13074 = vmax.bf16 %v13010, 0
    %v13075 = vmax.bf16 %v13011, 0
    %v13076 = vmax.bf16 %v13012, 0
    %v13077 = vmax.bf16 %v13013, 0
    %v13078 = vmax.bf16 %v13014, 0
    %v13079 = vmax.bf16 %v13015, 0
    %v13080 = vmax.bf16 %v13016, 0
    %v13081 = vmax.bf16 %v13017, 0
    %v13082 = vmax.bf16 %v13018, 0
    %v13083 = vmax.bf16 %v13019, 0
    %v13084 = vmax.bf16 %v13020, 0
    %v13085 = vmax.bf16 %v13021, 0
    %v13086 = vmax.bf16 %v13022, 0
    %v13087 = vmax.bf16 %v13023, 0
    %v13088 = vmax.bf16 %v13024, 0
    %v13089 = vmax.bf16 %v13025, 0
    %v13090 = vmax.bf16 %v13026, 0
    %v13091 = vmax.bf16 %v13027, 0
    %v13092 = vmax.bf16 %v13028, 0
    %v13093 = vmax.bf16 %v13029, 0
    %v13094 = vmax.bf16 %v13030, 0
    %v13095 = vmax.bf16 %v13031, 0
    %v13096 = vmax.bf16 %v13032, 0
    %v13097 = vmax.bf16 %v13033, 0
    %v13098 = vmax.bf16 %v13034, 0
    %v13099 = vmax.bf16 %v13035, 0
    %v13100 = vmax.bf16 %v13036, 0
    %v13101 = vmax.bf16 %v13037, 0
    %v13102 = vmax.bf16 %v13038, 0
    %v13103 = vmax.bf16 %v13039, 0
    %v13104 = vmax.bf16 %v13040, 0
    %v13105 = vmax.bf16 %v13041, 0
    %v13106 = vmax.bf16 %v13042, 0
    %v13107 = vmax.bf16 %v13043, 0
    %v13108 = vmax.bf16 %v13044, 0
    %v13109 = vmax.bf16 %v13045, 0
    %v13110 = vmax.bf16 %v13046, 0
    %v13111 = vmax.bf16 %v13047, 0
    %v13112 = vmax.bf16 %v13048, 0
    %v13113 = vmax.bf16 %v13049, 0
    %v13114 = vmax.bf16 %v13050, 0
    %v13115 = vmax.bf16 %v13051, 0
    %v13116 = vmax.bf16 %v13052, 0
    %v13117 = vmax.bf16 %v13053, 0
    %v13118 = vmax.bf16 %v13054, 0
    %v13119 = vmax.bf16 %v13055, 0
    %v13120 = vmax.bf16 %v13056, 0
    %v13121 = vmax.bf16 %v13057, 0
    %v13122 = vmax.bf16 %v13058, 0
    %v13123 = vmax.bf16 %v13059, 0
    %v13124 = vmax.bf16 %v13060, 0
    %v13125 = vmax.bf16 %v13061, 0
    %v13126 = vmax.bf16 %v13062, 0
    %v13127 = vmax.bf16 %v13063, 0
    %v13128 = vmax.bf16 %v13064, 0
    %v13129 = vmax.bf16 %v13065, 0
    %v13130 = vmax.bf16 %v13066, 0
    %v13131 = vmax.bf16 %v13067, 0
    %v13132 = vld [vmem:[%s11] sm:$0xf]
    %v13133 = vld [vmem:[#allocation2] sm:$0x1]
    %13135 = vset.pattern.permute.xlu0 0
    %13136 = vperm.xlu0 %13135, %v13133
    %v13137 = vpop.permute.xlu0 %13136
    %v13139 = vlaneseq
    %v13140 = vshrl.u32 %v13139, 7
    %v13141 = vsub.s32 0, %v13140
    %v13142 = vrot.slane %v13137, %v13141
    %v13145 = vunpack.c.l.s4 1966171168
    %v13146 = vunpack.c.0.s8 %v13145
    %v13147 = vlaneseq
    %v13148 = vshrl.u32 %v13147, 7
    %v13149 = vsub.s32 %v13146, %v13148
    %v13150 = vrot.slane %v13132, %v13149
    %v13151 = vcombine.high %v13150, %v13150
    %v13153 = vunpack.c.l.s4 1966171168
    %v13154 = vunpack.c.0.s8 %v13153
    %v13155 = vlaneseq
    %v13156 = vshrl.u32 %v13155, 7
    %v13157 = vsub.s32 %v13154, %v13156
    %v13158 = vrot.slane %v13150, %v13157
    %v13160 = vunpack.c.l.s4 1966171168
    %v13161 = vunpack.c.0.s8 %v13160
    %v13162 = vlaneseq
    %v13163 = vshrl.u32 %v13162, 7
    %v13164 = vsub.s32 %v13161, %v13163
    %v13165 = vrot.slane %v13151, %v13164
    %v13166 = vcombine.high %v13158, %v13158
    %v13167 = vcombine.high %v13165, %v13165
    %13172 = vmatprep.subr.bf16.mxu0 %v13083
    %13173 = vmatpush1.bf16.msra.mxu0 %v13082
    %13174 = vmatprep.subr.bf16.mxu0 %v13081
    %13175 = vmatpush1.bf16.msra.mxu0 %v13080
    %13176 = vmatprep.subr.bf16.mxu0 %v13079
    %13177 = vmatpush1.bf16.msra.mxu0 %v13078
    %13178 = vmatprep.subr.bf16.mxu0 %v13077
    %13179 = vmatpush1.bf16.msra.mxu0 %v13076
    %13180 = vmatprep.subr.bf16.mxu0 %v13075
    %13181 = vmatpush1.bf16.msra.mxu0 %v13074
    %13182 = vmatprep.subr.bf16.mxu0 %v13073
    %13183 = vmatpush1.bf16.msra.mxu0 %v13072
    %13184 = vmatprep.subr.bf16.mxu0 %v13071
    %13185 = vmatpush1.bf16.msra.mxu0 %v13070
    %13186 = vmatprep.subr.bf16.mxu0 %v13069
    %13187 = vmatpush1.bf16.msra.mxu0 %v13068
    %13188 = vmatprep.subr.bf16.mxu0 %v13099
    %13189 = vmatpush2.bf16.msra.mxu0 %v13098
    %13190 = vmatprep.subr.bf16.mxu0 %v13097
    %13191 = vmatpush2.bf16.msra.mxu0 %v13096
    %13192 = vmatprep.subr.bf16.mxu0 %v13095
    %13193 = vmatpush2.bf16.msra.mxu0 %v13094
    %13194 = vmatprep.subr.bf16.mxu0 %v13093
    %13195 = vmatpush2.bf16.msra.mxu0 %v13092
    %13196 = vmatprep.subr.bf16.mxu0 %v13091
    %13197 = vmatpush2.bf16.msra.mxu0 %v13090
    %13198 = vmatprep.subr.bf16.mxu0 %v13089
    %13199 = vmatpush2.bf16.msra.mxu0 %v13088
    %13200 = vmatprep.subr.bf16.mxu0 %v13087
    %13201 = vmatpush2.bf16.msra.mxu0 %v13086
    %13202 = vmatprep.subr.bf16.mxu0 %v13085
    %13203 = vmatpush2.bf16.msra.mxu0 %v13084
    %13204 = vmatprep.mubr.bf16.mxu0 %v13165
    %13205 = vmatmul.mubr.bf16.gmra.mxu0 %v13158
    %v13206 = vpop.f32.mrf.mxu0
    %v13207 = vadd.f32 %v13142, %v13206
    %v13208 = vpop.f32.mrf.mxu0
    %v13209 = vadd.f32 %v13142, %v13208
    %v13210 = vpop.f32.mrf.mxu0
    %v13211 = vpop.f32.mrf.mxu0
    %13212 = vdwg.mxu0
    %13213 = vmatprep.subr.bf16.mxu0 %v13115
    %13214 = vmatpush1.bf16.msra.mxu0 %v13114
    %13215 = vmatprep.subr.bf16.mxu0 %v13113
    %13216 = vmatpush1.bf16.msra.mxu0 %v13112
    %13217 = vmatprep.subr.bf16.mxu0 %v13111
    %13218 = vmatpush1.bf16.msra.mxu0 %v13110
    %13219 = vmatprep.subr.bf16.mxu0 %v13109
    %13220 = vmatpush1.bf16.msra.mxu0 %v13108
    %13221 = vmatprep.subr.bf16.mxu0 %v13107
    %13222 = vmatpush1.bf16.msra.mxu0 %v13106
    %13223 = vmatprep.subr.bf16.mxu0 %v13105
    %13224 = vmatpush1.bf16.msra.mxu0 %v13104
    %13225 = vmatprep.subr.bf16.mxu0 %v13103
    %13226 = vmatpush1.bf16.msra.mxu0 %v13102
    %13227 = vmatprep.subr.bf16.mxu0 %v13101
    %13228 = vmatpush1.bf16.msra.mxu0 %v13100
    %13229 = vmatprep.subr.bf16.mxu0 %v13131
    %13230 = vmatpush2.bf16.msra.mxu0 %v13130
    %13231 = vmatprep.subr.bf16.mxu0 %v13129
    %13232 = vmatpush2.bf16.msra.mxu0 %v13128
    %13233 = vmatprep.subr.bf16.mxu0 %v13127
    %13234 = vmatpush2.bf16.msra.mxu0 %v13126
    %13235 = vmatprep.subr.bf16.mxu0 %v13125
    %13236 = vmatpush2.bf16.msra.mxu0 %v13124
    %13237 = vmatprep.subr.bf16.mxu0 %v13123
    %13238 = vmatpush2.bf16.msra.mxu0 %v13122
    %13239 = vmatprep.subr.bf16.mxu0 %v13121
    %13240 = vmatpush2.bf16.msra.mxu0 %v13120
    %13241 = vmatprep.subr.bf16.mxu0 %v13119
    %13242 = vmatpush2.bf16.msra.mxu0 %v13118
    %13243 = vmatprep.subr.bf16.mxu0 %v13117
    %13244 = vmatpush2.bf16.msra.mxu0 %v13116
    %13245 = vmatprep.mubr.bf16.mxu0 %v13167
    %13246 = vmatmul.mubr.bf16.gmra.mxu0 %v13166
    %v13247 = vpop.f32.mrf.mxu0
    %v13248 = vadd.f32 %v13207, %v13247
    %v13249 = vpop.f32.mrf.mxu0
    %v13250 = vadd.f32 %v13209, %v13249
    %v13251 = vpop.f32.mrf.mxu0
    %v13252 = vpop.f32.mrf.mxu0
    %13253 = vdwg.mxu0
    %v13254 = vxor.u32 %v13248, 2147483648
    %v13255 = vxor.u32 %v13250, 2147483648
    %v13256 = vmul.f32 %v13254, 1.442695
    %v13257 = vpow.pop %v13256
    %v13258 = vmul.f32 %v13255, 1.442695
    %v13259 = vpow.pop %v13258
    %v13260 = vadd.f32 %v13257, 1.0
    %v13261 = vadd.f32 %v13259, 1.0
    %v13262 = vrcp.pop %v13260
    %v13263 = vmul.f32 1.0, %v13262
    %v13264 = vrcp.pop %v13261
    %v13265 = vmul.f32 1.0, %v13264
    %v13268 = vcombine.low %v13263, %v13265
    %v13270 = vunpack.c.l.s4 1966171168
    %v13271 = vunpack.c.0.s8 %v13270
    %v13272 = vlaneseq
    %v13273 = vshrl.u32 %v13272, 7
    %v13274 = vsub.s32 %v13271, %v13273
    %v13275 = vrot.slane %v13268, %v13274
    %v13277 = vunpack.c.l.s4 1966171168
    %v13278 = vunpack.c.0.s8 %v13277
    %v13279 = vlaneseq
    %v13280 = vshrl.u32 %v13279, 7
    %v13281 = vsub.s32 %v13278, %v13280
    %v13282 = vrot.slane %v13275, %v13281
    %v13284 = vlaneseq
    %vm13285 = vcmp.ge.s32.totalorder %v13284, 0
    %vm13286 = vcmp.lt.s32.totalorder %v13284, 256
    %vm13287 = vmand %vm13285, %vm13286
    %13288 = vst.msk [vmem:[#allocation8] sm:$0x3] %vm13287, %v13282
    // Predicated region
    $region62: #{tpu_custom_call.1} parent=1 // pred_check
      _
    $region63: #{tpu_custom_call.1} parent=1 // pred_check_branch
      %13290 = sbr.rel (0) target = $region65
    $region64: #{tpu_custom_call.1} parent=1 // pred_region
      %s13292 = ssub.s32 32, 32
      %13293 = vsyncadd [#allocation5], %s13292
      %s13295 = sshll.u32 [#allocation8], 4
      %s13296 = int_to_ptr.vmem [resolvable:$true] %s13295
      %13298 = dma.vmem_to_hbm [thread:$0]  %s13296, 32, %s13, [#allocation5]
    $region65: #{tpu_custom_call.1} parent=1 // pred_fallthru
      _
    // Predicated region
    $region66: #{tpu_custom_call.1} parent=1 // pred_check
      _
    $region67: #{tpu_custom_call.1} parent=1 // pred_check_branch
      %13300 = sbr.rel (0) target = $region69
    $region68: #{tpu_custom_call.1} parent=1 // pred_region
      %13301 = dma.done [#allocation5], 32
    $region69: #{tpu_custom_call.1} parent=1 // pred_fallthru
      _
    %13302 = vsyncpa [#allocation4], 1
    %13303 = vsyncpa [#allocation7], 1
    %13304 = vsyncpa [#allocation5], 1

</llo_original>
